<compile_context>
chip_gen: v7x
topology: tpu7x:2x2x1
jax: 0.10.0
libtpu: 0.0.40
codegen_flags: <defaults>
</compile_context>

<pallas_src>
import functools

import jax
import jax.numpy as jnp
from jax import lax
from jax.experimental import pallas as pl
from jax.experimental.pallas import tpu as pltpu

_VMEM_LIMIT = 48 * 1024 * 1024   # leave headroom on v7x (64 MiB physical per TC)


def _softmax_last(s):
    """Softmax over the last axis; divide goes through the EUP via approx reciprocal."""
    e = jnp.exp(s - jnp.max(s, axis=-1, keepdims=True))
    return e * pl.reciprocal(jnp.sum(e, axis=-1, keepdims=True), approx=True)


def _const_spec(shape):
    zeros = (0,) * len(shape)
    return pl.BlockSpec(shape, lambda i: zeros)


def _pick_block(n, target):
    """Largest divisor of n that is <= target and keeps >= 2 grid steps (megacore)."""
    for b in range(min(target, n), 0, -1):
        if n % b == 0 and n // b >= 2:
            return b
    return n


# ----------------------------------------------------------------------------
# Kernel 1: backbone patch-linear + GRU (fused gates, unrolled recurrence)
# Gridded over the stacked-batch axis; raw/ctx written back to HBM as bf16.
# ----------------------------------------------------------------------------
def _encode_kernel(patch_ref, wp_ref, bp_ref, wi_ref, bi_ref, wh_ref, bh_ref,
                   raw_ref, ctx_ref, ctx_acc_ref):
    f32, bf16 = jnp.float32, jnp.bfloat16
    patches = patch_ref[...]                       # (BB, T, K) f32
    bb, t_len, k = patches.shape
    h = wp_ref.shape[1]

    # hoisted bf16 weight casts (MXU operands only; elementwise stays f32)
    wp_b = wp_ref[...].astype(bf16)
    wi_b = wi_ref[...].astype(bf16)
    wh_b = wh_ref[...].astype(bf16)
    b_h = bh_ref[...]                              # (1, 3H) f32

    # conv-as-matmul backbone collapsed to a single 2-D matmul (M = BB*T)
    raw2 = jnp.dot(patches.reshape(bb * t_len, k).astype(bf16), wp_b,
                   preferred_element_type=f32) + bp_ref[...]
    raw2 = jnp.maximum(raw2, 0.0)                  # (BB*T, H) f32
    raw_ref[...] = raw2.reshape(bb, t_len, h).astype(bf16)

    # fused input-gate projection: one (H,3H) matmul for r|z|n, M = BB*T
    xg = (jnp.dot(raw2.astype(bf16), wi_b, preferred_element_type=f32)
          + bi_ref[...]).reshape(bb, t_len, 3 * h)

    hidden = jnp.zeros((bb, h), f32)
    # TODO(synk): for production T (~49) switch to lax.fori_loop carrying `hidden`
    #             (bounded live ranges); full unroll kept only for this tiny T.
    for t in range(t_len):
        hg = jnp.dot(hidden.astype(bf16), wh_b, preferred_element_type=f32) + b_h
        xt = xg[:, t, :]
        r = jax.nn.sigmoid(xt[:, :h] + hg[:, :h])
        z = jax.nn.sigmoid(xt[:, h:2 * h] + hg[:, h:2 * h])
        n = jnp.tanh(xt[:, 2 * h:] + r * hg[:, 2 * h:])
        hidden = (1.0 - z) * n + z * hidden
        ctx_acc_ref[:, t, :] = hidden              # f32 scratch (safe per-row store)

    ctx_ref[...] = ctx_acc_ref[...].astype(bf16)   # single lane/sublane-dense store


def encode(patches, p):
    nb, t, k = patches.shape
    h = p["w_patch"].shape[1]
    bb = _pick_block(nb, 16)
    grid = (nb // bb,)
    row_spec = pl.BlockSpec((bb, t, k), lambda i: (i, 0, 0))
    out_spec = pl.BlockSpec((bb, t, h), lambda i: (i, 0, 0))
    weights = [p["w_patch"], p["b_patch"], p["w_ig"], p["b_ig"], p["w_hg"], p["b_hg"]]
    out_shape = (jax.ShapeDtypeStruct((nb, t, h), jnp.bfloat16),
                 jax.ShapeDtypeStruct((nb, t, h), jnp.bfloat16))
    return pl.pallas_call(
        _encode_kernel,
        out_shape=out_shape,
        grid=grid,
        in_specs=[row_spec] + [_const_spec(w.shape) for w in weights],
        out_specs=(out_spec, out_spec),
        scratch_shapes=[pltpu.VMEM((bb, t, h), jnp.float32)],
        compiler_params=pltpu.CompilerParams(
            dimension_semantics=("parallel",),
            vmem_limit_bytes=_VMEM_LIMIT),
    )(patches, *weights)


# ----------------------------------------------------------------------------
# Kernel 2: self-attn -> pair-attn -> fusion -> gating -> global-attn -> classifier
# Grid over blocks of PB pairs; each 2*PB-row block is [PB left rows | PB right rows].
# ----------------------------------------------------------------------------
def _chain_kernel(raw_ref, ctx_ref,
                  w_bilin_ref,
                  wfgx_ref, wfgy_ref, bfg_ref, wfhx_ref, wfhy_ref, bfh_ref,
                  wgx_ref, wgy_ref, bgate_ref,
                  v_ref,
                  wcl_ref, wcr_ref, wcm_ref, wcd_ref, bcls_ref,
                  whg1_ref, bhg1_ref, whh1_ref, bhh1_ref,
                  whg2_ref, bhg2_ref, whh2_ref, bhh2_ref,
                  wout_ref, bout_ref,
                  o_ref):
    f32, bf16 = jnp.float32, jnp.bfloat16
    raw_b = raw_ref[...]            # (2PB, T, H) bf16 : rows [:PB]=left, [PB:]=right
    cin_b = ctx_ref[...]            # (2PB, T, H) bf16
    nb, t, h = raw_b.shape
    pb = nb // 2
    scale = float(h) ** -0.5

    # hoisted bf16 weight casts (one per weight per grid step)
    w_bilin_b = w_bilin_ref[...].astype(bf16)
    wfgx_b, wfgy_b = wfgx_ref[...].astype(bf16), wfgy_ref[...].astype(bf16)
    wfhx_b, wfhy_b = wfhx_ref[...].astype(bf16), wfhy_ref[...].astype(bf16)
    wgx_b, wgy_b = wgx_ref[...].astype(bf16), wgy_ref[...].astype(bf16)
    wcl_b, wcr_b = wcl_ref[...].astype(bf16), wcr_ref[...].astype(bf16)
    wcm_b, wcd_b = wcm_ref[...].astype(bf16), wcd_ref[...].astype(bf16)
    whg1_b, whh1_b = whg1_ref[...].astype(bf16), whh1_ref[...].astype(bf16)
    whg2_b, whh2_b = whg2_ref[...].astype(bf16), whh2_ref[...].astype(bf16)
    wout_b = wout_ref[...].astype(bf16)

    # --- self attention (dot alignment, per-sequence batched) ---
    s = jnp.einsum("bqh,bkh->bqk", cin_b, cin_b, preferred_element_type=f32) * scale
    p = _softmax_last(s)
    ctx3 = jnp.einsum("bqk,bkh->bqh", p.astype(bf16), cin_b,
                      preferred_element_type=f32)                  # (2PB,T,H) f32
    ctx2_f = ctx3.reshape(nb * t, h)
    ctx2_b = ctx2_f.astype(bf16)                                   # hoisted bf16 view

    # --- pair attention (bilinear): query = own ctx, key = other ctx, value = other raw ---
    octx_b = jnp.concatenate([ctx3[pb:], ctx3[:pb]], axis=0).astype(bf16)
    oraw_b = jnp.concatenate([raw_b[pb:], raw_b[:pb]], axis=0)     # bf16
    xw = jnp.dot(ctx2_b, w_bilin_b, preferred_element_type=f32).reshape(nb, t, h)
    s2 = jnp.einsum("bqg,bkg->bqk", xw.astype(bf16), octx_b,
                    preferred_element_type=f32) * scale
    p2 = _softmax_last(s2)
    aligned = jnp.einsum("bqk,bkh->bqh", p2.astype(bf16), oraw_b,
                         preferred_element_type=f32)               # (2PB,T,H) f32
    aligned2_b = aligned.reshape(nb * t, h).astype(bf16)

    # --- word fusion (highway-style), split-weight 2-D matmuls (M = 2PB*T) ---
    g = jax.nn.sigmoid(jnp.dot(ctx2_b, wfgx_b, preferred_element_type=f32)
                       + jnp.dot(aligned2_b, wfgy_b, preferred_element_type=f32)
                       + bfg_ref[...])
    hc = jnp.tanh(jnp.dot(ctx2_b, wfhx_b, preferred_element_type=f32)
                  + jnp.dot(aligned2_b, wfhy_b, preferred_element_type=f32)
                  + bfh_ref[...])
    fused = g * hc + (1.0 - g) * ctx2_f                            # (2PB*T, H) f32

    # --- gating mechanism (dropout p=0.1 identity in eval) ---
    raw2_b = raw_b.reshape(nb * t, h)                              # bf16 MXU operand
    gg = jax.nn.sigmoid(jnp.dot(raw2_b, wgx_b, preferred_element_type=f32)
                        + jnp.dot(fused.astype(bf16), wgy_b, preferred_element_type=f32)
                        + bgate_ref[...])
    gated = gg * fused + (1.0 - gg) * raw2_b.astype(f32)
    gated3 = gated.reshape(nb, t, h)

    # --- global attention pooling (dot style), scores (2PB, T) ---
    sc = jnp.sum(gated3 * v_ref[...], axis=-1)
    sc = sc - jnp.max(sc, axis=-1, keepdims=True)
    e = jnp.exp(sc)
    pr = e * pl.reciprocal(jnp.sum(e, axis=-1, keepdims=True), approx=True)
    pooled = jnp.sum(pr[:, :, None] * gated3, axis=1)              # (2PB, H)

    # --- concat-mul-diff comparator (split-weight) + 2-layer-highway classifier ---
    l = pooled[:pb, :]
    r = pooled[pb:, :]
    x = (jnp.dot(l.astype(bf16), wcl_b, preferred_element_type=f32)
         + jnp.dot(r.astype(bf16), wcr_b, preferred_element_type=f32)
         + jnp.dot((l * r).astype(bf16), wcm_b, preferred_element_type=f32)
         + jnp.dot((l - r).astype(bf16), wcd_b, preferred_element_type=f32)
         + bcls_ref[...])
    x = jnp.maximum(x, 0.0)

    def highway(x, wg_b, bg, wh_b, bh):
        xb = x.astype(bf16)
        gt = jax.nn.sigmoid(jnp.dot(xb, wg_b, preferred_element_type=f32) + bg)
        hh = jnp.maximum(jnp.dot(xb, wh_b, preferred_element_type=f32) + bh, 0.0)
        return gt * hh + (1.0 - gt) * x

    x = highway(x, whg1_b, bhg1_ref[...], whh1_b, bhh1_ref[...])
    x = highway(x, whg2_b, bhg2_ref[...], whh2_b, bhh2_ref[...])
    logits = jnp.dot(x.astype(bf16), wout_b, preferred_element_type=f32) + bout_ref[...]
    o_ref[...] = jax.nn.log_softmax(logits, axis=-1).reshape(1, pb, 2)  # LogSoftmax(dim=1)


def fused_chain(raw, ctx, p, *, pairs_per_block):
    nb, t, h = raw.shape
    n_pairs = nb // 2
    pb = pairs_per_block
    n_blocks = n_pairs // pb
    pair_spec = pl.BlockSpec((2 * pb, t, h), lambda i: (i, 0, 0))
    weights = [
        p["w_bilin"],
        p["w_fus_g_x"], p["w_fus_g_y"], p["b_fus_g"],
        p["w_fus_h_x"], p["w_fus_h_y"], p["b_fus_h"],
        p["w_gate_x"], p["w_gate_y"], p["b_gate"],
        p["v_glob"],
        p["w_cls_l"], p["w_cls_r"], p["w_cls_m"], p["w_cls_d"], p["b_cls1"],
        p["w_hwy_g1"], p["b_hwy_g1"], p["w_hwy_h1"], p["b_hwy_h1"],
        p["w_hwy_g2"], p["b_hwy_g2"], p["w_hwy_h2"], p["b_hwy_h2"],
        p["w_out"], p["b_out"],
    ]
    in_specs = [pair_spec, pair_spec] + [_const_spec(w.shape) for w in weights]
    out = pl.pallas_call(
        _chain_kernel,
        out_shape=jax.ShapeDtypeStruct((n_blocks, pb, 2), jnp.float32),
        grid=(n_blocks,),
        in_specs=in_specs,
        out_specs=pl.BlockSpec((1, pb, 2), lambda i: (i, 0, 0)),
        compiler_params=pltpu.CompilerParams(
            dimension_semantics=("parallel",),      # v7x: shard pair blocks across TCs
            vmem_limit_bytes=_VMEM_LIMIT),
    )(raw, ctx, *weights)
    return out.reshape(n_pairs, 2)


# ----------------------------------------------------------------------------
# Backbone patchify (NCHW -> (B, T, C*p*p)) on host; conv-as-matmul in Pallas
# ----------------------------------------------------------------------------
def _patchify(x, patch):
    b, c, hh, ww = x.shape
    gh, gw = hh // patch, ww // patch
    x = x.reshape(b, c, gh, patch, gw, patch)
    x = x.transpose(0, 2, 4, 1, 3, 5)              # (B, gh, gw, C, p, p)
    return x.reshape(b, gh * gw, c * patch * patch)


# ----------------------------------------------------------------------------
# Full mcan_reid forward: stack left/right (block-interleaved), encode, chain
# ----------------------------------------------------------------------------
def mcan_reid_forward(params, left, right, *, patch, pairs_per_block=None):
    b = left.shape[0]
    pb = pairs_per_block if pairs_per_block is not None else _pick_block(b, 8)
    img = left.shape[1:]
    # block-interleave: each chunk of 2*pb rows = [pb lefts | pb rights] of pb pairs
    stacked = jnp.concatenate([left.reshape((b // pb, pb) + img),
                               right.reshape((b // pb, pb) + img)],
                              axis=1).reshape((2 * b,) + img)
    patches = _patchify(stacked, patch)            # (2B, T, C*p*p)
    raw, ctx = encode(patches, params)             # kernel 1: backbone + GRU (bf16 out)
    out = fused_chain(raw, ctx, params, pairs_per_block=pb)   # kernel 2
    return out                                     # (B, 2), original pair order


# ----------------------------------------------------------------------------
# Deterministic parameter init (shapes follow the module, hidden 512 -> 32)
# ----------------------------------------------------------------------------
def init_params(key, c, patch, hidden):
    h = hidden
    keys = iter(jax.random.split(key, 32))

    def w(shape):
        fan_in = shape[0]
        return jax.random.normal(next(keys), shape, jnp.float32) / jnp.sqrt(jnp.float32(fan_in))

    def zb(n):
        return jnp.zeros((1, n), jnp.float32)

    p = {}
    p["w_patch"] = w((c * patch * patch, h)); p["b_patch"] = zb(h)
    # GRU gates fused as r|z|n blocks
    p["w_ig"] = w((h, 3 * h)); p["b_ig"] = zb(3 * h)
    p["w_hg"] = w((h, 3 * h)); p["b_hg"] = zb(3 * h)
    p["w_bilin"] = w((h, h))
    # fusion / gating weights pre-split (x half / y half of the concat)
    p["w_fus_g_x"] = w((h, h)); p["w_fus_g_y"] = w((h, h)); p["b_fus_g"] = zb(h)
    p["w_fus_h_x"] = w((h, h)); p["w_fus_h_y"] = w((h, h)); p["b_fus_h"] = zb(h)
    p["w_gate_x"] = w((h, h)); p["w_gate_y"] = w((h, h)); p["b_gate"] = zb(h)
    p["v_glob"] = w((1, h))
    # classifier first layer split into the 4 concat-mul-diff blocks
    p["w_cls_l"] = w((h, h)); p["w_cls_r"] = w((h, h))
    p["w_cls_m"] = w((h, h)); p["w_cls_d"] = w((h, h)); p["b_cls1"] = zb(h)
    p["w_hwy_g1"] = w((h, h)); p["b_hwy_g1"] = zb(h)
    p["w_hwy_h1"] = w((h, h)); p["b_hwy_h1"] = zb(h)
    p["w_hwy_g2"] = w((h, h)); p["b_hwy_g2"] = zb(h)
    p["w_hwy_h2"] = w((h, h)); p["b_hwy_h2"] = zb(h)
    p["w_out"] = w((h, 2)); p["b_out"] = zb(2)
    return p


if __name__ == "__main__":
    key = jax.random.PRNGKey(0)
    k_left, k_right, k_param = jax.random.split(key, 3)

    B, C, IMG = 2, 4, 16      # images: NCHW
    HIDDEN, PATCH = 32, 4     # -> seq = (16/4)*(16/4) = 16 tokens, hidden = 32

    left = jax.random.normal(k_left, (B, C, IMG, IMG), jnp.float32)
    right = jax.random.normal(k_right, (B, C, IMG, IMG), jnp.float32)
    params = init_params(k_param, c=C, patch=PATCH, hidden=HIDDEN)

    fwd = jax.jit(functools.partial(mcan_reid_forward, patch=PATCH))
    out = fwd(params, left, right)
    out = jax.block_until_ready(out)

    assert out.shape == (B, 2) and out.dtype == jnp.float32
    # rows of a LogSoftmax output must sum (in prob space) to 1
    assert bool(jnp.allclose(jnp.sum(jnp.exp(out), axis=1), 1.0, atol=1e-4))
    print("KERNEL_OK")
</pallas_src>

<mosaic_0001>
module attributes {stable_mosaic.version = 11 : i64} {
  func.func @_chain_kernel(%arg0: i32, %arg1: memref<2x16x32xbf16, #tpu.memory_space<vmem>>, %arg2: memref<2x16x32xbf16, #tpu.memory_space<vmem>>, %arg3: memref<32x32xf32, #tpu.memory_space<vmem>>, %arg4: memref<32x32xf32, #tpu.memory_space<vmem>>, %arg5: memref<32x32xf32, #tpu.memory_space<vmem>>, %arg6: memref<1x32xf32, #tpu.memory_space<vmem>>, %arg7: memref<32x32xf32, #tpu.memory_space<vmem>>, %arg8: memref<32x32xf32, #tpu.memory_space<vmem>>, %arg9: memref<1x32xf32, #tpu.memory_space<vmem>>, %arg10: memref<32x32xf32, #tpu.memory_space<vmem>>, %arg11: memref<32x32xf32, #tpu.memory_space<vmem>>, %arg12: memref<1x32xf32, #tpu.memory_space<vmem>>, %arg13: memref<1x32xf32, #tpu.memory_space<vmem>>, %arg14: memref<32x32xf32, #tpu.memory_space<vmem>>, %arg15: memref<32x32xf32, #tpu.memory_space<vmem>>, %arg16: memref<32x32xf32, #tpu.memory_space<vmem>>, %arg17: memref<32x32xf32, #tpu.memory_space<vmem>>, %arg18: memref<1x32xf32, #tpu.memory_space<vmem>>, %arg19: memref<32x32xf32, #tpu.memory_space<vmem>>, %arg20: memref<1x32xf32, #tpu.memory_space<vmem>>, %arg21: memref<32x32xf32, #tpu.memory_space<vmem>>, %arg22: memref<1x32xf32, #tpu.memory_space<vmem>>, %arg23: memref<32x32xf32, #tpu.memory_space<vmem>>, %arg24: memref<1x32xf32, #tpu.memory_space<vmem>>, %arg25: memref<32x32xf32, #tpu.memory_space<vmem>>, %arg26: memref<1x32xf32, #tpu.memory_space<vmem>>, %arg27: memref<32x2xf32, #tpu.memory_space<vmem>>, %arg28: memref<1x2xf32, #tpu.memory_space<vmem>>, %arg29: memref<1x1x2xf32, #tpu.memory_space<vmem>>) attributes {dimension_semantics = [#tpu.dimension_semantics<parallel>], iteration_bounds = array<i64: 2>, scalar_prefetch = 0 : i64, scratch_operands = 0 : i64, tpu.core_type = #tpu.core_type<tc>, window_params = [{transform_indices = @transform_0, window_bounds = array<i64: 2, 16, 32>}, {transform_indices = @transform_1, window_bounds = array<i64: 2, 16, 32>}, {pipeline_mode = #tpu.pipeline_mode<synchronous>, transform_indices = @transform_2, window_bounds = array<i64: 32, 32>}, {pipeline_mode = #tpu.pipeline_mode<synchronous>, transform_indices = @transform_3, window_bounds = array<i64: 32, 32>}, {pipeline_mode = #tpu.pipeline_mode<synchronous>, transform_indices = @transform_4, window_bounds = array<i64: 32, 32>}, {pipeline_mode = #tpu.pipeline_mode<synchronous>, transform_indices = @transform_5, window_bounds = array<i64: 1, 32>}, {pipeline_mode = #tpu.pipeline_mode<synchronous>, transform_indices = @transform_6, window_bounds = array<i64: 32, 32>}, {pipeline_mode = #tpu.pipeline_mode<synchronous>, transform_indices = @transform_7, window_bounds = array<i64: 32, 32>}, {pipeline_mode = #tpu.pipeline_mode<synchronous>, transform_indices = @transform_8, window_bounds = array<i64: 1, 32>}, {pipeline_mode = #tpu.pipeline_mode<synchronous>, transform_indices = @transform_9, window_bounds = array<i64: 32, 32>}, {pipeline_mode = #tpu.pipeline_mode<synchronous>, transform_indices = @transform_10, window_bounds = array<i64: 32, 32>}, {pipeline_mode = #tpu.pipeline_mode<synchronous>, transform_indices = @transform_11, window_bounds = array<i64: 1, 32>}, {pipeline_mode = #tpu.pipeline_mode<synchronous>, transform_indices = @transform_12, window_bounds = array<i64: 1, 32>}, {pipeline_mode = #tpu.pipeline_mode<synchronous>, transform_indices = @transform_13, window_bounds = array<i64: 32, 32>}, {pipeline_mode = #tpu.pipeline_mode<synchronous>, transform_indices = @transform_14, window_bounds = array<i64: 32, 32>}, {pipeline_mode = #tpu.pipeline_mode<synchronous>, transform_indices = @transform_15, window_bounds = array<i64: 32, 32>}, {pipeline_mode = #tpu.pipeline_mode<synchronous>, transform_indices = @transform_16, window_bounds = array<i64: 32, 32>}, {pipeline_mode = #tpu.pipeline_mode<synchronous>, transform_indices = @transform_17, window_bounds = array<i64: 1, 32>}, {pipeline_mode = #tpu.pipeline_mode<synchronous>, transform_indices = @transform_18, window_bounds = array<i64: 32, 32>}, {pipeline_mode = #tpu.pipeline_mode<synchronous>, transform_indices = @transform_19, window_bounds = array<i64: 1, 32>}, {pipeline_mode = #tpu.pipeline_mode<synchronous>, transform_indices = @transform_20, window_bounds = array<i64: 32, 32>}, {pipeline_mode = #tpu.pipeline_mode<synchronous>, transform_indices = @transform_21, window_bounds = array<i64: 1, 32>}, {pipeline_mode = #tpu.pipeline_mode<synchronous>, transform_indices = @transform_22, window_bounds = array<i64: 32, 32>}, {pipeline_mode = #tpu.pipeline_mode<synchronous>, transform_indices = @transform_23, window_bounds = array<i64: 1, 32>}, {pipeline_mode = #tpu.pipeline_mode<synchronous>, transform_indices = @transform_24, window_bounds = array<i64: 32, 32>}, {pipeline_mode = #tpu.pipeline_mode<synchronous>, transform_indices = @transform_25, window_bounds = array<i64: 1, 32>}, {pipeline_mode = #tpu.pipeline_mode<synchronous>, transform_indices = @transform_26, window_bounds = array<i64: 32, 2>}, {pipeline_mode = #tpu.pipeline_mode<synchronous>, transform_indices = @transform_27, window_bounds = array<i64: 1, 2>}, {transform_indices = @transform_28, window_bounds = array<i64: 1, 1, 2>}]} {
    %c0 = arith.constant 0 : index
    %c0_0 = arith.constant 0 : index
    %c0_1 = arith.constant 0 : index
    %0 = vector.load %arg1[%c0, %c0_0, %c0_1] : memref<2x16x32xbf16, #tpu.memory_space<vmem>>, vector<2x16x32xbf16>
    %c0_2 = arith.constant 0 : index
    %c0_3 = arith.constant 0 : index
    %c0_4 = arith.constant 0 : index
    %1 = vector.load %arg2[%c0_2, %c0_3, %c0_4] : memref<2x16x32xbf16, #tpu.memory_space<vmem>>, vector<2x16x32xbf16>
    %c0_5 = arith.constant 0 : index
    %c0_6 = arith.constant 0 : index
    %2 = vector.load %arg3[%c0_5, %c0_6] : memref<32x32xf32, #tpu.memory_space<vmem>>, vector<32x32xf32>
    %3 = arith.truncf %2 : vector<32x32xf32> to vector<32x32xbf16>
    %c0_7 = arith.constant 0 : index
    %c0_8 = arith.constant 0 : index
    %4 = vector.load %arg4[%c0_7, %c0_8] : memref<32x32xf32, #tpu.memory_space<vmem>>, vector<32x32xf32>
    %5 = arith.truncf %4 : vector<32x32xf32> to vector<32x32xbf16>
    %c0_9 = arith.constant 0 : index
    %c0_10 = arith.constant 0 : index
    %6 = vector.load %arg5[%c0_9, %c0_10] : memref<32x32xf32, #tpu.memory_space<vmem>>, vector<32x32xf32>
    %7 = arith.truncf %6 : vector<32x32xf32> to vector<32x32xbf16>
    %c0_11 = arith.constant 0 : index
    %c0_12 = arith.constant 0 : index
    %8 = vector.load %arg7[%c0_11, %c0_12] : memref<32x32xf32, #tpu.memory_space<vmem>>, vector<32x32xf32>
    %9 = arith.truncf %8 : vector<32x32xf32> to vector<32x32xbf16>
    %c0_13 = arith.constant 0 : index
    %c0_14 = arith.constant 0 : index
    %10 = vector.load %arg8[%c0_13, %c0_14] : memref<32x32xf32, #tpu.memory_space<vmem>>, vector<32x32xf32>
    %11 = arith.truncf %10 : vector<32x32xf32> to vector<32x32xbf16>
    %c0_15 = arith.constant 0 : index
    %c0_16 = arith.constant 0 : index
    %12 = vector.load %arg10[%c0_15, %c0_16] : memref<32x32xf32, #tpu.memory_space<vmem>>, vector<32x32xf32>
    %13 = arith.truncf %12 : vector<32x32xf32> to vector<32x32xbf16>
    %c0_17 = arith.constant 0 : index
    %c0_18 = arith.constant 0 : index
    %14 = vector.load %arg11[%c0_17, %c0_18] : memref<32x32xf32, #tpu.memory_space<vmem>>, vector<32x32xf32>
    %15 = arith.truncf %14 : vector<32x32xf32> to vector<32x32xbf16>
    %c0_19 = arith.constant 0 : index
    %c0_20 = arith.constant 0 : index
    %16 = vector.load %arg14[%c0_19, %c0_20] : memref<32x32xf32, #tpu.memory_space<vmem>>, vector<32x32xf32>
    %17 = arith.truncf %16 : vector<32x32xf32> to vector<32x32xbf16>
    %c0_21 = arith.constant 0 : index
    %c0_22 = arith.constant 0 : index
    %18 = vector.load %arg15[%c0_21, %c0_22] : memref<32x32xf32, #tpu.memory_space<vmem>>, vector<32x32xf32>
    %19 = arith.truncf %18 : vector<32x32xf32> to vector<32x32xbf16>
    %c0_23 = arith.constant 0 : index
    %c0_24 = arith.constant 0 : index
    %20 = vector.load %arg16[%c0_23, %c0_24] : memref<32x32xf32, #tpu.memory_space<vmem>>, vector<32x32xf32>
    %21 = arith.truncf %20 : vector<32x32xf32> to vector<32x32xbf16>
    %c0_25 = arith.constant 0 : index
    %c0_26 = arith.constant 0 : index
    %22 = vector.load %arg17[%c0_25, %c0_26] : memref<32x32xf32, #tpu.memory_space<vmem>>, vector<32x32xf32>
    %23 = arith.truncf %22 : vector<32x32xf32> to vector<32x32xbf16>
    %c0_27 = arith.constant 0 : index
    %c0_28 = arith.constant 0 : index
    %24 = vector.load %arg19[%c0_27, %c0_28] : memref<32x32xf32, #tpu.memory_space<vmem>>, vector<32x32xf32>
    %25 = arith.truncf %24 : vector<32x32xf32> to vector<32x32xbf16>
    %c0_29 = arith.constant 0 : index
    %c0_30 = arith.constant 0 : index
    %26 = vector.load %arg21[%c0_29, %c0_30] : memref<32x32xf32, #tpu.memory_space<vmem>>, vector<32x32xf32>
    %27 = arith.truncf %26 : vector<32x32xf32> to vector<32x32xbf16>
    %c0_31 = arith.constant 0 : index
    %c0_32 = arith.constant 0 : index
    %28 = vector.load %arg23[%c0_31, %c0_32] : memref<32x32xf32, #tpu.memory_space<vmem>>, vector<32x32xf32>
    %29 = arith.truncf %28 : vector<32x32xf32> to vector<32x32xbf16>
    %c0_33 = arith.constant 0 : index
    %c0_34 = arith.constant 0 : index
    %30 = vector.load %arg25[%c0_33, %c0_34] : memref<32x32xf32, #tpu.memory_space<vmem>>, vector<32x32xf32>
    %31 = arith.truncf %30 : vector<32x32xf32> to vector<32x32xbf16>
    %c0_35 = arith.constant 0 : index
    %c0_36 = arith.constant 0 : index
    %32 = vector.load %arg27[%c0_35, %c0_36] : memref<32x2xf32, #tpu.memory_space<vmem>>, vector<32x2xf32>
    %33 = arith.truncf %32 : vector<32x2xf32> to vector<32x2xbf16>
    "tpu.trace_start"() <{level = 10 : i32, message = "bqh,bkh->bqk"}> : () -> ()
    %cst = arith.constant dense<0.000000e+00> : vector<2x16x16xf32>
    %34 = tpu.matmul %1, %1, %cst {dimension_numbers = #tpu.dot_dimension_numbers<[2], [2], [1], [1], [0, 0, 0, 1, 1, 1], [0], [0]>} : vector<2x16x32xbf16>, vector<2x16x32xbf16>, vector<2x16x16xf32> -> vector<2x16x16xf32>
    "tpu.trace_stop"() : () -> ()
    %cst_37 = arith.constant 0.176776692 : f32
    %35 = vector.broadcast %cst_37 : f32 to vector<2x16x16xf32>
    %36 = arith.mulf %34, %35 : vector<2x16x16xf32>
    %cst_38 = arith.constant dense<0xFF800000> : vector<2x16xf32>
    %37 = vector.multi_reduction <maximumf>, %36, %cst_38 [2] : vector<2x16x16xf32> to vector<2x16xf32>
    %38 = vector.shape_cast %37 : vector<2x16xf32> to vector<2x16x1xf32>
    %39 = vector.broadcast %38 : vector<2x16x1xf32> to vector<2x16x16xf32>
    %40 = arith.subf %36, %39 : vector<2x16x16xf32>
    %41 = math.exp %40 : vector<2x16x16xf32>
    %cst_39 = arith.constant dense<0.000000e+00> : vector<2x16xf32>
    %42 = vector.multi_reduction <add>, %41, %cst_39 [2] : vector<2x16x16xf32> to vector<2x16xf32>
    %43 = vector.shape_cast %42 : vector<2x16xf32> to vector<2x16x1xf32>
    %44 = tpu.reciprocal %43 {approx = true} : vector<2x16x1xf32> -> vector<2x16x1xf32>
    %45 = vector.broadcast %44 : vector<2x16x1xf32> to vector<2x16x16xf32>
    %46 = arith.mulf %41, %45 : vector<2x16x16xf32>
    %47 = arith.truncf %46 : vector<2x16x16xf32> to vector<2x16x16xbf16>
    "tpu.trace_start"() <{level = 10 : i32, message = "bqk,bkh->bqh"}> : () -> ()
    %cst_40 = arith.constant dense<0.000000e+00> : vector<2x16x32xf32>
    %48 = tpu.matmul %47, %1, %cst_40 {dimension_numbers = #tpu.dot_dimension_numbers<[2], [1], [1], [2], [0, 0, 0, 1, 1, 2], [0], [0]>} : vector<2x16x16xbf16>, vector<2x16x32xbf16>, vector<2x16x32xf32> -> vector<2x16x32xf32>
    "tpu.trace_stop"() : () -> ()
    %49 = vector.shape_cast %48 : vector<2x16x32xf32> to vector<32x32xf32>
    %50 = arith.truncf %49 : vector<32x32xf32> to vector<32x32xbf16>
    %51 = vector.extract_strided_slice %48 {offsets = [1, 0, 0], sizes = [1, 16, 32], strides = [1, 1, 1]} : vector<2x16x32xf32> to vector<1x16x32xf32>
    %52 = vector.extract_strided_slice %48 {offsets = [0, 0, 0], sizes = [1, 16, 32], strides = [1, 1, 1]} : vector<2x16x32xf32> to vector<1x16x32xf32>
    %53 = tpu.concatenate %51, %52 in 0 : vector<1x16x32xf32>, vector<1x16x32xf32> -> vector<2x16x32xf32>
    %54 = arith.truncf %53 : vector<2x16x32xf32> to vector<2x16x32xbf16>
    %55 = vector.extract_strided_slice %0 {offsets = [1, 0, 0], sizes = [1, 16, 32], strides = [1, 1, 1]} : vector<2x16x32xbf16> to vector<1x16x32xbf16>
    %56 = vector.extract_strided_slice %0 {offsets = [0, 0, 0], sizes = [1, 16, 32], strides = [1, 1, 1]} : vector<2x16x32xbf16> to vector<1x16x32xbf16>
    %57 = tpu.concatenate %55, %56 in 0 : vector<1x16x32xbf16>, vector<1x16x32xbf16> -> vector<2x16x32xbf16>
    %cst_41 = arith.constant dense<0.000000e+00> : vector<32x32xf32>
    %58 = tpu.matmul %50, %3, %cst_41 {dimension_numbers = #tpu.dot_dimension_numbers<[1], [0], [0], [1], [0, 0, 1, 1], [], []>} : vector<32x32xbf16>, vector<32x32xbf16>, vector<32x32xf32> -> vector<32x32xf32>
    %59 = vector.shape_cast %58 : vector<32x32xf32> to vector<2x16x32xf32>
    %60 = arith.truncf %59 : vector<2x16x32xf32> to vector<2x16x32xbf16>
    "tpu.trace_start"() <{level = 10 : i32, message = "bqg,bkg->bqk"}> : () -> ()
    %cst_42 = arith.constant dense<0.000000e+00> : vector<2x16x16xf32>
    %61 = tpu.matmul %60, %54, %cst_42 {dimension_numbers = #tpu.dot_dimension_numbers<[2], [2], [1], [1], [0, 0, 0, 1, 1, 1], [0], [0]>} : vector<2x16x32xbf16>, vector<2x16x32xbf16>, vector<2x16x16xf32> -> vector<2x16x16xf32>
    "tpu.trace_stop"() : () -> ()
    %cst_43 = arith.constant 0.176776692 : f32
    %62 = vector.broadcast %cst_43 : f32 to vector<2x16x16xf32>
    %63 = arith.mulf %61, %62 : vector<2x16x16xf32>
    %cst_44 = arith.constant dense<0xFF800000> : vector<2x16xf32>
    %64 = vector.multi_reduction <maximumf>, %63, %cst_44 [2] : vector<2x16x16xf32> to vector<2x16xf32>
    %65 = vector.shape_cast %64 : vector<2x16xf32> to vector<2x16x1xf32>
    %66 = vector.broadcast %65 : vector<2x16x1xf32> to vector<2x16x16xf32>
    %67 = arith.subf %63, %66 : vector<2x16x16xf32>
    %68 = math.exp %67 : vector<2x16x16xf32>
    %cst_45 = arith.constant dense<0.000000e+00> : vector<2x16xf32>
    %69 = vector.multi_reduction <add>, %68, %cst_45 [2] : vector<2x16x16xf32> to vector<2x16xf32>
    %70 = vector.shape_cast %69 : vector<2x16xf32> to vector<2x16x1xf32>
    %71 = tpu.reciprocal %70 {approx = true} : vector<2x16x1xf32> -> vector<2x16x1xf32>
    %72 = vector.broadcast %71 : vector<2x16x1xf32> to vector<2x16x16xf32>
    %73 = arith.mulf %68, %72 : vector<2x16x16xf32>
    %74 = arith.truncf %73 : vector<2x16x16xf32> to vector<2x16x16xbf16>
    "tpu.trace_start"() <{level = 10 : i32, message = "bqk,bkh->bqh"}> : () -> ()
    %cst_46 = arith.constant dense<0.000000e+00> : vector<2x16x32xf32>
    %75 = tpu.matmul %74, %57, %cst_46 {dimension_numbers = #tpu.dot_dimension_numbers<[2], [1], [1], [2], [0, 0, 0, 1, 1, 2], [0], [0]>} : vector<2x16x16xbf16>, vector<2x16x32xbf16>, vector<2x16x32xf32> -> vector<2x16x32xf32>
    "tpu.trace_stop"() : () -> ()
    %76 = vector.shape_cast %75 : vector<2x16x32xf32> to vector<32x32xf32>
    %77 = arith.truncf %76 : vector<32x32xf32> to vector<32x32xbf16>
    %cst_47 = arith.constant dense<0.000000e+00> : vector<32x32xf32>
    %78 = tpu.matmul %50, %5, %cst_47 {dimension_numbers = #tpu.dot_dimension_numbers<[1], [0], [0], [1], [0, 0, 1, 1], [], []>} : vector<32x32xbf16>, vector<32x32xbf16>, vector<32x32xf32> -> vector<32x32xf32>
    %cst_48 = arith.constant dense<0.000000e+00> : vector<32x32xf32>
    %79 = tpu.matmul %77, %7, %cst_48 {dimension_numbers = #tpu.dot_dimension_numbers<[1], [0], [0], [1], [0, 0, 1, 1], [], []>} : vector<32x32xbf16>, vector<32x32xbf16>, vector<32x32xf32> -> vector<32x32xf32>
    %80 = arith.addf %78, %79 : vector<32x32xf32>
    %c0_49 = arith.constant 0 : index
    %c0_50 = arith.constant 0 : index
    %81 = vector.load %arg6[%c0_49, %c0_50] : memref<1x32xf32, #tpu.memory_space<vmem>>, vector<1x32xf32>
    %82 = vector.broadcast %81 : vector<1x32xf32> to vector<32x32xf32>
    %83 = arith.addf %80, %82 : vector<32x32xf32>
    %84 = arith.negf %83 : vector<32x32xf32>
    %85 = math.exp %84 : vector<32x32xf32>
    %cst_51 = arith.constant 1.000000e+00 : f32
    %86 = vector.broadcast %cst_51 : f32 to vector<32x32xf32>
    %87 = arith.addf %86, %85 : vector<32x32xf32>
    %88 = arith.divf %86, %87 : vector<32x32xf32>
    %cst_52 = arith.constant dense<0.000000e+00> : vector<32x32xf32>
    %89 = tpu.matmul %50, %9, %cst_52 {dimension_numbers = #tpu.dot_dimension_numbers<[1], [0], [0], [1], [0, 0, 1, 1], [], []>} : vector<32x32xbf16>, vector<32x32xbf16>, vector<32x32xf32> -> vector<32x32xf32>
    %cst_53 = arith.constant dense<0.000000e+00> : vector<32x32xf32>
    %90 = tpu.matmul %77, %11, %cst_53 {dimension_numbers = #tpu.dot_dimension_numbers<[1], [0], [0], [1], [0, 0, 1, 1], [], []>} : vector<32x32xbf16>, vector<32x32xbf16>, vector<32x32xf32> -> vector<32x32xf32>
    %91 = arith.addf %89, %90 : vector<32x32xf32>
    %c0_54 = arith.constant 0 : index
    %c0_55 = arith.constant 0 : index
    %92 = vector.load %arg9[%c0_54, %c0_55] : memref<1x32xf32, #tpu.memory_space<vmem>>, vector<1x32xf32>
    %93 = vector.broadcast %92 : vector<1x32xf32> to vector<32x32xf32>
    %94 = arith.addf %91, %93 : vector<32x32xf32>
    %95 = math.tanh %94 : vector<32x32xf32>
    %96 = arith.mulf %88, %95 : vector<32x32xf32>
    %cst_56 = arith.constant 1.000000e+00 : f32
    %97 = vector.broadcast %cst_56 : f32 to vector<32x32xf32>
    %98 = arith.subf %97, %88 : vector<32x32xf32>
    %99 = arith.mulf %98, %49 : vector<32x32xf32>
    %100 = arith.addf %96, %99 : vector<32x32xf32>
    %101 = vector.shape_cast %0 : vector<2x16x32xbf16> to vector<32x32xbf16>
    %cst_57 = arith.constant dense<0.000000e+00> : vector<32x32xf32>
    %102 = tpu.matmul %101, %13, %cst_57 {dimension_numbers = #tpu.dot_dimension_numbers<[1], [0], [0], [1], [0, 0, 1, 1], [], []>} : vector<32x32xbf16>, vector<32x32xbf16>, vector<32x32xf32> -> vector<32x32xf32>
    %103 = arith.truncf %100 : vector<32x32xf32> to vector<32x32xbf16>
    %cst_58 = arith.constant dense<0.000000e+00> : vector<32x32xf32>
    %104 = tpu.matmul %103, %15, %cst_58 {dimension_numbers = #tpu.dot_dimension_numbers<[1], [0], [0], [1], [0, 0, 1, 1], [], []>} : vector<32x32xbf16>, vector<32x32xbf16>, vector<32x32xf32> -> vector<32x32xf32>
    %105 = arith.addf %102, %104 : vector<32x32xf32>
    %c0_59 = arith.constant 0 : index
    %c0_60 = arith.constant 0 : index
    %106 = vector.load %arg12[%c0_59, %c0_60] : memref<1x32xf32, #tpu.memory_space<vmem>>, vector<1x32xf32>
    %107 = vector.broadcast %106 : vector<1x32xf32> to vector<32x32xf32>
    %108 = arith.addf %105, %107 : vector<32x32xf32>
    %109 = arith.negf %108 : vector<32x32xf32>
    %110 = math.exp %109 : vector<32x32xf32>
    %cst_61 = arith.constant 1.000000e+00 : f32
    %111 = vector.broadcast %cst_61 : f32 to vector<32x32xf32>
    %112 = arith.addf %111, %110 : vector<32x32xf32>
    %113 = arith.divf %111, %112 : vector<32x32xf32>
    %114 = arith.mulf %113, %100 : vector<32x32xf32>
    %cst_62 = arith.constant 1.000000e+00 : f32
    %115 = vector.broadcast %cst_62 : f32 to vector<32x32xf32>
    %116 = arith.subf %115, %113 : vector<32x32xf32>
    %117 = arith.extf %101 : vector<32x32xbf16> to vector<32x32xf32>
    %118 = arith.mulf %116, %117 : vector<32x32xf32>
    %119 = arith.addf %114, %118 : vector<32x32xf32>
    %120 = vector.shape_cast %119 : vector<32x32xf32> to vector<2x16x32xf32>
    %c0_63 = arith.constant 0 : index
    %c0_64 = arith.constant 0 : index
    %121 = vector.load %arg13[%c0_63, %c0_64] : memref<1x32xf32, #tpu.memory_space<vmem>>, vector<1x32xf32>
    %122 = vector.shape_cast %121 : vector<1x32xf32> to vector<1x1x32xf32>
    %123 = vector.broadcast %122 : vector<1x1x32xf32> to vector<2x16x32xf32>
    %124 = arith.mulf %120, %123 : vector<2x16x32xf32>
    %cst_65 = arith.constant dense<0.000000e+00> : vector<2x16xf32>
    %125 = vector.multi_reduction <add>, %124, %cst_65 [2] : vector<2x16x32xf32> to vector<2x16xf32>
    %cst_66 = arith.constant dense<0xFF800000> : vector<2xf32>
    %126 = vector.multi_reduction <maximumf>, %125, %cst_66 [1] : vector<2x16xf32> to vector<2xf32>
    %127 = vector.shape_cast %126 : vector<2xf32> to vector<2x1xf32>
    %128 = vector.broadcast %127 : vector<2x1xf32> to vector<2x16xf32>
    %129 = arith.subf %125, %128 : vector<2x16xf32>
    %130 = math.exp %129 : vector<2x16xf32>
    %cst_67 = arith.constant dense<0.000000e+00> : vector<2xf32>
    %131 = vector.multi_reduction <add>, %130, %cst_67 [1] : vector<2x16xf32> to vector<2xf32>
    %132 = vector.shape_cast %131 : vector<2xf32> to vector<2x1xf32>
    %133 = tpu.reciprocal %132 {approx = true} : vector<2x1xf32> -> vector<2x1xf32>
    %134 = vector.broadcast %133 : vector<2x1xf32> to vector<2x16xf32>
    %135 = arith.mulf %130, %134 : vector<2x16xf32>
    %136 = vector.shape_cast %135 : vector<2x16xf32> to vector<2x16x1xf32>
    %137 = vector.broadcast %136 : vector<2x16x1xf32> to vector<2x16x32xf32>
    %138 = arith.mulf %137, %120 : vector<2x16x32xf32>
    %cst_68 = arith.constant dense<0.000000e+00> : vector<2x32xf32>
    %139 = vector.multi_reduction <add>, %138, %cst_68 [1] : vector<2x16x32xf32> to vector<2x32xf32>
    %140 = vector.extract_strided_slice %139 {offsets = [0, 0], sizes = [1, 32], strides = [1, 1]} : vector<2x32xf32> to vector<1x32xf32>
    %141 = vector.extract_strided_slice %139 {offsets = [1, 0], sizes = [1, 32], strides = [1, 1]} : vector<2x32xf32> to vector<1x32xf32>
    %142 = arith.truncf %140 : vector<1x32xf32> to vector<1x32xbf16>
    %cst_69 = arith.constant dense<0.000000e+00> : vector<1x32xf32>
    %143 = tpu.matmul %142, %17, %cst_69 {dimension_numbers = #tpu.dot_dimension_numbers<[1], [0], [0], [1], [0, 0, 1, 1], [], []>} : vector<1x32xbf16>, vector<32x32xbf16>, vector<1x32xf32> -> vector<1x32xf32>
    %144 = arith.truncf %141 : vector<1x32xf32> to vector<1x32xbf16>
    %cst_70 = arith.constant dense<0.000000e+00> : vector<1x32xf32>
    %145 = tpu.matmul %144, %19, %cst_70 {dimension_numbers = #tpu.dot_dimension_numbers<[1], [0], [0], [1], [0, 0, 1, 1], [], []>} : vector<1x32xbf16>, vector<32x32xbf16>, vector<1x32xf32> -> vector<1x32xf32>
    %146 = arith.addf %143, %145 : vector<1x32xf32>
    %147 = arith.mulf %140, %141 : vector<1x32xf32>
    %148 = arith.truncf %147 : vector<1x32xf32> to vector<1x32xbf16>
    %cst_71 = arith.constant dense<0.000000e+00> : vector<1x32xf32>
    %149 = tpu.matmul %148, %21, %cst_71 {dimension_numbers = #tpu.dot_dimension_numbers<[1], [0], [0], [1], [0, 0, 1, 1], [], []>} : vector<1x32xbf16>, vector<32x32xbf16>, vector<1x32xf32> -> vector<1x32xf32>
    %150 = arith.addf %146, %149 : vector<1x32xf32>
    %151 = arith.subf %140, %141 : vector<1x32xf32>
    %152 = arith.truncf %151 : vector<1x32xf32> to vector<1x32xbf16>
    %cst_72 = arith.constant dense<0.000000e+00> : vector<1x32xf32>
    %153 = tpu.matmul %152, %23, %cst_72 {dimension_numbers = #tpu.dot_dimension_numbers<[1], [0], [0], [1], [0, 0, 1, 1], [], []>} : vector<1x32xbf16>, vector<32x32xbf16>, vector<1x32xf32> -> vector<1x32xf32>
    %154 = arith.addf %150, %153 : vector<1x32xf32>
    %c0_73 = arith.constant 0 : index
    %c0_74 = arith.constant 0 : index
    %155 = vector.load %arg18[%c0_73, %c0_74] : memref<1x32xf32, #tpu.memory_space<vmem>>, vector<1x32xf32>
    %156 = arith.addf %154, %155 : vector<1x32xf32>
    %cst_75 = arith.constant 0.000000e+00 : f32
    %157 = vector.broadcast %cst_75 : f32 to vector<1x32xf32>
    %158 = arith.maximumf %156, %157 : vector<1x32xf32>
    %c0_76 = arith.constant 0 : index
    %c0_77 = arith.constant 0 : index
    %159 = vector.load %arg20[%c0_76, %c0_77] : memref<1x32xf32, #tpu.memory_space<vmem>>, vector<1x32xf32>
    %c0_78 = arith.constant 0 : index
    %c0_79 = arith.constant 0 : index
    %160 = vector.load %arg22[%c0_78, %c0_79] : memref<1x32xf32, #tpu.memory_space<vmem>>, vector<1x32xf32>
    %161 = arith.truncf %158 : vector<1x32xf32> to vector<1x32xbf16>
    %cst_80 = arith.constant dense<0.000000e+00> : vector<1x32xf32>
    %162 = tpu.matmul %161, %25, %cst_80 {dimension_numbers = #tpu.dot_dimension_numbers<[1], [0], [0], [1], [0, 0, 1, 1], [], []>} : vector<1x32xbf16>, vector<32x32xbf16>, vector<1x32xf32> -> vector<1x32xf32>
    %163 = arith.addf %162, %159 : vector<1x32xf32>
    %164 = arith.negf %163 : vector<1x32xf32>
    %165 = math.exp %164 : vector<1x32xf32>
    %cst_81 = arith.constant 1.000000e+00 : f32
    %166 = vector.broadcast %cst_81 : f32 to vector<1x32xf32>
    %167 = arith.addf %166, %165 : vector<1x32xf32>
    %168 = arith.divf %166, %167 : vector<1x32xf32>
    %cst_82 = arith.constant dense<0.000000e+00> : vector<1x32xf32>
    %169 = tpu.matmul %161, %27, %cst_82 {dimension_numbers = #tpu.dot_dimension_numbers<[1], [0], [0], [1], [0, 0, 1, 1], [], []>} : vector<1x32xbf16>, vector<32x32xbf16>, vector<1x32xf32> -> vector<1x32xf32>
    %170 = arith.addf %169, %160 : vector<1x32xf32>
    %cst_83 = arith.constant 0.000000e+00 : f32
    %171 = vector.broadcast %cst_83 : f32 to vector<1x32xf32>
    %172 = arith.maximumf %170, %171 : vector<1x32xf32>
    %173 = arith.mulf %168, %172 : vector<1x32xf32>
    %cst_84 = arith.constant 1.000000e+00 : f32
    %174 = vector.broadcast %cst_84 : f32 to vector<1x32xf32>
    %175 = arith.subf %174, %168 : vector<1x32xf32>
    %176 = arith.mulf %175, %158 : vector<1x32xf32>
    %177 = arith.addf %173, %176 : vector<1x32xf32>
    %c0_85 = arith.constant 0 : index
    %c0_86 = arith.constant 0 : index
    %178 = vector.load %arg24[%c0_85, %c0_86] : memref<1x32xf32, #tpu.memory_space<vmem>>, vector<1x32xf32>
    %c0_87 = arith.constant 0 : index
    %c0_88 = arith.constant 0 : index
    %179 = vector.load %arg26[%c0_87, %c0_88] : memref<1x32xf32, #tpu.memory_space<vmem>>, vector<1x32xf32>
    %180 = arith.truncf %177 : vector<1x32xf32> to vector<1x32xbf16>
    %cst_89 = arith.constant dense<0.000000e+00> : vector<1x32xf32>
    %181 = tpu.matmul %180, %29, %cst_89 {dimension_numbers = #tpu.dot_dimension_numbers<[1], [0], [0], [1], [0, 0, 1, 1], [], []>} : vector<1x32xbf16>, vector<32x32xbf16>, vector<1x32xf32> -> vector<1x32xf32>
    %182 = arith.addf %181, %178 : vector<1x32xf32>
    %183 = arith.negf %182 : vector<1x32xf32>
    %184 = math.exp %183 : vector<1x32xf32>
    %cst_90 = arith.constant 1.000000e+00 : f32
    %185 = vector.broadcast %cst_90 : f32 to vector<1x32xf32>
    %186 = arith.addf %185, %184 : vector<1x32xf32>
    %187 = arith.divf %185, %186 : vector<1x32xf32>
    %cst_91 = arith.constant dense<0.000000e+00> : vector<1x32xf32>
    %188 = tpu.matmul %180, %31, %cst_91 {dimension_numbers = #tpu.dot_dimension_numbers<[1], [0], [0], [1], [0, 0, 1, 1], [], []>} : vector<1x32xbf16>, vector<32x32xbf16>, vector<1x32xf32> -> vector<1x32xf32>
    %189 = arith.addf %188, %179 : vector<1x32xf32>
    %cst_92 = arith.constant 0.000000e+00 : f32
    %190 = vector.broadcast %cst_92 : f32 to vector<1x32xf32>
    %191 = arith.maximumf %189, %190 : vector<1x32xf32>
    %192 = arith.mulf %187, %191 : vector<1x32xf32>
    %cst_93 = arith.constant 1.000000e+00 : f32
    %193 = vector.broadcast %cst_93 : f32 to vector<1x32xf32>
    %194 = arith.subf %193, %187 : vector<1x32xf32>
    %195 = arith.mulf %194, %177 : vector<1x32xf32>
    %196 = arith.addf %192, %195 : vector<1x32xf32>
    %197 = arith.truncf %196 : vector<1x32xf32> to vector<1x32xbf16>
    %cst_94 = arith.constant dense<0.000000e+00> : vector<1x2xf32>
    %198 = tpu.matmul %197, %33, %cst_94 {dimension_numbers = #tpu.dot_dimension_numbers<[1], [0], [0], [1], [0, 0, 1, 1], [], []>} : vector<1x32xbf16>, vector<32x2xbf16>, vector<1x2xf32> -> vector<1x2xf32>
    %c0_95 = arith.constant 0 : index
    %c0_96 = arith.constant 0 : index
    %199 = vector.load %arg28[%c0_95, %c0_96] : memref<1x2xf32, #tpu.memory_space<vmem>>, vector<1x2xf32>
    %200 = arith.addf %198, %199 : vector<1x2xf32>
    %cst_97 = arith.constant dense<0xFF800000> : vector<1xf32>
    %201 = vector.multi_reduction <maximumf>, %200, %cst_97 [1] : vector<1x2xf32> to vector<1xf32>
    %cst_98 = arith.constant 0xFF800000 : f32
    %202 = vector.broadcast %cst_98 : f32 to vector<1xf32>
    %203 = arith.maximumf %202, %201 : vector<1xf32>
    %204 = vector.shape_cast %203 : vector<1xf32> to vector<1x1xf32>
    %205 = vector.broadcast %204 : vector<1x1xf32> to vector<1x2xf32>
    %206 = arith.subf %200, %205 : vector<1x2xf32>
    %207 = math.exp %206 : vector<1x2xf32>
    %cst_99 = arith.constant dense<0.000000e+00> : vector<1xf32>
    %208 = vector.multi_reduction <add>, %207, %cst_99 [1] : vector<1x2xf32> to vector<1xf32>
    %209 = vector.shape_cast %208 : vector<1xf32> to vector<1x1xf32>
    %210 = math.log %209 : vector<1x1xf32>
    %211 = vector.broadcast %210 : vector<1x1xf32> to vector<1x2xf32>
    %212 = arith.subf %206, %211 : vector<1x2xf32>
    %213 = vector.shape_cast %212 : vector<1x2xf32> to vector<1x1x2xf32>
    %c0_100 = arith.constant 0 : index
    %c0_101 = arith.constant 0 : index
    %c0_102 = arith.constant 0 : index
    %214 = vector.load %arg29[%c0_100, %c0_101, %c0_102] : memref<1x1x2xf32, #tpu.memory_space<vmem>>, vector<1x1x2xf32>
    tpu.vector_store %arg29[%c0_100, %c0_101, %c0_102], %213 {strides = array<i32>} : memref<1x1x2xf32, #tpu.memory_space<vmem>>, vector<1x1x2xf32>,
    return
  }
  func.func @transform_0(%arg0: i32) -> (i32, i32, i32) {
    %c0_i32 = arith.constant 0 : i32
    %c0_i32_0 = arith.constant 0 : i32
    %c0_i32_1 = arith.constant 0 : i32
    return %arg0, %c0_i32, %c0_i32_0 : i32, i32, i32
  }
  func.func @transform_1(%arg0: i32) -> (i32, i32, i32) {
    %c0_i32 = arith.constant 0 : i32
    %c0_i32_0 = arith.constant 0 : i32
    %c0_i32_1 = arith.constant 0 : i32
    return %arg0, %c0_i32, %c0_i32_0 : i32, i32, i32
  }
  func.func @transform_2(%arg0: i32) -> (i32, i32) {
    %c0_i32 = arith.constant 0 : i32
    %c0_i32_0 = arith.constant 0 : i32
    %c0_i32_1 = arith.constant 0 : i32
    return %c0_i32, %c0_i32_0 : i32, i32
  }
  func.func @transform_3(%arg0: i32) -> (i32, i32) {
    %c0_i32 = arith.constant 0 : i32
    %c0_i32_0 = arith.constant 0 : i32
    %c0_i32_1 = arith.constant 0 : i32
    return %c0_i32, %c0_i32_0 : i32, i32
  }
  func.func @transform_4(%arg0: i32) -> (i32, i32) {
    %c0_i32 = arith.constant 0 : i32
    %c0_i32_0 = arith.constant 0 : i32
    %c0_i32_1 = arith.constant 0 : i32
    return %c0_i32, %c0_i32_0 : i32, i32
  }
  func.func @transform_5(%arg0: i32) -> (i32, i32) {
    %c0_i32 = arith.constant 0 : i32
    %c0_i32_0 = arith.constant 0 : i32
    %c0_i32_1 = arith.constant 0 : i32
    return %c0_i32, %c0_i32_0 : i32, i32
  }
  func.func @transform_6(%arg0: i32) -> (i32, i32) {
    %c0_i32 = arith.constant 0 : i32
    %c0_i32_0 = arith.constant 0 : i32
    %c0_i32_1 = arith.constant 0 : i32
    return %c0_i32, %c0_i32_0 : i32, i32
  }
  func.func @transform_7(%arg0: i32) -> (i32, i32) {
    %c0_i32 = arith.constant 0 : i32
    %c0_i32_0 = arith.constant 0 : i32
    %c0_i32_1 = arith.constant 0 : i32
    return %c0_i32, %c0_i32_0 : i32, i32
  }
  func.func @transform_8(%arg0: i32) -> (i32, i32) {
    %c0_i32 = arith.constant 0 : i32
    %c0_i32_0 = arith.constant 0 : i32
    %c0_i32_1 = arith.constant 0 : i32
    return %c0_i32, %c0_i32_0 : i32, i32
  }
  func.func @transform_9(%arg0: i32) -> (i32, i32) {
    %c0_i32 = arith.constant 0 : i32
    %c0_i32_0 = arith.constant 0 : i32
    %c0_i32_1 = arith.constant 0 : i32
    return %c0_i32, %c0_i32_0 : i32, i32
  }
  func.func @transform_10(%arg0: i32) -> (i32, i32) {
    %c0_i32 = arith.constant 0 : i32
    %c0_i32_0 = arith.constant 0 : i32
    %c0_i32_1 = arith.constant 0 : i32
    return %c0_i32, %c0_i32_0 : i32, i32
  }
  func.func @transform_11(%arg0: i32) -> (i32, i32) {
    %c0_i32 = arith.constant 0 : i32
    %c0_i32_0 = arith.constant 0 : i32
    %c0_i32_1 = arith.constant 0 : i32
    return %c0_i32, %c0_i32_0 : i32, i32
  }
  func.func @transform_12(%arg0: i32) -> (i32, i32) {
    %c0_i32 = arith.constant 0 : i32
    %c0_i32_0 = arith.constant 0 : i32
    %c0_i32_1 = arith.constant 0 : i32
    return %c0_i32, %c0_i32_0 : i32, i32
  }
  func.func @transform_13(%arg0: i32) -> (i32, i32) {
    %c0_i32 = arith.constant 0 : i32
    %c0_i32_0 = arith.constant 0 : i32
    %c0_i32_1 = arith.constant 0 : i32
    return %c0_i32, %c0_i32_0 : i32, i32
  }
  func.func @transform_14(%arg0: i32) -> (i32, i32) {
    %c0_i32 = arith.constant 0 : i32
    %c0_i32_0 = arith.constant 0 : i32
    %c0_i32_1 = arith.constant 0 : i32
    return %c0_i32, %c0_i32_0 : i32, i32
  }
  func.func @transform_15(%arg0: i32) -> (i32, i32) {
    %c0_i32 = arith.constant 0 : i32
    %c0_i32_0 = arith.constant 0 : i32
    %c0_i32_1 = arith.constant 0 : i32
    return %c0_i32, %c0_i32_0 : i32, i32
  }
  func.func @transform_16(%arg0: i32) -> (i32, i32) {
    %c0_i32 = arith.constant 0 : i32
    %c0_i32_0 = arith.constant 0 : i32
    %c0_i32_1 = arith.constant 0 : i32
    return %c0_i32, %c0_i32_0 : i32, i32
  }
  func.func @transform_17(%arg0: i32) -> (i32, i32) {
    %c0_i32 = arith.constant 0 : i32
    %c0_i32_0 = arith.constant 0 : i32
    %c0_i32_1 = arith.constant 0 : i32
    return %c0_i32, %c0_i32_0 : i32, i32
  }
  func.func @transform_18(%arg0: i32) -> (i32, i32) {
    %c0_i32 = arith.constant 0 : i32
    %c0_i32_0 = arith.constant 0 : i32
    %c0_i32_1 = arith.constant 0 : i32
    return %c0_i32, %c0_i32_0 : i32, i32
  }
  func.func @transform_19(%arg0: i32) -> (i32, i32) {
    %c0_i32 = arith.constant 0 : i32
    %c0_i32_0 = arith.constant 0 : i32
    %c0_i32_1 = arith.constant 0 : i32
    return %c0_i32, %c0_i32_0 : i32, i32
  }
  func.func @transform_20(%arg0: i32) -> (i32, i32) {
    %c0_i32 = arith.constant 0 : i32
    %c0_i32_0 = arith.constant 0 : i32
    %c0_i32_1 = arith.constant 0 : i32
    return %c0_i32, %c0_i32_0 : i32, i32
  }
  func.func @transform_21(%arg0: i32) -> (i32, i32) {
    %c0_i32 = arith.constant 0 : i32
    %c0_i32_0 = arith.constant 0 : i32
    %c0_i32_1 = arith.constant 0 : i32
    return %c0_i32, %c0_i32_0 : i32, i32
  }
  func.func @transform_22(%arg0: i32) -> (i32, i32) {
    %c0_i32 = arith.constant 0 : i32
    %c0_i32_0 = arith.constant 0 : i32
    %c0_i32_1 = arith.constant 0 : i32
    return %c0_i32, %c0_i32_0 : i32, i32
  }
  func.func @transform_23(%arg0: i32) -> (i32, i32) {
    %c0_i32 = arith.constant 0 : i32
    %c0_i32_0 = arith.constant 0 : i32
    %c0_i32_1 = arith.constant 0 : i32
    return %c0_i32, %c0_i32_0 : i32, i32
  }
  func.func @transform_24(%arg0: i32) -> (i32, i32) {
    %c0_i32 = arith.constant 0 : i32
    %c0_i32_0 = arith.constant 0 : i32
    %c0_i32_1 = arith.constant 0 : i32
    return %c0_i32, %c0_i32_0 : i32, i32
  }
  func.func @transform_25(%arg0: i32) -> (i32, i32) {
    %c0_i32 = arith.constant 0 : i32
    %c0_i32_0 = arith.constant 0 : i32
    %c0_i32_1 = arith.constant 0 : i32
    return %c0_i32, %c0_i32_0 : i32, i32
  }
  func.func @transform_26(%arg0: i32) -> (i32, i32) {
    %c0_i32 = arith.constant 0 : i32
    %c0_i32_0 = arith.constant 0 : i32
    %c0_i32_1 = arith.constant 0 : i32
    return %c0_i32, %c0_i32_0 : i32, i32
  }
  func.func @transform_27(%arg0: i32) -> (i32, i32) {
    %c0_i32 = arith.constant 0 : i32
    %c0_i32_0 = arith.constant 0 : i32
    %c0_i32_1 = arith.constant 0 : i32
    return %c0_i32, %c0_i32_0 : i32, i32
  }
  func.func @transform_28(%arg0: i32) -> (i32, i32, i32) {
    %c0_i32 = arith.constant 0 : i32
    %c0_i32_0 = arith.constant 0 : i32
    %c0_i32_1 = arith.constant 0 : i32
    return %arg0, %c0_i32, %c0_i32_0 : i32, i32, i32
  }
}

module attributes {stable_mosaic.version = 11 : i64} {
  func.func @_encode_kernel(%arg0: i32, %arg1: memref<2x16x64xf32, #tpu.memory_space<vmem>>, %arg2: memref<64x32xf32, #tpu.memory_space<vmem>>, %arg3: memref<1x32xf32, #tpu.memory_space<vmem>>, %arg4: memref<32x96xf32, #tpu.memory_space<vmem>>, %arg5: memref<1x96xf32, #tpu.memory_space<vmem>>, %arg6: memref<32x96xf32, #tpu.memory_space<vmem>>, %arg7: memref<1x96xf32, #tpu.memory_space<vmem>>, %arg8: memref<2x16x32xbf16, #tpu.memory_space<vmem>>, %arg9: memref<2x16x32xbf16, #tpu.memory_space<vmem>>, %arg10: memref<2x16x32xf32, #tpu.memory_space<vmem>>) attributes {dimension_semantics = [#tpu.dimension_semantics<parallel>], iteration_bounds = array<i64: 2>, scalar_prefetch = 0 : i64, scratch_operands = 1 : i64, tpu.core_type = #tpu.core_type<tc>, window_params = [{transform_indices = @transform_0, window_bounds = array<i64: 2, 16, 64>}, {pipeline_mode = #tpu.pipeline_mode<synchronous>, transform_indices = @transform_1, window_bounds = array<i64: 64, 32>}, {pipeline_mode = #tpu.pipeline_mode<synchronous>, transform_indices = @transform_2, window_bounds = array<i64: 1, 32>}, {pipeline_mode = #tpu.pipeline_mode<synchronous>, transform_indices = @transform_3, window_bounds = array<i64: 32, 96>}, {pipeline_mode = #tpu.pipeline_mode<synchronous>, transform_indices = @transform_4, window_bounds = array<i64: 1, 96>}, {pipeline_mode = #tpu.pipeline_mode<synchronous>, transform_indices = @transform_5, window_bounds = array<i64: 32, 96>}, {pipeline_mode = #tpu.pipeline_mode<synchronous>, transform_indices = @transform_6, window_bounds = array<i64: 1, 96>}, {transform_indices = @transform_7, window_bounds = array<i64: 2, 16, 32>}, {transform_indices = @transform_8, window_bounds = array<i64: 2, 16, 32>}]} {
    %c0 = arith.constant 0 : index
    %c0_0 = arith.constant 0 : index
    %c0_1 = arith.constant 0 : index
    %0 = vector.load %arg1[%c0, %c0_0, %c0_1] : memref<2x16x64xf32, #tpu.memory_space<vmem>>, vector<2x16x64xf32>
    %c0_2 = arith.constant 0 : index
    %c0_3 = arith.constant 0 : index
    %1 = vector.load %arg2[%c0_2, %c0_3] : memref<64x32xf32, #tpu.memory_space<vmem>>, vector<64x32xf32>
    %2 = arith.truncf %1 : vector<64x32xf32> to vector<64x32xbf16>
    %c0_4 = arith.constant 0 : index
    %c0_5 = arith.constant 0 : index
    %3 = vector.load %arg4[%c0_4, %c0_5] : memref<32x96xf32, #tpu.memory_space<vmem>>, vector<32x96xf32>
    %4 = arith.truncf %3 : vector<32x96xf32> to vector<32x96xbf16>
    %c0_6 = arith.constant 0 : index
    %c0_7 = arith.constant 0 : index
    %5 = vector.load %arg6[%c0_6, %c0_7] : memref<32x96xf32, #tpu.memory_space<vmem>>, vector<32x96xf32>
    %6 = arith.truncf %5 : vector<32x96xf32> to vector<32x96xbf16>
    %c0_8 = arith.constant 0 : index
    %c0_9 = arith.constant 0 : index
    %7 = vector.load %arg7[%c0_8, %c0_9] : memref<1x96xf32, #tpu.memory_space<vmem>>, vector<1x96xf32>
    %8 = vector.shape_cast %0 : vector<2x16x64xf32> to vector<32x64xf32>
    %9 = arith.truncf %8 : vector<32x64xf32> to vector<32x64xbf16>
    %cst = arith.constant dense<0.000000e+00> : vector<32x32xf32>
    %10 = tpu.matmul %9, %2, %cst {dimension_numbers = #tpu.dot_dimension_numbers<[1], [0], [0], [1], [0, 0, 1, 1], [], []>} : vector<32x64xbf16>, vector<64x32xbf16>, vector<32x32xf32> -> vector<32x32xf32>
    %c0_10 = arith.constant 0 : index
    %c0_11 = arith.constant 0 : index
    %11 = vector.load %arg3[%c0_10, %c0_11] : memref<1x32xf32, #tpu.memory_space<vmem>>, vector<1x32xf32>
    %12 = vector.broadcast %11 : vector<1x32xf32> to vector<32x32xf32>
    %13 = arith.addf %10, %12 : vector<32x32xf32>
    %cst_12 = arith.constant 0.000000e+00 : f32
    %14 = vector.broadcast %cst_12 : f32 to vector<32x32xf32>
    %15 = arith.maximumf %13, %14 : vector<32x32xf32>
    %16 = vector.shape_cast %15 : vector<32x32xf32> to vector<2x16x32xf32>
    %17 = arith.truncf %16 : vector<2x16x32xf32> to vector<2x16x32xbf16>
    %c0_13 = arith.constant 0 : index
    %c0_14 = arith.constant 0 : index
    %c0_15 = arith.constant 0 : index
    %18 = vector.load %arg8[%c0_13, %c0_14, %c0_15] : memref<2x16x32xbf16, #tpu.memory_space<vmem>>, vector<2x16x32xbf16>
    tpu.vector_store %arg8[%c0_13, %c0_14, %c0_15], %17 {strides = array<i32>} : memref<2x16x32xbf16, #tpu.memory_space<vmem>>, vector<2x16x32xbf16>,
    %19 = arith.truncf %15 : vector<32x32xf32> to vector<32x32xbf16>
    %cst_16 = arith.constant dense<0.000000e+00> : vector<32x96xf32>
    %20 = tpu.matmul %19, %4, %cst_16 {dimension_numbers = #tpu.dot_dimension_numbers<[1], [0], [0], [1], [0, 0, 1, 1], [], []>} : vector<32x32xbf16>, vector<32x96xbf16>, vector<32x96xf32> -> vector<32x96xf32>
    %c0_17 = arith.constant 0 : index
    %c0_18 = arith.constant 0 : index
    %21 = vector.load %arg5[%c0_17, %c0_18] : memref<1x96xf32, #tpu.memory_space<vmem>>, vector<1x96xf32>
    %22 = vector.broadcast %21 : vector<1x96xf32> to vector<32x96xf32>
    %23 = arith.addf %20, %22 : vector<32x96xf32>
    %24 = vector.shape_cast %23 : vector<32x96xf32> to vector<2x16x96xf32>
    %cst_19 = arith.constant 0.000000e+00 : f32
    %25 = vector.broadcast %cst_19 : f32 to vector<2x32xf32>
    %26 = arith.truncf %25 : vector<2x32xf32> to vector<2x32xbf16>
    %cst_20 = arith.constant dense<0.000000e+00> : vector<2x96xf32>
    %27 = tpu.matmul %26, %6, %cst_20 {dimension_numbers = #tpu.dot_dimension_numbers<[1], [0], [0], [1], [0, 0, 1, 1], [], []>} : vector<2x32xbf16>, vector<32x96xbf16>, vector<2x96xf32> -> vector<2x96xf32>
    %28 = vector.broadcast %7 : vector<1x96xf32> to vector<2x96xf32>
    %29 = arith.addf %27, %28 : vector<2x96xf32>
    %30 = vector.extract_strided_slice %24 {offsets = [0, 0, 0], sizes = [2, 1, 96], strides = [1, 1, 1]} : vector<2x16x96xf32> to vector<2x1x96xf32>
    %31 = vector.shape_cast %30 : vector<2x1x96xf32> to vector<2x96xf32>
    %32 = vector.extract_strided_slice %31 {offsets = [0, 0], sizes = [2, 32], strides = [1, 1]} : vector<2x96xf32> to vector<2x32xf32>
    %33 = vector.extract_strided_slice %29 {offsets = [0, 0], sizes = [2, 32], strides = [1, 1]} : vector<2x96xf32> to vector<2x32xf32>
    %34 = arith.addf %32, %33 : vector<2x32xf32>
    %35 = arith.negf %34 : vector<2x32xf32>
    %36 = math.exp %35 : vector<2x32xf32>
    %cst_21 = arith.constant 1.000000e+00 : f32
    %37 = vector.broadcast %cst_21 : f32 to vector<2x32xf32>
    %38 = arith.addf %37, %36 : vector<2x32xf32>
    %39 = arith.divf %37, %38 : vector<2x32xf32>
    %40 = vector.extract_strided_slice %31 {offsets = [0, 32], sizes = [2, 32], strides = [1, 1]} : vector<2x96xf32> to vector<2x32xf32>
    %41 = vector.extract_strided_slice %29 {offsets = [0, 32], sizes = [2, 32], strides = [1, 1]} : vector<2x96xf32> to vector<2x32xf32>
    %42 = arith.addf %40, %41 : vector<2x32xf32>
    %43 = arith.negf %42 : vector<2x32xf32>
    %44 = math.exp %43 : vector<2x32xf32>
    %cst_22 = arith.constant 1.000000e+00 : f32
    %45 = vector.broadcast %cst_22 : f32 to vector<2x32xf32>
    %46 = arith.addf %45, %44 : vector<2x32xf32>
    %47 = arith.divf %45, %46 : vector<2x32xf32>
    %48 = vector.extract_strided_slice %31 {offsets = [0, 64], sizes = [2, 32], strides = [1, 1]} : vector<2x96xf32> to vector<2x32xf32>
    %49 = vector.extract_strided_slice %29 {offsets = [0, 64], sizes = [2, 32], strides = [1, 1]} : vector<2x96xf32> to vector<2x32xf32>
    %50 = arith.mulf %39, %49 : vector<2x32xf32>
    %51 = arith.addf %48, %50 : vector<2x32xf32>
    %52 = math.tanh %51 : vector<2x32xf32>
    %cst_23 = arith.constant 1.000000e+00 : f32
    %53 = vector.broadcast %cst_23 : f32 to vector<2x32xf32>
    %54 = arith.subf %53, %47 : vector<2x32xf32>
    %55 = arith.mulf %54, %52 : vector<2x32xf32>
    %56 = arith.mulf %47, %25 : vector<2x32xf32>
    %57 = arith.addf %55, %56 : vector<2x32xf32>
    %c0_24 = arith.constant 0 : index
    %c0_25 = arith.constant 0 : index
    %c0_26 = arith.constant 0 : index
    %58 = vector.load %arg10[%c0_24, %c0_25, %c0_26] : memref<2x16x32xf32, #tpu.memory_space<vmem>>, vector<2x1x32xf32>
    %59 = vector.shape_cast %58 : vector<2x1x32xf32> to vector<2x32xf32>
    %60 = vector.shape_cast %57 : vector<2x32xf32> to vector<2x1x32xf32>
    tpu.vector_store %arg10[%c0_24, %c0_25, %c0_26], %60 {strides = array<i32>} : memref<2x16x32xf32, #tpu.memory_space<vmem>>, vector<2x1x32xf32>,
    %61 = arith.truncf %57 : vector<2x32xf32> to vector<2x32xbf16>
    %cst_27 = arith.constant dense<0.000000e+00> : vector<2x96xf32>
    %62 = tpu.matmul %61, %6, %cst_27 {dimension_numbers = #tpu.dot_dimension_numbers<[1], [0], [0], [1], [0, 0, 1, 1], [], []>} : vector<2x32xbf16>, vector<32x96xbf16>, vector<2x96xf32> -> vector<2x96xf32>
    %63 = vector.broadcast %7 : vector<1x96xf32> to vector<2x96xf32>
    %64 = arith.addf %62, %63 : vector<2x96xf32>
    %65 = vector.extract_strided_slice %24 {offsets = [0, 1, 0], sizes = [2, 1, 96], strides = [1, 1, 1]} : vector<2x16x96xf32> to vector<2x1x96xf32>
    %66 = vector.shape_cast %65 : vector<2x1x96xf32> to vector<2x96xf32>
    %67 = vector.extract_strided_slice %66 {offsets = [0, 0], sizes = [2, 32], strides = [1, 1]} : vector<2x96xf32> to vector<2x32xf32>
    %68 = vector.extract_strided_slice %64 {offsets = [0, 0], sizes = [2, 32], strides = [1, 1]} : vector<2x96xf32> to vector<2x32xf32>
    %69 = arith.addf %67, %68 : vector<2x32xf32>
    %70 = arith.negf %69 : vector<2x32xf32>
    %71 = math.exp %70 : vector<2x32xf32>
    %cst_28 = arith.constant 1.000000e+00 : f32
    %72 = vector.broadcast %cst_28 : f32 to vector<2x32xf32>
    %73 = arith.addf %72, %71 : vector<2x32xf32>
    %74 = arith.divf %72, %73 : vector<2x32xf32>
    %75 = vector.extract_strided_slice %66 {offsets = [0, 32], sizes = [2, 32], strides = [1, 1]} : vector<2x96xf32> to vector<2x32xf32>
    %76 = vector.extract_strided_slice %64 {offsets = [0, 32], sizes = [2, 32], strides = [1, 1]} : vector<2x96xf32> to vector<2x32xf32>
    %77 = arith.addf %75, %76 : vector<2x32xf32>
    %78 = arith.negf %77 : vector<2x32xf32>
    %79 = math.exp %78 : vector<2x32xf32>
    %cst_29 = arith.constant 1.000000e+00 : f32
    %80 = vector.broadcast %cst_29 : f32 to vector<2x32xf32>
    %81 = arith.addf %80, %79 : vector<2x32xf32>
    %82 = arith.divf %80, %81 : vector<2x32xf32>
    %83 = vector.extract_strided_slice %66 {offsets = [0, 64], sizes = [2, 32], strides = [1, 1]} : vector<2x96xf32> to vector<2x32xf32>
    %84 = vector.extract_strided_slice %64 {offsets = [0, 64], sizes = [2, 32], strides = [1, 1]} : vector<2x96xf32> to vector<2x32xf32>
    %85 = arith.mulf %74, %84 : vector<2x32xf32>
    %86 = arith.addf %83, %85 : vector<2x32xf32>
    %87 = math.tanh %86 : vector<2x32xf32>
    %cst_30 = arith.constant 1.000000e+00 : f32
    %88 = vector.broadcast %cst_30 : f32 to vector<2x32xf32>
    %89 = arith.subf %88, %82 : vector<2x32xf32>
    %90 = arith.mulf %89, %87 : vector<2x32xf32>
    %91 = arith.mulf %82, %57 : vector<2x32xf32>
    %92 = arith.addf %90, %91 : vector<2x32xf32>
    %c0_31 = arith.constant 0 : index
    %c1 = arith.constant 1 : index
    %c0_32 = arith.constant 0 : index
    %93 = vector.load %arg10[%c0_31, %c1, %c0_32] : memref<2x16x32xf32, #tpu.memory_space<vmem>>, vector<2x1x32xf32>
    %94 = vector.shape_cast %93 : vector<2x1x32xf32> to vector<2x32xf32>
    %95 = vector.shape_cast %92 : vector<2x32xf32> to vector<2x1x32xf32>
    tpu.vector_store %arg10[%c0_31, %c1, %c0_32], %95 {strides = array<i32>} : memref<2x16x32xf32, #tpu.memory_space<vmem>>, vector<2x1x32xf32>,
    %96 = arith.truncf %92 : vector<2x32xf32> to vector<2x32xbf16>
    %cst_33 = arith.constant dense<0.000000e+00> : vector<2x96xf32>
    %97 = tpu.matmul %96, %6, %cst_33 {dimension_numbers = #tpu.dot_dimension_numbers<[1], [0], [0], [1], [0, 0, 1, 1], [], []>} : vector<2x32xbf16>, vector<32x96xbf16>, vector<2x96xf32> -> vector<2x96xf32>
    %98 = vector.broadcast %7 : vector<1x96xf32> to vector<2x96xf32>
    %99 = arith.addf %97, %98 : vector<2x96xf32>
    %100 = vector.extract_strided_slice %24 {offsets = [0, 2, 0], sizes = [2, 1, 96], strides = [1, 1, 1]} : vector<2x16x96xf32> to vector<2x1x96xf32>
    %101 = vector.shape_cast %100 : vector<2x1x96xf32> to vector<2x96xf32>
    %102 = vector.extract_strided_slice %101 {offsets = [0, 0], sizes = [2, 32], strides = [1, 1]} : vector<2x96xf32> to vector<2x32xf32>
    %103 = vector.extract_strided_slice %99 {offsets = [0, 0], sizes = [2, 32], strides = [1, 1]} : vector<2x96xf32> to vector<2x32xf32>
    %104 = arith.addf %102, %103 : vector<2x32xf32>
    %105 = arith.negf %104 : vector<2x32xf32>
    %106 = math.exp %105 : vector<2x32xf32>
    %cst_34 = arith.constant 1.000000e+00 : f32
    %107 = vector.broadcast %cst_34 : f32 to vector<2x32xf32>
    %108 = arith.addf %107, %106 : vector<2x32xf32>
    %109 = arith.divf %107, %108 : vector<2x32xf32>
    %110 = vector.extract_strided_slice %101 {offsets = [0, 32], sizes = [2, 32], strides = [1, 1]} : vector<2x96xf32> to vector<2x32xf32>
    %111 = vector.extract_strided_slice %99 {offsets = [0, 32], sizes = [2, 32], strides = [1, 1]} : vector<2x96xf32> to vector<2x32xf32>
    %112 = arith.addf %110, %111 : vector<2x32xf32>
    %113 = arith.negf %112 : vector<2x32xf32>
    %114 = math.exp %113 : vector<2x32xf32>
    %cst_35 = arith.constant 1.000000e+00 : f32
    %115 = vector.broadcast %cst_35 : f32 to vector<2x32xf32>
    %116 = arith.addf %115, %114 : vector<2x32xf32>
    %117 = arith.divf %115, %116 : vector<2x32xf32>
    %118 = vector.extract_strided_slice %101 {offsets = [0, 64], sizes = [2, 32], strides = [1, 1]} : vector<2x96xf32> to vector<2x32xf32>
    %119 = vector.extract_strided_slice %99 {offsets = [0, 64], sizes = [2, 32], strides = [1, 1]} : vector<2x96xf32> to vector<2x32xf32>
    %120 = arith.mulf %109, %119 : vector<2x32xf32>
    %121 = arith.addf %118, %120 : vector<2x32xf32>
    %122 = math.tanh %121 : vector<2x32xf32>
    %cst_36 = arith.constant 1.000000e+00 : f32
    %123 = vector.broadcast %cst_36 : f32 to vector<2x32xf32>
    %124 = arith.subf %123, %117 : vector<2x32xf32>
    %125 = arith.mulf %124, %122 : vector<2x32xf32>
    %126 = arith.mulf %117, %92 : vector<2x32xf32>
    %127 = arith.addf %125, %126 : vector<2x32xf32>
    %c0_37 = arith.constant 0 : index
    %c2 = arith.constant 2 : index
    %c0_38 = arith.constant 0 : index
    %128 = vector.load %arg10[%c0_37, %c2, %c0_38] : memref<2x16x32xf32, #tpu.memory_space<vmem>>, vector<2x1x32xf32>
    %129 = vector.shape_cast %128 : vector<2x1x32xf32> to vector<2x32xf32>
    %130 = vector.shape_cast %127 : vector<2x32xf32> to vector<2x1x32xf32>
    tpu.vector_store %arg10[%c0_37, %c2, %c0_38], %130 {strides = array<i32>} : memref<2x16x32xf32, #tpu.memory_space<vmem>>, vector<2x1x32xf32>,
    %131 = arith.truncf %127 : vector<2x32xf32> to vector<2x32xbf16>
    %cst_39 = arith.constant dense<0.000000e+00> : vector<2x96xf32>
    %132 = tpu.matmul %131, %6, %cst_39 {dimension_numbers = #tpu.dot_dimension_numbers<[1], [0], [0], [1], [0, 0, 1, 1], [], []>} : vector<2x32xbf16>, vector<32x96xbf16>, vector<2x96xf32> -> vector<2x96xf32>
    %133 = vector.broadcast %7 : vector<1x96xf32> to vector<2x96xf32>
    %134 = arith.addf %132, %133 : vector<2x96xf32>
    %135 = vector.extract_strided_slice %24 {offsets = [0, 3, 0], sizes = [2, 1, 96], strides = [1, 1, 1]} : vector<2x16x96xf32> to vector<2x1x96xf32>
    %136 = vector.shape_cast %135 : vector<2x1x96xf32> to vector<2x96xf32>
    %137 = vector.extract_strided_slice %136 {offsets = [0, 0], sizes = [2, 32], strides = [1, 1]} : vector<2x96xf32> to vector<2x32xf32>
    %138 = vector.extract_strided_slice %134 {offsets = [0, 0], sizes = [2, 32], strides = [1, 1]} : vector<2x96xf32> to vector<2x32xf32>
    %139 = arith.addf %137, %138 : vector<2x32xf32>
    %140 = arith.negf %139 : vector<2x32xf32>
    %141 = math.exp %140 : vector<2x32xf32>
    %cst_40 = arith.constant 1.000000e+00 : f32
    %142 = vector.broadcast %cst_40 : f32 to vector<2x32xf32>
    %143 = arith.addf %142, %141 : vector<2x32xf32>
    %144 = arith.divf %142, %143 : vector<2x32xf32>
    %145 = vector.extract_strided_slice %136 {offsets = [0, 32], sizes = [2, 32], strides = [1, 1]} : vector<2x96xf32> to vector<2x32xf32>
    %146 = vector.extract_strided_slice %134 {offsets = [0, 32], sizes = [2, 32], strides = [1, 1]} : vector<2x96xf32> to vector<2x32xf32>
    %147 = arith.addf %145, %146 : vector<2x32xf32>
    %148 = arith.negf %147 : vector<2x32xf32>
    %149 = math.exp %148 : vector<2x32xf32>
    %cst_41 = arith.constant 1.000000e+00 : f32
    %150 = vector.broadcast %cst_41 : f32 to vector<2x32xf32>
    %151 = arith.addf %150, %149 : vector<2x32xf32>
    %152 = arith.divf %150, %151 : vector<2x32xf32>
    %153 = vector.extract_strided_slice %136 {offsets = [0, 64], sizes = [2, 32], strides = [1, 1]} : vector<2x96xf32> to vector<2x32xf32>
    %154 = vector.extract_strided_slice %134 {offsets = [0, 64], sizes = [2, 32], strides = [1, 1]} : vector<2x96xf32> to vector<2x32xf32>
    %155 = arith.mulf %144, %154 : vector<2x32xf32>
    %156 = arith.addf %153, %155 : vector<2x32xf32>
    %157 = math.tanh %156 : vector<2x32xf32>
    %cst_42 = arith.constant 1.000000e+00 : f32
    %158 = vector.broadcast %cst_42 : f32 to vector<2x32xf32>
    %159 = arith.subf %158, %152 : vector<2x32xf32>
    %160 = arith.mulf %159, %157 : vector<2x32xf32>
    %161 = arith.mulf %152, %127 : vector<2x32xf32>
    %162 = arith.addf %160, %161 : vector<2x32xf32>
    %c0_43 = arith.constant 0 : index
    %c3 = arith.constant 3 : index
    %c0_44 = arith.constant 0 : index
    %163 = vector.load %arg10[%c0_43, %c3, %c0_44] : memref<2x16x32xf32, #tpu.memory_space<vmem>>, vector<2x1x32xf32>
    %164 = vector.shape_cast %163 : vector<2x1x32xf32> to vector<2x32xf32>
    %165 = vector.shape_cast %162 : vector<2x32xf32> to vector<2x1x32xf32>
    tpu.vector_store %arg10[%c0_43, %c3, %c0_44], %165 {strides = array<i32>} : memref<2x16x32xf32, #tpu.memory_space<vmem>>, vector<2x1x32xf32>,
    %166 = arith.truncf %162 : vector<2x32xf32> to vector<2x32xbf16>
    %cst_45 = arith.constant dense<0.000000e+00> : vector<2x96xf32>
    %167 = tpu.matmul %166, %6, %cst_45 {dimension_numbers = #tpu.dot_dimension_numbers<[1], [0], [0], [1], [0, 0, 1, 1], [], []>} : vector<2x32xbf16>, vector<32x96xbf16>, vector<2x96xf32> -> vector<2x96xf32>
    %168 = vector.broadcast %7 : vector<1x96xf32> to vector<2x96xf32>
    %169 = arith.addf %167, %168 : vector<2x96xf32>
    %170 = vector.extract_strided_slice %24 {offsets = [0, 4, 0], sizes = [2, 1, 96], strides = [1, 1, 1]} : vector<2x16x96xf32> to vector<2x1x96xf32>
    %171 = vector.shape_cast %170 : vector<2x1x96xf32> to vector<2x96xf32>
    %172 = vector.extract_strided_slice %171 {offsets = [0, 0], sizes = [2, 32], strides = [1, 1]} : vector<2x96xf32> to vector<2x32xf32>
    %173 = vector.extract_strided_slice %169 {offsets = [0, 0], sizes = [2, 32], strides = [1, 1]} : vector<2x96xf32> to vector<2x32xf32>
    %174 = arith.addf %172, %173 : vector<2x32xf32>
    %175 = arith.negf %174 : vector<2x32xf32>
    %176 = math.exp %175 : vector<2x32xf32>
    %cst_46 = arith.constant 1.000000e+00 : f32
    %177 = vector.broadcast %cst_46 : f32 to vector<2x32xf32>
    %178 = arith.addf %177, %176 : vector<2x32xf32>
    %179 = arith.divf %177, %178 : vector<2x32xf32>
    %180 = vector.extract_strided_slice %171 {offsets = [0, 32], sizes = [2, 32], strides = [1, 1]} : vector<2x96xf32> to vector<2x32xf32>
    %181 = vector.extract_strided_slice %169 {offsets = [0, 32], sizes = [2, 32], strides = [1, 1]} : vector<2x96xf32> to vector<2x32xf32>
    %182 = arith.addf %180, %181 : vector<2x32xf32>
    %183 = arith.negf %182 : vector<2x32xf32>
    %184 = math.exp %183 : vector<2x32xf32>
    %cst_47 = arith.constant 1.000000e+00 : f32
    %185 = vector.broadcast %cst_47 : f32 to vector<2x32xf32>
    %186 = arith.addf %185, %184 : vector<2x32xf32>
    %187 = arith.divf %185, %186 : vector<2x32xf32>
    %188 = vector.extract_strided_slice %171 {offsets = [0, 64], sizes = [2, 32], strides = [1, 1]} : vector<2x96xf32> to vector<2x32xf32>
    %189 = vector.extract_strided_slice %169 {offsets = [0, 64], sizes = [2, 32], strides = [1, 1]} : vector<2x96xf32> to vector<2x32xf32>
    %190 = arith.mulf %179, %189 : vector<2x32xf32>
    %191 = arith.addf %188, %190 : vector<2x32xf32>
    %192 = math.tanh %191 : vector<2x32xf32>
    %cst_48 = arith.constant 1.000000e+00 : f32
    %193 = vector.broadcast %cst_48 : f32 to vector<2x32xf32>
    %194 = arith.subf %193, %187 : vector<2x32xf32>
    %195 = arith.mulf %194, %192 : vector<2x32xf32>
    %196 = arith.mulf %187, %162 : vector<2x32xf32>
    %197 = arith.addf %195, %196 : vector<2x32xf32>
    %c0_49 = arith.constant 0 : index
    %c4 = arith.constant 4 : index
    %c0_50 = arith.constant 0 : index
    %198 = vector.load %arg10[%c0_49, %c4, %c0_50] : memref<2x16x32xf32, #tpu.memory_space<vmem>>, vector<2x1x32xf32>
    %199 = vector.shape_cast %198 : vector<2x1x32xf32> to vector<2x32xf32>
    %200 = vector.shape_cast %197 : vector<2x32xf32> to vector<2x1x32xf32>
    tpu.vector_store %arg10[%c0_49, %c4, %c0_50], %200 {strides = array<i32>} : memref<2x16x32xf32, #tpu.memory_space<vmem>>, vector<2x1x32xf32>,
    %201 = arith.truncf %197 : vector<2x32xf32> to vector<2x32xbf16>
    %cst_51 = arith.constant dense<0.000000e+00> : vector<2x96xf32>
    %202 = tpu.matmul %201, %6, %cst_51 {dimension_numbers = #tpu.dot_dimension_numbers<[1], [0], [0], [1], [0, 0, 1, 1], [], []>} : vector<2x32xbf16>, vector<32x96xbf16>, vector<2x96xf32> -> vector<2x96xf32>
    %203 = vector.broadcast %7 : vector<1x96xf32> to vector<2x96xf32>
    %204 = arith.addf %202, %203 : vector<2x96xf32>
    %205 = vector.extract_strided_slice %24 {offsets = [0, 5, 0], sizes = [2, 1, 96], strides = [1, 1, 1]} : vector<2x16x96xf32> to vector<2x1x96xf32>
    %206 = vector.shape_cast %205 : vector<2x1x96xf32> to vector<2x96xf32>
    %207 = vector.extract_strided_slice %206 {offsets = [0, 0], sizes = [2, 32], strides = [1, 1]} : vector<2x96xf32> to vector<2x32xf32>
    %208 = vector.extract_strided_slice %204 {offsets = [0, 0], sizes = [2, 32], strides = [1, 1]} : vector<2x96xf32> to vector<2x32xf32>
    %209 = arith.addf %207, %208 : vector<2x32xf32>
    %210 = arith.negf %209 : vector<2x32xf32>
    %211 = math.exp %210 : vector<2x32xf32>
    %cst_52 = arith.constant 1.000000e+00 : f32
    %212 = vector.broadcast %cst_52 : f32 to vector<2x32xf32>
    %213 = arith.addf %212, %211 : vector<2x32xf32>
    %214 = arith.divf %212, %213 : vector<2x32xf32>
    %215 = vector.extract_strided_slice %206 {offsets = [0, 32], sizes = [2, 32], strides = [1, 1]} : vector<2x96xf32> to vector<2x32xf32>
    %216 = vector.extract_strided_slice %204 {offsets = [0, 32], sizes = [2, 32], strides = [1, 1]} : vector<2x96xf32> to vector<2x32xf32>
    %217 = arith.addf %215, %216 : vector<2x32xf32>
    %218 = arith.negf %217 : vector<2x32xf32>
    %219 = math.exp %218 : vector<2x32xf32>
    %cst_53 = arith.constant 1.000000e+00 : f32
    %220 = vector.broadcast %cst_53 : f32 to vector<2x32xf32>
    %221 = arith.addf %220, %219 : vector<2x32xf32>
    %222 = arith.divf %220, %221 : vector<2x32xf32>
    %223 = vector.extract_strided_slice %206 {offsets = [0, 64], sizes = [2, 32], strides = [1, 1]} : vector<2x96xf32> to vector<2x32xf32>
    %224 = vector.extract_strided_slice %204 {offsets = [0, 64], sizes = [2, 32], strides = [1, 1]} : vector<2x96xf32> to vector<2x32xf32>
    %225 = arith.mulf %214, %224 : vector<2x32xf32>
    %226 = arith.addf %223, %225 : vector<2x32xf32>
    %227 = math.tanh %226 : vector<2x32xf32>
    %cst_54 = arith.constant 1.000000e+00 : f32
    %228 = vector.broadcast %cst_54 : f32 to vector<2x32xf32>
    %229 = arith.subf %228, %222 : vector<2x32xf32>
    %230 = arith.mulf %229, %227 : vector<2x32xf32>
    %231 = arith.mulf %222, %197 : vector<2x32xf32>
    %232 = arith.addf %230, %231 : vector<2x32xf32>
    %c0_55 = arith.constant 0 : index
    %c5 = arith.constant 5 : index
    %c0_56 = arith.constant 0 : index
    %233 = vector.load %arg10[%c0_55, %c5, %c0_56] : memref<2x16x32xf32, #tpu.memory_space<vmem>>, vector<2x1x32xf32>
    %234 = vector.shape_cast %233 : vector<2x1x32xf32> to vector<2x32xf32>
    %235 = vector.shape_cast %232 : vector<2x32xf32> to vector<2x1x32xf32>
    tpu.vector_store %arg10[%c0_55, %c5, %c0_56], %235 {strides = array<i32>} : memref<2x16x32xf32, #tpu.memory_space<vmem>>, vector<2x1x32xf32>,
    %236 = arith.truncf %232 : vector<2x32xf32> to vector<2x32xbf16>
    %cst_57 = arith.constant dense<0.000000e+00> : vector<2x96xf32>
    %237 = tpu.matmul %236, %6, %cst_57 {dimension_numbers = #tpu.dot_dimension_numbers<[1], [0], [0], [1], [0, 0, 1, 1], [], []>} : vector<2x32xbf16>, vector<32x96xbf16>, vector<2x96xf32> -> vector<2x96xf32>
    %238 = vector.broadcast %7 : vector<1x96xf32> to vector<2x96xf32>
    %239 = arith.addf %237, %238 : vector<2x96xf32>
    %240 = vector.extract_strided_slice %24 {offsets = [0, 6, 0], sizes = [2, 1, 96], strides = [1, 1, 1]} : vector<2x16x96xf32> to vector<2x1x96xf32>
    %241 = vector.shape_cast %240 : vector<2x1x96xf32> to vector<2x96xf32>
    %242 = vector.extract_strided_slice %241 {offsets = [0, 0], sizes = [2, 32], strides = [1, 1]} : vector<2x96xf32> to vector<2x32xf32>
    %243 = vector.extract_strided_slice %239 {offsets = [0, 0], sizes = [2, 32], strides = [1, 1]} : vector<2x96xf32> to vector<2x32xf32>
    %244 = arith.addf %242, %243 : vector<2x32xf32>
    %245 = arith.negf %244 : vector<2x32xf32>
    %246 = math.exp %245 : vector<2x32xf32>
    %cst_58 = arith.constant 1.000000e+00 : f32
    %247 = vector.broadcast %cst_58 : f32 to vector<2x32xf32>
    %248 = arith.addf %247, %246 : vector<2x32xf32>
    %249 = arith.divf %247, %248 : vector<2x32xf32>
    %250 = vector.extract_strided_slice %241 {offsets = [0, 32], sizes = [2, 32], strides = [1, 1]} : vector<2x96xf32> to vector<2x32xf32>
    %251 = vector.extract_strided_slice %239 {offsets = [0, 32], sizes = [2, 32], strides = [1, 1]} : vector<2x96xf32> to vector<2x32xf32>
    %252 = arith.addf %250, %251 : vector<2x32xf32>
    %253 = arith.negf %252 : vector<2x32xf32>
    %254 = math.exp %253 : vector<2x32xf32>
    %cst_59 = arith.constant 1.000000e+00 : f32
    %255 = vector.broadcast %cst_59 : f32 to vector<2x32xf32>
    %256 = arith.addf %255, %254 : vector<2x32xf32>
    %257 = arith.divf %255, %256 : vector<2x32xf32>
    %258 = vector.extract_strided_slice %241 {offsets = [0, 64], sizes = [2, 32], strides = [1, 1]} : vector<2x96xf32> to vector<2x32xf32>
    %259 = vector.extract_strided_slice %239 {offsets = [0, 64], sizes = [2, 32], strides = [1, 1]} : vector<2x96xf32> to vector<2x32xf32>
    %260 = arith.mulf %249, %259 : vector<2x32xf32>
    %261 = arith.addf %258, %260 : vector<2x32xf32>
    %262 = math.tanh %261 : vector<2x32xf32>
    %cst_60 = arith.constant 1.000000e+00 : f32
    %263 = vector.broadcast %cst_60 : f32 to vector<2x32xf32>
    %264 = arith.subf %263, %257 : vector<2x32xf32>
    %265 = arith.mulf %264, %262 : vector<2x32xf32>
    %266 = arith.mulf %257, %232 : vector<2x32xf32>
    %267 = arith.addf %265, %266 : vector<2x32xf32>
    %c0_61 = arith.constant 0 : index
    %c6 = arith.constant 6 : index
    %c0_62 = arith.constant 0 : index
    %268 = vector.load %arg10[%c0_61, %c6, %c0_62] : memref<2x16x32xf32, #tpu.memory_space<vmem>>, vector<2x1x32xf32>
    %269 = vector.shape_cast %268 : vector<2x1x32xf32> to vector<2x32xf32>
    %270 = vector.shape_cast %267 : vector<2x32xf32> to vector<2x1x32xf32>
    tpu.vector_store %arg10[%c0_61, %c6, %c0_62], %270 {strides = array<i32>} : memref<2x16x32xf32, #tpu.memory_space<vmem>>, vector<2x1x32xf32>,
    %271 = arith.truncf %267 : vector<2x32xf32> to vector<2x32xbf16>
    %cst_63 = arith.constant dense<0.000000e+00> : vector<2x96xf32>
    %272 = tpu.matmul %271, %6, %cst_63 {dimension_numbers = #tpu.dot_dimension_numbers<[1], [0], [0], [1], [0, 0, 1, 1], [], []>} : vector<2x32xbf16>, vector<32x96xbf16>, vector<2x96xf32> -> vector<2x96xf32>
    %273 = vector.broadcast %7 : vector<1x96xf32> to vector<2x96xf32>
    %274 = arith.addf %272, %273 : vector<2x96xf32>
    %275 = vector.extract_strided_slice %24 {offsets = [0, 7, 0], sizes = [2, 1, 96], strides = [1, 1, 1]} : vector<2x16x96xf32> to vector<2x1x96xf32>
    %276 = vector.shape_cast %275 : vector<2x1x96xf32> to vector<2x96xf32>
    %277 = vector.extract_strided_slice %276 {offsets = [0, 0], sizes = [2, 32], strides = [1, 1]} : vector<2x96xf32> to vector<2x32xf32>
    %278 = vector.extract_strided_slice %274 {offsets = [0, 0], sizes = [2, 32], strides = [1, 1]} : vector<2x96xf32> to vector<2x32xf32>
    %279 = arith.addf %277, %278 : vector<2x32xf32>
    %280 = arith.negf %279 : vector<2x32xf32>
    %281 = math.exp %280 : vector<2x32xf32>
    %cst_64 = arith.constant 1.000000e+00 : f32
    %282 = vector.broadcast %cst_64 : f32 to vector<2x32xf32>
    %283 = arith.addf %282, %281 : vector<2x32xf32>
    %284 = arith.divf %282, %283 : vector<2x32xf32>
    %285 = vector.extract_strided_slice %276 {offsets = [0, 32], sizes = [2, 32], strides = [1, 1]} : vector<2x96xf32> to vector<2x32xf32>
    %286 = vector.extract_strided_slice %274 {offsets = [0, 32], sizes = [2, 32], strides = [1, 1]} : vector<2x96xf32> to vector<2x32xf32>
    %287 = arith.addf %285, %286 : vector<2x32xf32>
    %288 = arith.negf %287 : vector<2x32xf32>
    %289 = math.exp %288 : vector<2x32xf32>
    %cst_65 = arith.constant 1.000000e+00 : f32
    %290 = vector.broadcast %cst_65 : f32 to vector<2x32xf32>
    %291 = arith.addf %290, %289 : vector<2x32xf32>
    %292 = arith.divf %290, %291 : vector<2x32xf32>
    %293 = vector.extract_strided_slice %276 {offsets = [0, 64], sizes = [2, 32], strides = [1, 1]} : vector<2x96xf32> to vector<2x32xf32>
    %294 = vector.extract_strided_slice %274 {offsets = [0, 64], sizes = [2, 32], strides = [1, 1]} : vector<2x96xf32> to vector<2x32xf32>
    %295 = arith.mulf %284, %294 : vector<2x32xf32>
    %296 = arith.addf %293, %295 : vector<2x32xf32>
    %297 = math.tanh %296 : vector<2x32xf32>
    %cst_66 = arith.constant 1.000000e+00 : f32
    %298 = vector.broadcast %cst_66 : f32 to vector<2x32xf32>
    %299 = arith.subf %298, %292 : vector<2x32xf32>
    %300 = arith.mulf %299, %297 : vector<2x32xf32>
    %301 = arith.mulf %292, %267 : vector<2x32xf32>
    %302 = arith.addf %300, %301 : vector<2x32xf32>
    %c0_67 = arith.constant 0 : index
    %c7 = arith.constant 7 : index
    %c0_68 = arith.constant 0 : index
    %303 = vector.load %arg10[%c0_67, %c7, %c0_68] : memref<2x16x32xf32, #tpu.memory_space<vmem>>, vector<2x1x32xf32>
    %304 = vector.shape_cast %303 : vector<2x1x32xf32> to vector<2x32xf32>
    %305 = vector.shape_cast %302 : vector<2x32xf32> to vector<2x1x32xf32>
    tpu.vector_store %arg10[%c0_67, %c7, %c0_68], %305 {strides = array<i32>} : memref<2x16x32xf32, #tpu.memory_space<vmem>>, vector<2x1x32xf32>,
    %306 = arith.truncf %302 : vector<2x32xf32> to vector<2x32xbf16>
    %cst_69 = arith.constant dense<0.000000e+00> : vector<2x96xf32>
    %307 = tpu.matmul %306, %6, %cst_69 {dimension_numbers = #tpu.dot_dimension_numbers<[1], [0], [0], [1], [0, 0, 1, 1], [], []>} : vector<2x32xbf16>, vector<32x96xbf16>, vector<2x96xf32> -> vector<2x96xf32>
    %308 = vector.broadcast %7 : vector<1x96xf32> to vector<2x96xf32>
    %309 = arith.addf %307, %308 : vector<2x96xf32>
    %310 = vector.extract_strided_slice %24 {offsets = [0, 8, 0], sizes = [2, 1, 96], strides = [1, 1, 1]} : vector<2x16x96xf32> to vector<2x1x96xf32>
    %311 = vector.shape_cast %310 : vector<2x1x96xf32> to vector<2x96xf32>
    %312 = vector.extract_strided_slice %311 {offsets = [0, 0], sizes = [2, 32], strides = [1, 1]} : vector<2x96xf32> to vector<2x32xf32>
    %313 = vector.extract_strided_slice %309 {offsets = [0, 0], sizes = [2, 32], strides = [1, 1]} : vector<2x96xf32> to vector<2x32xf32>
    %314 = arith.addf %312, %313 : vector<2x32xf32>
    %315 = arith.negf %314 : vector<2x32xf32>
    %316 = math.exp %315 : vector<2x32xf32>
    %cst_70 = arith.constant 1.000000e+00 : f32
    %317 = vector.broadcast %cst_70 : f32 to vector<2x32xf32>
    %318 = arith.addf %317, %316 : vector<2x32xf32>
    %319 = arith.divf %317, %318 : vector<2x32xf32>
    %320 = vector.extract_strided_slice %311 {offsets = [0, 32], sizes = [2, 32], strides = [1, 1]} : vector<2x96xf32> to vector<2x32xf32>
    %321 = vector.extract_strided_slice %309 {offsets = [0, 32], sizes = [2, 32], strides = [1, 1]} : vector<2x96xf32> to vector<2x32xf32>
    %322 = arith.addf %320, %321 : vector<2x32xf32>
    %323 = arith.negf %322 : vector<2x32xf32>
    %324 = math.exp %323 : vector<2x32xf32>
    %cst_71 = arith.constant 1.000000e+00 : f32
    %325 = vector.broadcast %cst_71 : f32 to vector<2x32xf32>
    %326 = arith.addf %325, %324 : vector<2x32xf32>
    %327 = arith.divf %325, %326 : vector<2x32xf32>
    %328 = vector.extract_strided_slice %311 {offsets = [0, 64], sizes = [2, 32], strides = [1, 1]} : vector<2x96xf32> to vector<2x32xf32>
    %329 = vector.extract_strided_slice %309 {offsets = [0, 64], sizes = [2, 32], strides = [1, 1]} : vector<2x96xf32> to vector<2x32xf32>
    %330 = arith.mulf %319, %329 : vector<2x32xf32>
    %331 = arith.addf %328, %330 : vector<2x32xf32>
    %332 = math.tanh %331 : vector<2x32xf32>
    %cst_72 = arith.constant 1.000000e+00 : f32
    %333 = vector.broadcast %cst_72 : f32 to vector<2x32xf32>
    %334 = arith.subf %333, %327 : vector<2x32xf32>
    %335 = arith.mulf %334, %332 : vector<2x32xf32>
    %336 = arith.mulf %327, %302 : vector<2x32xf32>
    %337 = arith.addf %335, %336 : vector<2x32xf32>
    %c0_73 = arith.constant 0 : index
    %c8 = arith.constant 8 : index
    %c0_74 = arith.constant 0 : index
    %338 = vector.load %arg10[%c0_73, %c8, %c0_74] : memref<2x16x32xf32, #tpu.memory_space<vmem>>, vector<2x1x32xf32>
    %339 = vector.shape_cast %338 : vector<2x1x32xf32> to vector<2x32xf32>
    %340 = vector.shape_cast %337 : vector<2x32xf32> to vector<2x1x32xf32>
    tpu.vector_store %arg10[%c0_73, %c8, %c0_74], %340 {strides = array<i32>} : memref<2x16x32xf32, #tpu.memory_space<vmem>>, vector<2x1x32xf32>,
    %341 = arith.truncf %337 : vector<2x32xf32> to vector<2x32xbf16>
    %cst_75 = arith.constant dense<0.000000e+00> : vector<2x96xf32>
    %342 = tpu.matmul %341, %6, %cst_75 {dimension_numbers = #tpu.dot_dimension_numbers<[1], [0], [0], [1], [0, 0, 1, 1], [], []>} : vector<2x32xbf16>, vector<32x96xbf16>, vector<2x96xf32> -> vector<2x96xf32>
    %343 = vector.broadcast %7 : vector<1x96xf32> to vector<2x96xf32>
    %344 = arith.addf %342, %343 : vector<2x96xf32>
    %345 = vector.extract_strided_slice %24 {offsets = [0, 9, 0], sizes = [2, 1, 96], strides = [1, 1, 1]} : vector<2x16x96xf32> to vector<2x1x96xf32>
    %346 = vector.shape_cast %345 : vector<2x1x96xf32> to vector<2x96xf32>
    %347 = vector.extract_strided_slice %346 {offsets = [0, 0], sizes = [2, 32], strides = [1, 1]} : vector<2x96xf32> to vector<2x32xf32>
    %348 = vector.extract_strided_slice %344 {offsets = [0, 0], sizes = [2, 32], strides = [1, 1]} : vector<2x96xf32> to vector<2x32xf32>
    %349 = arith.addf %347, %348 : vector<2x32xf32>
    %350 = arith.negf %349 : vector<2x32xf32>
    %351 = math.exp %350 : vector<2x32xf32>
    %cst_76 = arith.constant 1.000000e+00 : f32
    %352 = vector.broadcast %cst_76 : f32 to vector<2x32xf32>
    %353 = arith.addf %352, %351 : vector<2x32xf32>
    %354 = arith.divf %352, %353 : vector<2x32xf32>
    %355 = vector.extract_strided_slice %346 {offsets = [0, 32], sizes = [2, 32], strides = [1, 1]} : vector<2x96xf32> to vector<2x32xf32>
    %356 = vector.extract_strided_slice %344 {offsets = [0, 32], sizes = [2, 32], strides = [1, 1]} : vector<2x96xf32> to vector<2x32xf32>
    %357 = arith.addf %355, %356 : vector<2x32xf32>
    %358 = arith.negf %357 : vector<2x32xf32>
    %359 = math.exp %358 : vector<2x32xf32>
    %cst_77 = arith.constant 1.000000e+00 : f32
    %360 = vector.broadcast %cst_77 : f32 to vector<2x32xf32>
    %361 = arith.addf %360, %359 : vector<2x32xf32>
    %362 = arith.divf %360, %361 : vector<2x32xf32>
    %363 = vector.extract_strided_slice %346 {offsets = [0, 64], sizes = [2, 32], strides = [1, 1]} : vector<2x96xf32> to vector<2x32xf32>
    %364 = vector.extract_strided_slice %344 {offsets = [0, 64], sizes = [2, 32], strides = [1, 1]} : vector<2x96xf32> to vector<2x32xf32>
    %365 = arith.mulf %354, %364 : vector<2x32xf32>
    %366 = arith.addf %363, %365 : vector<2x32xf32>
    %367 = math.tanh %366 : vector<2x32xf32>
    %cst_78 = arith.constant 1.000000e+00 : f32
    %368 = vector.broadcast %cst_78 : f32 to vector<2x32xf32>
    %369 = arith.subf %368, %362 : vector<2x32xf32>
    %370 = arith.mulf %369, %367 : vector<2x32xf32>
    %371 = arith.mulf %362, %337 : vector<2x32xf32>
    %372 = arith.addf %370, %371 : vector<2x32xf32>
    %c0_79 = arith.constant 0 : index
    %c9 = arith.constant 9 : index
    %c0_80 = arith.constant 0 : index
    %373 = vector.load %arg10[%c0_79, %c9, %c0_80] : memref<2x16x32xf32, #tpu.memory_space<vmem>>, vector<2x1x32xf32>
    %374 = vector.shape_cast %373 : vector<2x1x32xf32> to vector<2x32xf32>
    %375 = vector.shape_cast %372 : vector<2x32xf32> to vector<2x1x32xf32>
    tpu.vector_store %arg10[%c0_79, %c9, %c0_80], %375 {strides = array<i32>} : memref<2x16x32xf32, #tpu.memory_space<vmem>>, vector<2x1x32xf32>,
    %376 = arith.truncf %372 : vector<2x32xf32> to vector<2x32xbf16>
    %cst_81 = arith.constant dense<0.000000e+00> : vector<2x96xf32>
    %377 = tpu.matmul %376, %6, %cst_81 {dimension_numbers = #tpu.dot_dimension_numbers<[1], [0], [0], [1], [0, 0, 1, 1], [], []>} : vector<2x32xbf16>, vector<32x96xbf16>, vector<2x96xf32> -> vector<2x96xf32>
    %378 = vector.broadcast %7 : vector<1x96xf32> to vector<2x96xf32>
    %379 = arith.addf %377, %378 : vector<2x96xf32>
    %380 = vector.extract_strided_slice %24 {offsets = [0, 10, 0], sizes = [2, 1, 96], strides = [1, 1, 1]} : vector<2x16x96xf32> to vector<2x1x96xf32>
    %381 = vector.shape_cast %380 : vector<2x1x96xf32> to vector<2x96xf32>
    %382 = vector.extract_strided_slice %381 {offsets = [0, 0], sizes = [2, 32], strides = [1, 1]} : vector<2x96xf32> to vector<2x32xf32>
    %383 = vector.extract_strided_slice %379 {offsets = [0, 0], sizes = [2, 32], strides = [1, 1]} : vector<2x96xf32> to vector<2x32xf32>
    %384 = arith.addf %382, %383 : vector<2x32xf32>
    %385 = arith.negf %384 : vector<2x32xf32>
    %386 = math.exp %385 : vector<2x32xf32>
    %cst_82 = arith.constant 1.000000e+00 : f32
    %387 = vector.broadcast %cst_82 : f32 to vector<2x32xf32>
    %388 = arith.addf %387, %386 : vector<2x32xf32>
    %389 = arith.divf %387, %388 : vector<2x32xf32>
    %390 = vector.extract_strided_slice %381 {offsets = [0, 32], sizes = [2, 32], strides = [1, 1]} : vector<2x96xf32> to vector<2x32xf32>
    %391 = vector.extract_strided_slice %379 {offsets = [0, 32], sizes = [2, 32], strides = [1, 1]} : vector<2x96xf32> to vector<2x32xf32>
    %392 = arith.addf %390, %391 : vector<2x32xf32>
    %393 = arith.negf %392 : vector<2x32xf32>
    %394 = math.exp %393 : vector<2x32xf32>
    %cst_83 = arith.constant 1.000000e+00 : f32
    %395 = vector.broadcast %cst_83 : f32 to vector<2x32xf32>
    %396 = arith.addf %395, %394 : vector<2x32xf32>
    %397 = arith.divf %395, %396 : vector<2x32xf32>
    %398 = vector.extract_strided_slice %381 {offsets = [0, 64], sizes = [2, 32], strides = [1, 1]} : vector<2x96xf32> to vector<2x32xf32>
    %399 = vector.extract_strided_slice %379 {offsets = [0, 64], sizes = [2, 32], strides = [1, 1]} : vector<2x96xf32> to vector<2x32xf32>
    %400 = arith.mulf %389, %399 : vector<2x32xf32>
    %401 = arith.addf %398, %400 : vector<2x32xf32>
    %402 = math.tanh %401 : vector<2x32xf32>
    %cst_84 = arith.constant 1.000000e+00 : f32
    %403 = vector.broadcast %cst_84 : f32 to vector<2x32xf32>
    %404 = arith.subf %403, %397 : vector<2x32xf32>
    %405 = arith.mulf %404, %402 : vector<2x32xf32>
    %406 = arith.mulf %397, %372 : vector<2x32xf32>
    %407 = arith.addf %405, %406 : vector<2x32xf32>
    %c0_85 = arith.constant 0 : index
    %c10 = arith.constant 10 : index
    %c0_86 = arith.constant 0 : index
    %408 = vector.load %arg10[%c0_85, %c10, %c0_86] : memref<2x16x32xf32, #tpu.memory_space<vmem>>, vector<2x1x32xf32>
    %409 = vector.shape_cast %408 : vector<2x1x32xf32> to vector<2x32xf32>
    %410 = vector.shape_cast %407 : vector<2x32xf32> to vector<2x1x32xf32>
    tpu.vector_store %arg10[%c0_85, %c10, %c0_86], %410 {strides = array<i32>} : memref<2x16x32xf32, #tpu.memory_space<vmem>>, vector<2x1x32xf32>,
    %411 = arith.truncf %407 : vector<2x32xf32> to vector<2x32xbf16>
    %cst_87 = arith.constant dense<0.000000e+00> : vector<2x96xf32>
    %412 = tpu.matmul %411, %6, %cst_87 {dimension_numbers = #tpu.dot_dimension_numbers<[1], [0], [0], [1], [0, 0, 1, 1], [], []>} : vector<2x32xbf16>, vector<32x96xbf16>, vector<2x96xf32> -> vector<2x96xf32>
    %413 = vector.broadcast %7 : vector<1x96xf32> to vector<2x96xf32>
    %414 = arith.addf %412, %413 : vector<2x96xf32>
    %415 = vector.extract_strided_slice %24 {offsets = [0, 11, 0], sizes = [2, 1, 96], strides = [1, 1, 1]} : vector<2x16x96xf32> to vector<2x1x96xf32>
    %416 = vector.shape_cast %415 : vector<2x1x96xf32> to vector<2x96xf32>
    %417 = vector.extract_strided_slice %416 {offsets = [0, 0], sizes = [2, 32], strides = [1, 1]} : vector<2x96xf32> to vector<2x32xf32>
    %418 = vector.extract_strided_slice %414 {offsets = [0, 0], sizes = [2, 32], strides = [1, 1]} : vector<2x96xf32> to vector<2x32xf32>
    %419 = arith.addf %417, %418 : vector<2x32xf32>
    %420 = arith.negf %419 : vector<2x32xf32>
    %421 = math.exp %420 : vector<2x32xf32>
    %cst_88 = arith.constant 1.000000e+00 : f32
    %422 = vector.broadcast %cst_88 : f32 to vector<2x32xf32>
    %423 = arith.addf %422, %421 : vector<2x32xf32>
    %424 = arith.divf %422, %423 : vector<2x32xf32>
    %425 = vector.extract_strided_slice %416 {offsets = [0, 32], sizes = [2, 32], strides = [1, 1]} : vector<2x96xf32> to vector<2x32xf32>
    %426 = vector.extract_strided_slice %414 {offsets = [0, 32], sizes = [2, 32], strides = [1, 1]} : vector<2x96xf32> to vector<2x32xf32>
    %427 = arith.addf %425, %426 : vector<2x32xf32>
    %428 = arith.negf %427 : vector<2x32xf32>
    %429 = math.exp %428 : vector<2x32xf32>
    %cst_89 = arith.constant 1.000000e+00 : f32
    %430 = vector.broadcast %cst_89 : f32 to vector<2x32xf32>
    %431 = arith.addf %430, %429 : vector<2x32xf32>
    %432 = arith.divf %430, %431 : vector<2x32xf32>
    %433 = vector.extract_strided_slice %416 {offsets = [0, 64], sizes = [2, 32], strides = [1, 1]} : vector<2x96xf32> to vector<2x32xf32>
    %434 = vector.extract_strided_slice %414 {offsets = [0, 64], sizes = [2, 32], strides = [1, 1]} : vector<2x96xf32> to vector<2x32xf32>
    %435 = arith.mulf %424, %434 : vector<2x32xf32>
    %436 = arith.addf %433, %435 : vector<2x32xf32>
    %437 = math.tanh %436 : vector<2x32xf32>
    %cst_90 = arith.constant 1.000000e+00 : f32
    %438 = vector.broadcast %cst_90 : f32 to vector<2x32xf32>
    %439 = arith.subf %438, %432 : vector<2x32xf32>
    %440 = arith.mulf %439, %437 : vector<2x32xf32>
    %441 = arith.mulf %432, %407 : vector<2x32xf32>
    %442 = arith.addf %440, %441 : vector<2x32xf32>
    %c0_91 = arith.constant 0 : index
    %c11 = arith.constant 11 : index
    %c0_92 = arith.constant 0 : index
    %443 = vector.load %arg10[%c0_91, %c11, %c0_92] : memref<2x16x32xf32, #tpu.memory_space<vmem>>, vector<2x1x32xf32>
    %444 = vector.shape_cast %443 : vector<2x1x32xf32> to vector<2x32xf32>
    %445 = vector.shape_cast %442 : vector<2x32xf32> to vector<2x1x32xf32>
    tpu.vector_store %arg10[%c0_91, %c11, %c0_92], %445 {strides = array<i32>} : memref<2x16x32xf32, #tpu.memory_space<vmem>>, vector<2x1x32xf32>,
    %446 = arith.truncf %442 : vector<2x32xf32> to vector<2x32xbf16>
    %cst_93 = arith.constant dense<0.000000e+00> : vector<2x96xf32>
    %447 = tpu.matmul %446, %6, %cst_93 {dimension_numbers = #tpu.dot_dimension_numbers<[1], [0], [0], [1], [0, 0, 1, 1], [], []>} : vector<2x32xbf16>, vector<32x96xbf16>, vector<2x96xf32> -> vector<2x96xf32>
    %448 = vector.broadcast %7 : vector<1x96xf32> to vector<2x96xf32>
    %449 = arith.addf %447, %448 : vector<2x96xf32>
    %450 = vector.extract_strided_slice %24 {offsets = [0, 12, 0], sizes = [2, 1, 96], strides = [1, 1, 1]} : vector<2x16x96xf32> to vector<2x1x96xf32>
    %451 = vector.shape_cast %450 : vector<2x1x96xf32> to vector<2x96xf32>
    %452 = vector.extract_strided_slice %451 {offsets = [0, 0], sizes = [2, 32], strides = [1, 1]} : vector<2x96xf32> to vector<2x32xf32>
    %453 = vector.extract_strided_slice %449 {offsets = [0, 0], sizes = [2, 32], strides = [1, 1]} : vector<2x96xf32> to vector<2x32xf32>
    %454 = arith.addf %452, %453 : vector<2x32xf32>
    %455 = arith.negf %454 : vector<2x32xf32>
    %456 = math.exp %455 : vector<2x32xf32>
    %cst_94 = arith.constant 1.000000e+00 : f32
    %457 = vector.broadcast %cst_94 : f32 to vector<2x32xf32>
    %458 = arith.addf %457, %456 : vector<2x32xf32>
    %459 = arith.divf %457, %458 : vector<2x32xf32>
    %460 = vector.extract_strided_slice %451 {offsets = [0, 32], sizes = [2, 32], strides = [1, 1]} : vector<2x96xf32> to vector<2x32xf32>
    %461 = vector.extract_strided_slice %449 {offsets = [0, 32], sizes = [2, 32], strides = [1, 1]} : vector<2x96xf32> to vector<2x32xf32>
    %462 = arith.addf %460, %461 : vector<2x32xf32>
    %463 = arith.negf %462 : vector<2x32xf32>
    %464 = math.exp %463 : vector<2x32xf32>
    %cst_95 = arith.constant 1.000000e+00 : f32
    %465 = vector.broadcast %cst_95 : f32 to vector<2x32xf32>
    %466 = arith.addf %465, %464 : vector<2x32xf32>
    %467 = arith.divf %465, %466 : vector<2x32xf32>
    %468 = vector.extract_strided_slice %451 {offsets = [0, 64], sizes = [2, 32], strides = [1, 1]} : vector<2x96xf32> to vector<2x32xf32>
    %469 = vector.extract_strided_slice %449 {offsets = [0, 64], sizes = [2, 32], strides = [1, 1]} : vector<2x96xf32> to vector<2x32xf32>
    %470 = arith.mulf %459, %469 : vector<2x32xf32>
    %471 = arith.addf %468, %470 : vector<2x32xf32>
    %472 = math.tanh %471 : vector<2x32xf32>
    %cst_96 = arith.constant 1.000000e+00 : f32
    %473 = vector.broadcast %cst_96 : f32 to vector<2x32xf32>
    %474 = arith.subf %473, %467 : vector<2x32xf32>
    %475 = arith.mulf %474, %472 : vector<2x32xf32>
    %476 = arith.mulf %467, %442 : vector<2x32xf32>
    %477 = arith.addf %475, %476 : vector<2x32xf32>
    %c0_97 = arith.constant 0 : index
    %c12 = arith.constant 12 : index
    %c0_98 = arith.constant 0 : index
    %478 = vector.load %arg10[%c0_97, %c12, %c0_98] : memref<2x16x32xf32, #tpu.memory_space<vmem>>, vector<2x1x32xf32>
    %479 = vector.shape_cast %478 : vector<2x1x32xf32> to vector<2x32xf32>
    %480 = vector.shape_cast %477 : vector<2x32xf32> to vector<2x1x32xf32>
    tpu.vector_store %arg10[%c0_97, %c12, %c0_98], %480 {strides = array<i32>} : memref<2x16x32xf32, #tpu.memory_space<vmem>>, vector<2x1x32xf32>,
    %481 = arith.truncf %477 : vector<2x32xf32> to vector<2x32xbf16>
    %cst_99 = arith.constant dense<0.000000e+00> : vector<2x96xf32>
    %482 = tpu.matmul %481, %6, %cst_99 {dimension_numbers = #tpu.dot_dimension_numbers<[1], [0], [0], [1], [0, 0, 1, 1], [], []>} : vector<2x32xbf16>, vector<32x96xbf16>, vector<2x96xf32> -> vector<2x96xf32>
    %483 = vector.broadcast %7 : vector<1x96xf32> to vector<2x96xf32>
    %484 = arith.addf %482, %483 : vector<2x96xf32>
    %485 = vector.extract_strided_slice %24 {offsets = [0, 13, 0], sizes = [2, 1, 96], strides = [1, 1, 1]} : vector<2x16x96xf32> to vector<2x1x96xf32>
    %486 = vector.shape_cast %485 : vector<2x1x96xf32> to vector<2x96xf32>
    %487 = vector.extract_strided_slice %486 {offsets = [0, 0], sizes = [2, 32], strides = [1, 1]} : vector<2x96xf32> to vector<2x32xf32>
    %488 = vector.extract_strided_slice %484 {offsets = [0, 0], sizes = [2, 32], strides = [1, 1]} : vector<2x96xf32> to vector<2x32xf32>
    %489 = arith.addf %487, %488 : vector<2x32xf32>
    %490 = arith.negf %489 : vector<2x32xf32>
    %491 = math.exp %490 : vector<2x32xf32>
    %cst_100 = arith.constant 1.000000e+00 : f32
    %492 = vector.broadcast %cst_100 : f32 to vector<2x32xf32>
    %493 = arith.addf %492, %491 : vector<2x32xf32>
    %494 = arith.divf %492, %493 : vector<2x32xf32>
    %495 = vector.extract_strided_slice %486 {offsets = [0, 32], sizes = [2, 32], strides = [1, 1]} : vector<2x96xf32> to vector<2x32xf32>
    %496 = vector.extract_strided_slice %484 {offsets = [0, 32], sizes = [2, 32], strides = [1, 1]} : vector<2x96xf32> to vector<2x32xf32>
    %497 = arith.addf %495, %496 : vector<2x32xf32>
    %498 = arith.negf %497 : vector<2x32xf32>
    %499 = math.exp %498 : vector<2x32xf32>
    %cst_101 = arith.constant 1.000000e+00 : f32
    %500 = vector.broadcast %cst_101 : f32 to vector<2x32xf32>
    %501 = arith.addf %500, %499 : vector<2x32xf32>
    %502 = arith.divf %500, %501 : vector<2x32xf32>
    %503 = vector.extract_strided_slice %486 {offsets = [0, 64], sizes = [2, 32], strides = [1, 1]} : vector<2x96xf32> to vector<2x32xf32>
    %504 = vector.extract_strided_slice %484 {offsets = [0, 64], sizes = [2, 32], strides = [1, 1]} : vector<2x96xf32> to vector<2x32xf32>
    %505 = arith.mulf %494, %504 : vector<2x32xf32>
    %506 = arith.addf %503, %505 : vector<2x32xf32>
    %507 = math.tanh %506 : vector<2x32xf32>
    %cst_102 = arith.constant 1.000000e+00 : f32
    %508 = vector.broadcast %cst_102 : f32 to vector<2x32xf32>
    %509 = arith.subf %508, %502 : vector<2x32xf32>
    %510 = arith.mulf %509, %507 : vector<2x32xf32>
    %511 = arith.mulf %502, %477 : vector<2x32xf32>
    %512 = arith.addf %510, %511 : vector<2x32xf32>
    %c0_103 = arith.constant 0 : index
    %c13 = arith.constant 13 : index
    %c0_104 = arith.constant 0 : index
    %513 = vector.load %arg10[%c0_103, %c13, %c0_104] : memref<2x16x32xf32, #tpu.memory_space<vmem>>, vector<2x1x32xf32>
    %514 = vector.shape_cast %513 : vector<2x1x32xf32> to vector<2x32xf32>
    %515 = vector.shape_cast %512 : vector<2x32xf32> to vector<2x1x32xf32>
    tpu.vector_store %arg10[%c0_103, %c13, %c0_104], %515 {strides = array<i32>} : memref<2x16x32xf32, #tpu.memory_space<vmem>>, vector<2x1x32xf32>,
    %516 = arith.truncf %512 : vector<2x32xf32> to vector<2x32xbf16>
    %cst_105 = arith.constant dense<0.000000e+00> : vector<2x96xf32>
    %517 = tpu.matmul %516, %6, %cst_105 {dimension_numbers = #tpu.dot_dimension_numbers<[1], [0], [0], [1], [0, 0, 1, 1], [], []>} : vector<2x32xbf16>, vector<32x96xbf16>, vector<2x96xf32> -> vector<2x96xf32>
    %518 = vector.broadcast %7 : vector<1x96xf32> to vector<2x96xf32>
    %519 = arith.addf %517, %518 : vector<2x96xf32>
    %520 = vector.extract_strided_slice %24 {offsets = [0, 14, 0], sizes = [2, 1, 96], strides = [1, 1, 1]} : vector<2x16x96xf32> to vector<2x1x96xf32>
    %521 = vector.shape_cast %520 : vector<2x1x96xf32> to vector<2x96xf32>
    %522 = vector.extract_strided_slice %521 {offsets = [0, 0], sizes = [2, 32], strides = [1, 1]} : vector<2x96xf32> to vector<2x32xf32>
    %523 = vector.extract_strided_slice %519 {offsets = [0, 0], sizes = [2, 32], strides = [1, 1]} : vector<2x96xf32> to vector<2x32xf32>
    %524 = arith.addf %522, %523 : vector<2x32xf32>
    %525 = arith.negf %524 : vector<2x32xf32>
    %526 = math.exp %525 : vector<2x32xf32>
    %cst_106 = arith.constant 1.000000e+00 : f32
    %527 = vector.broadcast %cst_106 : f32 to vector<2x32xf32>
    %528 = arith.addf %527, %526 : vector<2x32xf32>
    %529 = arith.divf %527, %528 : vector<2x32xf32>
    %530 = vector.extract_strided_slice %521 {offsets = [0, 32], sizes = [2, 32], strides = [1, 1]} : vector<2x96xf32> to vector<2x32xf32>
    %531 = vector.extract_strided_slice %519 {offsets = [0, 32], sizes = [2, 32], strides = [1, 1]} : vector<2x96xf32> to vector<2x32xf32>
    %532 = arith.addf %530, %531 : vector<2x32xf32>
    %533 = arith.negf %532 : vector<2x32xf32>
    %534 = math.exp %533 : vector<2x32xf32>
    %cst_107 = arith.constant 1.000000e+00 : f32
    %535 = vector.broadcast %cst_107 : f32 to vector<2x32xf32>
    %536 = arith.addf %535, %534 : vector<2x32xf32>
    %537 = arith.divf %535, %536 : vector<2x32xf32>
    %538 = vector.extract_strided_slice %521 {offsets = [0, 64], sizes = [2, 32], strides = [1, 1]} : vector<2x96xf32> to vector<2x32xf32>
    %539 = vector.extract_strided_slice %519 {offsets = [0, 64], sizes = [2, 32], strides = [1, 1]} : vector<2x96xf32> to vector<2x32xf32>
    %540 = arith.mulf %529, %539 : vector<2x32xf32>
    %541 = arith.addf %538, %540 : vector<2x32xf32>
    %542 = math.tanh %541 : vector<2x32xf32>
    %cst_108 = arith.constant 1.000000e+00 : f32
    %543 = vector.broadcast %cst_108 : f32 to vector<2x32xf32>
    %544 = arith.subf %543, %537 : vector<2x32xf32>
    %545 = arith.mulf %544, %542 : vector<2x32xf32>
    %546 = arith.mulf %537, %512 : vector<2x32xf32>
    %547 = arith.addf %545, %546 : vector<2x32xf32>
    %c0_109 = arith.constant 0 : index
    %c14 = arith.constant 14 : index
    %c0_110 = arith.constant 0 : index
    %548 = vector.load %arg10[%c0_109, %c14, %c0_110] : memref<2x16x32xf32, #tpu.memory_space<vmem>>, vector<2x1x32xf32>
    %549 = vector.shape_cast %548 : vector<2x1x32xf32> to vector<2x32xf32>
    %550 = vector.shape_cast %547 : vector<2x32xf32> to vector<2x1x32xf32>
    tpu.vector_store %arg10[%c0_109, %c14, %c0_110], %550 {strides = array<i32>} : memref<2x16x32xf32, #tpu.memory_space<vmem>>, vector<2x1x32xf32>,
    %551 = arith.truncf %547 : vector<2x32xf32> to vector<2x32xbf16>
    %cst_111 = arith.constant dense<0.000000e+00> : vector<2x96xf32>
    %552 = tpu.matmul %551, %6, %cst_111 {dimension_numbers = #tpu.dot_dimension_numbers<[1], [0], [0], [1], [0, 0, 1, 1], [], []>} : vector<2x32xbf16>, vector<32x96xbf16>, vector<2x96xf32> -> vector<2x96xf32>
    %553 = vector.broadcast %7 : vector<1x96xf32> to vector<2x96xf32>
    %554 = arith.addf %552, %553 : vector<2x96xf32>
    %555 = vector.extract_strided_slice %24 {offsets = [0, 15, 0], sizes = [2, 1, 96], strides = [1, 1, 1]} : vector<2x16x96xf32> to vector<2x1x96xf32>
    %556 = vector.shape_cast %555 : vector<2x1x96xf32> to vector<2x96xf32>
    %557 = vector.extract_strided_slice %556 {offsets = [0, 0], sizes = [2, 32], strides = [1, 1]} : vector<2x96xf32> to vector<2x32xf32>
    %558 = vector.extract_strided_slice %554 {offsets = [0, 0], sizes = [2, 32], strides = [1, 1]} : vector<2x96xf32> to vector<2x32xf32>
    %559 = arith.addf %557, %558 : vector<2x32xf32>
    %560 = arith.negf %559 : vector<2x32xf32>
    %561 = math.exp %560 : vector<2x32xf32>
    %cst_112 = arith.constant 1.000000e+00 : f32
    %562 = vector.broadcast %cst_112 : f32 to vector<2x32xf32>
    %563 = arith.addf %562, %561 : vector<2x32xf32>
    %564 = arith.divf %562, %563 : vector<2x32xf32>
    %565 = vector.extract_strided_slice %556 {offsets = [0, 32], sizes = [2, 32], strides = [1, 1]} : vector<2x96xf32> to vector<2x32xf32>
    %566 = vector.extract_strided_slice %554 {offsets = [0, 32], sizes = [2, 32], strides = [1, 1]} : vector<2x96xf32> to vector<2x32xf32>
    %567 = arith.addf %565, %566 : vector<2x32xf32>
    %568 = arith.negf %567 : vector<2x32xf32>
    %569 = math.exp %568 : vector<2x32xf32>
    %cst_113 = arith.constant 1.000000e+00 : f32
    %570 = vector.broadcast %cst_113 : f32 to vector<2x32xf32>
    %571 = arith.addf %570, %569 : vector<2x32xf32>
    %572 = arith.divf %570, %571 : vector<2x32xf32>
    %573 = vector.extract_strided_slice %556 {offsets = [0, 64], sizes = [2, 32], strides = [1, 1]} : vector<2x96xf32> to vector<2x32xf32>
    %574 = vector.extract_strided_slice %554 {offsets = [0, 64], sizes = [2, 32], strides = [1, 1]} : vector<2x96xf32> to vector<2x32xf32>
    %575 = arith.mulf %564, %574 : vector<2x32xf32>
    %576 = arith.addf %573, %575 : vector<2x32xf32>
    %577 = math.tanh %576 : vector<2x32xf32>
    %cst_114 = arith.constant 1.000000e+00 : f32
    %578 = vector.broadcast %cst_114 : f32 to vector<2x32xf32>
    %579 = arith.subf %578, %572 : vector<2x32xf32>
    %580 = arith.mulf %579, %577 : vector<2x32xf32>
    %581 = arith.mulf %572, %547 : vector<2x32xf32>
    %582 = arith.addf %580, %581 : vector<2x32xf32>
    %c0_115 = arith.constant 0 : index
    %c15 = arith.constant 15 : index
    %c0_116 = arith.constant 0 : index
    %583 = vector.load %arg10[%c0_115, %c15, %c0_116] : memref<2x16x32xf32, #tpu.memory_space<vmem>>, vector<2x1x32xf32>
    %584 = vector.shape_cast %583 : vector<2x1x32xf32> to vector<2x32xf32>
    %585 = vector.shape_cast %582 : vector<2x32xf32> to vector<2x1x32xf32>
    tpu.vector_store %arg10[%c0_115, %c15, %c0_116], %585 {strides = array<i32>} : memref<2x16x32xf32, #tpu.memory_space<vmem>>, vector<2x1x32xf32>,
    %c0_117 = arith.constant 0 : index
    %c0_118 = arith.constant 0 : index
    %c0_119 = arith.constant 0 : index
    %586 = vector.load %arg10[%c0_117, %c0_118, %c0_119] : memref<2x16x32xf32, #tpu.memory_space<vmem>>, vector<2x16x32xf32>
    %587 = arith.truncf %586 : vector<2x16x32xf32> to vector<2x16x32xbf16>
    %c0_120 = arith.constant 0 : index
    %c0_121 = arith.constant 0 : index
    %c0_122 = arith.constant 0 : index
    %588 = vector.load %arg9[%c0_120, %c0_121, %c0_122] : memref<2x16x32xbf16, #tpu.memory_space<vmem>>, vector<2x16x32xbf16>
    tpu.vector_store %arg9[%c0_120, %c0_121, %c0_122], %587 {strides = array<i32>} : memref<2x16x32xbf16, #tpu.memory_space<vmem>>, vector<2x16x32xbf16>,
    return
  }
  func.func @transform_0(%arg0: i32) -> (i32, i32, i32) {
    %c0_i32 = arith.constant 0 : i32
    %c0_i32_0 = arith.constant 0 : i32
    %c0_i32_1 = arith.constant 0 : i32
    return %arg0, %c0_i32, %c0_i32_0 : i32, i32, i32
  }
  func.func @transform_1(%arg0: i32) -> (i32, i32) {
    %c0_i32 = arith.constant 0 : i32
    %c0_i32_0 = arith.constant 0 : i32
    %c0_i32_1 = arith.constant 0 : i32
    return %c0_i32, %c0_i32_0 : i32, i32
  }
  func.func @transform_2(%arg0: i32) -> (i32, i32) {
    %c0_i32 = arith.constant 0 : i32
    %c0_i32_0 = arith.constant 0 : i32
    %c0_i32_1 = arith.constant 0 : i32
    return %c0_i32, %c0_i32_0 : i32, i32
  }
  func.func @transform_3(%arg0: i32) -> (i32, i32) {
    %c0_i32 = arith.constant 0 : i32
    %c0_i32_0 = arith.constant 0 : i32
    %c0_i32_1 = arith.constant 0 : i32
    return %c0_i32, %c0_i32_0 : i32, i32
  }
  func.func @transform_4(%arg0: i32) -> (i32, i32) {
    %c0_i32 = arith.constant 0 : i32
    %c0_i32_0 = arith.constant 0 : i32
    %c0_i32_1 = arith.constant 0 : i32
    return %c0_i32, %c0_i32_0 : i32, i32
  }
  func.func @transform_5(%arg0: i32) -> (i32, i32) {
    %c0_i32 = arith.constant 0 : i32
    %c0_i32_0 = arith.constant 0 : i32
    %c0_i32_1 = arith.constant 0 : i32
    return %c0_i32, %c0_i32_0 : i32, i32
  }
  func.func @transform_6(%arg0: i32) -> (i32, i32) {
    %c0_i32 = arith.constant 0 : i32
    %c0_i32_0 = arith.constant 0 : i32
    %c0_i32_1 = arith.constant 0 : i32
    return %c0_i32, %c0_i32_0 : i32, i32
  }
  func.func @transform_7(%arg0: i32) -> (i32, i32, i32) {
    %c0_i32 = arith.constant 0 : i32
    %c0_i32_0 = arith.constant 0 : i32
    %c0_i32_1 = arith.constant 0 : i32
    return %arg0, %c0_i32, %c0_i32_0 : i32, i32, i32
  }
  func.func @transform_8(%arg0: i32) -> (i32, i32, i32) {
    %c0_i32 = arith.constant 0 : i32
    %c0_i32_0 = arith.constant 0 : i32
    %c0_i32_1 = arith.constant 0 : i32
    return %arg0, %c0_i32, %c0_i32_0 : i32, i32, i32
  }
}

</mosaic_0001>

<llo_original>
// kernel: mcan_reid_forward.3
$region0: #{mcan_reid_forward.3}
  #allocation0 [shape = 'u32[]', space=smem, size = 0x4, offset = 0x4, fixed_abs, tag = 'smem constant byte address 0x4 - core index']
  #allocation1 [shape = 'u32[144,128]{1,0:T(1,128)}', space=vmem, size = 0x12000, scoped, tag = 'internal scratch']
  %s0 = inlined_call_operand.vmem [shape: bf16[4,16,32], index: 0, kind: input, shape index: {}]
  %s1 = inlined_call_operand.vmem [shape: bf16[4,16,32], index: 1, kind: input, shape index: {}]
  %s2 = inlined_call_operand.vmem [shape: f32[32,32], index: 2, kind: input, shape index: {}]
  %s3 = inlined_call_operand.vmem [shape: f32[32,32], index: 3, kind: input, shape index: {}]
  %s4 = inlined_call_operand.vmem [shape: f32[32,32], index: 4, kind: input, shape index: {}]
  %s5 = inlined_call_operand.vmem [shape: f32[1,32], index: 5, kind: input, shape index: {}]
  %s6 = inlined_call_operand.vmem [shape: f32[32,32], index: 6, kind: input, shape index: {}]
  %s7 = inlined_call_operand.vmem [shape: f32[32,32], index: 7, kind: input, shape index: {}]
  %s8 = inlined_call_operand.vmem [shape: f32[1,32], index: 8, kind: input, shape index: {}]
  %s9 = inlined_call_operand.vmem [shape: f32[32,32], index: 9, kind: input, shape index: {}]
  %s10 = inlined_call_operand.vmem [shape: f32[32,32], index: 10, kind: input, shape index: {}]
  %s11 = inlined_call_operand.vmem [shape: f32[1,32], index: 11, kind: input, shape index: {}]
  %s12 = inlined_call_operand.vmem [shape: f32[1,32], index: 12, kind: input, shape index: {}]
  %s13 = inlined_call_operand.vmem [shape: f32[32,32], index: 13, kind: input, shape index: {}]
  %s14 = inlined_call_operand.vmem [shape: f32[32,32], index: 14, kind: input, shape index: {}]
  %s15 = inlined_call_operand.vmem [shape: f32[32,32], index: 15, kind: input, shape index: {}]
  %s16 = inlined_call_operand.vmem [shape: f32[32,32], index: 16, kind: input, shape index: {}]
  %s17 = inlined_call_operand.vmem [shape: f32[1,32], index: 17, kind: input, shape index: {}]
  %s18 = inlined_call_operand.vmem [shape: f32[32,32], index: 18, kind: input, shape index: {}]
  %s19 = inlined_call_operand.vmem [shape: f32[1,32], index: 19, kind: input, shape index: {}]
  %s20 = inlined_call_operand.vmem [shape: f32[32,32], index: 20, kind: input, shape index: {}]
  %s21 = inlined_call_operand.vmem [shape: f32[1,32], index: 21, kind: input, shape index: {}]
  %s22 = inlined_call_operand.vmem [shape: f32[32,32], index: 22, kind: input, shape index: {}]
  %s23 = inlined_call_operand.vmem [shape: f32[1,32], index: 23, kind: input, shape index: {}]
  %s24 = inlined_call_operand.vmem [shape: f32[32,32], index: 24, kind: input, shape index: {}]
  %s25 = inlined_call_operand.vmem [shape: f32[1,32], index: 25, kind: input, shape index: {}]
  %s26 = inlined_call_operand.vmem [shape: f32[32,2], index: 26, kind: input, shape index: {}]
  %s27 = inlined_call_operand.vmem [shape: f32[1,2], index: 27, kind: input, shape index: {}]
  %s28 = inlined_call_operand.hbm [shape: f32[2,1,2], index: 28, kind: output, shape index: {}]
  %s29 = sld [smem:[#allocation0]]
  $region145: #{mcan_reid_forward.3} parent=0
    _
  %s31 = ssub.s32 1, %s29
  %s32 = scalar_select 0, %s31, %s29
  $region1: #{mcan_reid_forward.3} parent=0
    #allocation2 [shape = 'u8[1024]{0}', space=vmem, size = 0x400, scoped, tag = 'output window, operand 0']
    #allocation3 [shape = 's32[2]{0}', space=sflag, size = 0x8, scoped, tag = 'scoped memory for mcan_reid_forward.3']
    %33 = vsyncpa [#allocation3], 0
    %s34 = scalar_lea.sflag [#allocation3], 1
    %35 = vsyncpa %s34, 0
    loop: start=0, step=1, limit=4
    $region2: #{mcan_reid_forward.3} parent=1 // loop_pre_header
      _
    $region3: #{mcan_reid_forward.3} parent=1 // loop_header
      %s37 = sphi 0, %s41
      %p38 = scmp.ge.s32.totalorder %s37, 4
      %s47 = sphi 0, %s49
      %s50 = sphi 0, %s47
      %s51 = sphi 0, %s50
      %s67 = sphi 0, %s51
      %s73 = sphi 0, %s75
      %s76 = sphi 0, %s73
      %s77 = sphi 0, %s76
      %s93 = sphi 0, %s77
      %s97 = sphi 0, %s97
      %s99 = sphi 0, %s97
      %s100 = sphi 0, %s99
      %s114 = sphi 0, %s100
      %s118 = sphi 0, %s118
      %s120 = sphi 0, %s118
      %s121 = sphi 0, %s120
      %s135 = sphi 0, %s121
      %s139 = sphi 0, %s139
      %s141 = sphi 0, %s139
      %s142 = sphi 0, %s141
      %s156 = sphi 0, %s142
      %s160 = sphi 0, %s160
      %s162 = sphi 0, %s160
      %s163 = sphi 0, %s162
      %s177 = sphi 0, %s163
      %s181 = sphi 0, %s181
      %s183 = sphi 0, %s181
      %s184 = sphi 0, %s183
      %s198 = sphi 0, %s184
      %s202 = sphi 0, %s202
      %s204 = sphi 0, %s202
      %s205 = sphi 0, %s204
      %s219 = sphi 0, %s205
      %s223 = sphi 0, %s223
      %s225 = sphi 0, %s223
      %s226 = sphi 0, %s225
      %s240 = sphi 0, %s226
      %s244 = sphi 0, %s244
      %s246 = sphi 0, %s244
      %s247 = sphi 0, %s246
      %s261 = sphi 0, %s247
      %s265 = sphi 0, %s265
      %s267 = sphi 0, %s265
      %s268 = sphi 0, %s267
      %s282 = sphi 0, %s268
      %s286 = sphi 0, %s286
      %s288 = sphi 0, %s286
      %s289 = sphi 0, %s288
      %s303 = sphi 0, %s289
      %s307 = sphi 0, %s307
      %s309 = sphi 0, %s307
      %s310 = sphi 0, %s309
      %s324 = sphi 0, %s310
      %s328 = sphi 0, %s328
      %s330 = sphi 0, %s328
      %s331 = sphi 0, %s330
      %s345 = sphi 0, %s331
      %s349 = sphi 0, %s349
      %s351 = sphi 0, %s349
      %s352 = sphi 0, %s351
      %s366 = sphi 0, %s352
      %s370 = sphi 0, %s370
      %s372 = sphi 0, %s370
      %s373 = sphi 0, %s372
      %s387 = sphi 0, %s373
      %s391 = sphi 0, %s391
      %s393 = sphi 0, %s391
      %s394 = sphi 0, %s393
      %s408 = sphi 0, %s394
      %s412 = sphi 0, %s412
      %s414 = sphi 0, %s412
      %s415 = sphi 0, %s414
      %s429 = sphi 0, %s415
      %s433 = sphi 0, %s433
      %s435 = sphi 0, %s433
      %s436 = sphi 0, %s435
      %s450 = sphi 0, %s436
      %s454 = sphi 0, %s454
      %s456 = sphi 0, %s454
      %s457 = sphi 0, %s456
      %s471 = sphi 0, %s457
      %s475 = sphi 0, %s475
      %s477 = sphi 0, %s475
      %s478 = sphi 0, %s477
      %s492 = sphi 0, %s478
      %s496 = sphi 0, %s496
      %s498 = sphi 0, %s496
      %s499 = sphi 0, %s498
      %s513 = sphi 0, %s499
      %s517 = sphi 0, %s517
      %s519 = sphi 0, %s517
      %s520 = sphi 0, %s519
      %s534 = sphi 0, %s520
      %s538 = sphi 0, %s538
      %s540 = sphi 0, %s538
      %s541 = sphi 0, %s540
      %s555 = sphi 0, %s541
      %s559 = sphi 0, %s559
      %s561 = sphi 0, %s559
      %s562 = sphi 0, %s561
      %s576 = sphi 0, %s562
      %s580 = sphi 0, %s580
      %s582 = sphi 0, %s580
      %s583 = sphi 0, %s582
      %s597 = sphi 0, %s583
      %s601 = sphi 0, %s601
      %s603 = sphi 0, %s601
      %s604 = sphi 0, %s603
      %s618 = sphi 0, %s604
      %s622 = sphi 0, %s622
      %s624 = sphi 0, %s622
      %s625 = sphi 0, %s624
      %s639 = sphi 0, %s625
      %s645 = sphi 0, %s647
      %s648 = sphi 0, %s645
      %s649 = sphi 0, %s648
      %s665 = sphi 0, %s649
    $region4: #{mcan_reid_forward.3} parent=1 // loop_header_branch
      %40 = sbr.rel (%p38) target = $region8
    $region5: #{mcan_reid_forward.3} parent=1 // loop_body
      %s42 = ssub.s32 %s37, 1
      %s43 = ssub.s32 %s37, 2
      %s44 = sadd.s32 %s37, 1
      %s45 = ssub.s32 %s37, %s44
      %p46 = scmp.eq.s32.totalorder %s45, 0
      %s48 = sadd.s32 %s47, 1
      %s49 = scalar_select %p46, %s47, %s48
      %p52 = pneg %p46
      %p53 = scmp.eq.s32.totalorder %s37, 1
      %p54 = por %p52, %p53
      %p55 = scmp.ne.s32.totalorder %s47, %s50
      %p56 = scmp.eq.s32.totalorder %s37, 0
      %p57 = por %p55, %p56
      %p58 = scmp.ne.s32.totalorder %s47, %s50
      %p59 = scmp.eq.s32.totalorder %s42, 1
      %p60 = por %p58, %p59
      %p61 = scmp.ne.s32.totalorder %s50, %s51
      %p62 = scmp.eq.s32.totalorder %s42, 0
      %p63 = por %p61, %p62
      %p64 = scmp.ne.s32.totalorder %s50, %s51
      %p65 = scmp.eq.s32.totalorder %s43, 1
      %p66 = por %p64, %p65
      %p68 = scmp.ne.s32.totalorder %s51, %s67
      %p69 = scmp.eq.s32.totalorder %s43, 0
      %p70 = por %p68, %p69
      %s71 = ssub.s32 %s37, %s44
      %p72 = scmp.eq.s32.totalorder %s71, 0
      %s74 = sadd.s32 %s73, 1
      %s75 = scalar_select %p72, %s73, %s74
      %p78 = pneg %p72
      %p79 = scmp.eq.s32.totalorder %s37, 1
      %p80 = por %p78, %p79
      %p81 = scmp.ne.s32.totalorder %s73, %s76
      %p82 = scmp.eq.s32.totalorder %s37, 0
      %p83 = por %p81, %p82
      %p84 = scmp.ne.s32.totalorder %s73, %s76
      %p85 = scmp.eq.s32.totalorder %s42, 1
      %p86 = por %p84, %p85
      %p87 = scmp.ne.s32.totalorder %s76, %s77
      %p88 = scmp.eq.s32.totalorder %s42, 0
      %p89 = por %p87, %p88
      %p90 = scmp.ne.s32.totalorder %s76, %s77
      %p91 = scmp.eq.s32.totalorder %s43, 1
      %p92 = por %p90, %p91
      %p94 = scmp.ne.s32.totalorder %s77, %s93
      %p95 = scmp.eq.s32.totalorder %s43, 0
      %p96 = por %p94, %p95
      %s98 = sadd.s32 %s97, 1
      %p101 = scmp.eq.s32.totalorder %s37, 1
      %p102 = scmp.ne.s32.totalorder %s97, %s99
      %p103 = scmp.eq.s32.totalorder %s37, 0
      %p104 = por %p102, %p103
      %p105 = scmp.ne.s32.totalorder %s97, %s99
      %p106 = scmp.eq.s32.totalorder %s42, 1
      %p107 = por %p105, %p106
      %p108 = scmp.ne.s32.totalorder %s99, %s100
      %p109 = scmp.eq.s32.totalorder %s42, 0
      %p110 = por %p108, %p109
      %p111 = scmp.ne.s32.totalorder %s99, %s100
      %p112 = scmp.eq.s32.totalorder %s43, 1
      %p113 = por %p111, %p112
      %p115 = scmp.ne.s32.totalorder %s100, %s114
      %p116 = scmp.eq.s32.totalorder %s43, 0
      %p117 = por %p115, %p116
      %s119 = sadd.s32 %s118, 1
      %p122 = scmp.eq.s32.totalorder %s37, 1
      %p123 = scmp.ne.s32.totalorder %s118, %s120
      %p124 = scmp.eq.s32.totalorder %s37, 0
      %p125 = por %p123, %p124
      %p126 = scmp.ne.s32.totalorder %s118, %s120
      %p127 = scmp.eq.s32.totalorder %s42, 1
      %p128 = por %p126, %p127
      %p129 = scmp.ne.s32.totalorder %s120, %s121
      %p130 = scmp.eq.s32.totalorder %s42, 0
      %p131 = por %p129, %p130
      %p132 = scmp.ne.s32.totalorder %s120, %s121
      %p133 = scmp.eq.s32.totalorder %s43, 1
      %p134 = por %p132, %p133
      %p136 = scmp.ne.s32.totalorder %s121, %s135
      %p137 = scmp.eq.s32.totalorder %s43, 0
      %p138 = por %p136, %p137
      %s140 = sadd.s32 %s139, 1
      %p143 = scmp.eq.s32.totalorder %s37, 1
      %p144 = scmp.ne.s32.totalorder %s139, %s141
      %p145 = scmp.eq.s32.totalorder %s37, 0
      %p146 = por %p144, %p145
      %p147 = scmp.ne.s32.totalorder %s139, %s141
      %p148 = scmp.eq.s32.totalorder %s42, 1
      %p149 = por %p147, %p148
      %p150 = scmp.ne.s32.totalorder %s141, %s142
      %p151 = scmp.eq.s32.totalorder %s42, 0
      %p152 = por %p150, %p151
      %p153 = scmp.ne.s32.totalorder %s141, %s142
      %p154 = scmp.eq.s32.totalorder %s43, 1
      %p155 = por %p153, %p154
      %p157 = scmp.ne.s32.totalorder %s142, %s156
      %p158 = scmp.eq.s32.totalorder %s43, 0
      %p159 = por %p157, %p158
      %s161 = sadd.s32 %s160, 1
      %p164 = scmp.eq.s32.totalorder %s37, 1
      %p165 = scmp.ne.s32.totalorder %s160, %s162
      %p166 = scmp.eq.s32.totalorder %s37, 0
      %p167 = por %p165, %p166
      %p168 = scmp.ne.s32.totalorder %s160, %s162
      %p169 = scmp.eq.s32.totalorder %s42, 1
      %p170 = por %p168, %p169
      %p171 = scmp.ne.s32.totalorder %s162, %s163
      %p172 = scmp.eq.s32.totalorder %s42, 0
      %p173 = por %p171, %p172
      %p174 = scmp.ne.s32.totalorder %s162, %s163
      %p175 = scmp.eq.s32.totalorder %s43, 1
      %p176 = por %p174, %p175
      %p178 = scmp.ne.s32.totalorder %s163, %s177
      %p179 = scmp.eq.s32.totalorder %s43, 0
      %p180 = por %p178, %p179
      %s182 = sadd.s32 %s181, 1
      %p185 = scmp.eq.s32.totalorder %s37, 1
      %p186 = scmp.ne.s32.totalorder %s181, %s183
      %p187 = scmp.eq.s32.totalorder %s37, 0
      %p188 = por %p186, %p187
      %p189 = scmp.ne.s32.totalorder %s181, %s183
      %p190 = scmp.eq.s32.totalorder %s42, 1
      %p191 = por %p189, %p190
      %p192 = scmp.ne.s32.totalorder %s183, %s184
      %p193 = scmp.eq.s32.totalorder %s42, 0
      %p194 = por %p192, %p193
      %p195 = scmp.ne.s32.totalorder %s183, %s184
      %p196 = scmp.eq.s32.totalorder %s43, 1
      %p197 = por %p195, %p196
      %p199 = scmp.ne.s32.totalorder %s184, %s198
      %p200 = scmp.eq.s32.totalorder %s43, 0
      %p201 = por %p199, %p200
      %s203 = sadd.s32 %s202, 1
      %p206 = scmp.eq.s32.totalorder %s37, 1
      %p207 = scmp.ne.s32.totalorder %s202, %s204
      %p208 = scmp.eq.s32.totalorder %s37, 0
      %p209 = por %p207, %p208
      %p210 = scmp.ne.s32.totalorder %s202, %s204
      %p211 = scmp.eq.s32.totalorder %s42, 1
      %p212 = por %p210, %p211
      %p213 = scmp.ne.s32.totalorder %s204, %s205
      %p214 = scmp.eq.s32.totalorder %s42, 0
      %p215 = por %p213, %p214
      %p216 = scmp.ne.s32.totalorder %s204, %s205
      %p217 = scmp.eq.s32.totalorder %s43, 1
      %p218 = por %p216, %p217
      %p220 = scmp.ne.s32.totalorder %s205, %s219
      %p221 = scmp.eq.s32.totalorder %s43, 0
      %p222 = por %p220, %p221
      %s224 = sadd.s32 %s223, 1
      %p227 = scmp.eq.s32.totalorder %s37, 1
      %p228 = scmp.ne.s32.totalorder %s223, %s225
      %p229 = scmp.eq.s32.totalorder %s37, 0
      %p230 = por %p228, %p229
      %p231 = scmp.ne.s32.totalorder %s223, %s225
      %p232 = scmp.eq.s32.totalorder %s42, 1
      %p233 = por %p231, %p232
      %p234 = scmp.ne.s32.totalorder %s225, %s226
      %p235 = scmp.eq.s32.totalorder %s42, 0
      %p236 = por %p234, %p235
      %p237 = scmp.ne.s32.totalorder %s225, %s226
      %p238 = scmp.eq.s32.totalorder %s43, 1
      %p239 = por %p237, %p238
      %p241 = scmp.ne.s32.totalorder %s226, %s240
      %p242 = scmp.eq.s32.totalorder %s43, 0
      %p243 = por %p241, %p242
      %s245 = sadd.s32 %s244, 1
      %p248 = scmp.eq.s32.totalorder %s37, 1
      %p249 = scmp.ne.s32.totalorder %s244, %s246
      %p250 = scmp.eq.s32.totalorder %s37, 0
      %p251 = por %p249, %p250
      %p252 = scmp.ne.s32.totalorder %s244, %s246
      %p253 = scmp.eq.s32.totalorder %s42, 1
      %p254 = por %p252, %p253
      %p255 = scmp.ne.s32.totalorder %s246, %s247
      %p256 = scmp.eq.s32.totalorder %s42, 0
      %p257 = por %p255, %p256
      %p258 = scmp.ne.s32.totalorder %s246, %s247
      %p259 = scmp.eq.s32.totalorder %s43, 1
      %p260 = por %p258, %p259
      %p262 = scmp.ne.s32.totalorder %s247, %s261
      %p263 = scmp.eq.s32.totalorder %s43, 0
      %p264 = por %p262, %p263
      %s266 = sadd.s32 %s265, 1
      %p269 = scmp.eq.s32.totalorder %s37, 1
      %p270 = scmp.ne.s32.totalorder %s265, %s267
      %p271 = scmp.eq.s32.totalorder %s37, 0
      %p272 = por %p270, %p271
      %p273 = scmp.ne.s32.totalorder %s265, %s267
      %p274 = scmp.eq.s32.totalorder %s42, 1
      %p275 = por %p273, %p274
      %p276 = scmp.ne.s32.totalorder %s267, %s268
      %p277 = scmp.eq.s32.totalorder %s42, 0
      %p278 = por %p276, %p277
      %p279 = scmp.ne.s32.totalorder %s267, %s268
      %p280 = scmp.eq.s32.totalorder %s43, 1
      %p281 = por %p279, %p280
      %p283 = scmp.ne.s32.totalorder %s268, %s282
      %p284 = scmp.eq.s32.totalorder %s43, 0
      %p285 = por %p283, %p284
      %s287 = sadd.s32 %s286, 1
      %p290 = scmp.eq.s32.totalorder %s37, 1
      %p291 = scmp.ne.s32.totalorder %s286, %s288
      %p292 = scmp.eq.s32.totalorder %s37, 0
      %p293 = por %p291, %p292
      %p294 = scmp.ne.s32.totalorder %s286, %s288
      %p295 = scmp.eq.s32.totalorder %s42, 1
      %p296 = por %p294, %p295
      %p297 = scmp.ne.s32.totalorder %s288, %s289
      %p298 = scmp.eq.s32.totalorder %s42, 0
      %p299 = por %p297, %p298
      %p300 = scmp.ne.s32.totalorder %s288, %s289
      %p301 = scmp.eq.s32.totalorder %s43, 1
      %p302 = por %p300, %p301
      %p304 = scmp.ne.s32.totalorder %s289, %s303
      %p305 = scmp.eq.s32.totalorder %s43, 0
      %p306 = por %p304, %p305
      %s308 = sadd.s32 %s307, 1
      %p311 = scmp.eq.s32.totalorder %s37, 1
      %p312 = scmp.ne.s32.totalorder %s307, %s309
      %p313 = scmp.eq.s32.totalorder %s37, 0
      %p314 = por %p312, %p313
      %p315 = scmp.ne.s32.totalorder %s307, %s309
      %p316 = scmp.eq.s32.totalorder %s42, 1
      %p317 = por %p315, %p316
      %p318 = scmp.ne.s32.totalorder %s309, %s310
      %p319 = scmp.eq.s32.totalorder %s42, 0
      %p320 = por %p318, %p319
      %p321 = scmp.ne.s32.totalorder %s309, %s310
      %p322 = scmp.eq.s32.totalorder %s43, 1
      %p323 = por %p321, %p322
      %p325 = scmp.ne.s32.totalorder %s310, %s324
      %p326 = scmp.eq.s32.totalorder %s43, 0
      %p327 = por %p325, %p326
      %s329 = sadd.s32 %s328, 1
      %p332 = scmp.eq.s32.totalorder %s37, 1
      %p333 = scmp.ne.s32.totalorder %s328, %s330
      %p334 = scmp.eq.s32.totalorder %s37, 0
      %p335 = por %p333, %p334
      %p336 = scmp.ne.s32.totalorder %s328, %s330
      %p337 = scmp.eq.s32.totalorder %s42, 1
      %p338 = por %p336, %p337
      %p339 = scmp.ne.s32.totalorder %s330, %s331
      %p340 = scmp.eq.s32.totalorder %s42, 0
      %p341 = por %p339, %p340
      %p342 = scmp.ne.s32.totalorder %s330, %s331
      %p343 = scmp.eq.s32.totalorder %s43, 1
      %p344 = por %p342, %p343
      %p346 = scmp.ne.s32.totalorder %s331, %s345
      %p347 = scmp.eq.s32.totalorder %s43, 0
      %p348 = por %p346, %p347
      %s350 = sadd.s32 %s349, 1
      %p353 = scmp.eq.s32.totalorder %s37, 1
      %p354 = scmp.ne.s32.totalorder %s349, %s351
      %p355 = scmp.eq.s32.totalorder %s37, 0
      %p356 = por %p354, %p355
      %p357 = scmp.ne.s32.totalorder %s349, %s351
      %p358 = scmp.eq.s32.totalorder %s42, 1
      %p359 = por %p357, %p358
      %p360 = scmp.ne.s32.totalorder %s351, %s352
      %p361 = scmp.eq.s32.totalorder %s42, 0
      %p362 = por %p360, %p361
      %p363 = scmp.ne.s32.totalorder %s351, %s352
      %p364 = scmp.eq.s32.totalorder %s43, 1
      %p365 = por %p363, %p364
      %p367 = scmp.ne.s32.totalorder %s352, %s366
      %p368 = scmp.eq.s32.totalorder %s43, 0
      %p369 = por %p367, %p368
      %s371 = sadd.s32 %s370, 1
      %p374 = scmp.eq.s32.totalorder %s37, 1
      %p375 = scmp.ne.s32.totalorder %s370, %s372
      %p376 = scmp.eq.s32.totalorder %s37, 0
      %p377 = por %p375, %p376
      %p378 = scmp.ne.s32.totalorder %s370, %s372
      %p379 = scmp.eq.s32.totalorder %s42, 1
      %p380 = por %p378, %p379
      %p381 = scmp.ne.s32.totalorder %s372, %s373
      %p382 = scmp.eq.s32.totalorder %s42, 0
      %p383 = por %p381, %p382
      %p384 = scmp.ne.s32.totalorder %s372, %s373
      %p385 = scmp.eq.s32.totalorder %s43, 1
      %p386 = por %p384, %p385
      %p388 = scmp.ne.s32.totalorder %s373, %s387
      %p389 = scmp.eq.s32.totalorder %s43, 0
      %p390 = por %p388, %p389
      %s392 = sadd.s32 %s391, 1
      %p395 = scmp.eq.s32.totalorder %s37, 1
      %p396 = scmp.ne.s32.totalorder %s391, %s393
      %p397 = scmp.eq.s32.totalorder %s37, 0
      %p398 = por %p396, %p397
      %p399 = scmp.ne.s32.totalorder %s391, %s393
      %p400 = scmp.eq.s32.totalorder %s42, 1
      %p401 = por %p399, %p400
      %p402 = scmp.ne.s32.totalorder %s393, %s394
      %p403 = scmp.eq.s32.totalorder %s42, 0
      %p404 = por %p402, %p403
      %p405 = scmp.ne.s32.totalorder %s393, %s394
      %p406 = scmp.eq.s32.totalorder %s43, 1
      %p407 = por %p405, %p406
      %p409 = scmp.ne.s32.totalorder %s394, %s408
      %p410 = scmp.eq.s32.totalorder %s43, 0
      %p411 = por %p409, %p410
      %s413 = sadd.s32 %s412, 1
      %p416 = scmp.eq.s32.totalorder %s37, 1
      %p417 = scmp.ne.s32.totalorder %s412, %s414
      %p418 = scmp.eq.s32.totalorder %s37, 0
      %p419 = por %p417, %p418
      %p420 = scmp.ne.s32.totalorder %s412, %s414
      %p421 = scmp.eq.s32.totalorder %s42, 1
      %p422 = por %p420, %p421
      %p423 = scmp.ne.s32.totalorder %s414, %s415
      %p424 = scmp.eq.s32.totalorder %s42, 0
      %p425 = por %p423, %p424
      %p426 = scmp.ne.s32.totalorder %s414, %s415
      %p427 = scmp.eq.s32.totalorder %s43, 1
      %p428 = por %p426, %p427
      %p430 = scmp.ne.s32.totalorder %s415, %s429
      %p431 = scmp.eq.s32.totalorder %s43, 0
      %p432 = por %p430, %p431
      %s434 = sadd.s32 %s433, 1
      %p437 = scmp.eq.s32.totalorder %s37, 1
      %p438 = scmp.ne.s32.totalorder %s433, %s435
      %p439 = scmp.eq.s32.totalorder %s37, 0
      %p440 = por %p438, %p439
      %p441 = scmp.ne.s32.totalorder %s433, %s435
      %p442 = scmp.eq.s32.totalorder %s42, 1
      %p443 = por %p441, %p442
      %p444 = scmp.ne.s32.totalorder %s435, %s436
      %p445 = scmp.eq.s32.totalorder %s42, 0
      %p446 = por %p444, %p445
      %p447 = scmp.ne.s32.totalorder %s435, %s436
      %p448 = scmp.eq.s32.totalorder %s43, 1
      %p449 = por %p447, %p448
      %p451 = scmp.ne.s32.totalorder %s436, %s450
      %p452 = scmp.eq.s32.totalorder %s43, 0
      %p453 = por %p451, %p452
      %s455 = sadd.s32 %s454, 1
      %p458 = scmp.eq.s32.totalorder %s37, 1
      %p459 = scmp.ne.s32.totalorder %s454, %s456
      %p460 = scmp.eq.s32.totalorder %s37, 0
      %p461 = por %p459, %p460
      %p462 = scmp.ne.s32.totalorder %s454, %s456
      %p463 = scmp.eq.s32.totalorder %s42, 1
      %p464 = por %p462, %p463
      %p465 = scmp.ne.s32.totalorder %s456, %s457
      %p466 = scmp.eq.s32.totalorder %s42, 0
      %p467 = por %p465, %p466
      %p468 = scmp.ne.s32.totalorder %s456, %s457
      %p469 = scmp.eq.s32.totalorder %s43, 1
      %p470 = por %p468, %p469
      %p472 = scmp.ne.s32.totalorder %s457, %s471
      %p473 = scmp.eq.s32.totalorder %s43, 0
      %p474 = por %p472, %p473
      %s476 = sadd.s32 %s475, 1
      %p479 = scmp.eq.s32.totalorder %s37, 1
      %p480 = scmp.ne.s32.totalorder %s475, %s477
      %p481 = scmp.eq.s32.totalorder %s37, 0
      %p482 = por %p480, %p481
      %p483 = scmp.ne.s32.totalorder %s475, %s477
      %p484 = scmp.eq.s32.totalorder %s42, 1
      %p485 = por %p483, %p484
      %p486 = scmp.ne.s32.totalorder %s477, %s478
      %p487 = scmp.eq.s32.totalorder %s42, 0
      %p488 = por %p486, %p487
      %p489 = scmp.ne.s32.totalorder %s477, %s478
      %p490 = scmp.eq.s32.totalorder %s43, 1
      %p491 = por %p489, %p490
      %p493 = scmp.ne.s32.totalorder %s478, %s492
      %p494 = scmp.eq.s32.totalorder %s43, 0
      %p495 = por %p493, %p494
      %s497 = sadd.s32 %s496, 1
      %p500 = scmp.eq.s32.totalorder %s37, 1
      %p501 = scmp.ne.s32.totalorder %s496, %s498
      %p502 = scmp.eq.s32.totalorder %s37, 0
      %p503 = por %p501, %p502
      %p504 = scmp.ne.s32.totalorder %s496, %s498
      %p505 = scmp.eq.s32.totalorder %s42, 1
      %p506 = por %p504, %p505
      %p507 = scmp.ne.s32.totalorder %s498, %s499
      %p508 = scmp.eq.s32.totalorder %s42, 0
      %p509 = por %p507, %p508
      %p510 = scmp.ne.s32.totalorder %s498, %s499
      %p511 = scmp.eq.s32.totalorder %s43, 1
      %p512 = por %p510, %p511
      %p514 = scmp.ne.s32.totalorder %s499, %s513
      %p515 = scmp.eq.s32.totalorder %s43, 0
      %p516 = por %p514, %p515
      %s518 = sadd.s32 %s517, 1
      %p521 = scmp.eq.s32.totalorder %s37, 1
      %p522 = scmp.ne.s32.totalorder %s517, %s519
      %p523 = scmp.eq.s32.totalorder %s37, 0
      %p524 = por %p522, %p523
      %p525 = scmp.ne.s32.totalorder %s517, %s519
      %p526 = scmp.eq.s32.totalorder %s42, 1
      %p527 = por %p525, %p526
      %p528 = scmp.ne.s32.totalorder %s519, %s520
      %p529 = scmp.eq.s32.totalorder %s42, 0
      %p530 = por %p528, %p529
      %p531 = scmp.ne.s32.totalorder %s519, %s520
      %p532 = scmp.eq.s32.totalorder %s43, 1
      %p533 = por %p531, %p532
      %p535 = scmp.ne.s32.totalorder %s520, %s534
      %p536 = scmp.eq.s32.totalorder %s43, 0
      %p537 = por %p535, %p536
      %s539 = sadd.s32 %s538, 1
      %p542 = scmp.eq.s32.totalorder %s37, 1
      %p543 = scmp.ne.s32.totalorder %s538, %s540
      %p544 = scmp.eq.s32.totalorder %s37, 0
      %p545 = por %p543, %p544
      %p546 = scmp.ne.s32.totalorder %s538, %s540
      %p547 = scmp.eq.s32.totalorder %s42, 1
      %p548 = por %p546, %p547
      %p549 = scmp.ne.s32.totalorder %s540, %s541
      %p550 = scmp.eq.s32.totalorder %s42, 0
      %p551 = por %p549, %p550
      %p552 = scmp.ne.s32.totalorder %s540, %s541
      %p553 = scmp.eq.s32.totalorder %s43, 1
      %p554 = por %p552, %p553
      %p556 = scmp.ne.s32.totalorder %s541, %s555
      %p557 = scmp.eq.s32.totalorder %s43, 0
      %p558 = por %p556, %p557
      %s560 = sadd.s32 %s559, 1
      %p563 = scmp.eq.s32.totalorder %s37, 1
      %p564 = scmp.ne.s32.totalorder %s559, %s561
      %p565 = scmp.eq.s32.totalorder %s37, 0
      %p566 = por %p564, %p565
      %p567 = scmp.ne.s32.totalorder %s559, %s561
      %p568 = scmp.eq.s32.totalorder %s42, 1
      %p569 = por %p567, %p568
      %p570 = scmp.ne.s32.totalorder %s561, %s562
      %p571 = scmp.eq.s32.totalorder %s42, 0
      %p572 = por %p570, %p571
      %p573 = scmp.ne.s32.totalorder %s561, %s562
      %p574 = scmp.eq.s32.totalorder %s43, 1
      %p575 = por %p573, %p574
      %p577 = scmp.ne.s32.totalorder %s562, %s576
      %p578 = scmp.eq.s32.totalorder %s43, 0
      %p579 = por %p577, %p578
      %s581 = sadd.s32 %s580, 1
      %p584 = scmp.eq.s32.totalorder %s37, 1
      %p585 = scmp.ne.s32.totalorder %s580, %s582
      %p586 = scmp.eq.s32.totalorder %s37, 0
      %p587 = por %p585, %p586
      %p588 = scmp.ne.s32.totalorder %s580, %s582
      %p589 = scmp.eq.s32.totalorder %s42, 1
      %p590 = por %p588, %p589
      %p591 = scmp.ne.s32.totalorder %s582, %s583
      %p592 = scmp.eq.s32.totalorder %s42, 0
      %p593 = por %p591, %p592
      %p594 = scmp.ne.s32.totalorder %s582, %s583
      %p595 = scmp.eq.s32.totalorder %s43, 1
      %p596 = por %p594, %p595
      %p598 = scmp.ne.s32.totalorder %s583, %s597
      %p599 = scmp.eq.s32.totalorder %s43, 0
      %p600 = por %p598, %p599
      %s602 = sadd.s32 %s601, 1
      %p605 = scmp.eq.s32.totalorder %s37, 1
      %p606 = scmp.ne.s32.totalorder %s601, %s603
      %p607 = scmp.eq.s32.totalorder %s37, 0
      %p608 = por %p606, %p607
      %p609 = scmp.ne.s32.totalorder %s601, %s603
      %p610 = scmp.eq.s32.totalorder %s42, 1
      %p611 = por %p609, %p610
      %p612 = scmp.ne.s32.totalorder %s603, %s604
      %p613 = scmp.eq.s32.totalorder %s42, 0
      %p614 = por %p612, %p613
      %p615 = scmp.ne.s32.totalorder %s603, %s604
      %p616 = scmp.eq.s32.totalorder %s43, 1
      %p617 = por %p615, %p616
      %p619 = scmp.ne.s32.totalorder %s604, %s618
      %p620 = scmp.eq.s32.totalorder %s43, 0
      %p621 = por %p619, %p620
      %s623 = sadd.s32 %s622, 1
      %p626 = scmp.eq.s32.totalorder %s37, 1
      %p627 = scmp.ne.s32.totalorder %s622, %s624
      %p628 = scmp.eq.s32.totalorder %s37, 0
      %p629 = por %p627, %p628
      %p630 = scmp.ne.s32.totalorder %s622, %s624
      %p631 = scmp.eq.s32.totalorder %s42, 1
      %p632 = por %p630, %p631
      %p633 = scmp.ne.s32.totalorder %s624, %s625
      %p634 = scmp.eq.s32.totalorder %s42, 0
      %p635 = por %p633, %p634
      %p636 = scmp.ne.s32.totalorder %s624, %s625
      %p637 = scmp.eq.s32.totalorder %s43, 1
      %p638 = por %p636, %p637
      %p640 = scmp.ne.s32.totalorder %s625, %s639
      %p641 = scmp.eq.s32.totalorder %s43, 0
      %p642 = por %p640, %p641
      %s643 = ssub.s32 %s37, %s44
      %p644 = scmp.eq.s32.totalorder %s643, 0
      %s646 = sadd.s32 %s645, 1
      %s647 = scalar_select %p644, %s645, %s646
      %p650 = pneg %p644
      %p651 = scmp.eq.s32.totalorder %s37, 1
      %p652 = por %p650, %p651
      %p653 = scmp.ne.s32.totalorder %s645, %s648
      %p654 = scmp.eq.s32.totalorder %s37, 0
      %p655 = por %p653, %p654
      %p656 = scmp.ne.s32.totalorder %s645, %s648
      %p657 = scmp.eq.s32.totalorder %s42, 1
      %p658 = por %p656, %p657
      %p659 = scmp.ne.s32.totalorder %s648, %s649
      %p660 = scmp.eq.s32.totalorder %s42, 0
      %p661 = por %p659, %p660
      %p662 = scmp.ne.s32.totalorder %s648, %s649
      %p663 = scmp.eq.s32.totalorder %s43, 1
      %p664 = por %p662, %p663
      %p666 = scmp.ne.s32.totalorder %s649, %s665
      %p667 = scmp.eq.s32.totalorder %s43, 0
      %p668 = por %p666, %p667
      %p669 = scmp.le.s32.totalorder 1, %s37
      %p670 = scmp.lt.s32.totalorder %s37, 3
      %p671 = pnand %p669, %p670
      %p672 = pneg %p671
      // Predicated region
      $region9: #{mcan_reid_forward.3} parent=5 // pred_check
        _
      $region10: #{mcan_reid_forward.3} parent=5 // pred_check_branch
        %674 = sbr.rel (%p671) target = $region12
      $region11: #{mcan_reid_forward.3} parent=5 // pred_region
        %s675 = ssub.s32 %s37, 1
        // Predicated region
        $region13: #{mcan_reid_forward.3} parent=11 // pred_check
          %p676 = pneg %p110
        $region14: #{mcan_reid_forward.3} parent=11 // pred_check_branch
          %678 = sbr.rel (%p676) target = $region16
        $region15: #{mcan_reid_forward.3} parent=11 // pred_region
          _
        $region16: #{mcan_reid_forward.3} parent=11 // pred_fallthru
          _
        // Predicated region
        $region17: #{mcan_reid_forward.3} parent=11 // pred_check
          %p679 = pneg %p131
        $region18: #{mcan_reid_forward.3} parent=11 // pred_check_branch
          %681 = sbr.rel (%p679) target = $region20
        $region19: #{mcan_reid_forward.3} parent=11 // pred_region
          _
        $region20: #{mcan_reid_forward.3} parent=11 // pred_fallthru
          _
        // Predicated region
        $region21: #{mcan_reid_forward.3} parent=11 // pred_check
          %p682 = pneg %p152
        $region22: #{mcan_reid_forward.3} parent=11 // pred_check_branch
          %684 = sbr.rel (%p682) target = $region24
        $region23: #{mcan_reid_forward.3} parent=11 // pred_region
          _
        $region24: #{mcan_reid_forward.3} parent=11 // pred_fallthru
          _
        // Predicated region
        $region25: #{mcan_reid_forward.3} parent=11 // pred_check
          %p685 = pneg %p173
        $region26: #{mcan_reid_forward.3} parent=11 // pred_check_branch
          %687 = sbr.rel (%p685) target = $region28
        $region27: #{mcan_reid_forward.3} parent=11 // pred_region
          _
        $region28: #{mcan_reid_forward.3} parent=11 // pred_fallthru
          _
        // Predicated region
        $region29: #{mcan_reid_forward.3} parent=11 // pred_check
          %p688 = pneg %p194
        $region30: #{mcan_reid_forward.3} parent=11 // pred_check_branch
          %690 = sbr.rel (%p688) target = $region32
        $region31: #{mcan_reid_forward.3} parent=11 // pred_region
          _
        $region32: #{mcan_reid_forward.3} parent=11 // pred_fallthru
          _
        // Predicated region
        $region33: #{mcan_reid_forward.3} parent=11 // pred_check
          %p691 = pneg %p215
        $region34: #{mcan_reid_forward.3} parent=11 // pred_check_branch
          %693 = sbr.rel (%p691) target = $region36
        $region35: #{mcan_reid_forward.3} parent=11 // pred_region
          _
        $region36: #{mcan_reid_forward.3} parent=11 // pred_fallthru
          _
        // Predicated region
        $region37: #{mcan_reid_forward.3} parent=11 // pred_check
          %p694 = pneg %p236
        $region38: #{mcan_reid_forward.3} parent=11 // pred_check_branch
          %696 = sbr.rel (%p694) target = $region40
        $region39: #{mcan_reid_forward.3} parent=11 // pred_region
          _
        $region40: #{mcan_reid_forward.3} parent=11 // pred_fallthru
          _
        // Predicated region
        $region41: #{mcan_reid_forward.3} parent=11 // pred_check
          %p697 = pneg %p257
        $region42: #{mcan_reid_forward.3} parent=11 // pred_check_branch
          %699 = sbr.rel (%p697) target = $region44
        $region43: #{mcan_reid_forward.3} parent=11 // pred_region
          _
        $region44: #{mcan_reid_forward.3} parent=11 // pred_fallthru
          _
        // Predicated region
        $region45: #{mcan_reid_forward.3} parent=11 // pred_check
          %p700 = pneg %p278
        $region46: #{mcan_reid_forward.3} parent=11 // pred_check_branch
          %702 = sbr.rel (%p700) target = $region48
        $region47: #{mcan_reid_forward.3} parent=11 // pred_region
          _
        $region48: #{mcan_reid_forward.3} parent=11 // pred_fallthru
          _
        // Predicated region
        $region49: #{mcan_reid_forward.3} parent=11 // pred_check
          %p703 = pneg %p299
        $region50: #{mcan_reid_forward.3} parent=11 // pred_check_branch
          %705 = sbr.rel (%p703) target = $region52
        $region51: #{mcan_reid_forward.3} parent=11 // pred_region
          _
        $region52: #{mcan_reid_forward.3} parent=11 // pred_fallthru
          _
        // Predicated region
        $region53: #{mcan_reid_forward.3} parent=11 // pred_check
          %p706 = pneg %p320
        $region54: #{mcan_reid_forward.3} parent=11 // pred_check_branch
          %708 = sbr.rel (%p706) target = $region56
        $region55: #{mcan_reid_forward.3} parent=11 // pred_region
          _
        $region56: #{mcan_reid_forward.3} parent=11 // pred_fallthru
          _
        // Predicated region
        $region57: #{mcan_reid_forward.3} parent=11 // pred_check
          %p709 = pneg %p341
        $region58: #{mcan_reid_forward.3} parent=11 // pred_check_branch
          %711 = sbr.rel (%p709) target = $region60
        $region59: #{mcan_reid_forward.3} parent=11 // pred_region
          _
        $region60: #{mcan_reid_forward.3} parent=11 // pred_fallthru
          _
        // Predicated region
        $region61: #{mcan_reid_forward.3} parent=11 // pred_check
          %p712 = pneg %p362
        $region62: #{mcan_reid_forward.3} parent=11 // pred_check_branch
          %714 = sbr.rel (%p712) target = $region64
        $region63: #{mcan_reid_forward.3} parent=11 // pred_region
          _
        $region64: #{mcan_reid_forward.3} parent=11 // pred_fallthru
          _
        // Predicated region
        $region65: #{mcan_reid_forward.3} parent=11 // pred_check
          %p715 = pneg %p383
        $region66: #{mcan_reid_forward.3} parent=11 // pred_check_branch
          %717 = sbr.rel (%p715) target = $region68
        $region67: #{mcan_reid_forward.3} parent=11 // pred_region
          _
        $region68: #{mcan_reid_forward.3} parent=11 // pred_fallthru
          _
        // Predicated region
        $region69: #{mcan_reid_forward.3} parent=11 // pred_check
          %p718 = pneg %p404
        $region70: #{mcan_reid_forward.3} parent=11 // pred_check_branch
          %720 = sbr.rel (%p718) target = $region72
        $region71: #{mcan_reid_forward.3} parent=11 // pred_region
          _
        $region72: #{mcan_reid_forward.3} parent=11 // pred_fallthru
          _
        // Predicated region
        $region73: #{mcan_reid_forward.3} parent=11 // pred_check
          %p721 = pneg %p425
        $region74: #{mcan_reid_forward.3} parent=11 // pred_check_branch
          %723 = sbr.rel (%p721) target = $region76
        $region75: #{mcan_reid_forward.3} parent=11 // pred_region
          _
        $region76: #{mcan_reid_forward.3} parent=11 // pred_fallthru
          _
        // Predicated region
        $region77: #{mcan_reid_forward.3} parent=11 // pred_check
          %p724 = pneg %p446
        $region78: #{mcan_reid_forward.3} parent=11 // pred_check_branch
          %726 = sbr.rel (%p724) target = $region80
        $region79: #{mcan_reid_forward.3} parent=11 // pred_region
          _
        $region80: #{mcan_reid_forward.3} parent=11 // pred_fallthru
          _
        // Predicated region
        $region81: #{mcan_reid_forward.3} parent=11 // pred_check
          %p727 = pneg %p467
        $region82: #{mcan_reid_forward.3} parent=11 // pred_check_branch
          %729 = sbr.rel (%p727) target = $region84
        $region83: #{mcan_reid_forward.3} parent=11 // pred_region
          _
        $region84: #{mcan_reid_forward.3} parent=11 // pred_fallthru
          _
        // Predicated region
        $region85: #{mcan_reid_forward.3} parent=11 // pred_check
          %p730 = pneg %p488
        $region86: #{mcan_reid_forward.3} parent=11 // pred_check_branch
          %732 = sbr.rel (%p730) target = $region88
        $region87: #{mcan_reid_forward.3} parent=11 // pred_region
          _
        $region88: #{mcan_reid_forward.3} parent=11 // pred_fallthru
          _
        // Predicated region
        $region89: #{mcan_reid_forward.3} parent=11 // pred_check
          %p733 = pneg %p509
        $region90: #{mcan_reid_forward.3} parent=11 // pred_check_branch
          %735 = sbr.rel (%p733) target = $region92
        $region91: #{mcan_reid_forward.3} parent=11 // pred_region
          _
        $region92: #{mcan_reid_forward.3} parent=11 // pred_fallthru
          _
        // Predicated region
        $region93: #{mcan_reid_forward.3} parent=11 // pred_check
          %p736 = pneg %p530
        $region94: #{mcan_reid_forward.3} parent=11 // pred_check_branch
          %738 = sbr.rel (%p736) target = $region96
        $region95: #{mcan_reid_forward.3} parent=11 // pred_region
          _
        $region96: #{mcan_reid_forward.3} parent=11 // pred_fallthru
          _
        // Predicated region
        $region97: #{mcan_reid_forward.3} parent=11 // pred_check
          %p739 = pneg %p551
        $region98: #{mcan_reid_forward.3} parent=11 // pred_check_branch
          %741 = sbr.rel (%p739) target = $region100
        $region99: #{mcan_reid_forward.3} parent=11 // pred_region
          _
        $region100: #{mcan_reid_forward.3} parent=11 // pred_fallthru
          _
        // Predicated region
        $region101: #{mcan_reid_forward.3} parent=11 // pred_check
          %p742 = pneg %p572
        $region102: #{mcan_reid_forward.3} parent=11 // pred_check_branch
          %744 = sbr.rel (%p742) target = $region104
        $region103: #{mcan_reid_forward.3} parent=11 // pred_region
          _
        $region104: #{mcan_reid_forward.3} parent=11 // pred_fallthru
          _
        // Predicated region
        $region105: #{mcan_reid_forward.3} parent=11 // pred_check
          %p745 = pneg %p593
        $region106: #{mcan_reid_forward.3} parent=11 // pred_check_branch
          %747 = sbr.rel (%p745) target = $region108
        $region107: #{mcan_reid_forward.3} parent=11 // pred_region
          _
        $region108: #{mcan_reid_forward.3} parent=11 // pred_fallthru
          _
        // Predicated region
        $region109: #{mcan_reid_forward.3} parent=11 // pred_check
          %p748 = pneg %p614
        $region110: #{mcan_reid_forward.3} parent=11 // pred_check_branch
          %750 = sbr.rel (%p748) target = $region112
        $region111: #{mcan_reid_forward.3} parent=11 // pred_region
          _
        $region112: #{mcan_reid_forward.3} parent=11 // pred_fallthru
          _
        // Predicated region
        $region113: #{mcan_reid_forward.3} parent=11 // pred_check
          %p751 = pneg %p635
        $region114: #{mcan_reid_forward.3} parent=11 // pred_check_branch
          %753 = sbr.rel (%p751) target = $region116
        $region115: #{mcan_reid_forward.3} parent=11 // pred_region
          _
        $region116: #{mcan_reid_forward.3} parent=11 // pred_fallthru
          _
      $region12: #{mcan_reid_forward.3} parent=5 // pred_fallthru
        _
      %p754 = scmp.lt.s32.totalorder %s37, 2
      // Predicated region
      $region117: #{mcan_reid_forward.3} parent=5 // pred_check
        %p755 = pneg %p754
      $region118: #{mcan_reid_forward.3} parent=5 // pred_check_branch
        %757 = sbr.rel (%p755) target = $region120
      $region119: #{mcan_reid_forward.3} parent=5 // pred_region
        // Predicated region
        $region121: #{mcan_reid_forward.3} parent=119 // pred_check
          %p758 = pneg %p57
        $region122: #{mcan_reid_forward.3} parent=119 // pred_check_branch
          %760 = sbr.rel (%p758) target = $region124
        $region123: #{mcan_reid_forward.3} parent=119 // pred_region
          %s761 = smul.u32 2, %s37
          %p762 = scmp.lt.s32.totalorder %s761, 3
          %s763 = scalar_select %p762, %s761, 3
          %s764 = smul.addr %s763, 2
          %s765 = smul.addr %s764, 4
          %s766 = scalar_lea.vmem %s0, %s765
          %s767 = smul.u32 2, %s37
        $region124: #{mcan_reid_forward.3} parent=119 // pred_fallthru
          _
        // Predicated region
        $region125: #{mcan_reid_forward.3} parent=119 // pred_check
          %p768 = pneg %p83
        $region126: #{mcan_reid_forward.3} parent=119 // pred_check_branch
          %770 = sbr.rel (%p768) target = $region128
        $region127: #{mcan_reid_forward.3} parent=119 // pred_region
          %s771 = smul.u32 2, %s37
          %p772 = scmp.lt.s32.totalorder %s771, 3
          %s773 = scalar_select %p772, %s771, 3
          %s774 = smul.addr %s773, 2
          %s775 = smul.addr %s774, 4
          %s776 = scalar_lea.vmem %s1, %s775
          %s777 = smul.u32 2, %s37
        $region128: #{mcan_reid_forward.3} parent=119 // pred_fallthru
          _
      $region120: #{mcan_reid_forward.3} parent=5 // pred_fallthru
        _
      %p778 = scmp.le.s32.totalorder 1, %s37
      %p779 = scmp.lt.s32.totalorder %s37, 3
      %p780 = pnand %p778, %p779
      %p781 = pneg %p780
      // Predicated region
      $region129: #{mcan_reid_forward.3} parent=5 // pred_check
        _
      $region130: #{mcan_reid_forward.3} parent=5 // pred_check_branch
        %783 = sbr.rel (%p780) target = $region132
      $region131: #{mcan_reid_forward.3} parent=5 // pred_region
        %s784 = ssub.s32 %s37, 1
        %s785 = smul.u32 2, %s42
        %p786 = scmp.lt.s32.totalorder %s785, 3
        %s787 = scalar_select %p786, %s785, 3
        %s788 = smul.addr %s787, 2
        %s789 = smul.addr %s788, 4
        %s790 = scalar_lea.vmem %s0, %s789
        %p791 = pneg %p63
        %p792 = pneg %p60
        %s793 = smul.u32 2, %s42
        %p794 = scmp.lt.s32.totalorder %s793, 3
        %s795 = scalar_select %p794, %s793, 3
        %s796 = smul.addr %s795, 2
        %s797 = smul.addr %s796, 4
        %s798 = scalar_lea.vmem %s1, %s797
        %p799 = pneg %p89
        %p800 = pneg %p86
        %p801 = pneg %p110
        %p802 = pneg %p107
        %p803 = pneg %p131
        %p804 = pneg %p128
        %p805 = pneg %p152
        %p806 = pneg %p149
        %p807 = pneg %p173
        %p808 = pneg %p170
        %p809 = pneg %p194
        %p810 = pneg %p191
        %p811 = pneg %p215
        %p812 = pneg %p212
        %p813 = pneg %p236
        %p814 = pneg %p233
        %p815 = pneg %p257
        %p816 = pneg %p254
        %p817 = pneg %p278
        %p818 = pneg %p275
        %p819 = pneg %p299
        %p820 = pneg %p296
        %p821 = pneg %p320
        %p822 = pneg %p317
        %p823 = pneg %p341
        %p824 = pneg %p338
        %p825 = pneg %p362
        %p826 = pneg %p359
        %p827 = pneg %p383
        %p828 = pneg %p380
        %p829 = pneg %p404
        %p830 = pneg %p401
        %p831 = pneg %p425
        %p832 = pneg %p422
        %p833 = pneg %p446
        %p834 = pneg %p443
        %p835 = pneg %p467
        %p836 = pneg %p464
        %p837 = pneg %p488
        %p838 = pneg %p485
        %p839 = pneg %p509
        %p840 = pneg %p506
        %p841 = pneg %p530
        %p842 = pneg %p527
        %p843 = pneg %p551
        %p844 = pneg %p548
        %p845 = pneg %p572
        %p846 = pneg %p569
        %p847 = pneg %p593
        %p848 = pneg %p590
        %p849 = pneg %p614
        %p850 = pneg %p611
        %p851 = pneg %p635
        %p852 = pneg %p632
        %p853 = pneg %p661
        %p854 = pneg %p658
        %s855 = sand.u32 %s648, 1
        %s856 = scalar_lea.sflag [#allocation3], %s855
        %s857 = sand.u32 %s648, 1
        %s858 = scalar_lea.vmem [#allocation2], %s857
        %s859 = smul.u32 2, %s42
        %p860 = scmp.lt.s32.totalorder %s859, 3
        %s861 = scalar_select %p860, %s859, 3
        %s862 = smul.addr %s861, 2
        %s863 = smul.addr %s862, 4
        %s864 = scalar_lea.vmem %s0, %s863
        %s865 = smul.u32 2, %s42
        %s866 = smul.u32 2, %s42
        %p867 = scmp.lt.s32.totalorder %s866, 3
        %s868 = scalar_select %p867, %s866, 3
        %s869 = smul.addr %s868, 2
        %s870 = smul.addr %s869, 4
        %s871 = scalar_lea.vmem %s1, %s870
        %s872 = smul.u32 2, %s42
        %v874 = vld [vmem:[%s864] sm:$0xf]
        %v875 = vld [vmem:[%s864 + $0x4] sm:$0xf]
        %v876 = vld [vmem:[%s864 + $0x8] sm:$0xf]
        %v877 = vld [vmem:[%s864 + $0xc] sm:$0xf]
        %v878 = vld [vmem:[%s871] sm:$0xf]
        %v879 = vld [vmem:[%s871 + $0x4] sm:$0xf]
        %v880 = vld [vmem:[%s871 + $0x8] sm:$0xf]
        %v881 = vld [vmem:[%s871 + $0xc] sm:$0xf]
        %v882 = vld [vmem:[%s2] sm:$0xff]
        %v883 = vld [vmem:[%s2 + $0x8] sm:$0xff]
        %v884 = vld [vmem:[%s2 + $0x10] sm:$0xff]
        %v885 = vld [vmem:[%s2 + $0x18] sm:$0xff]
        %v886 = vpack.c.bf16 %v883, %v882
        %v887 = vpack.c.bf16 %v885, %v884
        %v888 = vld [vmem:[%s3] sm:$0xff]
        %v889 = vld [vmem:[%s3 + $0x8] sm:$0xff]
        %v890 = vld [vmem:[%s3 + $0x10] sm:$0xff]
        %v891 = vld [vmem:[%s3 + $0x18] sm:$0xff]
        %v892 = vpack.c.bf16 %v889, %v888
        %v893 = vpack.c.bf16 %v891, %v890
        %v894 = vld [vmem:[%s4] sm:$0xff]
        %v895 = vld [vmem:[%s4 + $0x8] sm:$0xff]
        %v896 = vld [vmem:[%s4 + $0x10] sm:$0xff]
        %v897 = vld [vmem:[%s4 + $0x18] sm:$0xff]
        %v898 = vpack.c.bf16 %v895, %v894
        %v899 = vpack.c.bf16 %v897, %v896
        %v900 = vld [vmem:[%s6] sm:$0xff]
        %v901 = vld [vmem:[%s6 + $0x8] sm:$0xff]
        %v902 = vld [vmem:[%s6 + $0x10] sm:$0xff]
        %v903 = vld [vmem:[%s6 + $0x18] sm:$0xff]
        %v904 = vpack.c.bf16 %v901, %v900
        %v905 = vpack.c.bf16 %v903, %v902
        %v906 = vld [vmem:[%s7] sm:$0xff]
        %v907 = vld [vmem:[%s7 + $0x8] sm:$0xff]
        %v908 = vld [vmem:[%s7 + $0x10] sm:$0xff]
        %v909 = vld [vmem:[%s7 + $0x18] sm:$0xff]
        %v910 = vpack.c.bf16 %v907, %v906
        %v911 = vpack.c.bf16 %v909, %v908
        %v912 = vld [vmem:[%s9] sm:$0xff]
        %v913 = vld [vmem:[%s9 + $0x8] sm:$0xff]
        %v914 = vld [vmem:[%s9 + $0x10] sm:$0xff]
        %v915 = vld [vmem:[%s9 + $0x18] sm:$0xff]
        %v916 = vpack.c.bf16 %v913, %v912
        %v917 = vpack.c.bf16 %v915, %v914
        %v918 = vld [vmem:[%s10] sm:$0xff]
        %v919 = vld [vmem:[%s10 + $0x8] sm:$0xff]
        %v920 = vld [vmem:[%s10 + $0x10] sm:$0xff]
        %v921 = vld [vmem:[%s10 + $0x18] sm:$0xff]
        %v922 = vpack.c.bf16 %v919, %v918
        %v923 = vpack.c.bf16 %v921, %v920
        %v924 = vld [vmem:[%s13] sm:$0xff]
        %v925 = vld [vmem:[%s13 + $0x8] sm:$0xff]
        %v926 = vld [vmem:[%s13 + $0x10] sm:$0xff]
        %v927 = vld [vmem:[%s13 + $0x18] sm:$0xff]
        %v928 = vpack.c.bf16 %v925, %v924
        %v929 = vpack.c.bf16 %v927, %v926
        %v930 = vld [vmem:[%s14] sm:$0xff]
        %v931 = vld [vmem:[%s14 + $0x8] sm:$0xff]
        %v932 = vld [vmem:[%s14 + $0x10] sm:$0xff]
        %v933 = vld [vmem:[%s14 + $0x18] sm:$0xff]
        %v934 = vpack.c.bf16 %v931, %v930
        %v935 = vpack.c.bf16 %v933, %v932
        %v936 = vld [vmem:[%s15] sm:$0xff]
        %v937 = vld [vmem:[%s15 + $0x8] sm:$0xff]
        %v938 = vld [vmem:[%s15 + $0x10] sm:$0xff]
        %v939 = vld [vmem:[%s15 + $0x18] sm:$0xff]
        %v940 = vpack.c.bf16 %v937, %v936
        %v941 = vpack.c.bf16 %v939, %v938
        %v942 = vld [vmem:[%s16] sm:$0xff]
        %v943 = vld [vmem:[%s16 + $0x8] sm:$0xff]
        %v944 = vld [vmem:[%s16 + $0x10] sm:$0xff]
        %v945 = vld [vmem:[%s16 + $0x18] sm:$0xff]
        %v946 = vpack.c.bf16 %v943, %v942
        %v947 = vpack.c.bf16 %v945, %v944
        %v948 = vld [vmem:[%s18] sm:$0xff]
        %v949 = vld [vmem:[%s18 + $0x8] sm:$0xff]
        %v950 = vld [vmem:[%s18 + $0x10] sm:$0xff]
        %v951 = vld [vmem:[%s18 + $0x18] sm:$0xff]
        %v952 = vpack.c.bf16 %v949, %v948
        %v953 = vpack.c.bf16 %v951, %v950
        %v954 = vld [vmem:[%s20] sm:$0xff]
        %v955 = vld [vmem:[%s20 + $0x8] sm:$0xff]
        %v956 = vld [vmem:[%s20 + $0x10] sm:$0xff]
        %v957 = vld [vmem:[%s20 + $0x18] sm:$0xff]
        %v958 = vpack.c.bf16 %v955, %v954
        %v959 = vpack.c.bf16 %v957, %v956
        %v960 = vld [vmem:[%s22] sm:$0xff]
        %v961 = vld [vmem:[%s22 + $0x8] sm:$0xff]
        %v962 = vld [vmem:[%s22 + $0x10] sm:$0xff]
        %v963 = vld [vmem:[%s22 + $0x18] sm:$0xff]
        %v964 = vpack.c.bf16 %v961, %v960
        %v965 = vpack.c.bf16 %v963, %v962
        %v966 = vld [vmem:[%s24] sm:$0xff]
        %v967 = vld [vmem:[%s24 + $0x8] sm:$0xff]
        %v968 = vld [vmem:[%s24 + $0x10] sm:$0xff]
        %v969 = vld [vmem:[%s24 + $0x18] sm:$0xff]
        %v970 = vpack.c.bf16 %v967, %v966
        %v971 = vpack.c.bf16 %v969, %v968
        %v972 = vld [vmem:[%s26] sm:$0xff]
        %v973 = vld [vmem:[%s26 + $0x8] sm:$0xff]
        %v974 = vld [vmem:[%s26 + $0x10] sm:$0xff]
        %v975 = vld [vmem:[%s26 + $0x18] sm:$0xff]
        %v976 = vpack.c.bf16 %v973, %v972
        %v977 = vpack.c.bf16 %v975, %v974
        %v980 = vunpack.c.l.b16 %v878
        %v981 = vunpack.c.l.b16 %v879
        %v982 = vpack.c.b16 %v981, %v980
        %vm983 = vcmask 261120
        %v985 = vsel %vm983, %v982, 0
        %987 = vmatprep.subr.bf16.mxu0 0
        %988 = vmatpush1.bf16.xpose.msra.mxu0 %v985
        %989 = vmatprep.subr.bf16.mxu0 0
        %990 = vmatpush1.bf16.xpose.msra.mxu0 0
        %991 = vmatprep.subr.bf16.mxu0 0
        %992 = vmatpush1.bf16.xpose.msra.mxu0 0
        %993 = vmatprep.subr.bf16.mxu0 0
        %994 = vmatpush1.bf16.xpose.msra.mxu0 0
        %995 = vmatprep.subr.bf16.mxu0 0
        %996 = vmatpush1.bf16.xpose.msra.mxu0 0
        %997 = vmatprep.subr.bf16.mxu0 0
        %998 = vmatpush1.bf16.xpose.msra.mxu0 0
        %999 = vmatprep.subr.bf16.mxu0 0
        %1000 = vmatpush1.bf16.xpose.msra.mxu0 0
        %1001 = vmatprep.subr.bf16.mxu0 0
        %1002 = vmatpush1.bf16.xpose.msra.mxu0 0
        %1003 = vmatprep.subr.bf16.mxu0 0
        %1004 = vmatpush1.bf16.xpose.msra.mxu0 0
        %1005 = vmatprep.subr.bf16.mxu0 0
        %1006 = vmatpush1.bf16.xpose.msra.mxu0 0
        %1007 = vmatprep.subr.bf16.mxu0 0
        %1008 = vmatpush1.bf16.xpose.msra.mxu0 0
        %1009 = vmatprep.subr.bf16.mxu0 0
        %1010 = vmatpush1.bf16.xpose.msra.mxu0 0
        %1011 = vmatprep.subr.bf16.mxu0 0
        %1012 = vmatpush1.bf16.xpose.msra.mxu0 0
        %1013 = vmatprep.subr.bf16.mxu0 0
        %1014 = vmatpush1.bf16.xpose.msra.mxu0 0
        %1015 = vmatprep.subr.bf16.mxu0 0
        %1016 = vmatpush1.bf16.xpose.msra.mxu0 0
        %1017 = vmatprep.subr.bf16.mxu0 0
        %1018 = vmatpush1.bf16.xpose.msra.mxu0 0
        %1019 = vmatprep.mubr.bf16.mxu0 0
        %1020 = vmatmul.mubr.bf16.gmra.mrb[0].mxu0 %v985
        %v1021 = vpop.f32.mrb[0].mxu0
        %v1022 = vadd.f32 0.0, %v1021
        %v1023 = vpop.f32.mrb[0].mxu0
        %v1024 = vpop.f32.mrb[0].mxu0
        %v1025 = vadd.f32 0.0, %v1024
        %v1026 = vpop.f32.mrb[0].mxu0
        %1027 = vdwg.mxu0
        %v1030 = vunpack.c.l.b16 %v880
        %v1031 = vunpack.c.l.b16 %v881
        %v1032 = vpack.c.b16 %v1031, %v1030
        %v1034 = vsel %vm983, %v1032, 0
        %1036 = vmatprep.subr.bf16.mxu0 0
        %1037 = vmatpush1.bf16.xpose.msra.mxu0 %v1034
        %1038 = vmatprep.subr.bf16.mxu0 0
        %1039 = vmatpush1.bf16.xpose.msra.mxu0 0
        %1040 = vmatprep.subr.bf16.mxu0 0
        %1041 = vmatpush1.bf16.xpose.msra.mxu0 0
        %1042 = vmatprep.subr.bf16.mxu0 0
        %1043 = vmatpush1.bf16.xpose.msra.mxu0 0
        %1044 = vmatprep.subr.bf16.mxu0 0
        %1045 = vmatpush1.bf16.xpose.msra.mxu0 0
        %1046 = vmatprep.subr.bf16.mxu0 0
        %1047 = vmatpush1.bf16.xpose.msra.mxu0 0
        %1048 = vmatprep.subr.bf16.mxu0 0
        %1049 = vmatpush1.bf16.xpose.msra.mxu0 0
        %1050 = vmatprep.subr.bf16.mxu0 0
        %1051 = vmatpush1.bf16.xpose.msra.mxu0 0
        %1052 = vmatprep.subr.bf16.mxu0 0
        %1053 = vmatpush1.bf16.xpose.msra.mxu0 0
        %1054 = vmatprep.subr.bf16.mxu0 0
        %1055 = vmatpush1.bf16.xpose.msra.mxu0 0
        %1056 = vmatprep.subr.bf16.mxu0 0
        %1057 = vmatpush1.bf16.xpose.msra.mxu0 0
        %1058 = vmatprep.subr.bf16.mxu0 0
        %1059 = vmatpush1.bf16.xpose.msra.mxu0 0
        %1060 = vmatprep.subr.bf16.mxu0 0
        %1061 = vmatpush1.bf16.xpose.msra.mxu0 0
        %1062 = vmatprep.subr.bf16.mxu0 0
        %1063 = vmatpush1.bf16.xpose.msra.mxu0 0
        %1064 = vmatprep.subr.bf16.mxu0 0
        %1065 = vmatpush1.bf16.xpose.msra.mxu0 0
        %1066 = vmatprep.subr.bf16.mxu0 0
        %1067 = vmatpush1.bf16.xpose.msra.mxu0 0
        %1068 = vmatprep.mubr.bf16.mxu0 0
        %1069 = vmatmul.mubr.bf16.gmra.mrb[0].mxu0 %v1034
        %v1070 = vpop.f32.mrb[0].mxu0
        %v1071 = vadd.f32 0.0, %v1070
        %v1072 = vpop.f32.mrb[0].mxu0
        %v1073 = vpop.f32.mrb[0].mxu0
        %v1074 = vadd.f32 0.0, %v1073
        %v1075 = vpop.f32.mrb[0].mxu0
        %1076 = vdwg.mxu0
        %v1077 = vmul.f32 %v1022, 0.17677669
        %v1078 = vmul.f32 %v1025, 0.17677669
        %v1079 = vmul.f32 %v1071, 0.17677669
        %v1080 = vmul.f32 %v1074, 0.17677669
        %vm1081 = vcmask 130048
        %v1082 = vsel %vm1081, %v1077, -inf
        %1083 = vmax.xlane.f32.xlu0 %v1082
        %v1084 = vpop.xlane.xlu0 %1083
        %v1085 = vsel %vm1081, %v1078, -inf
        %1086 = vmax.xlane.f32.xlu0 %v1085
        %v1087 = vpop.xlane.xlu0 %1086
        %v1088 = vsel %vm1081, %v1079, -inf
        %1089 = vmax.xlane.f32.xlu0 %v1088
        %v1090 = vpop.xlane.xlu0 %1089
        %v1091 = vsel %vm1081, %v1080, -inf
        %1092 = vmax.xlane.f32.xlu0 %v1091
        %v1093 = vpop.xlane.xlu0 %1092
        %v1094 = vsub.f32 %v1077, %v1084
        %v1095 = vsub.f32 %v1078, %v1087
        %v1096 = vsub.f32 %v1079, %v1090
        %v1097 = vsub.f32 %v1080, %v1093
        %v1098 = vmul.f32 %v1094, 1.442695
        %v1099 = vpow.pop %v1098
        %v1100 = vmul.f32 %v1095, 1.442695
        %v1101 = vpow.pop %v1100
        %v1102 = vmul.f32 %v1096, 1.442695
        %v1103 = vpow.pop %v1102
        %v1104 = vmul.f32 %v1097, 1.442695
        %v1105 = vpow.pop %v1104
        %v1106 = vsel %vm1081, %v1099, 0.0
        %1107 = vadd.xlane.f32.xlu0 %v1106
        %v1108 = vpop.xlane.xlu0 %1107
        %v1109 = vsel %vm1081, %v1101, 0.0
        %1110 = vadd.xlane.f32.xlu0 %v1109
        %v1111 = vpop.xlane.xlu0 %1110
        %v1112 = vsel %vm1081, %v1103, 0.0
        %1113 = vadd.xlane.f32.xlu0 %v1112
        %v1114 = vpop.xlane.xlu0 %1113
        %v1115 = vsel %vm1081, %v1105, 0.0
        %1116 = vadd.xlane.f32.xlu0 %v1115
        %v1117 = vpop.xlane.xlu0 %1116
        %v1118 = vrcp.pop %v1108
        %v1119 = vrcp.pop %v1111
        %v1120 = vrcp.pop %v1114
        %v1121 = vrcp.pop %v1117
        %v1122 = vmul.f32 %v1099, %v1118
        %v1123 = vmul.f32 %v1101, %v1119
        %v1124 = vmul.f32 %v1103, %v1120
        %v1125 = vmul.f32 %v1105, %v1121
        %v1126 = vpack.c.bf16 %v1123, %v1122
        %v1127 = vpack.c.bf16 %v1125, %v1124
        %v1130 = vsel %vm1081, %v1126, 0
        %1132 = vmatprep.subr.bf16.mxu0 0
        %1133 = vmatpush1.bf16.msra.mxu0 %v982
        %1134 = vmatprep.subr.bf16.mxu0 0
        %1135 = vmatpush1.bf16.msra.mxu0 0
        %1136 = vmatprep.subr.bf16.mxu0 0
        %1137 = vmatpush1.bf16.msra.mxu0 0
        %1138 = vmatprep.subr.bf16.mxu0 0
        %1139 = vmatpush1.bf16.msra.mxu0 0
        %1140 = vmatprep.subr.bf16.mxu0 0
        %1141 = vmatpush1.bf16.msra.mxu0 0
        %1142 = vmatprep.subr.bf16.mxu0 0
        %1143 = vmatpush1.bf16.msra.mxu0 0
        %1144 = vmatprep.subr.bf16.mxu0 0
        %1145 = vmatpush1.bf16.msra.mxu0 0
        %1146 = vmatprep.subr.bf16.mxu0 0
        %1147 = vmatpush1.bf16.msra.mxu0 0
        %1148 = vmatprep.subr.bf16.mxu0 0
        %1149 = vmatpush1.bf16.msra.mxu0 0
        %1150 = vmatprep.subr.bf16.mxu0 0
        %1151 = vmatpush1.bf16.msra.mxu0 0
        %1152 = vmatprep.subr.bf16.mxu0 0
        %1153 = vmatpush1.bf16.msra.mxu0 0
        %1154 = vmatprep.subr.bf16.mxu0 0
        %1155 = vmatpush1.bf16.msra.mxu0 0
        %1156 = vmatprep.subr.bf16.mxu0 0
        %1157 = vmatpush1.bf16.msra.mxu0 0
        %1158 = vmatprep.subr.bf16.mxu0 0
        %1159 = vmatpush1.bf16.msra.mxu0 0
        %1160 = vmatprep.subr.bf16.mxu0 0
        %1161 = vmatpush1.bf16.msra.mxu0 0
        %1162 = vmatprep.subr.bf16.mxu0 0
        %1163 = vmatpush1.bf16.msra.mxu0 0
        %1164 = vmatprep.mubr.bf16.mxu0 0
        %1165 = vmatmul.mubr.bf16.gmra.mrb[0].mxu0 %v1130
        %v1166 = vpop.f32.mrb[0].mxu0
        %v1167 = vadd.f32 0.0, %v1166
        %v1168 = vpop.f32.mrb[0].mxu0
        %v1169 = vpop.f32.mrb[0].mxu0
        %v1170 = vadd.f32 0.0, %v1169
        %v1171 = vpop.f32.mrb[0].mxu0
        %1172 = vdwg.mxu0
        %v1175 = vsel %vm1081, %v1127, 0
        %1177 = vmatprep.subr.bf16.mxu0 0
        %1178 = vmatpush1.bf16.msra.mxu0 %v1032
        %1179 = vmatprep.subr.bf16.mxu0 0
        %1180 = vmatpush1.bf16.msra.mxu0 0
        %1181 = vmatprep.subr.bf16.mxu0 0
        %1182 = vmatpush1.bf16.msra.mxu0 0
        %1183 = vmatprep.subr.bf16.mxu0 0
        %1184 = vmatpush1.bf16.msra.mxu0 0
        %1185 = vmatprep.subr.bf16.mxu0 0
        %1186 = vmatpush1.bf16.msra.mxu0 0
        %1187 = vmatprep.subr.bf16.mxu0 0
        %1188 = vmatpush1.bf16.msra.mxu0 0
        %1189 = vmatprep.subr.bf16.mxu0 0
        %1190 = vmatpush1.bf16.msra.mxu0 0
        %1191 = vmatprep.subr.bf16.mxu0 0
        %1192 = vmatpush1.bf16.msra.mxu0 0
        %1193 = vmatprep.subr.bf16.mxu0 0
        %1194 = vmatpush1.bf16.msra.mxu0 0
        %1195 = vmatprep.subr.bf16.mxu0 0
        %1196 = vmatpush1.bf16.msra.mxu0 0
        %1197 = vmatprep.subr.bf16.mxu0 0
        %1198 = vmatpush1.bf16.msra.mxu0 0
        %1199 = vmatprep.subr.bf16.mxu0 0
        %1200 = vmatpush1.bf16.msra.mxu0 0
        %1201 = vmatprep.subr.bf16.mxu0 0
        %1202 = vmatpush1.bf16.msra.mxu0 0
        %1203 = vmatprep.subr.bf16.mxu0 0
        %1204 = vmatpush1.bf16.msra.mxu0 0
        %1205 = vmatprep.subr.bf16.mxu0 0
        %1206 = vmatpush1.bf16.msra.mxu0 0
        %1207 = vmatprep.subr.bf16.mxu0 0
        %1208 = vmatpush1.bf16.msra.mxu0 0
        %1209 = vmatprep.mubr.bf16.mxu0 0
        %1210 = vmatmul.mubr.bf16.gmra.mrb[0].mxu0 %v1175
        %v1211 = vpop.f32.mrb[0].mxu0
        %v1212 = vadd.f32 0.0, %v1211
        %v1213 = vpop.f32.mrb[0].mxu0
        %v1214 = vpop.f32.mrb[0].mxu0
        %v1215 = vadd.f32 0.0, %v1214
        %v1216 = vpop.f32.mrb[0].mxu0
        %1217 = vdwg.mxu0
        %v1218 = vpack.c.bf16 %v1170, %v1167
        %v1219 = vpack.c.bf16 %v1215, %v1212
        %v1221 = vsel %vm983, %v1218, 0
        %v1224 = vsel %vm983, %v1219, 0
        %1226 = vmatprep.subr.bf16.mxu0 0
        %1227 = vmatpush1.bf16.msra.mxu0 %v886
        %1228 = vmatprep.subr.bf16.mxu0 0
        %1229 = vmatpush1.bf16.msra.mxu0 %v887
        %1230 = vmatprep.subr.bf16.mxu0 0
        %1231 = vmatpush1.bf16.msra.mxu0 0
        %1232 = vmatprep.subr.bf16.mxu0 0
        %1233 = vmatpush1.bf16.msra.mxu0 0
        %1234 = vmatprep.subr.bf16.mxu0 0
        %1235 = vmatpush1.bf16.msra.mxu0 0
        %1236 = vmatprep.subr.bf16.mxu0 0
        %1237 = vmatpush1.bf16.msra.mxu0 0
        %1238 = vmatprep.subr.bf16.mxu0 0
        %1239 = vmatpush1.bf16.msra.mxu0 0
        %1240 = vmatprep.subr.bf16.mxu0 0
        %1241 = vmatpush1.bf16.msra.mxu0 0
        %1242 = vmatprep.subr.bf16.mxu0 0
        %1243 = vmatpush1.bf16.msra.mxu0 0
        %1244 = vmatprep.subr.bf16.mxu0 0
        %1245 = vmatpush1.bf16.msra.mxu0 0
        %1246 = vmatprep.subr.bf16.mxu0 0
        %1247 = vmatpush1.bf16.msra.mxu0 0
        %1248 = vmatprep.subr.bf16.mxu0 0
        %1249 = vmatpush1.bf16.msra.mxu0 0
        %1250 = vmatprep.subr.bf16.mxu0 0
        %1251 = vmatpush1.bf16.msra.mxu0 0
        %1252 = vmatprep.subr.bf16.mxu0 0
        %1253 = vmatpush1.bf16.msra.mxu0 0
        %1254 = vmatprep.subr.bf16.mxu0 0
        %1255 = vmatpush1.bf16.msra.mxu0 0
        %1256 = vmatprep.subr.bf16.mxu0 0
        %1257 = vmatpush1.bf16.msra.mxu0 0
        %1258 = vmatprep.mubr.bf16.mxu0 0
        %1259 = vmatmul.mubr.bf16.gmra.mrb[0].mxu0 %v1221
        %v1260 = vpop.f32.mrb[0].mxu0
        %v1261 = vadd.f32 0.0, %v1260
        %v1262 = vpop.f32.mrb[0].mxu0
        %v1263 = vpop.f32.mrb[0].mxu0
        %v1264 = vadd.f32 0.0, %v1263
        %v1265 = vpop.f32.mrb[0].mxu0
        %1266 = vmatprep.mubr.bf16.mxu0 0
        %1267 = vmatmul.mubr.bf16.gmra.mrb[0].mxu0 %v1224
        %v1268 = vpop.f32.mrb[0].mxu0
        %v1269 = vadd.f32 0.0, %v1268
        %v1270 = vpop.f32.mrb[0].mxu0
        %v1271 = vpop.f32.mrb[0].mxu0
        %v1272 = vadd.f32 0.0, %v1271
        %v1273 = vpop.f32.mrb[0].mxu0
        %1274 = vdwg.mxu0
        %v1275 = vpack.c.bf16 %v1264, %v1261
        %v1276 = vpack.c.bf16 %v1272, %v1269
        %v1278 = vsel %vm983, %v1275, 0
        %1280 = vmatprep.subr.bf16.mxu0 0
        %1281 = vmatpush1.bf16.xpose.msra.mxu0 %v1224
        %1282 = vmatprep.subr.bf16.mxu0 0
        %1283 = vmatpush1.bf16.xpose.msra.mxu0 0
        %1284 = vmatprep.subr.bf16.mxu0 0
        %1285 = vmatpush1.bf16.xpose.msra.mxu0 0
        %1286 = vmatprep.subr.bf16.mxu0 0
        %1287 = vmatpush1.bf16.xpose.msra.mxu0 0
        %1288 = vmatprep.subr.bf16.mxu0 0
        %1289 = vmatpush1.bf16.xpose.msra.mxu0 0
        %1290 = vmatprep.subr.bf16.mxu0 0
        %1291 = vmatpush1.bf16.xpose.msra.mxu0 0
        %1292 = vmatprep.subr.bf16.mxu0 0
        %1293 = vmatpush1.bf16.xpose.msra.mxu0 0
        %1294 = vmatprep.subr.bf16.mxu0 0
        %1295 = vmatpush1.bf16.xpose.msra.mxu0 0
        %1296 = vmatprep.subr.bf16.mxu0 0
        %1297 = vmatpush1.bf16.xpose.msra.mxu0 0
        %1298 = vmatprep.subr.bf16.mxu0 0
        %1299 = vmatpush1.bf16.xpose.msra.mxu0 0
        %1300 = vmatprep.subr.bf16.mxu0 0
        %1301 = vmatpush1.bf16.xpose.msra.mxu0 0
        %1302 = vmatprep.subr.bf16.mxu0 0
        %1303 = vmatpush1.bf16.xpose.msra.mxu0 0
        %1304 = vmatprep.subr.bf16.mxu0 0
        %1305 = vmatpush1.bf16.xpose.msra.mxu0 0
        %1306 = vmatprep.subr.bf16.mxu0 0
        %1307 = vmatpush1.bf16.xpose.msra.mxu0 0
        %1308 = vmatprep.subr.bf16.mxu0 0
        %1309 = vmatpush1.bf16.xpose.msra.mxu0 0
        %1310 = vmatprep.subr.bf16.mxu0 0
        %1311 = vmatpush1.bf16.xpose.msra.mxu0 0
        %1312 = vmatprep.mubr.bf16.mxu0 0
        %1313 = vmatmul.mubr.bf16.gmra.mrb[0].mxu0 %v1278
        %v1314 = vpop.f32.mrb[0].mxu0
        %v1315 = vadd.f32 0.0, %v1314
        %v1316 = vpop.f32.mrb[0].mxu0
        %v1317 = vpop.f32.mrb[0].mxu0
        %v1318 = vadd.f32 0.0, %v1317
        %v1319 = vpop.f32.mrb[0].mxu0
        %1320 = vdwg.mxu0
        %v1322 = vsel %vm983, %v1276, 0
        %1324 = vmatprep.subr.bf16.mxu0 0
        %1325 = vmatpush1.bf16.xpose.msra.mxu0 %v1221
        %1326 = vmatprep.subr.bf16.mxu0 0
        %1327 = vmatpush1.bf16.xpose.msra.mxu0 0
        %1328 = vmatprep.subr.bf16.mxu0 0
        %1329 = vmatpush1.bf16.xpose.msra.mxu0 0
        %1330 = vmatprep.subr.bf16.mxu0 0
        %1331 = vmatpush1.bf16.xpose.msra.mxu0 0
        %1332 = vmatprep.subr.bf16.mxu0 0
        %1333 = vmatpush1.bf16.xpose.msra.mxu0 0
        %1334 = vmatprep.subr.bf16.mxu0 0
        %1335 = vmatpush1.bf16.xpose.msra.mxu0 0
        %1336 = vmatprep.subr.bf16.mxu0 0
        %1337 = vmatpush1.bf16.xpose.msra.mxu0 0
        %1338 = vmatprep.subr.bf16.mxu0 0
        %1339 = vmatpush1.bf16.xpose.msra.mxu0 0
        %1340 = vmatprep.subr.bf16.mxu0 0
        %1341 = vmatpush1.bf16.xpose.msra.mxu0 0
        %1342 = vmatprep.subr.bf16.mxu0 0
        %1343 = vmatpush1.bf16.xpose.msra.mxu0 0
        %1344 = vmatprep.subr.bf16.mxu0 0
        %1345 = vmatpush1.bf16.xpose.msra.mxu0 0
        %1346 = vmatprep.subr.bf16.mxu0 0
        %1347 = vmatpush1.bf16.xpose.msra.mxu0 0
        %1348 = vmatprep.subr.bf16.mxu0 0
        %1349 = vmatpush1.bf16.xpose.msra.mxu0 0
        %1350 = vmatprep.subr.bf16.mxu0 0
        %1351 = vmatpush1.bf16.xpose.msra.mxu0 0
        %1352 = vmatprep.subr.bf16.mxu0 0
        %1353 = vmatpush1.bf16.xpose.msra.mxu0 0
        %1354 = vmatprep.subr.bf16.mxu0 0
        %1355 = vmatpush1.bf16.xpose.msra.mxu0 0
        %1356 = vmatprep.mubr.bf16.mxu0 0
        %1357 = vmatmul.mubr.bf16.gmra.mrb[0].mxu0 %v1322
        %v1358 = vpop.f32.mrb[0].mxu0
        %v1359 = vadd.f32 0.0, %v1358
        %v1360 = vpop.f32.mrb[0].mxu0
        %v1361 = vpop.f32.mrb[0].mxu0
        %v1362 = vadd.f32 0.0, %v1361
        %v1363 = vpop.f32.mrb[0].mxu0
        %1364 = vdwg.mxu0
        %v1365 = vmul.f32 %v1315, 0.17677669
        %v1366 = vmul.f32 %v1318, 0.17677669
        %v1367 = vmul.f32 %v1359, 0.17677669
        %v1368 = vmul.f32 %v1362, 0.17677669
        %v1369 = vsel %vm1081, %v1365, -inf
        %1370 = vmax.xlane.f32.xlu0 %v1369
        %v1371 = vpop.xlane.xlu0 %1370
        %v1372 = vsel %vm1081, %v1366, -inf
        %1373 = vmax.xlane.f32.xlu0 %v1372
        %v1374 = vpop.xlane.xlu0 %1373
        %v1375 = vsel %vm1081, %v1367, -inf
        %1376 = vmax.xlane.f32.xlu0 %v1375
        %v1377 = vpop.xlane.xlu0 %1376
        %v1378 = vsel %vm1081, %v1368, -inf
        %1379 = vmax.xlane.f32.xlu0 %v1378
        %v1380 = vpop.xlane.xlu0 %1379
        %v1381 = vsub.f32 %v1365, %v1371
        %v1382 = vsub.f32 %v1366, %v1374
        %v1383 = vsub.f32 %v1367, %v1377
        %v1384 = vsub.f32 %v1368, %v1380
        %v1385 = vmul.f32 %v1381, 1.442695
        %v1386 = vpow.pop %v1385
        %v1387 = vmul.f32 %v1382, 1.442695
        %v1388 = vpow.pop %v1387
        %v1389 = vmul.f32 %v1383, 1.442695
        %v1390 = vpow.pop %v1389
        %v1391 = vmul.f32 %v1384, 1.442695
        %v1392 = vpow.pop %v1391
        %v1393 = vsel %vm1081, %v1386, 0.0
        %1394 = vadd.xlane.f32.xlu0 %v1393
        %v1395 = vpop.xlane.xlu0 %1394
        %v1396 = vsel %vm1081, %v1388, 0.0
        %1397 = vadd.xlane.f32.xlu0 %v1396
        %v1398 = vpop.xlane.xlu0 %1397
        %v1399 = vsel %vm1081, %v1390, 0.0
        %1400 = vadd.xlane.f32.xlu0 %v1399
        %v1401 = vpop.xlane.xlu0 %1400
        %v1402 = vsel %vm1081, %v1392, 0.0
        %1403 = vadd.xlane.f32.xlu0 %v1402
        %v1404 = vpop.xlane.xlu0 %1403
        %v1405 = vrcp.pop %v1395
        %v1406 = vrcp.pop %v1398
        %v1407 = vrcp.pop %v1401
        %v1408 = vrcp.pop %v1404
        %v1409 = vmul.f32 %v1386, %v1405
        %v1410 = vmul.f32 %v1388, %v1406
        %v1411 = vmul.f32 %v1390, %v1407
        %v1412 = vmul.f32 %v1392, %v1408
        %v1413 = vpack.c.bf16 %v1410, %v1409
        %v1414 = vpack.c.bf16 %v1412, %v1411
        %v1417 = vunpack.c.l.b16 %v876
        %v1418 = vunpack.c.l.b16 %v877
        %v1419 = vpack.c.b16 %v1418, %v1417
        %v1422 = vsel %vm1081, %v1413, 0
        %1424 = vmatprep.subr.bf16.mxu0 0
        %1425 = vmatpush1.bf16.msra.mxu0 %v1419
        %1426 = vmatprep.subr.bf16.mxu0 0
        %1427 = vmatpush1.bf16.msra.mxu0 0
        %1428 = vmatprep.subr.bf16.mxu0 0
        %1429 = vmatpush1.bf16.msra.mxu0 0
        %1430 = vmatprep.subr.bf16.mxu0 0
        %1431 = vmatpush1.bf16.msra.mxu0 0
        %1432 = vmatprep.subr.bf16.mxu0 0
        %1433 = vmatpush1.bf16.msra.mxu0 0
        %1434 = vmatprep.subr.bf16.mxu0 0
        %1435 = vmatpush1.bf16.msra.mxu0 0
        %1436 = vmatprep.subr.bf16.mxu0 0
        %1437 = vmatpush1.bf16.msra.mxu0 0
        %1438 = vmatprep.subr.bf16.mxu0 0
        %1439 = vmatpush1.bf16.msra.mxu0 0
        %1440 = vmatprep.subr.bf16.mxu0 0
        %1441 = vmatpush1.bf16.msra.mxu0 0
        %1442 = vmatprep.subr.bf16.mxu0 0
        %1443 = vmatpush1.bf16.msra.mxu0 0
        %1444 = vmatprep.subr.bf16.mxu0 0
        %1445 = vmatpush1.bf16.msra.mxu0 0
        %1446 = vmatprep.subr.bf16.mxu0 0
        %1447 = vmatpush1.bf16.msra.mxu0 0
        %1448 = vmatprep.subr.bf16.mxu0 0
        %1449 = vmatpush1.bf16.msra.mxu0 0
        %1450 = vmatprep.subr.bf16.mxu0 0
        %1451 = vmatpush1.bf16.msra.mxu0 0
        %1452 = vmatprep.subr.bf16.mxu0 0
        %1453 = vmatpush1.bf16.msra.mxu0 0
        %1454 = vmatprep.subr.bf16.mxu0 0
        %1455 = vmatpush1.bf16.msra.mxu0 0
        %1456 = vmatprep.mubr.bf16.mxu0 0
        %1457 = vmatmul.mubr.bf16.gmra.mrb[0].mxu0 %v1422
        %v1458 = vpop.f32.mrb[0].mxu0
        %v1459 = vadd.f32 0.0, %v1458
        %v1460 = vpop.f32.mrb[0].mxu0
        %v1461 = vpop.f32.mrb[0].mxu0
        %v1462 = vadd.f32 0.0, %v1461
        %v1463 = vpop.f32.mrb[0].mxu0
        %1464 = vdwg.mxu0
        %v1467 = vunpack.c.l.b16 %v874
        %v1468 = vunpack.c.l.b16 %v875
        %v1469 = vpack.c.b16 %v1468, %v1467
        %v1472 = vsel %vm1081, %v1414, 0
        %1474 = vmatprep.subr.bf16.mxu0 0
        %1475 = vmatpush1.bf16.msra.mxu0 %v1469
        %1476 = vmatprep.subr.bf16.mxu0 0
        %1477 = vmatpush1.bf16.msra.mxu0 0
        %1478 = vmatprep.subr.bf16.mxu0 0
        %1479 = vmatpush1.bf16.msra.mxu0 0
        %1480 = vmatprep.subr.bf16.mxu0 0
        %1481 = vmatpush1.bf16.msra.mxu0 0
        %1482 = vmatprep.subr.bf16.mxu0 0
        %1483 = vmatpush1.bf16.msra.mxu0 0
        %1484 = vmatprep.subr.bf16.mxu0 0
        %1485 = vmatpush1.bf16.msra.mxu0 0
        %1486 = vmatprep.subr.bf16.mxu0 0
        %1487 = vmatpush1.bf16.msra.mxu0 0
        %1488 = vmatprep.subr.bf16.mxu0 0
        %1489 = vmatpush1.bf16.msra.mxu0 0
        %1490 = vmatprep.subr.bf16.mxu0 0
        %1491 = vmatpush1.bf16.msra.mxu0 0
        %1492 = vmatprep.subr.bf16.mxu0 0
        %1493 = vmatpush1.bf16.msra.mxu0 0
        %1494 = vmatprep.subr.bf16.mxu0 0
        %1495 = vmatpush1.bf16.msra.mxu0 0
        %1496 = vmatprep.subr.bf16.mxu0 0
        %1497 = vmatpush1.bf16.msra.mxu0 0
        %1498 = vmatprep.subr.bf16.mxu0 0
        %1499 = vmatpush1.bf16.msra.mxu0 0
        %1500 = vmatprep.subr.bf16.mxu0 0
        %1501 = vmatpush1.bf16.msra.mxu0 0
        %1502 = vmatprep.subr.bf16.mxu0 0
        %1503 = vmatpush1.bf16.msra.mxu0 0
        %1504 = vmatprep.subr.bf16.mxu0 0
        %1505 = vmatpush1.bf16.msra.mxu0 0
        %1506 = vmatprep.mubr.bf16.mxu0 0
        %1507 = vmatmul.mubr.bf16.gmra.mrb[0].mxu0 %v1472
        %v1508 = vpop.f32.mrb[0].mxu0
        %v1509 = vadd.f32 0.0, %v1508
        %v1510 = vpop.f32.mrb[0].mxu0
        %v1511 = vpop.f32.mrb[0].mxu0
        %v1512 = vadd.f32 0.0, %v1511
        %v1513 = vpop.f32.mrb[0].mxu0
        %1514 = vdwg.mxu0
        %v1515 = vpack.c.bf16 %v1462, %v1459
        %v1516 = vpack.c.bf16 %v1512, %v1509
        %v1518 = vsel %vm983, %v1515, 0
        %v1521 = vsel %vm983, %v1516, 0
        %1523 = vmatprep.subr.bf16.mxu0 0
        %1524 = vmatpush1.bf16.msra.mxu0 %v898
        %1525 = vmatprep.subr.bf16.mxu0 0
        %1526 = vmatpush1.bf16.msra.mxu0 %v899
        %1527 = vmatprep.subr.bf16.mxu0 0
        %1528 = vmatpush1.bf16.msra.mxu0 0
        %1529 = vmatprep.subr.bf16.mxu0 0
        %1530 = vmatpush1.bf16.msra.mxu0 0
        %1531 = vmatprep.subr.bf16.mxu0 0
        %1532 = vmatpush1.bf16.msra.mxu0 0
        %1533 = vmatprep.subr.bf16.mxu0 0
        %1534 = vmatpush1.bf16.msra.mxu0 0
        %1535 = vmatprep.subr.bf16.mxu0 0
        %1536 = vmatpush1.bf16.msra.mxu0 0
        %1537 = vmatprep.subr.bf16.mxu0 0
        %1538 = vmatpush1.bf16.msra.mxu0 0
        %1539 = vmatprep.subr.bf16.mxu0 0
        %1540 = vmatpush1.bf16.msra.mxu0 0
        %1541 = vmatprep.subr.bf16.mxu0 0
        %1542 = vmatpush1.bf16.msra.mxu0 0
        %1543 = vmatprep.subr.bf16.mxu0 0
        %1544 = vmatpush1.bf16.msra.mxu0 0
        %1545 = vmatprep.subr.bf16.mxu0 0
        %1546 = vmatpush1.bf16.msra.mxu0 0
        %1547 = vmatprep.subr.bf16.mxu0 0
        %1548 = vmatpush1.bf16.msra.mxu0 0
        %1549 = vmatprep.subr.bf16.mxu0 0
        %1550 = vmatpush1.bf16.msra.mxu0 0
        %1551 = vmatprep.subr.bf16.mxu0 0
        %1552 = vmatpush1.bf16.msra.mxu0 0
        %1553 = vmatprep.subr.bf16.mxu0 0
        %1554 = vmatpush1.bf16.msra.mxu0 0
        %1555 = vmatprep.mubr.bf16.mxu0 0
        %1556 = vmatmul.mubr.bf16.gmra.mrb[0].mxu0 %v1518
        %v1557 = vpop.f32.mrb[0].mxu0
        %v1558 = vadd.f32 0.0, %v1557
        %v1559 = vpop.f32.mrb[0].mxu0
        %v1560 = vpop.f32.mrb[0].mxu0
        %v1561 = vadd.f32 0.0, %v1560
        %v1562 = vpop.f32.mrb[0].mxu0
        %1563 = vmatprep.mubr.bf16.mxu0 0
        %1564 = vmatmul.mubr.bf16.gmra.mrb[0].mxu0 %v1521
        %v1565 = vpop.f32.mrb[0].mxu0
        %v1566 = vadd.f32 0.0, %v1565
        %v1567 = vpop.f32.mrb[0].mxu0
        %v1568 = vpop.f32.mrb[0].mxu0
        %v1569 = vadd.f32 0.0, %v1568
        %v1570 = vpop.f32.mrb[0].mxu0
        %1571 = vdwg.mxu0
        %1572 = vmatprep.subr.bf16.mxu0 0
        %1573 = vmatpush1.bf16.msra.mxu0 %v892
        %1574 = vmatprep.subr.bf16.mxu0 0
        %1575 = vmatpush1.bf16.msra.mxu0 %v893
        %1576 = vmatprep.subr.bf16.mxu0 0
        %1577 = vmatpush1.bf16.msra.mxu0 0
        %1578 = vmatprep.subr.bf16.mxu0 0
        %1579 = vmatpush1.bf16.msra.mxu0 0
        %1580 = vmatprep.subr.bf16.mxu0 0
        %1581 = vmatpush1.bf16.msra.mxu0 0
        %1582 = vmatprep.subr.bf16.mxu0 0
        %1583 = vmatpush1.bf16.msra.mxu0 0
        %1584 = vmatprep.subr.bf16.mxu0 0
        %1585 = vmatpush1.bf16.msra.mxu0 0
        %1586 = vmatprep.subr.bf16.mxu0 0
        %1587 = vmatpush1.bf16.msra.mxu0 0
        %1588 = vmatprep.subr.bf16.mxu0 0
        %1589 = vmatpush1.bf16.msra.mxu0 0
        %1590 = vmatprep.subr.bf16.mxu0 0
        %1591 = vmatpush1.bf16.msra.mxu0 0
        %1592 = vmatprep.subr.bf16.mxu0 0
        %1593 = vmatpush1.bf16.msra.mxu0 0
        %1594 = vmatprep.subr.bf16.mxu0 0
        %1595 = vmatpush1.bf16.msra.mxu0 0
        %1596 = vmatprep.subr.bf16.mxu0 0
        %1597 = vmatpush1.bf16.msra.mxu0 0
        %1598 = vmatprep.subr.bf16.mxu0 0
        %1599 = vmatpush1.bf16.msra.mxu0 0
        %1600 = vmatprep.subr.bf16.mxu0 0
        %1601 = vmatpush1.bf16.msra.mxu0 0
        %1602 = vmatprep.subr.bf16.mxu0 0
        %1603 = vmatpush1.bf16.msra.mxu0 0
        %1604 = vmatprep.mubr.bf16.mxu0 0
        %1605 = vmatmul.mubr.bf16.gmra.mrb[0].mxu0 %v1221
        %v1606 = vpop.f32.mrb[0].mxu0
        %v1607 = vadd.f32 %v1558, %v1606
        %v1608 = vpop.f32.mrb[0].mxu0
        %v1609 = vpop.f32.mrb[0].mxu0
        %v1610 = vadd.f32 %v1561, %v1609
        %v1611 = vpop.f32.mrb[0].mxu0
        %1612 = vmatprep.mubr.bf16.mxu0 0
        %1613 = vmatmul.mubr.bf16.gmra.mrb[0].mxu0 %v1224
        %v1614 = vpop.f32.mrb[0].mxu0
        %v1615 = vadd.f32 %v1566, %v1614
        %v1616 = vpop.f32.mrb[0].mxu0
        %v1617 = vpop.f32.mrb[0].mxu0
        %v1618 = vadd.f32 %v1569, %v1617
        %v1619 = vpop.f32.mrb[0].mxu0
        %1620 = vdwg.mxu0
        %v1621 = vld [vmem:[%s5] sm:$0x1]
        %v1623 = vlaneseq
        %v1624 = vshrl.u32 %v1623, 7
        %v1625 = vsub.s32 0, %v1624
        %v1626 = vrot.slane %v1621, %v1625
        %v1628 = vadd.f32 %v1607, %v1626
        %v1629 = vadd.f32 %v1610, %v1626
        %v1630 = vadd.f32 %v1615, %v1626
        %v1631 = vadd.f32 %v1618, %v1626
        %v1632 = vxor.u32 %v1628, 2147483648
        %v1633 = vxor.u32 %v1629, 2147483648
        %v1634 = vxor.u32 %v1630, 2147483648
        %v1635 = vxor.u32 %v1631, 2147483648
        %v1636 = vmul.f32 %v1632, 1.442695
        %v1637 = vpow.pop %v1636
        %v1638 = vmul.f32 %v1633, 1.442695
        %v1639 = vpow.pop %v1638
        %v1640 = vmul.f32 %v1634, 1.442695
        %v1641 = vpow.pop %v1640
        %v1642 = vmul.f32 %v1635, 1.442695
        %v1643 = vpow.pop %v1642
        %v1644 = vadd.f32 %v1637, 1.0
        %v1645 = vadd.f32 %v1639, 1.0
        %v1646 = vadd.f32 %v1641, 1.0
        %v1647 = vadd.f32 %v1643, 1.0
        %v1648 = vrcp.pop %v1644
        %v1649 = vmul.f32 1.0, %v1648
        %v1650 = vrcp.pop %v1645
        %v1651 = vmul.f32 1.0, %v1650
        %v1652 = vrcp.pop %v1646
        %v1653 = vmul.f32 1.0, %v1652
        %v1654 = vrcp.pop %v1647
        %v1655 = vmul.f32 1.0, %v1654
        %1656 = vmatprep.subr.bf16.mxu0 0
        %1657 = vmatpush1.bf16.msra.mxu0 %v910
        %1658 = vmatprep.subr.bf16.mxu0 0
        %1659 = vmatpush1.bf16.msra.mxu0 %v911
        %1660 = vmatprep.subr.bf16.mxu0 0
        %1661 = vmatpush1.bf16.msra.mxu0 0
        %1662 = vmatprep.subr.bf16.mxu0 0
        %1663 = vmatpush1.bf16.msra.mxu0 0
        %1664 = vmatprep.subr.bf16.mxu0 0
        %1665 = vmatpush1.bf16.msra.mxu0 0
        %1666 = vmatprep.subr.bf16.mxu0 0
        %1667 = vmatpush1.bf16.msra.mxu0 0
        %1668 = vmatprep.subr.bf16.mxu0 0
        %1669 = vmatpush1.bf16.msra.mxu0 0
        %1670 = vmatprep.subr.bf16.mxu0 0
        %1671 = vmatpush1.bf16.msra.mxu0 0
        %1672 = vmatprep.subr.bf16.mxu0 0
        %1673 = vmatpush1.bf16.msra.mxu0 0
        %1674 = vmatprep.subr.bf16.mxu0 0
        %1675 = vmatpush1.bf16.msra.mxu0 0
        %1676 = vmatprep.subr.bf16.mxu0 0
        %1677 = vmatpush1.bf16.msra.mxu0 0
        %1678 = vmatprep.subr.bf16.mxu0 0
        %1679 = vmatpush1.bf16.msra.mxu0 0
        %1680 = vmatprep.subr.bf16.mxu0 0
        %1681 = vmatpush1.bf16.msra.mxu0 0
        %1682 = vmatprep.subr.bf16.mxu0 0
        %1683 = vmatpush1.bf16.msra.mxu0 0
        %1684 = vmatprep.subr.bf16.mxu0 0
        %1685 = vmatpush1.bf16.msra.mxu0 0
        %1686 = vmatprep.subr.bf16.mxu0 0
        %1687 = vmatpush1.bf16.msra.mxu0 0
        %1688 = vmatprep.mubr.bf16.mxu0 0
        %1689 = vmatmul.mubr.bf16.gmra.mrb[0].mxu0 %v1518
        %v1690 = vpop.f32.mrb[0].mxu0
        %v1691 = vadd.f32 0.0, %v1690
        %v1692 = vpop.f32.mrb[0].mxu0
        %v1693 = vpop.f32.mrb[0].mxu0
        %v1694 = vadd.f32 0.0, %v1693
        %v1695 = vpop.f32.mrb[0].mxu0
        %1696 = vmatprep.mubr.bf16.mxu0 0
        %1697 = vmatmul.mubr.bf16.gmra.mrb[0].mxu0 %v1521
        %v1698 = vpop.f32.mrb[0].mxu0
        %v1699 = vadd.f32 0.0, %v1698
        %v1700 = vpop.f32.mrb[0].mxu0
        %v1701 = vpop.f32.mrb[0].mxu0
        %v1702 = vadd.f32 0.0, %v1701
        %v1703 = vpop.f32.mrb[0].mxu0
        %1704 = vdwg.mxu0
        %1705 = vmatprep.subr.bf16.mxu0 0
        %1706 = vmatpush1.bf16.msra.mxu0 %v904
        %1707 = vmatprep.subr.bf16.mxu0 0
        %1708 = vmatpush1.bf16.msra.mxu0 %v905
        %1709 = vmatprep.subr.bf16.mxu0 0
        %1710 = vmatpush1.bf16.msra.mxu0 0
        %1711 = vmatprep.subr.bf16.mxu0 0
        %1712 = vmatpush1.bf16.msra.mxu0 0
        %1713 = vmatprep.subr.bf16.mxu0 0
        %1714 = vmatpush1.bf16.msra.mxu0 0
        %1715 = vmatprep.subr.bf16.mxu0 0
        %1716 = vmatpush1.bf16.msra.mxu0 0
        %1717 = vmatprep.subr.bf16.mxu0 0
        %1718 = vmatpush1.bf16.msra.mxu0 0
        %1719 = vmatprep.subr.bf16.mxu0 0
        %1720 = vmatpush1.bf16.msra.mxu0 0
        %1721 = vmatprep.subr.bf16.mxu0 0
        %1722 = vmatpush1.bf16.msra.mxu0 0
        %1723 = vmatprep.subr.bf16.mxu0 0
        %1724 = vmatpush1.bf16.msra.mxu0 0
        %1725 = vmatprep.subr.bf16.mxu0 0
        %1726 = vmatpush1.bf16.msra.mxu0 0
        %1727 = vmatprep.subr.bf16.mxu0 0
        %1728 = vmatpush1.bf16.msra.mxu0 0
        %1729 = vmatprep.subr.bf16.mxu0 0
        %1730 = vmatpush1.bf16.msra.mxu0 0
        %1731 = vmatprep.subr.bf16.mxu0 0
        %1732 = vmatpush1.bf16.msra.mxu0 0
        %1733 = vmatprep.subr.bf16.mxu0 0
        %1734 = vmatpush1.bf16.msra.mxu0 0
        %1735 = vmatprep.subr.bf16.mxu0 0
        %1736 = vmatpush1.bf16.msra.mxu0 0
        %1737 = vmatprep.mubr.bf16.mxu0 0
        %1738 = vmatmul.mubr.bf16.gmra.mrb[0].mxu0 %v1221
        %v1739 = vpop.f32.mrb[0].mxu0
        %v1740 = vadd.f32 %v1691, %v1739
        %v1741 = vpop.f32.mrb[0].mxu0
        %v1742 = vpop.f32.mrb[0].mxu0
        %v1743 = vadd.f32 %v1694, %v1742
        %v1744 = vpop.f32.mrb[0].mxu0
        %1745 = vmatprep.mubr.bf16.mxu0 0
        %1746 = vmatmul.mubr.bf16.gmra.mrb[0].mxu0 %v1224
        %v1747 = vpop.f32.mrb[0].mxu0
        %v1748 = vadd.f32 %v1699, %v1747
        %v1749 = vpop.f32.mrb[0].mxu0
        %v1750 = vpop.f32.mrb[0].mxu0
        %v1751 = vadd.f32 %v1702, %v1750
        %v1752 = vpop.f32.mrb[0].mxu0
        %1753 = vdwg.mxu0
        %v1754 = vld [vmem:[%s8] sm:$0x1]
        %v1756 = vlaneseq
        %v1757 = vshrl.u32 %v1756, 7
        %v1758 = vsub.s32 0, %v1757
        %v1759 = vrot.slane %v1754, %v1758
        %v1761 = vadd.f32 %v1740, %v1759
        %v1762 = vadd.f32 %v1743, %v1759
        %v1763 = vadd.f32 %v1748, %v1759
        %v1764 = vadd.f32 %v1751, %v1759
        %v1765 = vtanh.pop %v1761
        %v1766 = vtanh.pop %v1762
        %v1767 = vtanh.pop %v1763
        %v1768 = vtanh.pop %v1764
        %v1769 = vmul.f32 %v1649, %v1765
        %v1770 = vmul.f32 %v1651, %v1766
        %v1771 = vmul.f32 %v1653, %v1767
        %v1772 = vmul.f32 %v1655, %v1768
        %v1773 = vsub.f32 1.0, %v1649
        %v1774 = vsub.f32 1.0, %v1651
        %v1775 = vsub.f32 1.0, %v1653
        %v1776 = vsub.f32 1.0, %v1655
        %v1777 = vmul.f32 %v1773, %v1167
        %v1778 = vmul.f32 %v1774, %v1170
        %v1779 = vmul.f32 %v1775, %v1212
        %v1780 = vmul.f32 %v1776, %v1215
        %v1781 = vadd.f32 %v1769, %v1777
        %v1782 = vadd.f32 %v1770, %v1778
        %v1783 = vadd.f32 %v1771, %v1779
        %v1784 = vadd.f32 %v1772, %v1780
        %v1785 = vpack.c.bf16 %v1782, %v1781
        %v1786 = vpack.c.bf16 %v1784, %v1783
        %v1788 = vsel %vm983, %v1785, 0
        %v1791 = vsel %vm983, %v1786, 0
        %1793 = vmatprep.subr.bf16.mxu0 0
        %1794 = vmatpush1.bf16.msra.mxu0 %v922
        %1795 = vmatprep.subr.bf16.mxu0 0
        %1796 = vmatpush1.bf16.msra.mxu0 %v923
        %1797 = vmatprep.subr.bf16.mxu0 0
        %1798 = vmatpush1.bf16.msra.mxu0 0
        %1799 = vmatprep.subr.bf16.mxu0 0
        %1800 = vmatpush1.bf16.msra.mxu0 0
        %1801 = vmatprep.subr.bf16.mxu0 0
        %1802 = vmatpush1.bf16.msra.mxu0 0
        %1803 = vmatprep.subr.bf16.mxu0 0
        %1804 = vmatpush1.bf16.msra.mxu0 0
        %1805 = vmatprep.subr.bf16.mxu0 0
        %1806 = vmatpush1.bf16.msra.mxu0 0
        %1807 = vmatprep.subr.bf16.mxu0 0
        %1808 = vmatpush1.bf16.msra.mxu0 0
        %1809 = vmatprep.subr.bf16.mxu0 0
        %1810 = vmatpush1.bf16.msra.mxu0 0
        %1811 = vmatprep.subr.bf16.mxu0 0
        %1812 = vmatpush1.bf16.msra.mxu0 0
        %1813 = vmatprep.subr.bf16.mxu0 0
        %1814 = vmatpush1.bf16.msra.mxu0 0
        %1815 = vmatprep.subr.bf16.mxu0 0
        %1816 = vmatpush1.bf16.msra.mxu0 0
        %1817 = vmatprep.subr.bf16.mxu0 0
        %1818 = vmatpush1.bf16.msra.mxu0 0
        %1819 = vmatprep.subr.bf16.mxu0 0
        %1820 = vmatpush1.bf16.msra.mxu0 0
        %1821 = vmatprep.subr.bf16.mxu0 0
        %1822 = vmatpush1.bf16.msra.mxu0 0
        %1823 = vmatprep.subr.bf16.mxu0 0
        %1824 = vmatpush1.bf16.msra.mxu0 0
        %1825 = vmatprep.mubr.bf16.mxu0 0
        %1826 = vmatmul.mubr.bf16.gmra.mrb[0].mxu0 %v1788
        %v1827 = vpop.f32.mrb[0].mxu0
        %v1828 = vadd.f32 0.0, %v1827
        %v1829 = vpop.f32.mrb[0].mxu0
        %v1830 = vpop.f32.mrb[0].mxu0
        %v1831 = vadd.f32 0.0, %v1830
        %v1832 = vpop.f32.mrb[0].mxu0
        %1833 = vmatprep.mubr.bf16.mxu0 0
        %1834 = vmatmul.mubr.bf16.gmra.mrb[0].mxu0 %v1791
        %v1835 = vpop.f32.mrb[0].mxu0
        %v1836 = vadd.f32 0.0, %v1835
        %v1837 = vpop.f32.mrb[0].mxu0
        %v1838 = vpop.f32.mrb[0].mxu0
        %v1839 = vadd.f32 0.0, %v1838
        %v1840 = vpop.f32.mrb[0].mxu0
        %1841 = vdwg.mxu0
        %v1843 = vsel %vm983, %v1469, 0
        %v1846 = vsel %vm983, %v1419, 0
        %1848 = vmatprep.subr.bf16.mxu0 0
        %1849 = vmatpush1.bf16.msra.mxu0 %v916
        %1850 = vmatprep.subr.bf16.mxu0 0
        %1851 = vmatpush1.bf16.msra.mxu0 %v917
        %1852 = vmatprep.subr.bf16.mxu0 0
        %1853 = vmatpush1.bf16.msra.mxu0 0
        %1854 = vmatprep.subr.bf16.mxu0 0
        %1855 = vmatpush1.bf16.msra.mxu0 0
        %1856 = vmatprep.subr.bf16.mxu0 0
        %1857 = vmatpush1.bf16.msra.mxu0 0
        %1858 = vmatprep.subr.bf16.mxu0 0
        %1859 = vmatpush1.bf16.msra.mxu0 0
        %1860 = vmatprep.subr.bf16.mxu0 0
        %1861 = vmatpush1.bf16.msra.mxu0 0
        %1862 = vmatprep.subr.bf16.mxu0 0
        %1863 = vmatpush1.bf16.msra.mxu0 0
        %1864 = vmatprep.subr.bf16.mxu0 0
        %1865 = vmatpush1.bf16.msra.mxu0 0
        %1866 = vmatprep.subr.bf16.mxu0 0
        %1867 = vmatpush1.bf16.msra.mxu0 0
        %1868 = vmatprep.subr.bf16.mxu0 0
        %1869 = vmatpush1.bf16.msra.mxu0 0
        %1870 = vmatprep.subr.bf16.mxu0 0
        %1871 = vmatpush1.bf16.msra.mxu0 0
        %1872 = vmatprep.subr.bf16.mxu0 0
        %1873 = vmatpush1.bf16.msra.mxu0 0
        %1874 = vmatprep.subr.bf16.mxu0 0
        %1875 = vmatpush1.bf16.msra.mxu0 0
        %1876 = vmatprep.subr.bf16.mxu0 0
        %1877 = vmatpush1.bf16.msra.mxu0 0
        %1878 = vmatprep.subr.bf16.mxu0 0
        %1879 = vmatpush1.bf16.msra.mxu0 0
        %1880 = vmatprep.mubr.bf16.mxu0 0
        %1881 = vmatmul.mubr.bf16.gmra.mrb[0].mxu0 %v1843
        %v1882 = vpop.f32.mrb[0].mxu0
        %v1883 = vadd.f32 %v1828, %v1882
        %v1884 = vpop.f32.mrb[0].mxu0
        %v1885 = vpop.f32.mrb[0].mxu0
        %v1886 = vadd.f32 %v1831, %v1885
        %v1887 = vpop.f32.mrb[0].mxu0
        %1888 = vmatprep.mubr.bf16.mxu0 0
        %1889 = vmatmul.mubr.bf16.gmra.mrb[0].mxu0 %v1846
        %v1890 = vpop.f32.mrb[0].mxu0
        %v1891 = vadd.f32 %v1836, %v1890
        %v1892 = vpop.f32.mrb[0].mxu0
        %v1893 = vpop.f32.mrb[0].mxu0
        %v1894 = vadd.f32 %v1839, %v1893
        %v1895 = vpop.f32.mrb[0].mxu0
        %1896 = vdwg.mxu0
        %v1897 = vld [vmem:[%s11] sm:$0x1]
        %v1899 = vlaneseq
        %v1900 = vshrl.u32 %v1899, 7
        %v1901 = vsub.s32 0, %v1900
        %v1902 = vrot.slane %v1897, %v1901
        %v1904 = vadd.f32 %v1883, %v1902
        %v1905 = vadd.f32 %v1886, %v1902
        %v1906 = vadd.f32 %v1891, %v1902
        %v1907 = vadd.f32 %v1894, %v1902
        %v1908 = vxor.u32 %v1904, 2147483648
        %v1909 = vxor.u32 %v1905, 2147483648
        %v1910 = vxor.u32 %v1906, 2147483648
        %v1911 = vxor.u32 %v1907, 2147483648
        %v1912 = vmul.f32 %v1908, 1.442695
        %v1913 = vpow.pop %v1912
        %v1914 = vmul.f32 %v1909, 1.442695
        %v1915 = vpow.pop %v1914
        %v1916 = vmul.f32 %v1910, 1.442695
        %v1917 = vpow.pop %v1916
        %v1918 = vmul.f32 %v1911, 1.442695
        %v1919 = vpow.pop %v1918
        %v1920 = vadd.f32 %v1913, 1.0
        %v1921 = vadd.f32 %v1915, 1.0
        %v1922 = vadd.f32 %v1917, 1.0
        %v1923 = vadd.f32 %v1919, 1.0
        %v1924 = vrcp.pop %v1920
        %v1925 = vmul.f32 1.0, %v1924
        %v1926 = vrcp.pop %v1921
        %v1927 = vmul.f32 1.0, %v1926
        %v1928 = vrcp.pop %v1922
        %v1929 = vmul.f32 1.0, %v1928
        %v1930 = vrcp.pop %v1923
        %v1931 = vmul.f32 1.0, %v1930
        %v1932 = vmul.f32 %v1925, %v1781
        %v1933 = vmul.f32 %v1927, %v1782
        %v1934 = vmul.f32 %v1929, %v1783
        %v1935 = vmul.f32 %v1931, %v1784
        %v1936 = vsub.f32 1.0, %v1925
        %v1937 = vsub.f32 1.0, %v1927
        %v1938 = vsub.f32 1.0, %v1929
        %v1939 = vsub.f32 1.0, %v1931
        %v1940 = vunpack.c.l.bf16 %v874
        %v1941 = vunpack.c.l.bf16 %v875
        %v1942 = vunpack.c.l.bf16 %v876
        %v1943 = vunpack.c.l.bf16 %v877
        %v1944 = vmul.f32 %v1936, %v1940
        %v1945 = vmul.f32 %v1937, %v1941
        %v1946 = vmul.f32 %v1938, %v1942
        %v1947 = vmul.f32 %v1939, %v1943
        %v1948 = vadd.f32 %v1932, %v1944
        %v1949 = vadd.f32 %v1933, %v1945
        %v1950 = vadd.f32 %v1934, %v1946
        %v1951 = vadd.f32 %v1935, %v1947
        %v1952 = vld [vmem:[%s12] sm:$0x1]
        %v1954 = vlaneseq
        %v1955 = vshrl.u32 %v1954, 7
        %v1956 = vsub.s32 0, %v1955
        %v1957 = vrot.slane %v1952, %v1956
        %v1959 = vmul.f32 %v1948, %v1957
        %v1960 = vmul.f32 %v1949, %v1957
        %v1961 = vmul.f32 %v1950, %v1957
        %v1962 = vmul.f32 %v1951, %v1957
        %v1963 = vsel %vm983, %v1959, 0.0
        %1964 = vadd.xlane.f32.xlu0 %v1963
        %v1965 = vpop.xlane.xlu0 %1964
        %v1966 = vsel %vm983, %v1960, 0.0
        %1967 = vadd.xlane.f32.xlu0 %v1966
        %v1968 = vpop.xlane.xlu0 %1967
        %v1969 = vsel %vm983, %v1961, 0.0
        %1970 = vadd.xlane.f32.xlu0 %v1969
        %v1971 = vpop.xlane.xlu0 %1970
        %v1972 = vsel %vm983, %v1962, 0.0
        %1973 = vadd.xlane.f32.xlu0 %v1972
        %v1974 = vpop.xlane.xlu0 %1973
        %v1979 = vlaneseq
        %v1980 = vand.u32 %v1979, 127
        %v1981 = vlaneseq
        %v1982 = vshrl.u32 %v1981, 7
        %v1983 = vsub.s32 %v1980, %v1982
        %v1984 = vrot.slane %v1965, %v1983
        %v1985 = vadd.s32 %v1980, 4294967288
        %v1986 = vlaneseq
        %v1987 = vshrl.u32 %v1986, 7
        %v1988 = vsub.s32 %v1985, %v1987
        %v1989 = vrot.slane %v1968, %v1988
        %vm1990 = vcmask 130112
        %v1991 = vsel %vm1990, %v1989, %v1984
        %v1992 = vlaneseq
        %v1993 = vshrl.u32 %v1992, 7
        %v1994 = vsub.s32 %v1980, %v1993
        %v1995 = vrot.slane %v1971, %v1994
        %v1996 = vlaneseq
        %v1997 = vshrl.u32 %v1996, 7
        %v1998 = vsub.s32 %v1985, %v1997
        %v1999 = vrot.slane %v1974, %v1998
        %v2000 = vsel %vm1990, %v1999, %v1995
        %vm2001 = vcmask 1041409
        %v2002 = vsel %vm2001, %v2000, %v1991
        %vm2004 = vcmask 123904
        %v2005 = vsel %vm2004, %v2002, -inf
        %2006 = vmax.xlane.f32.xlu0 %v2005
        %v2007 = vpop.xlane.xlu0 %2006
        %v2009 = vlaneseq
        %v2010 = vshrl.u32 %v2009, 7
        %v2011 = vsub.s32 0, %v2010
        %v2012 = vrot.slane %v2007, %v2011
        %v2013 = vlaneseq
        %v2014 = vshrl.u32 %v2013, 7
        %v2015 = vsub.s32 1, %v2014
        %v2016 = vrot.slane %v2007, %v2015
        %v2019 = vsub.f32 %v1965, %v2012
        %v2020 = vsub.f32 %v1968, %v2012
        %v2021 = vsub.f32 %v1971, %v2016
        %v2022 = vsub.f32 %v1974, %v2016
        %v2023 = vmul.f32 %v2019, 1.442695
        %v2024 = vpow.pop %v2023
        %v2025 = vmul.f32 %v2020, 1.442695
        %v2026 = vpow.pop %v2025
        %v2027 = vmul.f32 %v2021, 1.442695
        %v2028 = vpow.pop %v2027
        %v2029 = vmul.f32 %v2022, 1.442695
        %v2030 = vpow.pop %v2029
        %2035 = vset.pattern.permute.xlu0 0
        %2036 = vperm.xlu0 %2035, %v2024
        %v2037 = vpop.permute.xlu0 %2036
        %2038 = vset.pattern.permute.xlu0 0
        %2039 = vperm.xlu0 %2038, %v2026
        %v2040 = vpop.permute.xlu0 %2039
        %2041 = vset.pattern.permute.xlu0 0
        %2042 = vperm.xlu0 %2041, %v2028
        %v2043 = vpop.permute.xlu0 %2042
        %2044 = vset.pattern.permute.xlu0 0
        %2045 = vperm.xlu0 %2044, %v2030
        %v2046 = vpop.permute.xlu0 %2045
        %v2047 = vlaneseq
        %v2048 = vshrl.u32 %v2047, 7
        %v2049 = vsub.s32 %v1980, %v2048
        %v2050 = vrot.slane %v2037, %v2049
        %v2051 = vlaneseq
        %v2052 = vshrl.u32 %v2051, 7
        %v2053 = vsub.s32 %v1985, %v2052
        %v2054 = vrot.slane %v2040, %v2053
        %v2055 = vsel %vm1990, %v2054, %v2050
        %v2056 = vlaneseq
        %v2057 = vshrl.u32 %v2056, 7
        %v2058 = vsub.s32 %v1980, %v2057
        %v2059 = vrot.slane %v2043, %v2058
        %v2060 = vlaneseq
        %v2061 = vshrl.u32 %v2060, 7
        %v2062 = vsub.s32 %v1985, %v2061
        %v2063 = vrot.slane %v2046, %v2062
        %v2064 = vsel %vm1990, %v2063, %v2059
        %v2065 = vsel %vm2001, %v2064, %v2055
        %v2067 = vsel %vm2004, %v2065, 0.0
        %2068 = vadd.xlane.f32.xlu0 %v2067
        %v2069 = vpop.xlane.xlu0 %2068
        %v2070 = vrcp.pop %v2069
        %v2072 = vlaneseq
        %v2073 = vshrl.u32 %v2072, 7
        %v2074 = vsub.s32 0, %v2073
        %v2075 = vrot.slane %v2070, %v2074
        %v2076 = vlaneseq
        %v2077 = vshrl.u32 %v2076, 7
        %v2078 = vsub.s32 1, %v2077
        %v2079 = vrot.slane %v2070, %v2078
        %v2082 = vmul.f32 %v2024, %v2075
        %v2083 = vmul.f32 %v2026, %v2075
        %v2084 = vmul.f32 %v2028, %v2079
        %v2085 = vmul.f32 %v2030, %v2079
        %2087 = vset.pattern.permute.xlu0 0
        %2088 = vperm.xlu0 %2087, %v2082
        %v2089 = vpop.permute.xlu0 %2088
        %2092 = vset.pattern.permute.xlu0 0
        %2093 = vperm.xlu0 %2092, %v2083
        %v2094 = vpop.permute.xlu0 %2093
        %2097 = vset.pattern.permute.xlu0 0
        %2098 = vperm.xlu0 %2097, %v2084
        %v2099 = vpop.permute.xlu0 %2098
        %2102 = vset.pattern.permute.xlu0 0
        %2103 = vperm.xlu0 %2102, %v2085
        %v2104 = vpop.permute.xlu0 %2103
        %v2106 = vmul.f32 %v2089, %v1948
        %v2107 = vmul.f32 %v2094, %v1949
        %v2108 = vmul.f32 %v2099, %v1950
        %v2109 = vmul.f32 %v2104, %v1951
        %v2110 = vsel %vm983, %v2106, 0.0
        %v2111 = vsel %vm983, %v2107, 0.0
        %v2112 = vadd.f32 %v2110, %v2111
        %v2113 = vrot.slane %v2112, 4
        %v2114 = vadd.f32 %v2112, %v2113
        %v2115 = vrot.slane %v2114, 2
        %v2116 = vadd.f32 %v2114, %v2115
        %v2117 = vrot.slane %v2116, 1
        %v2118 = vadd.f32 %v2116, %v2117
        %v2119 = vsel %vm983, %v2108, 0.0
        %v2120 = vsel %vm983, %v2109, 0.0
        %v2121 = vadd.f32 %v2119, %v2120
        %v2122 = vrot.slane %v2121, 4
        %v2123 = vadd.f32 %v2121, %v2122
        %v2124 = vrot.slane %v2123, 2
        %v2125 = vadd.f32 %v2123, %v2124
        %v2126 = vrot.slane %v2125, 1
        %v2127 = vadd.f32 %v2125, %v2126
        %v2128 = vpack.c.bf16 %v2118, %v2118
        %v2129 = vpack.c.bf16 %v2127, %v2127
        %v2131 = vsel %vm983, %v2129, 0
        %2133 = vmatprep.subr.bf16.mxu0 0
        %2134 = vmatpush1.bf16.msra.mxu0 %v934
        %2135 = vmatprep.subr.bf16.mxu0 0
        %2136 = vmatpush1.bf16.msra.mxu0 %v935
        %2137 = vmatprep.subr.bf16.mxu0 0
        %2138 = vmatpush1.bf16.msra.mxu0 0
        %2139 = vmatprep.subr.bf16.mxu0 0
        %2140 = vmatpush1.bf16.msra.mxu0 0
        %2141 = vmatprep.subr.bf16.mxu0 0
        %2142 = vmatpush1.bf16.msra.mxu0 0
        %2143 = vmatprep.subr.bf16.mxu0 0
        %2144 = vmatpush1.bf16.msra.mxu0 0
        %2145 = vmatprep.subr.bf16.mxu0 0
        %2146 = vmatpush1.bf16.msra.mxu0 0
        %2147 = vmatprep.subr.bf16.mxu0 0
        %2148 = vmatpush1.bf16.msra.mxu0 0
        %2149 = vmatprep.subr.bf16.mxu0 0
        %2150 = vmatpush1.bf16.msra.mxu0 0
        %2151 = vmatprep.subr.bf16.mxu0 0
        %2152 = vmatpush1.bf16.msra.mxu0 0
        %2153 = vmatprep.subr.bf16.mxu0 0
        %2154 = vmatpush1.bf16.msra.mxu0 0
        %2155 = vmatprep.subr.bf16.mxu0 0
        %2156 = vmatpush1.bf16.msra.mxu0 0
        %2157 = vmatprep.subr.bf16.mxu0 0
        %2158 = vmatpush1.bf16.msra.mxu0 0
        %2159 = vmatprep.subr.bf16.mxu0 0
        %2160 = vmatpush1.bf16.msra.mxu0 0
        %2161 = vmatprep.subr.bf16.mxu0 0
        %2162 = vmatpush1.bf16.msra.mxu0 0
        %2163 = vmatprep.subr.bf16.mxu0 0
        %2164 = vmatpush1.bf16.msra.mxu0 0
        %2165 = vmatprep.mubr.bf16.mxu0 0
        %2166 = vmatmul.mubr.bf16.gmra.mrb[0].mxu0 %v2131
        %v2167 = vpop.f32.mrb[0].mxu0
        %v2168 = vadd.f32 0.0, %v2167
        %v2169 = vpop.f32.mrb[0].mxu0
        %v2170 = vpop.f32.mrb[0].mxu0
        %v2171 = vpop.f32.mrb[0].mxu0
        %2172 = vdwg.mxu0
        %v2174 = vsel %vm983, %v2128, 0
        %2176 = vmatprep.subr.bf16.mxu0 0
        %2177 = vmatpush1.bf16.msra.mxu0 %v928
        %2178 = vmatprep.subr.bf16.mxu0 0
        %2179 = vmatpush1.bf16.msra.mxu0 %v929
        %2180 = vmatprep.subr.bf16.mxu0 0
        %2181 = vmatpush1.bf16.msra.mxu0 0
        %2182 = vmatprep.subr.bf16.mxu0 0
        %2183 = vmatpush1.bf16.msra.mxu0 0
        %2184 = vmatprep.subr.bf16.mxu0 0
        %2185 = vmatpush1.bf16.msra.mxu0 0
        %2186 = vmatprep.subr.bf16.mxu0 0
        %2187 = vmatpush1.bf16.msra.mxu0 0
        %2188 = vmatprep.subr.bf16.mxu0 0
        %2189 = vmatpush1.bf16.msra.mxu0 0
        %2190 = vmatprep.subr.bf16.mxu0 0
        %2191 = vmatpush1.bf16.msra.mxu0 0
        %2192 = vmatprep.subr.bf16.mxu0 0
        %2193 = vmatpush1.bf16.msra.mxu0 0
        %2194 = vmatprep.subr.bf16.mxu0 0
        %2195 = vmatpush1.bf16.msra.mxu0 0
        %2196 = vmatprep.subr.bf16.mxu0 0
        %2197 = vmatpush1.bf16.msra.mxu0 0
        %2198 = vmatprep.subr.bf16.mxu0 0
        %2199 = vmatpush1.bf16.msra.mxu0 0
        %2200 = vmatprep.subr.bf16.mxu0 0
        %2201 = vmatpush1.bf16.msra.mxu0 0
        %2202 = vmatprep.subr.bf16.mxu0 0
        %2203 = vmatpush1.bf16.msra.mxu0 0
        %2204 = vmatprep.subr.bf16.mxu0 0
        %2205 = vmatpush1.bf16.msra.mxu0 0
        %2206 = vmatprep.subr.bf16.mxu0 0
        %2207 = vmatpush1.bf16.msra.mxu0 0
        %2208 = vmatprep.mubr.bf16.mxu0 0
        %2209 = vmatmul.mubr.bf16.gmra.mrb[0].mxu0 %v2174
        %v2210 = vpop.f32.mrb[0].mxu0
        %v2211 = vadd.f32 %v2168, %v2210
        %v2212 = vpop.f32.mrb[0].mxu0
        %v2213 = vpop.f32.mrb[0].mxu0
        %v2214 = vpop.f32.mrb[0].mxu0
        %2215 = vdwg.mxu0
        %v2216 = vmul.f32 %v2118, %v2127
        %v2217 = vpack.c.bf16 %v2216, %v2216
        %v2219 = vsel %vm983, %v2217, 0
        %2221 = vmatprep.subr.bf16.mxu0 0
        %2222 = vmatpush1.bf16.msra.mxu0 %v940
        %2223 = vmatprep.subr.bf16.mxu0 0
        %2224 = vmatpush1.bf16.msra.mxu0 %v941
        %2225 = vmatprep.subr.bf16.mxu0 0
        %2226 = vmatpush1.bf16.msra.mxu0 0
        %2227 = vmatprep.subr.bf16.mxu0 0
        %2228 = vmatpush1.bf16.msra.mxu0 0
        %2229 = vmatprep.subr.bf16.mxu0 0
        %2230 = vmatpush1.bf16.msra.mxu0 0
        %2231 = vmatprep.subr.bf16.mxu0 0
        %2232 = vmatpush1.bf16.msra.mxu0 0
        %2233 = vmatprep.subr.bf16.mxu0 0
        %2234 = vmatpush1.bf16.msra.mxu0 0
        %2235 = vmatprep.subr.bf16.mxu0 0
        %2236 = vmatpush1.bf16.msra.mxu0 0
        %2237 = vmatprep.subr.bf16.mxu0 0
        %2238 = vmatpush1.bf16.msra.mxu0 0
        %2239 = vmatprep.subr.bf16.mxu0 0
        %2240 = vmatpush1.bf16.msra.mxu0 0
        %2241 = vmatprep.subr.bf16.mxu0 0
        %2242 = vmatpush1.bf16.msra.mxu0 0
        %2243 = vmatprep.subr.bf16.mxu0 0
        %2244 = vmatpush1.bf16.msra.mxu0 0
        %2245 = vmatprep.subr.bf16.mxu0 0
        %2246 = vmatpush1.bf16.msra.mxu0 0
        %2247 = vmatprep.subr.bf16.mxu0 0
        %2248 = vmatpush1.bf16.msra.mxu0 0
        %2249 = vmatprep.subr.bf16.mxu0 0
        %2250 = vmatpush1.bf16.msra.mxu0 0
        %2251 = vmatprep.subr.bf16.mxu0 0
        %2252 = vmatpush1.bf16.msra.mxu0 0
        %2253 = vmatprep.mubr.bf16.mxu0 0
        %2254 = vmatmul.mubr.bf16.gmra.mrb[0].mxu0 %v2219
        %v2255 = vpop.f32.mrb[0].mxu0
        %v2256 = vadd.f32 0.0, %v2255
        %v2257 = vpop.f32.mrb[0].mxu0
        %v2258 = vpop.f32.mrb[0].mxu0
        %v2259 = vpop.f32.mrb[0].mxu0
        %2260 = vdwg.mxu0
        %v2261 = vadd.f32 %v2211, %v2256
        %v2262 = vsub.f32 %v2118, %v2127
        %v2263 = vpack.c.bf16 %v2262, %v2262
        %v2265 = vsel %vm983, %v2263, 0
        %2267 = vmatprep.subr.bf16.mxu0 0
        %2268 = vmatpush1.bf16.msra.mxu0 %v946
        %2269 = vmatprep.subr.bf16.mxu0 0
        %2270 = vmatpush1.bf16.msra.mxu0 %v947
        %2271 = vmatprep.subr.bf16.mxu0 0
        %2272 = vmatpush1.bf16.msra.mxu0 0
        %2273 = vmatprep.subr.bf16.mxu0 0
        %2274 = vmatpush1.bf16.msra.mxu0 0
        %2275 = vmatprep.subr.bf16.mxu0 0
        %2276 = vmatpush1.bf16.msra.mxu0 0
        %2277 = vmatprep.subr.bf16.mxu0 0
        %2278 = vmatpush1.bf16.msra.mxu0 0
        %2279 = vmatprep.subr.bf16.mxu0 0
        %2280 = vmatpush1.bf16.msra.mxu0 0
        %2281 = vmatprep.subr.bf16.mxu0 0
        %2282 = vmatpush1.bf16.msra.mxu0 0
        %2283 = vmatprep.subr.bf16.mxu0 0
        %2284 = vmatpush1.bf16.msra.mxu0 0
        %2285 = vmatprep.subr.bf16.mxu0 0
        %2286 = vmatpush1.bf16.msra.mxu0 0
        %2287 = vmatprep.subr.bf16.mxu0 0
        %2288 = vmatpush1.bf16.msra.mxu0 0
        %2289 = vmatprep.subr.bf16.mxu0 0
        %2290 = vmatpush1.bf16.msra.mxu0 0
        %2291 = vmatprep.subr.bf16.mxu0 0
        %2292 = vmatpush1.bf16.msra.mxu0 0
        %2293 = vmatprep.subr.bf16.mxu0 0
        %2294 = vmatpush1.bf16.msra.mxu0 0
        %2295 = vmatprep.subr.bf16.mxu0 0
        %2296 = vmatpush1.bf16.msra.mxu0 0
        %2297 = vmatprep.subr.bf16.mxu0 0
        %2298 = vmatpush1.bf16.msra.mxu0 0
        %2299 = vmatprep.mubr.bf16.mxu0 0
        %2300 = vmatmul.mubr.bf16.gmra.mrb[0].mxu0 %v2265
        %v2301 = vpop.f32.mrb[0].mxu0
        %v2302 = vadd.f32 0.0, %v2301
        %v2303 = vpop.f32.mrb[0].mxu0
        %v2304 = vpop.f32.mrb[0].mxu0
        %v2305 = vpop.f32.mrb[0].mxu0
        %2306 = vdwg.mxu0
        %v2307 = vadd.f32 %v2261, %v2302
        %v2308 = vld [vmem:[%s17] sm:$0x1]
        %v2309 = vadd.f32 %v2307, %v2308
        %v2310 = vmax.f32 %v2309, 0.0
        %v2311 = vld [vmem:[%s19] sm:$0x1]
        %v2312 = vld [vmem:[%s21] sm:$0x1]
        %v2313 = vpack.c.bf16 %v2310, %v2310
        %v2315 = vsel %vm983, %v2313, 0
        %2317 = vmatprep.subr.bf16.mxu0 0
        %2318 = vmatpush1.bf16.msra.mxu0 %v952
        %2319 = vmatprep.subr.bf16.mxu0 0
        %2320 = vmatpush1.bf16.msra.mxu0 %v953
        %2321 = vmatprep.subr.bf16.mxu0 0
        %2322 = vmatpush1.bf16.msra.mxu0 0
        %2323 = vmatprep.subr.bf16.mxu0 0
        %2324 = vmatpush1.bf16.msra.mxu0 0
        %2325 = vmatprep.subr.bf16.mxu0 0
        %2326 = vmatpush1.bf16.msra.mxu0 0
        %2327 = vmatprep.subr.bf16.mxu0 0
        %2328 = vmatpush1.bf16.msra.mxu0 0
        %2329 = vmatprep.subr.bf16.mxu0 0
        %2330 = vmatpush1.bf16.msra.mxu0 0
        %2331 = vmatprep.subr.bf16.mxu0 0
        %2332 = vmatpush1.bf16.msra.mxu0 0
        %2333 = vmatprep.subr.bf16.mxu0 0
        %2334 = vmatpush1.bf16.msra.mxu0 0
        %2335 = vmatprep.subr.bf16.mxu0 0
        %2336 = vmatpush1.bf16.msra.mxu0 0
        %2337 = vmatprep.subr.bf16.mxu0 0
        %2338 = vmatpush1.bf16.msra.mxu0 0
        %2339 = vmatprep.subr.bf16.mxu0 0
        %2340 = vmatpush1.bf16.msra.mxu0 0
        %2341 = vmatprep.subr.bf16.mxu0 0
        %2342 = vmatpush1.bf16.msra.mxu0 0
        %2343 = vmatprep.subr.bf16.mxu0 0
        %2344 = vmatpush1.bf16.msra.mxu0 0
        %2345 = vmatprep.subr.bf16.mxu0 0
        %2346 = vmatpush1.bf16.msra.mxu0 0
        %2347 = vmatprep.subr.bf16.mxu0 0
        %2348 = vmatpush1.bf16.msra.mxu0 0
        %2349 = vmatprep.mubr.bf16.mxu0 0
        %2350 = vmatmul.mubr.bf16.gmra.mrb[0].mxu0 %v2315
        %v2351 = vpop.f32.mrb[0].mxu0
        %v2352 = vadd.f32 %v2311, %v2351
        %v2353 = vpop.f32.mrb[0].mxu0
        %v2354 = vpop.f32.mrb[0].mxu0
        %v2355 = vpop.f32.mrb[0].mxu0
        %2356 = vdwg.mxu0
        %v2357 = vxor.u32 %v2352, 2147483648
        %v2358 = vmul.f32 %v2357, 1.442695
        %v2359 = vpow.pop %v2358
        %v2360 = vadd.f32 %v2359, 1.0
        %v2361 = vrcp.pop %v2360
        %v2362 = vmul.f32 1.0, %v2361
        %2363 = vmatprep.subr.bf16.mxu0 0
        %2364 = vmatpush1.bf16.msra.mxu0 %v958
        %2365 = vmatprep.subr.bf16.mxu0 0
        %2366 = vmatpush1.bf16.msra.mxu0 %v959
        %2367 = vmatprep.subr.bf16.mxu0 0
        %2368 = vmatpush1.bf16.msra.mxu0 0
        %2369 = vmatprep.subr.bf16.mxu0 0
        %2370 = vmatpush1.bf16.msra.mxu0 0
        %2371 = vmatprep.subr.bf16.mxu0 0
        %2372 = vmatpush1.bf16.msra.mxu0 0
        %2373 = vmatprep.subr.bf16.mxu0 0
        %2374 = vmatpush1.bf16.msra.mxu0 0
        %2375 = vmatprep.subr.bf16.mxu0 0
        %2376 = vmatpush1.bf16.msra.mxu0 0
        %2377 = vmatprep.subr.bf16.mxu0 0
        %2378 = vmatpush1.bf16.msra.mxu0 0
        %2379 = vmatprep.subr.bf16.mxu0 0
        %2380 = vmatpush1.bf16.msra.mxu0 0
        %2381 = vmatprep.subr.bf16.mxu0 0
        %2382 = vmatpush1.bf16.msra.mxu0 0
        %2383 = vmatprep.subr.bf16.mxu0 0
        %2384 = vmatpush1.bf16.msra.mxu0 0
        %2385 = vmatprep.subr.bf16.mxu0 0
        %2386 = vmatpush1.bf16.msra.mxu0 0
        %2387 = vmatprep.subr.bf16.mxu0 0
        %2388 = vmatpush1.bf16.msra.mxu0 0
        %2389 = vmatprep.subr.bf16.mxu0 0
        %2390 = vmatpush1.bf16.msra.mxu0 0
        %2391 = vmatprep.subr.bf16.mxu0 0
        %2392 = vmatpush1.bf16.msra.mxu0 0
        %2393 = vmatprep.subr.bf16.mxu0 0
        %2394 = vmatpush1.bf16.msra.mxu0 0
        %2395 = vmatprep.mubr.bf16.mxu0 0
        %2396 = vmatmul.mubr.bf16.gmra.mrb[0].mxu0 %v2315
        %v2397 = vpop.f32.mrb[0].mxu0
        %v2398 = vadd.f32 %v2312, %v2397
        %v2399 = vpop.f32.mrb[0].mxu0
        %v2400 = vpop.f32.mrb[0].mxu0
        %v2401 = vpop.f32.mrb[0].mxu0
        %2402 = vdwg.mxu0
        %v2403 = vmax.f32 %v2398, 0.0
        %v2404 = vmul.f32 %v2362, %v2403
        %v2405 = vsub.f32 1.0, %v2362
        %v2406 = vmul.f32 %v2405, %v2310
        %v2407 = vadd.f32 %v2404, %v2406
        %v2408 = vld [vmem:[%s23] sm:$0x1]
        %v2409 = vld [vmem:[%s25] sm:$0x1]
        %v2410 = vpack.c.bf16 %v2407, %v2407
        %v2412 = vsel %vm983, %v2410, 0
        %2414 = vmatprep.subr.bf16.mxu0 0
        %2415 = vmatpush1.bf16.msra.mxu0 %v964
        %2416 = vmatprep.subr.bf16.mxu0 0
        %2417 = vmatpush1.bf16.msra.mxu0 %v965
        %2418 = vmatprep.subr.bf16.mxu0 0
        %2419 = vmatpush1.bf16.msra.mxu0 0
        %2420 = vmatprep.subr.bf16.mxu0 0
        %2421 = vmatpush1.bf16.msra.mxu0 0
        %2422 = vmatprep.subr.bf16.mxu0 0
        %2423 = vmatpush1.bf16.msra.mxu0 0
        %2424 = vmatprep.subr.bf16.mxu0 0
        %2425 = vmatpush1.bf16.msra.mxu0 0
        %2426 = vmatprep.subr.bf16.mxu0 0
        %2427 = vmatpush1.bf16.msra.mxu0 0
        %2428 = vmatprep.subr.bf16.mxu0 0
        %2429 = vmatpush1.bf16.msra.mxu0 0
        %2430 = vmatprep.subr.bf16.mxu0 0
        %2431 = vmatpush1.bf16.msra.mxu0 0
        %2432 = vmatprep.subr.bf16.mxu0 0
        %2433 = vmatpush1.bf16.msra.mxu0 0
        %2434 = vmatprep.subr.bf16.mxu0 0
        %2435 = vmatpush1.bf16.msra.mxu0 0
        %2436 = vmatprep.subr.bf16.mxu0 0
        %2437 = vmatpush1.bf16.msra.mxu0 0
        %2438 = vmatprep.subr.bf16.mxu0 0
        %2439 = vmatpush1.bf16.msra.mxu0 0
        %2440 = vmatprep.subr.bf16.mxu0 0
        %2441 = vmatpush1.bf16.msra.mxu0 0
        %2442 = vmatprep.subr.bf16.mxu0 0
        %2443 = vmatpush1.bf16.msra.mxu0 0
        %2444 = vmatprep.subr.bf16.mxu0 0
        %2445 = vmatpush1.bf16.msra.mxu0 0
        %2446 = vmatprep.mubr.bf16.mxu0 0
        %2447 = vmatmul.mubr.bf16.gmra.mrb[0].mxu0 %v2412
        %v2448 = vpop.f32.mrb[0].mxu0
        %v2449 = vadd.f32 %v2408, %v2448
        %v2450 = vpop.f32.mrb[0].mxu0
        %v2451 = vpop.f32.mrb[0].mxu0
        %v2452 = vpop.f32.mrb[0].mxu0
        %2453 = vdwg.mxu0
        %v2454 = vxor.u32 %v2449, 2147483648
        %v2455 = vmul.f32 %v2454, 1.442695
        %v2456 = vpow.pop %v2455
        %v2457 = vadd.f32 %v2456, 1.0
        %v2458 = vrcp.pop %v2457
        %v2459 = vmul.f32 1.0, %v2458
        %2460 = vmatprep.subr.bf16.mxu0 0
        %2461 = vmatpush1.bf16.msra.mxu0 %v970
        %2462 = vmatprep.subr.bf16.mxu0 0
        %2463 = vmatpush1.bf16.msra.mxu0 %v971
        %2464 = vmatprep.subr.bf16.mxu0 0
        %2465 = vmatpush1.bf16.msra.mxu0 0
        %2466 = vmatprep.subr.bf16.mxu0 0
        %2467 = vmatpush1.bf16.msra.mxu0 0
        %2468 = vmatprep.subr.bf16.mxu0 0
        %2469 = vmatpush1.bf16.msra.mxu0 0
        %2470 = vmatprep.subr.bf16.mxu0 0
        %2471 = vmatpush1.bf16.msra.mxu0 0
        %2472 = vmatprep.subr.bf16.mxu0 0
        %2473 = vmatpush1.bf16.msra.mxu0 0
        %2474 = vmatprep.subr.bf16.mxu0 0
        %2475 = vmatpush1.bf16.msra.mxu0 0
        %2476 = vmatprep.subr.bf16.mxu0 0
        %2477 = vmatpush1.bf16.msra.mxu0 0
        %2478 = vmatprep.subr.bf16.mxu0 0
        %2479 = vmatpush1.bf16.msra.mxu0 0
        %2480 = vmatprep.subr.bf16.mxu0 0
        %2481 = vmatpush1.bf16.msra.mxu0 0
        %2482 = vmatprep.subr.bf16.mxu0 0
        %2483 = vmatpush1.bf16.msra.mxu0 0
        %2484 = vmatprep.subr.bf16.mxu0 0
        %2485 = vmatpush1.bf16.msra.mxu0 0
        %2486 = vmatprep.subr.bf16.mxu0 0
        %2487 = vmatpush1.bf16.msra.mxu0 0
        %2488 = vmatprep.subr.bf16.mxu0 0
        %2489 = vmatpush1.bf16.msra.mxu0 0
        %2490 = vmatprep.subr.bf16.mxu0 0
        %2491 = vmatpush1.bf16.msra.mxu0 0
        %2492 = vmatprep.mubr.bf16.mxu0 0
        %2493 = vmatmul.mubr.bf16.gmra.mrb[0].mxu0 %v2412
        %v2494 = vpop.f32.mrb[0].mxu0
        %v2495 = vadd.f32 %v2409, %v2494
        %v2496 = vpop.f32.mrb[0].mxu0
        %v2497 = vpop.f32.mrb[0].mxu0
        %v2498 = vpop.f32.mrb[0].mxu0
        %2499 = vdwg.mxu0
        %v2500 = vmax.f32 %v2495, 0.0
        %v2501 = vmul.f32 %v2459, %v2500
        %v2502 = vsub.f32 1.0, %v2459
        %v2503 = vmul.f32 %v2502, %v2407
        %v2504 = vadd.f32 %v2501, %v2503
        %v2505 = vpack.c.bf16 %v2504, %v2504
        %v2506 = vld [vmem:[%s27] sm:$0x1]
        %v2508 = vsel %vm983, %v2505, 0
        %2510 = vmatprep.subr.bf16.mxu0 0
        %2511 = vmatpush1.bf16.msra.mxu0 %v976
        %2512 = vmatprep.subr.bf16.mxu0 0
        %2513 = vmatpush1.bf16.msra.mxu0 %v977
        %2514 = vmatprep.subr.bf16.mxu0 0
        %2515 = vmatpush1.bf16.msra.mxu0 0
        %2516 = vmatprep.subr.bf16.mxu0 0
        %2517 = vmatpush1.bf16.msra.mxu0 0
        %2518 = vmatprep.subr.bf16.mxu0 0
        %2519 = vmatpush1.bf16.msra.mxu0 0
        %2520 = vmatprep.subr.bf16.mxu0 0
        %2521 = vmatpush1.bf16.msra.mxu0 0
        %2522 = vmatprep.subr.bf16.mxu0 0
        %2523 = vmatpush1.bf16.msra.mxu0 0
        %2524 = vmatprep.subr.bf16.mxu0 0
        %2525 = vmatpush1.bf16.msra.mxu0 0
        %2526 = vmatprep.subr.bf16.mxu0 0
        %2527 = vmatpush1.bf16.msra.mxu0 0
        %2528 = vmatprep.subr.bf16.mxu0 0
        %2529 = vmatpush1.bf16.msra.mxu0 0
        %2530 = vmatprep.subr.bf16.mxu0 0
        %2531 = vmatpush1.bf16.msra.mxu0 0
        %2532 = vmatprep.subr.bf16.mxu0 0
        %2533 = vmatpush1.bf16.msra.mxu0 0
        %2534 = vmatprep.subr.bf16.mxu0 0
        %2535 = vmatpush1.bf16.msra.mxu0 0
        %2536 = vmatprep.subr.bf16.mxu0 0
        %2537 = vmatpush1.bf16.msra.mxu0 0
        %2538 = vmatprep.subr.bf16.mxu0 0
        %2539 = vmatpush1.bf16.msra.mxu0 0
        %2540 = vmatprep.subr.bf16.mxu0 0
        %2541 = vmatpush1.bf16.msra.mxu0 0
        %2542 = vmatprep.mubr.bf16.mxu0 0
        %2543 = vmatmul.mubr.bf16.gmra.mrb[0].mxu0 %v2508
        %v2544 = vpop.f32.mrb[0].mxu0
        %v2545 = vadd.f32 %v2506, %v2544
        %v2546 = vpop.f32.mrb[0].mxu0
        %v2547 = vpop.f32.mrb[0].mxu0
        %v2548 = vpop.f32.mrb[0].mxu0
        %2549 = vdwg.mxu0
        %vm2550 = vcmask 8192
        %v2551 = vsel %vm2550, %v2545, -inf
        %2552 = vmax.xlane.f32.xlu0 %v2551
        %v2553 = vpop.xlane.xlu0 %2552
        %v2554 = vsub.f32 %v2545, %v2553
        %v2555 = vmul.f32 %v2554, 1.442695
        %v2556 = vpow.pop %v2555
        %v2557 = vsel %vm2550, %v2556, 0.0
        %2558 = vadd.xlane.f32.xlu0 %v2557
        %v2559 = vpop.xlane.xlu0 %2558
        %v2560 = vlog2.pop %v2559
        %v2561 = vmul.f32 %v2560, 0.6931472
        %v2562 = vsub.f32 %v2554, %v2561
        %2563 = vst.msk [vmem:[%s858] sm:$0x1] %vm2550, %v2562
        %s2564 = sand.u32 %s648, 1
        %s2565 = scalar_lea.sflag [#allocation3], %s2564
        %s2566 = sand.u32 %s648, 1
        %s2567 = scalar_lea.vmem [#allocation2], %s2566
        // Predicated region
        $region133: #{mcan_reid_forward.3} parent=131 // pred_check
          %p2568 = pneg %p658
        $region134: #{mcan_reid_forward.3} parent=131 // pred_check_branch
          %2570 = sbr.rel (%p2568) target = $region136
        $region135: #{mcan_reid_forward.3} parent=131 // pred_region
          %s2572 = ssub.s32 16, 16
          %2573 = vsyncadd %s2565, %s2572
          %s2574 = smul.addr %s42, 16
          %s2575 = scalar_lea.hbm %s28, %s2574
          %s2577 = sshll.u32 %s2567, 4
          %s2578 = int_to_ptr.vmem [resolvable:$true] %s2577
          %2580 = dma.vmem_to_hbm [thread:$0]  %s2578, 16, %s2575, %s2565
        $region136: #{mcan_reid_forward.3} parent=131 // pred_fallthru
          _
      $region132: #{mcan_reid_forward.3} parent=5 // pred_fallthru
        _
      %p2581 = scmp.le.s32.totalorder 2, %s37
      // Predicated region
      $region137: #{mcan_reid_forward.3} parent=5 // pred_check
        %p2582 = pneg %p2581
      $region138: #{mcan_reid_forward.3} parent=5 // pred_check_branch
        %2584 = sbr.rel (%p2582) target = $region140
      $region139: #{mcan_reid_forward.3} parent=5 // pred_region
        %s2585 = ssub.s32 %s37, 2
        // Predicated region
        $region141: #{mcan_reid_forward.3} parent=139 // pred_check
          %p2586 = pneg %p664
        $region142: #{mcan_reid_forward.3} parent=139 // pred_check_branch
          %2588 = sbr.rel (%p2586) target = $region144
        $region143: #{mcan_reid_forward.3} parent=139 // pred_region
          %s2589 = sand.u32 %s649, 1
          %s2590 = scalar_lea.sflag [#allocation3], %s2589
          %s2591 = sand.u32 %s649, 1
          %s2592 = scalar_lea.vmem [#allocation2], %s2591
          %2593 = dma.done %s2590, 16
        $region144: #{mcan_reid_forward.3} parent=139 // pred_fallthru
          _
      $region140: #{mcan_reid_forward.3} parent=5 // pred_fallthru
        _
    $region6: #{mcan_reid_forward.3} parent=1 // loop_footer
      %s41 = sadd.s32 1, %s37
    $region7: #{mcan_reid_forward.3} parent=1 // loop_footer_branch
      %36 = sbr.rel target = $region3
    $region8: #{mcan_reid_forward.3} parent=1 // loop_exit
      _
    %2594 = vsyncpa [#allocation3], 1
    %s2595 = scalar_lea.sflag [#allocation3], 1
    %2596 = vsyncpa %s2595, 1

// kernel: mcan_reid_forward.2
$region0: #{mcan_reid_forward.2}
  #allocation0 [shape = 'u32[]', space=smem, size = 0x4, offset = 0x4, fixed_abs, tag = 'smem constant byte address 0x4 - core index']
  #allocation1 [shape = 'u32[144,128]{1,0:T(1,128)}', space=vmem, size = 0x12000, scoped, tag = 'internal scratch']
  #allocation2 [shape = 'f32[2,16,32]{2,1,0:T(8,128)}', space=vmem, size = 0x4000, scoped, tag = 'scratch operand']
  %s0 = inlined_call_operand.vmem [shape: f32[4,16,64], index: 0, kind: input, shape index: {}]
  %s1 = inlined_call_operand.vmem [shape: f32[64,32], index: 1, kind: input, shape index: {}]
  %s2 = inlined_call_operand.vmem [shape: f32[1,32], index: 2, kind: input, shape index: {}]
  %s3 = inlined_call_operand.vmem [shape: f32[32,96], index: 3, kind: input, shape index: {}]
  %s4 = inlined_call_operand.vmem [shape: f32[1,96], index: 4, kind: input, shape index: {}]
  %s5 = inlined_call_operand.vmem [shape: f32[32,96], index: 5, kind: input, shape index: {}]
  %s6 = inlined_call_operand.vmem [shape: f32[1,96], index: 6, kind: input, shape index: {}]
  %s7 = inlined_call_operand.vmem [shape: bf16[4,16,32], index: 7, kind: output, shape index: {0}]
  %s8 = inlined_call_operand.vmem [shape: bf16[4,16,32], index: 8, kind: output, shape index: {1}]
  %9 = xla_tuple %s7, %s8
  %s10 = sld [smem:[#allocation0]]
  $region69: #{mcan_reid_forward.2} parent=0
    _
  %s12 = ssub.s32 1, %s10
  %s13 = scalar_select 0, %s12, %s10
  loop: start=0, step=1, limit=4
  $region2: #{mcan_reid_forward.2} parent=0 // loop_pre_header
    _
  $region3: #{mcan_reid_forward.2} parent=0 // loop_header
    %s15 = sphi 0, %s19
    %p16 = scmp.ge.s32.totalorder %s15, 4
    %s25 = sphi 0, %s27
    %s28 = sphi 0, %s25
    %s29 = sphi 0, %s28
    %s45 = sphi 0, %s29
    %s49 = sphi 0, %s49
    %s51 = sphi 0, %s49
    %s52 = sphi 0, %s51
    %s66 = sphi 0, %s52
    %s70 = sphi 0, %s70
    %s72 = sphi 0, %s70
    %s73 = sphi 0, %s72
    %s87 = sphi 0, %s73
    %s91 = sphi 0, %s91
    %s93 = sphi 0, %s91
    %s94 = sphi 0, %s93
    %s108 = sphi 0, %s94
    %s112 = sphi 0, %s112
    %s114 = sphi 0, %s112
    %s115 = sphi 0, %s114
    %s129 = sphi 0, %s115
    %s133 = sphi 0, %s133
    %s135 = sphi 0, %s133
    %s136 = sphi 0, %s135
    %s150 = sphi 0, %s136
    %s154 = sphi 0, %s154
    %s156 = sphi 0, %s154
    %s157 = sphi 0, %s156
    %s171 = sphi 0, %s157
    %s177 = sphi 0, %s179
    %s180 = sphi 0, %s177
    %s181 = sphi 0, %s180
    %s197 = sphi 0, %s181
    %s203 = sphi 0, %s205
    %s206 = sphi 0, %s203
    %s207 = sphi 0, %s206
    %s223 = sphi 0, %s207
  $region4: #{mcan_reid_forward.2} parent=0 // loop_header_branch
    %18 = sbr.rel (%p16) target = $region8
  $region5: #{mcan_reid_forward.2} parent=0 // loop_body
    %s20 = ssub.s32 %s15, 1
    %s21 = ssub.s32 %s15, 2
    %s22 = sadd.s32 %s15, 1
    %s23 = ssub.s32 %s15, %s22
    %p24 = scmp.eq.s32.totalorder %s23, 0
    %s26 = sadd.s32 %s25, 1
    %s27 = scalar_select %p24, %s25, %s26
    %p30 = pneg %p24
    %p31 = scmp.eq.s32.totalorder %s15, 1
    %p32 = por %p30, %p31
    %p33 = scmp.ne.s32.totalorder %s25, %s28
    %p34 = scmp.eq.s32.totalorder %s15, 0
    %p35 = por %p33, %p34
    %p36 = scmp.ne.s32.totalorder %s25, %s28
    %p37 = scmp.eq.s32.totalorder %s20, 1
    %p38 = por %p36, %p37
    %p39 = scmp.ne.s32.totalorder %s28, %s29
    %p40 = scmp.eq.s32.totalorder %s20, 0
    %p41 = por %p39, %p40
    %p42 = scmp.ne.s32.totalorder %s28, %s29
    %p43 = scmp.eq.s32.totalorder %s21, 1
    %p44 = por %p42, %p43
    %p46 = scmp.ne.s32.totalorder %s29, %s45
    %p47 = scmp.eq.s32.totalorder %s21, 0
    %p48 = por %p46, %p47
    %s50 = sadd.s32 %s49, 1
    %p53 = scmp.eq.s32.totalorder %s15, 1
    %p54 = scmp.ne.s32.totalorder %s49, %s51
    %p55 = scmp.eq.s32.totalorder %s15, 0
    %p56 = por %p54, %p55
    %p57 = scmp.ne.s32.totalorder %s49, %s51
    %p58 = scmp.eq.s32.totalorder %s20, 1
    %p59 = por %p57, %p58
    %p60 = scmp.ne.s32.totalorder %s51, %s52
    %p61 = scmp.eq.s32.totalorder %s20, 0
    %p62 = por %p60, %p61
    %p63 = scmp.ne.s32.totalorder %s51, %s52
    %p64 = scmp.eq.s32.totalorder %s21, 1
    %p65 = por %p63, %p64
    %p67 = scmp.ne.s32.totalorder %s52, %s66
    %p68 = scmp.eq.s32.totalorder %s21, 0
    %p69 = por %p67, %p68
    %s71 = sadd.s32 %s70, 1
    %p74 = scmp.eq.s32.totalorder %s15, 1
    %p75 = scmp.ne.s32.totalorder %s70, %s72
    %p76 = scmp.eq.s32.totalorder %s15, 0
    %p77 = por %p75, %p76
    %p78 = scmp.ne.s32.totalorder %s70, %s72
    %p79 = scmp.eq.s32.totalorder %s20, 1
    %p80 = por %p78, %p79
    %p81 = scmp.ne.s32.totalorder %s72, %s73
    %p82 = scmp.eq.s32.totalorder %s20, 0
    %p83 = por %p81, %p82
    %p84 = scmp.ne.s32.totalorder %s72, %s73
    %p85 = scmp.eq.s32.totalorder %s21, 1
    %p86 = por %p84, %p85
    %p88 = scmp.ne.s32.totalorder %s73, %s87
    %p89 = scmp.eq.s32.totalorder %s21, 0
    %p90 = por %p88, %p89
    %s92 = sadd.s32 %s91, 1
    %p95 = scmp.eq.s32.totalorder %s15, 1
    %p96 = scmp.ne.s32.totalorder %s91, %s93
    %p97 = scmp.eq.s32.totalorder %s15, 0
    %p98 = por %p96, %p97
    %p99 = scmp.ne.s32.totalorder %s91, %s93
    %p100 = scmp.eq.s32.totalorder %s20, 1
    %p101 = por %p99, %p100
    %p102 = scmp.ne.s32.totalorder %s93, %s94
    %p103 = scmp.eq.s32.totalorder %s20, 0
    %p104 = por %p102, %p103
    %p105 = scmp.ne.s32.totalorder %s93, %s94
    %p106 = scmp.eq.s32.totalorder %s21, 1
    %p107 = por %p105, %p106
    %p109 = scmp.ne.s32.totalorder %s94, %s108
    %p110 = scmp.eq.s32.totalorder %s21, 0
    %p111 = por %p109, %p110
    %s113 = sadd.s32 %s112, 1
    %p116 = scmp.eq.s32.totalorder %s15, 1
    %p117 = scmp.ne.s32.totalorder %s112, %s114
    %p118 = scmp.eq.s32.totalorder %s15, 0
    %p119 = por %p117, %p118
    %p120 = scmp.ne.s32.totalorder %s112, %s114
    %p121 = scmp.eq.s32.totalorder %s20, 1
    %p122 = por %p120, %p121
    %p123 = scmp.ne.s32.totalorder %s114, %s115
    %p124 = scmp.eq.s32.totalorder %s20, 0
    %p125 = por %p123, %p124
    %p126 = scmp.ne.s32.totalorder %s114, %s115
    %p127 = scmp.eq.s32.totalorder %s21, 1
    %p128 = por %p126, %p127
    %p130 = scmp.ne.s32.totalorder %s115, %s129
    %p131 = scmp.eq.s32.totalorder %s21, 0
    %p132 = por %p130, %p131
    %s134 = sadd.s32 %s133, 1
    %p137 = scmp.eq.s32.totalorder %s15, 1
    %p138 = scmp.ne.s32.totalorder %s133, %s135
    %p139 = scmp.eq.s32.totalorder %s15, 0
    %p140 = por %p138, %p139
    %p141 = scmp.ne.s32.totalorder %s133, %s135
    %p142 = scmp.eq.s32.totalorder %s20, 1
    %p143 = por %p141, %p142
    %p144 = scmp.ne.s32.totalorder %s135, %s136
    %p145 = scmp.eq.s32.totalorder %s20, 0
    %p146 = por %p144, %p145
    %p147 = scmp.ne.s32.totalorder %s135, %s136
    %p148 = scmp.eq.s32.totalorder %s21, 1
    %p149 = por %p147, %p148
    %p151 = scmp.ne.s32.totalorder %s136, %s150
    %p152 = scmp.eq.s32.totalorder %s21, 0
    %p153 = por %p151, %p152
    %s155 = sadd.s32 %s154, 1
    %p158 = scmp.eq.s32.totalorder %s15, 1
    %p159 = scmp.ne.s32.totalorder %s154, %s156
    %p160 = scmp.eq.s32.totalorder %s15, 0
    %p161 = por %p159, %p160
    %p162 = scmp.ne.s32.totalorder %s154, %s156
    %p163 = scmp.eq.s32.totalorder %s20, 1
    %p164 = por %p162, %p163
    %p165 = scmp.ne.s32.totalorder %s156, %s157
    %p166 = scmp.eq.s32.totalorder %s20, 0
    %p167 = por %p165, %p166
    %p168 = scmp.ne.s32.totalorder %s156, %s157
    %p169 = scmp.eq.s32.totalorder %s21, 1
    %p170 = por %p168, %p169
    %p172 = scmp.ne.s32.totalorder %s157, %s171
    %p173 = scmp.eq.s32.totalorder %s21, 0
    %p174 = por %p172, %p173
    %s175 = ssub.s32 %s15, %s22
    %p176 = scmp.eq.s32.totalorder %s175, 0
    %s178 = sadd.s32 %s177, 1
    %s179 = scalar_select %p176, %s177, %s178
    %p182 = pneg %p176
    %p183 = scmp.eq.s32.totalorder %s15, 1
    %p184 = por %p182, %p183
    %p185 = scmp.ne.s32.totalorder %s177, %s180
    %p186 = scmp.eq.s32.totalorder %s15, 0
    %p187 = por %p185, %p186
    %p188 = scmp.ne.s32.totalorder %s177, %s180
    %p189 = scmp.eq.s32.totalorder %s20, 1
    %p190 = por %p188, %p189
    %p191 = scmp.ne.s32.totalorder %s180, %s181
    %p192 = scmp.eq.s32.totalorder %s20, 0
    %p193 = por %p191, %p192
    %p194 = scmp.ne.s32.totalorder %s180, %s181
    %p195 = scmp.eq.s32.totalorder %s21, 1
    %p196 = por %p194, %p195
    %p198 = scmp.ne.s32.totalorder %s181, %s197
    %p199 = scmp.eq.s32.totalorder %s21, 0
    %p200 = por %p198, %p199
    %s201 = ssub.s32 %s15, %s22
    %p202 = scmp.eq.s32.totalorder %s201, 0
    %s204 = sadd.s32 %s203, 1
    %s205 = scalar_select %p202, %s203, %s204
    %p208 = pneg %p202
    %p209 = scmp.eq.s32.totalorder %s15, 1
    %p210 = por %p208, %p209
    %p211 = scmp.ne.s32.totalorder %s203, %s206
    %p212 = scmp.eq.s32.totalorder %s15, 0
    %p213 = por %p211, %p212
    %p214 = scmp.ne.s32.totalorder %s203, %s206
    %p215 = scmp.eq.s32.totalorder %s20, 1
    %p216 = por %p214, %p215
    %p217 = scmp.ne.s32.totalorder %s206, %s207
    %p218 = scmp.eq.s32.totalorder %s20, 0
    %p219 = por %p217, %p218
    %p220 = scmp.ne.s32.totalorder %s206, %s207
    %p221 = scmp.eq.s32.totalorder %s21, 1
    %p222 = por %p220, %p221
    %p224 = scmp.ne.s32.totalorder %s207, %s223
    %p225 = scmp.eq.s32.totalorder %s21, 0
    %p226 = por %p224, %p225
    %p227 = scmp.le.s32.totalorder 1, %s15
    %p228 = scmp.lt.s32.totalorder %s15, 3
    %p229 = pnand %p227, %p228
    %p230 = pneg %p229
    // Predicated region
    $region9: #{mcan_reid_forward.2} parent=5 // pred_check
      _
    $region10: #{mcan_reid_forward.2} parent=5 // pred_check_branch
      %232 = sbr.rel (%p229) target = $region12
    $region11: #{mcan_reid_forward.2} parent=5 // pred_region
      %s233 = ssub.s32 %s15, 1
      // Predicated region
      $region13: #{mcan_reid_forward.2} parent=11 // pred_check
        %p234 = pneg %p62
      $region14: #{mcan_reid_forward.2} parent=11 // pred_check_branch
        %236 = sbr.rel (%p234) target = $region16
      $region15: #{mcan_reid_forward.2} parent=11 // pred_region
        _
      $region16: #{mcan_reid_forward.2} parent=11 // pred_fallthru
        _
      // Predicated region
      $region17: #{mcan_reid_forward.2} parent=11 // pred_check
        %p237 = pneg %p83
      $region18: #{mcan_reid_forward.2} parent=11 // pred_check_branch
        %239 = sbr.rel (%p237) target = $region20
      $region19: #{mcan_reid_forward.2} parent=11 // pred_region
        _
      $region20: #{mcan_reid_forward.2} parent=11 // pred_fallthru
        _
      // Predicated region
      $region21: #{mcan_reid_forward.2} parent=11 // pred_check
        %p240 = pneg %p104
      $region22: #{mcan_reid_forward.2} parent=11 // pred_check_branch
        %242 = sbr.rel (%p240) target = $region24
      $region23: #{mcan_reid_forward.2} parent=11 // pred_region
        _
      $region24: #{mcan_reid_forward.2} parent=11 // pred_fallthru
        _
      // Predicated region
      $region25: #{mcan_reid_forward.2} parent=11 // pred_check
        %p243 = pneg %p125
      $region26: #{mcan_reid_forward.2} parent=11 // pred_check_branch
        %245 = sbr.rel (%p243) target = $region28
      $region27: #{mcan_reid_forward.2} parent=11 // pred_region
        _
      $region28: #{mcan_reid_forward.2} parent=11 // pred_fallthru
        _
      // Predicated region
      $region29: #{mcan_reid_forward.2} parent=11 // pred_check
        %p246 = pneg %p146
      $region30: #{mcan_reid_forward.2} parent=11 // pred_check_branch
        %248 = sbr.rel (%p246) target = $region32
      $region31: #{mcan_reid_forward.2} parent=11 // pred_region
        _
      $region32: #{mcan_reid_forward.2} parent=11 // pred_fallthru
        _
      // Predicated region
      $region33: #{mcan_reid_forward.2} parent=11 // pred_check
        %p249 = pneg %p167
      $region34: #{mcan_reid_forward.2} parent=11 // pred_check_branch
        %251 = sbr.rel (%p249) target = $region36
      $region35: #{mcan_reid_forward.2} parent=11 // pred_region
        _
      $region36: #{mcan_reid_forward.2} parent=11 // pred_fallthru
        _
    $region12: #{mcan_reid_forward.2} parent=5 // pred_fallthru
      _
    %p252 = scmp.lt.s32.totalorder %s15, 2
    // Predicated region
    $region37: #{mcan_reid_forward.2} parent=5 // pred_check
      %p253 = pneg %p252
    $region38: #{mcan_reid_forward.2} parent=5 // pred_check_branch
      %255 = sbr.rel (%p253) target = $region40
    $region39: #{mcan_reid_forward.2} parent=5 // pred_region
      // Predicated region
      $region41: #{mcan_reid_forward.2} parent=39 // pred_check
        %p256 = pneg %p35
      $region42: #{mcan_reid_forward.2} parent=39 // pred_check_branch
        %258 = sbr.rel (%p256) target = $region44
      $region43: #{mcan_reid_forward.2} parent=39 // pred_region
        %s259 = smul.u32 2, %s15
        %p260 = scmp.lt.s32.totalorder %s259, 3
        %s261 = scalar_select %p260, %s259, 3
        %s262 = smul.addr %s261, 2
        %s263 = smul.addr %s262, 8
        %s264 = scalar_lea.vmem %s0, %s263
        %s265 = smul.u32 2, %s15
      $region44: #{mcan_reid_forward.2} parent=39 // pred_fallthru
        _
    $region40: #{mcan_reid_forward.2} parent=5 // pred_fallthru
      _
    %p266 = scmp.le.s32.totalorder 1, %s15
    %p267 = scmp.lt.s32.totalorder %s15, 3
    %p268 = pnand %p266, %p267
    %p269 = pneg %p268
    // Predicated region
    $region45: #{mcan_reid_forward.2} parent=5 // pred_check
      _
    $region46: #{mcan_reid_forward.2} parent=5 // pred_check_branch
      %271 = sbr.rel (%p268) target = $region48
    $region47: #{mcan_reid_forward.2} parent=5 // pred_region
      %s272 = ssub.s32 %s15, 1
      %s273 = smul.u32 2, %s20
      %p274 = scmp.lt.s32.totalorder %s273, 3
      %s275 = scalar_select %p274, %s273, 3
      %s276 = smul.addr %s275, 2
      %s277 = smul.addr %s276, 8
      %s278 = scalar_lea.vmem %s0, %s277
      %p279 = pneg %p41
      %p280 = pneg %p38
      %p281 = pneg %p62
      %p282 = pneg %p59
      %p283 = pneg %p83
      %p284 = pneg %p80
      %p285 = pneg %p104
      %p286 = pneg %p101
      %p287 = pneg %p125
      %p288 = pneg %p122
      %p289 = pneg %p146
      %p290 = pneg %p143
      %p291 = pneg %p167
      %p292 = pneg %p164
      %p293 = pneg %p193
      %p294 = pneg %p190
      %s295 = smul.u32 2, %s20
      %p296 = scmp.lt.s32.totalorder %s295, 3
      %s297 = scalar_select %p296, %s295, 3
      %s298 = smul.addr %s297, 2
      %s299 = smul.addr %s298, 4
      %s300 = scalar_lea.vmem %s7, %s299
      %p301 = pneg %p219
      %p302 = pneg %p216
      %s303 = smul.u32 2, %s20
      %p304 = scmp.lt.s32.totalorder %s303, 3
      %s305 = scalar_select %p304, %s303, 3
      %s306 = smul.addr %s305, 2
      %s307 = smul.addr %s306, 4
      %s308 = scalar_lea.vmem %s8, %s307
      %s309 = smul.u32 2, %s20
      %p310 = scmp.lt.s32.totalorder %s309, 3
      %s311 = scalar_select %p310, %s309, 3
      %s312 = smul.addr %s311, 2
      %s313 = smul.addr %s312, 8
      %s314 = scalar_lea.vmem %s0, %s313
      %s315 = smul.u32 2, %s20
      %s316 = smul.u32 2, %s20
      %p317 = scmp.lt.s32.totalorder %s316, 3
      %s318 = scalar_select %p317, %s316, 3
      %s319 = smul.addr %s318, 2
      %s320 = smul.addr %s319, 4
      %s321 = scalar_lea.vmem %s7, %s320
      %s322 = smul.u32 2, %s20
      %s323 = smul.u32 2, %s20
      %p324 = scmp.lt.s32.totalorder %s323, 3
      %s325 = scalar_select %p324, %s323, 3
      %s326 = smul.addr %s325, 2
      %s327 = smul.addr %s326, 4
      %s328 = scalar_lea.vmem %s8, %s327
      %s329 = smul.u32 2, %s20
      %v331 = vld [vmem:[%s314] sm:$0xff]
      %v332 = vld [vmem:[%s314 + $0x8] sm:$0xff]
      %v333 = vld [vmem:[%s314 + $0x10] sm:$0xff]
      %v334 = vld [vmem:[%s314 + $0x18] sm:$0xff]
      %v335 = vld [vmem:[%s1] sm:$0xff]
      %v336 = vld [vmem:[%s1 + $0x8] sm:$0xff]
      %v337 = vld [vmem:[%s1 + $0x10] sm:$0xff]
      %v338 = vld [vmem:[%s1 + $0x18] sm:$0xff]
      %v339 = vld [vmem:[%s1 + $0x20] sm:$0xff]
      %v340 = vld [vmem:[%s1 + $0x28] sm:$0xff]
      %v341 = vld [vmem:[%s1 + $0x30] sm:$0xff]
      %v342 = vld [vmem:[%s1 + $0x38] sm:$0xff]
      %v343 = vpack.c.bf16 %v336, %v335
      %v344 = vpack.c.bf16 %v338, %v337
      %v345 = vpack.c.bf16 %v340, %v339
      %v346 = vpack.c.bf16 %v342, %v341
      %v347 = vld [vmem:[%s3] sm:$0xff]
      %v348 = vld [vmem:[%s3 + $0x8] sm:$0xff]
      %v349 = vld [vmem:[%s3 + $0x10] sm:$0xff]
      %v350 = vld [vmem:[%s3 + $0x18] sm:$0xff]
      %v351 = vpack.c.bf16 %v348, %v347
      %v352 = vpack.c.bf16 %v350, %v349
      %v353 = vld [vmem:[%s5] sm:$0xff]
      %v354 = vld [vmem:[%s5 + $0x8] sm:$0xff]
      %v355 = vld [vmem:[%s5 + $0x10] sm:$0xff]
      %v356 = vld [vmem:[%s5 + $0x18] sm:$0xff]
      %v357 = vpack.c.bf16 %v354, %v353
      %v358 = vpack.c.bf16 %v356, %v355
      %v359 = vld [vmem:[%s6] sm:$0x1]
      %v360 = vpack.c.bf16 %v332, %v331
      %v361 = vpack.c.bf16 %v334, %v333
      %v362 = vld [vmem:[%s2] sm:$0x1]
      %v364 = vlaneseq
      %v365 = vshrl.u32 %v364, 7
      %v366 = vsub.s32 0, %v365
      %v367 = vrot.slane %v362, %v366
      %vm369 = vcmask 523264
      %v371 = vsel %vm369, %v360, 0
      %v374 = vsel %vm369, %v361, 0
      %376 = vmatprep.subr.bf16.mxu0 0
      %377 = vmatpush1.bf16.msra.mxu0 %v343
      %378 = vmatprep.subr.bf16.mxu0 0
      %379 = vmatpush1.bf16.msra.mxu0 %v344
      %380 = vmatprep.subr.bf16.mxu0 0
      %381 = vmatpush1.bf16.msra.mxu0 %v345
      %382 = vmatprep.subr.bf16.mxu0 0
      %383 = vmatpush1.bf16.msra.mxu0 %v346
      %384 = vmatprep.subr.bf16.mxu0 0
      %385 = vmatpush1.bf16.msra.mxu0 0
      %386 = vmatprep.subr.bf16.mxu0 0
      %387 = vmatpush1.bf16.msra.mxu0 0
      %388 = vmatprep.subr.bf16.mxu0 0
      %389 = vmatpush1.bf16.msra.mxu0 0
      %390 = vmatprep.subr.bf16.mxu0 0
      %391 = vmatpush1.bf16.msra.mxu0 0
      %392 = vmatprep.subr.bf16.mxu0 0
      %393 = vmatpush1.bf16.msra.mxu0 0
      %394 = vmatprep.subr.bf16.mxu0 0
      %395 = vmatpush1.bf16.msra.mxu0 0
      %396 = vmatprep.subr.bf16.mxu0 0
      %397 = vmatpush1.bf16.msra.mxu0 0
      %398 = vmatprep.subr.bf16.mxu0 0
      %399 = vmatpush1.bf16.msra.mxu0 0
      %400 = vmatprep.subr.bf16.mxu0 0
      %401 = vmatpush1.bf16.msra.mxu0 0
      %402 = vmatprep.subr.bf16.mxu0 0
      %403 = vmatpush1.bf16.msra.mxu0 0
      %404 = vmatprep.subr.bf16.mxu0 0
      %405 = vmatpush1.bf16.msra.mxu0 0
      %406 = vmatprep.subr.bf16.mxu0 0
      %407 = vmatpush1.bf16.msra.mxu0 0
      %408 = vmatprep.mubr.bf16.mxu0 0
      %409 = vmatmul.mubr.bf16.gmra.mrb[0].mxu0 %v371
      %v410 = vpop.f32.mrb[0].mxu0
      %v411 = vadd.f32 %v367, %v410
      %v412 = vpop.f32.mrb[0].mxu0
      %v413 = vpop.f32.mrb[0].mxu0
      %v414 = vadd.f32 %v367, %v413
      %v415 = vpop.f32.mrb[0].mxu0
      %416 = vmatprep.mubr.bf16.mxu0 0
      %417 = vmatmul.mubr.bf16.gmra.mrb[0].mxu0 %v374
      %v418 = vpop.f32.mrb[0].mxu0
      %v419 = vadd.f32 %v367, %v418
      %v420 = vpop.f32.mrb[0].mxu0
      %v421 = vpop.f32.mrb[0].mxu0
      %v422 = vadd.f32 %v367, %v421
      %v423 = vpop.f32.mrb[0].mxu0
      %424 = vdwg.mxu0
      %v425 = vmax.f32 %v411, 0.0
      %v426 = vmax.f32 %v414, 0.0
      %v427 = vmax.f32 %v419, 0.0
      %v428 = vmax.f32 %v422, 0.0
      %v429 = vpack.c.bf16 %v426, %v425
      %v430 = vpack.c.bf16 %v428, %v427
      %v433 = vunpack.c.l.b16 %v429
      %v434 = vunpack.c.h.b16 %v429
      %v435 = vunpack.c.l.b16 %v430
      %v436 = vunpack.c.h.b16 %v430
      %v437 = vpack.c.b16 %v433, %v433
      %v438 = vpack.c.b16 %v434, %v434
      %v439 = vpack.c.b16 %v435, %v435
      %v440 = vpack.c.b16 %v436, %v436
      %vm445 = vcmask 257024
      %446 = vst.msk [vmem:[%s321] sm:$0xf] %vm445, %v437
      %447 = vst.msk [vmem:[%s321 + $0x4] sm:$0xf] %vm445, %v438
      %448 = vst.msk [vmem:[%s321 + $0x8] sm:$0xf] %vm445, %v439
      %449 = vst.msk [vmem:[%s321 + $0xc] sm:$0xf] %vm445, %v440
      %v450 = vld [vmem:[%s4] sm:$0x1]
      %v452 = vlaneseq
      %v453 = vshrl.u32 %v452, 7
      %v454 = vsub.s32 0, %v453
      %v455 = vrot.slane %v450, %v454
      %vm457 = vcmask 261120
      %v459 = vsel %vm457, %v429, 0
      %v462 = vsel %vm457, %v430, 0
      %464 = vmatprep.subr.bf16.mxu0 0
      %465 = vmatpush1.bf16.msra.mxu0 %v351
      %466 = vmatprep.subr.bf16.mxu0 0
      %467 = vmatpush1.bf16.msra.mxu0 %v352
      %468 = vmatprep.subr.bf16.mxu0 0
      %469 = vmatpush1.bf16.msra.mxu0 0
      %470 = vmatprep.subr.bf16.mxu0 0
      %471 = vmatpush1.bf16.msra.mxu0 0
      %472 = vmatprep.subr.bf16.mxu0 0
      %473 = vmatpush1.bf16.msra.mxu0 0
      %474 = vmatprep.subr.bf16.mxu0 0
      %475 = vmatpush1.bf16.msra.mxu0 0
      %476 = vmatprep.subr.bf16.mxu0 0
      %477 = vmatpush1.bf16.msra.mxu0 0
      %478 = vmatprep.subr.bf16.mxu0 0
      %479 = vmatpush1.bf16.msra.mxu0 0
      %480 = vmatprep.subr.bf16.mxu0 0
      %481 = vmatpush1.bf16.msra.mxu0 0
      %482 = vmatprep.subr.bf16.mxu0 0
      %483 = vmatpush1.bf16.msra.mxu0 0
      %484 = vmatprep.subr.bf16.mxu0 0
      %485 = vmatpush1.bf16.msra.mxu0 0
      %486 = vmatprep.subr.bf16.mxu0 0
      %487 = vmatpush1.bf16.msra.mxu0 0
      %488 = vmatprep.subr.bf16.mxu0 0
      %489 = vmatpush1.bf16.msra.mxu0 0
      %490 = vmatprep.subr.bf16.mxu0 0
      %491 = vmatpush1.bf16.msra.mxu0 0
      %492 = vmatprep.subr.bf16.mxu0 0
      %493 = vmatpush1.bf16.msra.mxu0 0
      %494 = vmatprep.subr.bf16.mxu0 0
      %495 = vmatpush1.bf16.msra.mxu0 0
      %496 = vmatprep.mubr.bf16.mxu0 0
      %497 = vmatmul.mubr.bf16.gmra.mrb[0].mxu0 %v459
      %v498 = vpop.f32.mrb[0].mxu0
      %v499 = vadd.f32 %v455, %v498
      %v500 = vpop.f32.mrb[0].mxu0
      %v501 = vpop.f32.mrb[0].mxu0
      %v502 = vadd.f32 %v455, %v501
      %v503 = vpop.f32.mrb[0].mxu0
      %504 = vmatprep.mubr.bf16.mxu0 0
      %505 = vmatmul.mubr.bf16.gmra.mrb[0].mxu0 %v462
      %v506 = vpop.f32.mrb[0].mxu0
      %v507 = vadd.f32 %v455, %v506
      %v508 = vpop.f32.mrb[0].mxu0
      %v509 = vpop.f32.mrb[0].mxu0
      %v510 = vadd.f32 %v455, %v509
      %v511 = vpop.f32.mrb[0].mxu0
      %512 = vdwg.mxu0
      %v514 = vlaneseq
      %v515 = vshrl.u32 %v514, 7
      %v516 = vsub.s32 0, %v515
      %v517 = vrot.slane %v359, %v516
      %v520 = vsel %vm457, 0, 0
      %522 = vmatprep.subr.bf16.mxu0 0
      %523 = vmatpush1.bf16.msra.mxu0 %v357
      %524 = vmatprep.subr.bf16.mxu0 0
      %525 = vmatpush1.bf16.msra.mxu0 %v358
      %526 = vmatprep.subr.bf16.mxu0 0
      %527 = vmatpush1.bf16.msra.mxu0 0
      %528 = vmatprep.subr.bf16.mxu0 0
      %529 = vmatpush1.bf16.msra.mxu0 0
      %530 = vmatprep.subr.bf16.mxu0 0
      %531 = vmatpush1.bf16.msra.mxu0 0
      %532 = vmatprep.subr.bf16.mxu0 0
      %533 = vmatpush1.bf16.msra.mxu0 0
      %534 = vmatprep.subr.bf16.mxu0 0
      %535 = vmatpush1.bf16.msra.mxu0 0
      %536 = vmatprep.subr.bf16.mxu0 0
      %537 = vmatpush1.bf16.msra.mxu0 0
      %538 = vmatprep.subr.bf16.mxu0 0
      %539 = vmatpush1.bf16.msra.mxu0 0
      %540 = vmatprep.subr.bf16.mxu0 0
      %541 = vmatpush1.bf16.msra.mxu0 0
      %542 = vmatprep.subr.bf16.mxu0 0
      %543 = vmatpush1.bf16.msra.mxu0 0
      %544 = vmatprep.subr.bf16.mxu0 0
      %545 = vmatpush1.bf16.msra.mxu0 0
      %546 = vmatprep.subr.bf16.mxu0 0
      %547 = vmatpush1.bf16.msra.mxu0 0
      %548 = vmatprep.subr.bf16.mxu0 0
      %549 = vmatpush1.bf16.msra.mxu0 0
      %550 = vmatprep.subr.bf16.mxu0 0
      %551 = vmatpush1.bf16.msra.mxu0 0
      %552 = vmatprep.subr.bf16.mxu0 0
      %553 = vmatpush1.bf16.msra.mxu0 0
      %554 = vmatprep.mubr.bf16.mxu0 0
      %555 = vmatmul.mubr.bf16.gmra.mrb[0].mxu0 %v520
      %v556 = vpop.f32.mrb[0].mxu0
      %v557 = vadd.f32 %v517, %v556
      %v558 = vpop.f32.mrb[0].mxu0
      %v559 = vpop.f32.mrb[0].mxu0
      %v560 = vpop.f32.mrb[0].mxu0
      %561 = vdwg.mxu0
      %v563 = vrot.slane %v557, 1
      %v566 = vadd.f32 %v499, %v557
      %v567 = vadd.f32 %v507, %v563
      %v568 = vxor.u32 %v566, 2147483648
      %v569 = vxor.u32 %v567, 2147483648
      %v570 = vmul.f32 %v568, 1.442695
      %v571 = vpow.pop %v570
      %v572 = vmul.f32 %v569, 1.442695
      %v573 = vpow.pop %v572
      %v574 = vadd.f32 %v571, 1.0
      %v575 = vadd.f32 %v573, 1.0
      %v576 = vrcp.pop %v574
      %v577 = vmul.f32 1.0, %v576
      %v578 = vrcp.pop %v575
      %v579 = vmul.f32 1.0, %v578
      %580 = vrot.lane.b32.xlu0 %v557, 64
      %v581 = vpop.permute.xlu0 %580
      %582 = vrot.lane.b32.xlu0 %v563, 64
      %v583 = vpop.permute.xlu0 %582
      %v586 = vmul.f32 %v577, %v581
      %v587 = vmul.f32 %v579, %v583
      %590 = vrot.lane.b32.xlu0 %v586, 64
      %v591 = vpop.permute.xlu0 %590
      %592 = vrot.lane.b32.xlu0 %v587, 64
      %v593 = vpop.permute.xlu0 %592
      %v596 = vadd.f32 %v499, %v591
      %v597 = vadd.f32 %v507, %v593
      %v598 = vtanh.pop %v596
      %v599 = vtanh.pop %v597
      %v600 = vsub.f32 1.0, %v577
      %v601 = vsub.f32 1.0, %v579
      %604 = vrot.lane.b32.xlu0 %v598, 96
      %v605 = vpop.permute.xlu0 %604
      %606 = vrot.lane.b32.xlu0 %v599, 96
      %v607 = vpop.permute.xlu0 %606
      %v610 = vmul.f32 %v600, %v605
      %v611 = vmul.f32 %v601, %v607
      %v612 = vmul.f32 %v577, 0.0
      %v613 = vmul.f32 %v579, 0.0
      %v614 = vadd.f32 %v610, %v612
      %v615 = vadd.f32 %v611, %v613
      %618 = vrot.lane.b32.xlu0 %v614, 96
      %v619 = vpop.permute.xlu0 %618
      %620 = vrot.lane.b32.xlu0 %v615, 96
      %v621 = vpop.permute.xlu0 %620
      %vm624 = vcmask 253952
      %625 = vst.msk [vmem:[#allocation2] sm:$0x1] %vm624, %v619
      %626 = vst.msk [vmem:[#allocation2 + $0x10] sm:$0x1] %vm624, %v621
      %v627 = vpack.c.bf16 %v614, %v614
      %v628 = vpack.c.bf16 %v615, %v615
      %v631 = vunpack.c.l.b16 %v627
      %v632 = vunpack.c.l.b16 %v628
      %v633 = vrot.slane %v632, 7
      %vm634 = vcmask 1041409
      %v635 = vsel %vm634, %v633, %v631
      %v636 = vpack.c.b16 %v635, %v635
      %637 = vrot.lane.b32.xlu0 %v636, 96
      %v638 = vpop.permute.xlu0 %637
      %v640 = vsel %vm457, %v638, 0
      %642 = vmatprep.subr.bf16.mxu0 0
      %643 = vmatpush1.bf16.msra.mxu0 %v357
      %644 = vmatprep.subr.bf16.mxu0 0
      %645 = vmatpush1.bf16.msra.mxu0 %v358
      %646 = vmatprep.subr.bf16.mxu0 0
      %647 = vmatpush1.bf16.msra.mxu0 0
      %648 = vmatprep.subr.bf16.mxu0 0
      %649 = vmatpush1.bf16.msra.mxu0 0
      %650 = vmatprep.subr.bf16.mxu0 0
      %651 = vmatpush1.bf16.msra.mxu0 0
      %652 = vmatprep.subr.bf16.mxu0 0
      %653 = vmatpush1.bf16.msra.mxu0 0
      %654 = vmatprep.subr.bf16.mxu0 0
      %655 = vmatpush1.bf16.msra.mxu0 0
      %656 = vmatprep.subr.bf16.mxu0 0
      %657 = vmatpush1.bf16.msra.mxu0 0
      %658 = vmatprep.subr.bf16.mxu0 0
      %659 = vmatpush1.bf16.msra.mxu0 0
      %660 = vmatprep.subr.bf16.mxu0 0
      %661 = vmatpush1.bf16.msra.mxu0 0
      %662 = vmatprep.subr.bf16.mxu0 0
      %663 = vmatpush1.bf16.msra.mxu0 0
      %664 = vmatprep.subr.bf16.mxu0 0
      %665 = vmatpush1.bf16.msra.mxu0 0
      %666 = vmatprep.subr.bf16.mxu0 0
      %667 = vmatpush1.bf16.msra.mxu0 0
      %668 = vmatprep.subr.bf16.mxu0 0
      %669 = vmatpush1.bf16.msra.mxu0 0
      %670 = vmatprep.subr.bf16.mxu0 0
      %671 = vmatpush1.bf16.msra.mxu0 0
      %672 = vmatprep.subr.bf16.mxu0 0
      %673 = vmatpush1.bf16.msra.mxu0 0
      %674 = vmatprep.mubr.bf16.mxu0 0
      %675 = vmatmul.mubr.bf16.gmra.mrb[0].mxu0 %v640
      %v676 = vpop.f32.mrb[0].mxu0
      %v677 = vadd.f32 %v517, %v676
      %v678 = vpop.f32.mrb[0].mxu0
      %v679 = vpop.f32.mrb[0].mxu0
      %v680 = vpop.f32.mrb[0].mxu0
      %681 = vdwg.mxu0
      %v683 = vrot.slane %v677, 7
      %v686 = vadd.f32 %v499, %v683
      %v687 = vadd.f32 %v507, %v677
      %v688 = vxor.u32 %v686, 2147483648
      %v689 = vxor.u32 %v687, 2147483648
      %v690 = vmul.f32 %v688, 1.442695
      %v691 = vpow.pop %v690
      %v692 = vmul.f32 %v689, 1.442695
      %v693 = vpow.pop %v692
      %v694 = vadd.f32 %v691, 1.0
      %v695 = vadd.f32 %v693, 1.0
      %v696 = vrcp.pop %v694
      %v697 = vmul.f32 1.0, %v696
      %v698 = vrcp.pop %v695
      %v699 = vmul.f32 1.0, %v698
      %700 = vrot.lane.b32.xlu0 %v683, 64
      %v701 = vpop.permute.xlu0 %700
      %702 = vrot.lane.b32.xlu0 %v677, 64
      %v703 = vpop.permute.xlu0 %702
      %v706 = vmul.f32 %v697, %v701
      %v707 = vmul.f32 %v699, %v703
      %710 = vrot.lane.b32.xlu0 %v706, 64
      %v711 = vpop.permute.xlu0 %710
      %712 = vrot.lane.b32.xlu0 %v707, 64
      %v713 = vpop.permute.xlu0 %712
      %v716 = vadd.f32 %v499, %v711
      %v717 = vadd.f32 %v507, %v713
      %v718 = vtanh.pop %v716
      %v719 = vtanh.pop %v717
      %v720 = vsub.f32 1.0, %v697
      %v721 = vsub.f32 1.0, %v699
      %724 = vrot.lane.b32.xlu0 %v718, 96
      %v725 = vpop.permute.xlu0 %724
      %726 = vrot.lane.b32.xlu0 %v719, 96
      %v727 = vpop.permute.xlu0 %726
      %v730 = vmul.f32 %v720, %v725
      %v731 = vmul.f32 %v721, %v727
      %v732 = vrot.slane %v614, 7
      %v733 = vrot.slane %v615, 7
      %v736 = vmul.f32 %v697, %v732
      %v737 = vmul.f32 %v699, %v733
      %v738 = vadd.f32 %v730, %v736
      %v739 = vadd.f32 %v731, %v737
      %742 = vrot.lane.b32.xlu0 %v738, 96
      %v743 = vpop.permute.xlu0 %742
      %744 = vrot.lane.b32.xlu0 %v739, 96
      %v745 = vpop.permute.xlu0 %744
      %vm748 = vcmask 254977
      %749 = vst.msk [vmem:[#allocation2] sm:$0x2] %vm748, %v743
      %750 = vst.msk [vmem:[#allocation2 + $0x10] sm:$0x2] %vm748, %v745
      %v751 = vpack.c.bf16 %v738, %v738
      %v752 = vpack.c.bf16 %v739, %v739
      %v755 = vunpack.c.l.b16 %v751
      %v756 = vunpack.c.l.b16 %v752
      %v757 = vrot.slane %v755, 1
      %v758 = vsel %vm634, %v756, %v757
      %v759 = vpack.c.b16 %v758, %v758
      %760 = vrot.lane.b32.xlu0 %v759, 96
      %v761 = vpop.permute.xlu0 %760
      %v763 = vsel %vm457, %v761, 0
      %765 = vmatprep.subr.bf16.mxu0 0
      %766 = vmatpush1.bf16.msra.mxu0 %v357
      %767 = vmatprep.subr.bf16.mxu0 0
      %768 = vmatpush1.bf16.msra.mxu0 %v358
      %769 = vmatprep.subr.bf16.mxu0 0
      %770 = vmatpush1.bf16.msra.mxu0 0
      %771 = vmatprep.subr.bf16.mxu0 0
      %772 = vmatpush1.bf16.msra.mxu0 0
      %773 = vmatprep.subr.bf16.mxu0 0
      %774 = vmatpush1.bf16.msra.mxu0 0
      %775 = vmatprep.subr.bf16.mxu0 0
      %776 = vmatpush1.bf16.msra.mxu0 0
      %777 = vmatprep.subr.bf16.mxu0 0
      %778 = vmatpush1.bf16.msra.mxu0 0
      %779 = vmatprep.subr.bf16.mxu0 0
      %780 = vmatpush1.bf16.msra.mxu0 0
      %781 = vmatprep.subr.bf16.mxu0 0
      %782 = vmatpush1.bf16.msra.mxu0 0
      %783 = vmatprep.subr.bf16.mxu0 0
      %784 = vmatpush1.bf16.msra.mxu0 0
      %785 = vmatprep.subr.bf16.mxu0 0
      %786 = vmatpush1.bf16.msra.mxu0 0
      %787 = vmatprep.subr.bf16.mxu0 0
      %788 = vmatpush1.bf16.msra.mxu0 0
      %789 = vmatprep.subr.bf16.mxu0 0
      %790 = vmatpush1.bf16.msra.mxu0 0
      %791 = vmatprep.subr.bf16.mxu0 0
      %792 = vmatpush1.bf16.msra.mxu0 0
      %793 = vmatprep.subr.bf16.mxu0 0
      %794 = vmatpush1.bf16.msra.mxu0 0
      %795 = vmatprep.subr.bf16.mxu0 0
      %796 = vmatpush1.bf16.msra.mxu0 0
      %797 = vmatprep.mubr.bf16.mxu0 0
      %798 = vmatmul.mubr.bf16.gmra.mrb[0].mxu0 %v763
      %v799 = vpop.f32.mrb[0].mxu0
      %v800 = vadd.f32 %v517, %v799
      %v801 = vpop.f32.mrb[0].mxu0
      %v802 = vpop.f32.mrb[0].mxu0
      %v803 = vpop.f32.mrb[0].mxu0
      %804 = vdwg.mxu0
      %v806 = vrot.slane %v800, 6
      %v807 = vrot.slane %v800, 7
      %v810 = vadd.f32 %v499, %v806
      %v811 = vadd.f32 %v507, %v807
      %v812 = vxor.u32 %v810, 2147483648
      %v813 = vxor.u32 %v811, 2147483648
      %v814 = vmul.f32 %v812, 1.442695
      %v815 = vpow.pop %v814
      %v816 = vmul.f32 %v813, 1.442695
      %v817 = vpow.pop %v816
      %v818 = vadd.f32 %v815, 1.0
      %v819 = vadd.f32 %v817, 1.0
      %v820 = vrcp.pop %v818
      %v821 = vmul.f32 1.0, %v820
      %v822 = vrcp.pop %v819
      %v823 = vmul.f32 1.0, %v822
      %824 = vrot.lane.b32.xlu0 %v806, 64
      %v825 = vpop.permute.xlu0 %824
      %826 = vrot.lane.b32.xlu0 %v807, 64
      %v827 = vpop.permute.xlu0 %826
      %v830 = vmul.f32 %v821, %v825
      %v831 = vmul.f32 %v823, %v827
      %834 = vrot.lane.b32.xlu0 %v830, 64
      %v835 = vpop.permute.xlu0 %834
      %836 = vrot.lane.b32.xlu0 %v831, 64
      %v837 = vpop.permute.xlu0 %836
      %v840 = vadd.f32 %v499, %v835
      %v841 = vadd.f32 %v507, %v837
      %v842 = vtanh.pop %v840
      %v843 = vtanh.pop %v841
      %v844 = vsub.f32 1.0, %v821
      %v845 = vsub.f32 1.0, %v823
      %848 = vrot.lane.b32.xlu0 %v842, 96
      %v849 = vpop.permute.xlu0 %848
      %850 = vrot.lane.b32.xlu0 %v843, 96
      %v851 = vpop.permute.xlu0 %850
      %v854 = vmul.f32 %v844, %v849
      %v855 = vmul.f32 %v845, %v851
      %v856 = vrot.slane %v738, 7
      %v857 = vrot.slane %v739, 7
      %v860 = vmul.f32 %v821, %v856
      %v861 = vmul.f32 %v823, %v857
      %v862 = vadd.f32 %v854, %v860
      %v863 = vadd.f32 %v855, %v861
      %866 = vrot.lane.b32.xlu0 %v862, 96
      %v867 = vpop.permute.xlu0 %866
      %868 = vrot.lane.b32.xlu0 %v863, 96
      %v869 = vpop.permute.xlu0 %868
      %vm872 = vcmask 256002
      %873 = vst.msk [vmem:[#allocation2] sm:$0x4] %vm872, %v867
      %874 = vst.msk [vmem:[#allocation2 + $0x10] sm:$0x4] %vm872, %v869
      %v875 = vpack.c.bf16 %v862, %v862
      %v876 = vpack.c.bf16 %v863, %v863
      %v879 = vunpack.c.l.b16 %v875
      %v880 = vunpack.c.l.b16 %v876
      %v881 = vrot.slane %v879, 2
      %v882 = vrot.slane %v880, 1
      %v883 = vsel %vm634, %v882, %v881
      %v884 = vpack.c.b16 %v883, %v883
      %885 = vrot.lane.b32.xlu0 %v884, 96
      %v886 = vpop.permute.xlu0 %885
      %v888 = vsel %vm457, %v886, 0
      %890 = vmatprep.subr.bf16.mxu0 0
      %891 = vmatpush1.bf16.msra.mxu0 %v357
      %892 = vmatprep.subr.bf16.mxu0 0
      %893 = vmatpush1.bf16.msra.mxu0 %v358
      %894 = vmatprep.subr.bf16.mxu0 0
      %895 = vmatpush1.bf16.msra.mxu0 0
      %896 = vmatprep.subr.bf16.mxu0 0
      %897 = vmatpush1.bf16.msra.mxu0 0
      %898 = vmatprep.subr.bf16.mxu0 0
      %899 = vmatpush1.bf16.msra.mxu0 0
      %900 = vmatprep.subr.bf16.mxu0 0
      %901 = vmatpush1.bf16.msra.mxu0 0
      %902 = vmatprep.subr.bf16.mxu0 0
      %903 = vmatpush1.bf16.msra.mxu0 0
      %904 = vmatprep.subr.bf16.mxu0 0
      %905 = vmatpush1.bf16.msra.mxu0 0
      %906 = vmatprep.subr.bf16.mxu0 0
      %907 = vmatpush1.bf16.msra.mxu0 0
      %908 = vmatprep.subr.bf16.mxu0 0
      %909 = vmatpush1.bf16.msra.mxu0 0
      %910 = vmatprep.subr.bf16.mxu0 0
      %911 = vmatpush1.bf16.msra.mxu0 0
      %912 = vmatprep.subr.bf16.mxu0 0
      %913 = vmatpush1.bf16.msra.mxu0 0
      %914 = vmatprep.subr.bf16.mxu0 0
      %915 = vmatpush1.bf16.msra.mxu0 0
      %916 = vmatprep.subr.bf16.mxu0 0
      %917 = vmatpush1.bf16.msra.mxu0 0
      %918 = vmatprep.subr.bf16.mxu0 0
      %919 = vmatpush1.bf16.msra.mxu0 0
      %920 = vmatprep.subr.bf16.mxu0 0
      %921 = vmatpush1.bf16.msra.mxu0 0
      %922 = vmatprep.mubr.bf16.mxu0 0
      %923 = vmatmul.mubr.bf16.gmra.mrb[0].mxu0 %v888
      %v924 = vpop.f32.mrb[0].mxu0
      %v925 = vadd.f32 %v517, %v924
      %v926 = vpop.f32.mrb[0].mxu0
      %v927 = vpop.f32.mrb[0].mxu0
      %v928 = vpop.f32.mrb[0].mxu0
      %929 = vdwg.mxu0
      %v931 = vrot.slane %v925, 5
      %v932 = vrot.slane %v925, 6
      %v935 = vadd.f32 %v499, %v931
      %v936 = vadd.f32 %v507, %v932
      %v937 = vxor.u32 %v935, 2147483648
      %v938 = vxor.u32 %v936, 2147483648
      %v939 = vmul.f32 %v937, 1.442695
      %v940 = vpow.pop %v939
      %v941 = vmul.f32 %v938, 1.442695
      %v942 = vpow.pop %v941
      %v943 = vadd.f32 %v940, 1.0
      %v944 = vadd.f32 %v942, 1.0
      %v945 = vrcp.pop %v943
      %v946 = vmul.f32 1.0, %v945
      %v947 = vrcp.pop %v944
      %v948 = vmul.f32 1.0, %v947
      %949 = vrot.lane.b32.xlu0 %v931, 64
      %v950 = vpop.permute.xlu0 %949
      %951 = vrot.lane.b32.xlu0 %v932, 64
      %v952 = vpop.permute.xlu0 %951
      %v955 = vmul.f32 %v946, %v950
      %v956 = vmul.f32 %v948, %v952
      %959 = vrot.lane.b32.xlu0 %v955, 64
      %v960 = vpop.permute.xlu0 %959
      %961 = vrot.lane.b32.xlu0 %v956, 64
      %v962 = vpop.permute.xlu0 %961
      %v965 = vadd.f32 %v499, %v960
      %v966 = vadd.f32 %v507, %v962
      %v967 = vtanh.pop %v965
      %v968 = vtanh.pop %v966
      %v969 = vsub.f32 1.0, %v946
      %v970 = vsub.f32 1.0, %v948
      %973 = vrot.lane.b32.xlu0 %v967, 96
      %v974 = vpop.permute.xlu0 %973
      %975 = vrot.lane.b32.xlu0 %v968, 96
      %v976 = vpop.permute.xlu0 %975
      %v979 = vmul.f32 %v969, %v974
      %v980 = vmul.f32 %v970, %v976
      %v981 = vrot.slane %v862, 7
      %v982 = vrot.slane %v863, 7
      %v985 = vmul.f32 %v946, %v981
      %v986 = vmul.f32 %v948, %v982
      %v987 = vadd.f32 %v979, %v985
      %v988 = vadd.f32 %v980, %v986
      %991 = vrot.lane.b32.xlu0 %v987, 96
      %v992 = vpop.permute.xlu0 %991
      %993 = vrot.lane.b32.xlu0 %v988, 96
      %v994 = vpop.permute.xlu0 %993
      %vm997 = vcmask 257027
      %998 = vst.msk [vmem:[#allocation2] sm:$0x8] %vm997, %v992
      %999 = vst.msk [vmem:[#allocation2 + $0x10] sm:$0x8] %vm997, %v994
      %v1000 = vpack.c.bf16 %v987, %v987
      %v1001 = vpack.c.bf16 %v988, %v988
      %v1004 = vunpack.c.l.b16 %v1000
      %v1005 = vunpack.c.l.b16 %v1001
      %v1006 = vrot.slane %v1004, 3
      %v1007 = vrot.slane %v1005, 2
      %v1008 = vsel %vm634, %v1007, %v1006
      %v1009 = vpack.c.b16 %v1008, %v1008
      %1010 = vrot.lane.b32.xlu0 %v1009, 96
      %v1011 = vpop.permute.xlu0 %1010
      %v1013 = vsel %vm457, %v1011, 0
      %1015 = vmatprep.subr.bf16.mxu0 0
      %1016 = vmatpush1.bf16.msra.mxu0 %v357
      %1017 = vmatprep.subr.bf16.mxu0 0
      %1018 = vmatpush1.bf16.msra.mxu0 %v358
      %1019 = vmatprep.subr.bf16.mxu0 0
      %1020 = vmatpush1.bf16.msra.mxu0 0
      %1021 = vmatprep.subr.bf16.mxu0 0
      %1022 = vmatpush1.bf16.msra.mxu0 0
      %1023 = vmatprep.subr.bf16.mxu0 0
      %1024 = vmatpush1.bf16.msra.mxu0 0
      %1025 = vmatprep.subr.bf16.mxu0 0
      %1026 = vmatpush1.bf16.msra.mxu0 0
      %1027 = vmatprep.subr.bf16.mxu0 0
      %1028 = vmatpush1.bf16.msra.mxu0 0
      %1029 = vmatprep.subr.bf16.mxu0 0
      %1030 = vmatpush1.bf16.msra.mxu0 0
      %1031 = vmatprep.subr.bf16.mxu0 0
      %1032 = vmatpush1.bf16.msra.mxu0 0
      %1033 = vmatprep.subr.bf16.mxu0 0
      %1034 = vmatpush1.bf16.msra.mxu0 0
      %1035 = vmatprep.subr.bf16.mxu0 0
      %1036 = vmatpush1.bf16.msra.mxu0 0
      %1037 = vmatprep.subr.bf16.mxu0 0
      %1038 = vmatpush1.bf16.msra.mxu0 0
      %1039 = vmatprep.subr.bf16.mxu0 0
      %1040 = vmatpush1.bf16.msra.mxu0 0
      %1041 = vmatprep.subr.bf16.mxu0 0
      %1042 = vmatpush1.bf16.msra.mxu0 0
      %1043 = vmatprep.subr.bf16.mxu0 0
      %1044 = vmatpush1.bf16.msra.mxu0 0
      %1045 = vmatprep.subr.bf16.mxu0 0
      %1046 = vmatpush1.bf16.msra.mxu0 0
      %1047 = vmatprep.mubr.bf16.mxu0 0
      %1048 = vmatmul.mubr.bf16.gmra.mrb[0].mxu0 %v1013
      %v1049 = vpop.f32.mrb[0].mxu0
      %v1050 = vadd.f32 %v517, %v1049
      %v1051 = vpop.f32.mrb[0].mxu0
      %v1052 = vpop.f32.mrb[0].mxu0
      %v1053 = vpop.f32.mrb[0].mxu0
      %1054 = vdwg.mxu0
      %v1056 = vrot.slane %v1050, 4
      %v1057 = vrot.slane %v1050, 5
      %v1060 = vadd.f32 %v499, %v1056
      %v1061 = vadd.f32 %v507, %v1057
      %v1062 = vxor.u32 %v1060, 2147483648
      %v1063 = vxor.u32 %v1061, 2147483648
      %v1064 = vmul.f32 %v1062, 1.442695
      %v1065 = vpow.pop %v1064
      %v1066 = vmul.f32 %v1063, 1.442695
      %v1067 = vpow.pop %v1066
      %v1068 = vadd.f32 %v1065, 1.0
      %v1069 = vadd.f32 %v1067, 1.0
      %v1070 = vrcp.pop %v1068
      %v1071 = vmul.f32 1.0, %v1070
      %v1072 = vrcp.pop %v1069
      %v1073 = vmul.f32 1.0, %v1072
      %1074 = vrot.lane.b32.xlu0 %v1056, 64
      %v1075 = vpop.permute.xlu0 %1074
      %1076 = vrot.lane.b32.xlu0 %v1057, 64
      %v1077 = vpop.permute.xlu0 %1076
      %v1080 = vmul.f32 %v1071, %v1075
      %v1081 = vmul.f32 %v1073, %v1077
      %1084 = vrot.lane.b32.xlu0 %v1080, 64
      %v1085 = vpop.permute.xlu0 %1084
      %1086 = vrot.lane.b32.xlu0 %v1081, 64
      %v1087 = vpop.permute.xlu0 %1086
      %v1090 = vadd.f32 %v499, %v1085
      %v1091 = vadd.f32 %v507, %v1087
      %v1092 = vtanh.pop %v1090
      %v1093 = vtanh.pop %v1091
      %v1094 = vsub.f32 1.0, %v1071
      %v1095 = vsub.f32 1.0, %v1073
      %1098 = vrot.lane.b32.xlu0 %v1092, 96
      %v1099 = vpop.permute.xlu0 %1098
      %1100 = vrot.lane.b32.xlu0 %v1093, 96
      %v1101 = vpop.permute.xlu0 %1100
      %v1104 = vmul.f32 %v1094, %v1099
      %v1105 = vmul.f32 %v1095, %v1101
      %v1106 = vrot.slane %v987, 7
      %v1107 = vrot.slane %v988, 7
      %v1110 = vmul.f32 %v1071, %v1106
      %v1111 = vmul.f32 %v1073, %v1107
      %v1112 = vadd.f32 %v1104, %v1110
      %v1113 = vadd.f32 %v1105, %v1111
      %1116 = vrot.lane.b32.xlu0 %v1112, 96
      %v1117 = vpop.permute.xlu0 %1116
      %1118 = vrot.lane.b32.xlu0 %v1113, 96
      %v1119 = vpop.permute.xlu0 %1118
      %vm1122 = vcmask 258052
      %1123 = vst.msk [vmem:[#allocation2] sm:$0x10] %vm1122, %v1117
      %1124 = vst.msk [vmem:[#allocation2 + $0x10] sm:$0x10] %vm1122, %v1119
      %v1125 = vpack.c.bf16 %v1112, %v1112
      %v1126 = vpack.c.bf16 %v1113, %v1113
      %v1129 = vunpack.c.l.b16 %v1125
      %v1130 = vunpack.c.l.b16 %v1126
      %v1131 = vrot.slane %v1129, 4
      %v1132 = vrot.slane %v1130, 3
      %v1133 = vsel %vm634, %v1132, %v1131
      %v1134 = vpack.c.b16 %v1133, %v1133
      %1135 = vrot.lane.b32.xlu0 %v1134, 96
      %v1136 = vpop.permute.xlu0 %1135
      %v1138 = vsel %vm457, %v1136, 0
      %1140 = vmatprep.subr.bf16.mxu0 0
      %1141 = vmatpush1.bf16.msra.mxu0 %v357
      %1142 = vmatprep.subr.bf16.mxu0 0
      %1143 = vmatpush1.bf16.msra.mxu0 %v358
      %1144 = vmatprep.subr.bf16.mxu0 0
      %1145 = vmatpush1.bf16.msra.mxu0 0
      %1146 = vmatprep.subr.bf16.mxu0 0
      %1147 = vmatpush1.bf16.msra.mxu0 0
      %1148 = vmatprep.subr.bf16.mxu0 0
      %1149 = vmatpush1.bf16.msra.mxu0 0
      %1150 = vmatprep.subr.bf16.mxu0 0
      %1151 = vmatpush1.bf16.msra.mxu0 0
      %1152 = vmatprep.subr.bf16.mxu0 0
      %1153 = vmatpush1.bf16.msra.mxu0 0
      %1154 = vmatprep.subr.bf16.mxu0 0
      %1155 = vmatpush1.bf16.msra.mxu0 0
      %1156 = vmatprep.subr.bf16.mxu0 0
      %1157 = vmatpush1.bf16.msra.mxu0 0
      %1158 = vmatprep.subr.bf16.mxu0 0
      %1159 = vmatpush1.bf16.msra.mxu0 0
      %1160 = vmatprep.subr.bf16.mxu0 0
      %1161 = vmatpush1.bf16.msra.mxu0 0
      %1162 = vmatprep.subr.bf16.mxu0 0
      %1163 = vmatpush1.bf16.msra.mxu0 0
      %1164 = vmatprep.subr.bf16.mxu0 0
      %1165 = vmatpush1.bf16.msra.mxu0 0
      %1166 = vmatprep.subr.bf16.mxu0 0
      %1167 = vmatpush1.bf16.msra.mxu0 0
      %1168 = vmatprep.subr.bf16.mxu0 0
      %1169 = vmatpush1.bf16.msra.mxu0 0
      %1170 = vmatprep.subr.bf16.mxu0 0
      %1171 = vmatpush1.bf16.msra.mxu0 0
      %1172 = vmatprep.mubr.bf16.mxu0 0
      %1173 = vmatmul.mubr.bf16.gmra.mrb[0].mxu0 %v1138
      %v1174 = vpop.f32.mrb[0].mxu0
      %v1175 = vadd.f32 %v517, %v1174
      %v1176 = vpop.f32.mrb[0].mxu0
      %v1177 = vpop.f32.mrb[0].mxu0
      %v1178 = vpop.f32.mrb[0].mxu0
      %1179 = vdwg.mxu0
      %v1181 = vrot.slane %v1175, 3
      %v1182 = vrot.slane %v1175, 4
      %v1185 = vadd.f32 %v499, %v1181
      %v1186 = vadd.f32 %v507, %v1182
      %v1187 = vxor.u32 %v1185, 2147483648
      %v1188 = vxor.u32 %v1186, 2147483648
      %v1189 = vmul.f32 %v1187, 1.442695
      %v1190 = vpow.pop %v1189
      %v1191 = vmul.f32 %v1188, 1.442695
      %v1192 = vpow.pop %v1191
      %v1193 = vadd.f32 %v1190, 1.0
      %v1194 = vadd.f32 %v1192, 1.0
      %v1195 = vrcp.pop %v1193
      %v1196 = vmul.f32 1.0, %v1195
      %v1197 = vrcp.pop %v1194
      %v1198 = vmul.f32 1.0, %v1197
      %1199 = vrot.lane.b32.xlu0 %v1181, 64
      %v1200 = vpop.permute.xlu0 %1199
      %1201 = vrot.lane.b32.xlu0 %v1182, 64
      %v1202 = vpop.permute.xlu0 %1201
      %v1205 = vmul.f32 %v1196, %v1200
      %v1206 = vmul.f32 %v1198, %v1202
      %1209 = vrot.lane.b32.xlu0 %v1205, 64
      %v1210 = vpop.permute.xlu0 %1209
      %1211 = vrot.lane.b32.xlu0 %v1206, 64
      %v1212 = vpop.permute.xlu0 %1211
      %v1215 = vadd.f32 %v499, %v1210
      %v1216 = vadd.f32 %v507, %v1212
      %v1217 = vtanh.pop %v1215
      %v1218 = vtanh.pop %v1216
      %v1219 = vsub.f32 1.0, %v1196
      %v1220 = vsub.f32 1.0, %v1198
      %1223 = vrot.lane.b32.xlu0 %v1217, 96
      %v1224 = vpop.permute.xlu0 %1223
      %1225 = vrot.lane.b32.xlu0 %v1218, 96
      %v1226 = vpop.permute.xlu0 %1225
      %v1229 = vmul.f32 %v1219, %v1224
      %v1230 = vmul.f32 %v1220, %v1226
      %v1231 = vrot.slane %v1112, 7
      %v1232 = vrot.slane %v1113, 7
      %v1235 = vmul.f32 %v1196, %v1231
      %v1236 = vmul.f32 %v1198, %v1232
      %v1237 = vadd.f32 %v1229, %v1235
      %v1238 = vadd.f32 %v1230, %v1236
      %1241 = vrot.lane.b32.xlu0 %v1237, 96
      %v1242 = vpop.permute.xlu0 %1241
      %1243 = vrot.lane.b32.xlu0 %v1238, 96
      %v1244 = vpop.permute.xlu0 %1243
      %vm1247 = vcmask 259077
      %1248 = vst.msk [vmem:[#allocation2] sm:$0x20] %vm1247, %v1242
      %1249 = vst.msk [vmem:[#allocation2 + $0x10] sm:$0x20] %vm1247, %v1244
      %v1250 = vpack.c.bf16 %v1237, %v1237
      %v1251 = vpack.c.bf16 %v1238, %v1238
      %v1254 = vunpack.c.l.b16 %v1250
      %v1255 = vunpack.c.l.b16 %v1251
      %v1256 = vrot.slane %v1254, 5
      %v1257 = vrot.slane %v1255, 4
      %v1258 = vsel %vm634, %v1257, %v1256
      %v1259 = vpack.c.b16 %v1258, %v1258
      %1260 = vrot.lane.b32.xlu0 %v1259, 96
      %v1261 = vpop.permute.xlu0 %1260
      %v1263 = vsel %vm457, %v1261, 0
      %1265 = vmatprep.subr.bf16.mxu0 0
      %1266 = vmatpush1.bf16.msra.mxu0 %v357
      %1267 = vmatprep.subr.bf16.mxu0 0
      %1268 = vmatpush1.bf16.msra.mxu0 %v358
      %1269 = vmatprep.subr.bf16.mxu0 0
      %1270 = vmatpush1.bf16.msra.mxu0 0
      %1271 = vmatprep.subr.bf16.mxu0 0
      %1272 = vmatpush1.bf16.msra.mxu0 0
      %1273 = vmatprep.subr.bf16.mxu0 0
      %1274 = vmatpush1.bf16.msra.mxu0 0
      %1275 = vmatprep.subr.bf16.mxu0 0
      %1276 = vmatpush1.bf16.msra.mxu0 0
      %1277 = vmatprep.subr.bf16.mxu0 0
      %1278 = vmatpush1.bf16.msra.mxu0 0
      %1279 = vmatprep.subr.bf16.mxu0 0
      %1280 = vmatpush1.bf16.msra.mxu0 0
      %1281 = vmatprep.subr.bf16.mxu0 0
      %1282 = vmatpush1.bf16.msra.mxu0 0
      %1283 = vmatprep.subr.bf16.mxu0 0
      %1284 = vmatpush1.bf16.msra.mxu0 0
      %1285 = vmatprep.subr.bf16.mxu0 0
      %1286 = vmatpush1.bf16.msra.mxu0 0
      %1287 = vmatprep.subr.bf16.mxu0 0
      %1288 = vmatpush1.bf16.msra.mxu0 0
      %1289 = vmatprep.subr.bf16.mxu0 0
      %1290 = vmatpush1.bf16.msra.mxu0 0
      %1291 = vmatprep.subr.bf16.mxu0 0
      %1292 = vmatpush1.bf16.msra.mxu0 0
      %1293 = vmatprep.subr.bf16.mxu0 0
      %1294 = vmatpush1.bf16.msra.mxu0 0
      %1295 = vmatprep.subr.bf16.mxu0 0
      %1296 = vmatpush1.bf16.msra.mxu0 0
      %1297 = vmatprep.mubr.bf16.mxu0 0
      %1298 = vmatmul.mubr.bf16.gmra.mrb[0].mxu0 %v1263
      %v1299 = vpop.f32.mrb[0].mxu0
      %v1300 = vadd.f32 %v517, %v1299
      %v1301 = vpop.f32.mrb[0].mxu0
      %v1302 = vpop.f32.mrb[0].mxu0
      %v1303 = vpop.f32.mrb[0].mxu0
      %1304 = vdwg.mxu0
      %v1306 = vrot.slane %v1300, 2
      %v1307 = vrot.slane %v1300, 3
      %v1310 = vadd.f32 %v499, %v1306
      %v1311 = vadd.f32 %v507, %v1307
      %v1312 = vxor.u32 %v1310, 2147483648
      %v1313 = vxor.u32 %v1311, 2147483648
      %v1314 = vmul.f32 %v1312, 1.442695
      %v1315 = vpow.pop %v1314
      %v1316 = vmul.f32 %v1313, 1.442695
      %v1317 = vpow.pop %v1316
      %v1318 = vadd.f32 %v1315, 1.0
      %v1319 = vadd.f32 %v1317, 1.0
      %v1320 = vrcp.pop %v1318
      %v1321 = vmul.f32 1.0, %v1320
      %v1322 = vrcp.pop %v1319
      %v1323 = vmul.f32 1.0, %v1322
      %1324 = vrot.lane.b32.xlu0 %v1306, 64
      %v1325 = vpop.permute.xlu0 %1324
      %1326 = vrot.lane.b32.xlu0 %v1307, 64
      %v1327 = vpop.permute.xlu0 %1326
      %v1330 = vmul.f32 %v1321, %v1325
      %v1331 = vmul.f32 %v1323, %v1327
      %1334 = vrot.lane.b32.xlu0 %v1330, 64
      %v1335 = vpop.permute.xlu0 %1334
      %1336 = vrot.lane.b32.xlu0 %v1331, 64
      %v1337 = vpop.permute.xlu0 %1336
      %v1340 = vadd.f32 %v499, %v1335
      %v1341 = vadd.f32 %v507, %v1337
      %v1342 = vtanh.pop %v1340
      %v1343 = vtanh.pop %v1341
      %v1344 = vsub.f32 1.0, %v1321
      %v1345 = vsub.f32 1.0, %v1323
      %1348 = vrot.lane.b32.xlu0 %v1342, 96
      %v1349 = vpop.permute.xlu0 %1348
      %1350 = vrot.lane.b32.xlu0 %v1343, 96
      %v1351 = vpop.permute.xlu0 %1350
      %v1354 = vmul.f32 %v1344, %v1349
      %v1355 = vmul.f32 %v1345, %v1351
      %v1356 = vrot.slane %v1237, 7
      %v1357 = vrot.slane %v1238, 7
      %v1360 = vmul.f32 %v1321, %v1356
      %v1361 = vmul.f32 %v1323, %v1357
      %v1362 = vadd.f32 %v1354, %v1360
      %v1363 = vadd.f32 %v1355, %v1361
      %1366 = vrot.lane.b32.xlu0 %v1362, 96
      %v1367 = vpop.permute.xlu0 %1366
      %1368 = vrot.lane.b32.xlu0 %v1363, 96
      %v1369 = vpop.permute.xlu0 %1368
      %vm1372 = vcmask 260102
      %1373 = vst.msk [vmem:[#allocation2] sm:$0x40] %vm1372, %v1367
      %1374 = vst.msk [vmem:[#allocation2 + $0x10] sm:$0x40] %vm1372, %v1369
      %v1375 = vpack.c.bf16 %v1362, %v1362
      %v1376 = vpack.c.bf16 %v1363, %v1363
      %v1379 = vunpack.c.l.b16 %v1375
      %v1380 = vunpack.c.l.b16 %v1376
      %v1381 = vrot.slane %v1379, 6
      %v1382 = vrot.slane %v1380, 5
      %v1383 = vsel %vm634, %v1382, %v1381
      %v1384 = vpack.c.b16 %v1383, %v1383
      %1385 = vrot.lane.b32.xlu0 %v1384, 96
      %v1386 = vpop.permute.xlu0 %1385
      %v1388 = vsel %vm457, %v1386, 0
      %1390 = vmatprep.subr.bf16.mxu0 0
      %1391 = vmatpush1.bf16.msra.mxu0 %v357
      %1392 = vmatprep.subr.bf16.mxu0 0
      %1393 = vmatpush1.bf16.msra.mxu0 %v358
      %1394 = vmatprep.subr.bf16.mxu0 0
      %1395 = vmatpush1.bf16.msra.mxu0 0
      %1396 = vmatprep.subr.bf16.mxu0 0
      %1397 = vmatpush1.bf16.msra.mxu0 0
      %1398 = vmatprep.subr.bf16.mxu0 0
      %1399 = vmatpush1.bf16.msra.mxu0 0
      %1400 = vmatprep.subr.bf16.mxu0 0
      %1401 = vmatpush1.bf16.msra.mxu0 0
      %1402 = vmatprep.subr.bf16.mxu0 0
      %1403 = vmatpush1.bf16.msra.mxu0 0
      %1404 = vmatprep.subr.bf16.mxu0 0
      %1405 = vmatpush1.bf16.msra.mxu0 0
      %1406 = vmatprep.subr.bf16.mxu0 0
      %1407 = vmatpush1.bf16.msra.mxu0 0
      %1408 = vmatprep.subr.bf16.mxu0 0
      %1409 = vmatpush1.bf16.msra.mxu0 0
      %1410 = vmatprep.subr.bf16.mxu0 0
      %1411 = vmatpush1.bf16.msra.mxu0 0
      %1412 = vmatprep.subr.bf16.mxu0 0
      %1413 = vmatpush1.bf16.msra.mxu0 0
      %1414 = vmatprep.subr.bf16.mxu0 0
      %1415 = vmatpush1.bf16.msra.mxu0 0
      %1416 = vmatprep.subr.bf16.mxu0 0
      %1417 = vmatpush1.bf16.msra.mxu0 0
      %1418 = vmatprep.subr.bf16.mxu0 0
      %1419 = vmatpush1.bf16.msra.mxu0 0
      %1420 = vmatprep.subr.bf16.mxu0 0
      %1421 = vmatpush1.bf16.msra.mxu0 0
      %1422 = vmatprep.mubr.bf16.mxu0 0
      %1423 = vmatmul.mubr.bf16.gmra.mrb[0].mxu0 %v1388
      %v1424 = vpop.f32.mrb[0].mxu0
      %v1425 = vadd.f32 %v517, %v1424
      %v1426 = vpop.f32.mrb[0].mxu0
      %v1427 = vpop.f32.mrb[0].mxu0
      %v1428 = vpop.f32.mrb[0].mxu0
      %1429 = vdwg.mxu0
      %v1431 = vrot.slane %v1425, 1
      %v1432 = vrot.slane %v1425, 2
      %v1435 = vadd.f32 %v499, %v1431
      %v1436 = vadd.f32 %v507, %v1432
      %v1437 = vxor.u32 %v1435, 2147483648
      %v1438 = vxor.u32 %v1436, 2147483648
      %v1439 = vmul.f32 %v1437, 1.442695
      %v1440 = vpow.pop %v1439
      %v1441 = vmul.f32 %v1438, 1.442695
      %v1442 = vpow.pop %v1441
      %v1443 = vadd.f32 %v1440, 1.0
      %v1444 = vadd.f32 %v1442, 1.0
      %v1445 = vrcp.pop %v1443
      %v1446 = vmul.f32 1.0, %v1445
      %v1447 = vrcp.pop %v1444
      %v1448 = vmul.f32 1.0, %v1447
      %1449 = vrot.lane.b32.xlu0 %v1431, 64
      %v1450 = vpop.permute.xlu0 %1449
      %1451 = vrot.lane.b32.xlu0 %v1432, 64
      %v1452 = vpop.permute.xlu0 %1451
      %v1455 = vmul.f32 %v1446, %v1450
      %v1456 = vmul.f32 %v1448, %v1452
      %1459 = vrot.lane.b32.xlu0 %v1455, 64
      %v1460 = vpop.permute.xlu0 %1459
      %1461 = vrot.lane.b32.xlu0 %v1456, 64
      %v1462 = vpop.permute.xlu0 %1461
      %v1465 = vadd.f32 %v499, %v1460
      %v1466 = vadd.f32 %v507, %v1462
      %v1467 = vtanh.pop %v1465
      %v1468 = vtanh.pop %v1466
      %v1469 = vsub.f32 1.0, %v1446
      %v1470 = vsub.f32 1.0, %v1448
      %1473 = vrot.lane.b32.xlu0 %v1467, 96
      %v1474 = vpop.permute.xlu0 %1473
      %1475 = vrot.lane.b32.xlu0 %v1468, 96
      %v1476 = vpop.permute.xlu0 %1475
      %v1479 = vmul.f32 %v1469, %v1474
      %v1480 = vmul.f32 %v1470, %v1476
      %v1481 = vrot.slane %v1362, 7
      %v1482 = vrot.slane %v1363, 7
      %v1485 = vmul.f32 %v1446, %v1481
      %v1486 = vmul.f32 %v1448, %v1482
      %v1487 = vadd.f32 %v1479, %v1485
      %v1488 = vadd.f32 %v1480, %v1486
      %1491 = vrot.lane.b32.xlu0 %v1487, 96
      %v1492 = vpop.permute.xlu0 %1491
      %1493 = vrot.lane.b32.xlu0 %v1488, 96
      %v1494 = vpop.permute.xlu0 %1493
      %vm1497 = vcmask 261127
      %1498 = vst.msk [vmem:[#allocation2] sm:$0x80] %vm1497, %v1492
      %1499 = vst.msk [vmem:[#allocation2 + $0x10] sm:$0x80] %vm1497, %v1494
      %v1500 = vpack.c.bf16 %v1487, %v1487
      %v1501 = vpack.c.bf16 %v1488, %v1488
      %v1504 = vunpack.c.l.b16 %v1500
      %v1505 = vunpack.c.l.b16 %v1501
      %v1506 = vrot.slane %v1504, 7
      %v1507 = vrot.slane %v1505, 6
      %v1508 = vsel %vm634, %v1507, %v1506
      %v1509 = vpack.c.b16 %v1508, %v1508
      %1510 = vrot.lane.b32.xlu0 %v1509, 96
      %v1511 = vpop.permute.xlu0 %1510
      %v1513 = vsel %vm457, %v1511, 0
      %1515 = vmatprep.subr.bf16.mxu0 0
      %1516 = vmatpush1.bf16.msra.mxu0 %v357
      %1517 = vmatprep.subr.bf16.mxu0 0
      %1518 = vmatpush1.bf16.msra.mxu0 %v358
      %1519 = vmatprep.subr.bf16.mxu0 0
      %1520 = vmatpush1.bf16.msra.mxu0 0
      %1521 = vmatprep.subr.bf16.mxu0 0
      %1522 = vmatpush1.bf16.msra.mxu0 0
      %1523 = vmatprep.subr.bf16.mxu0 0
      %1524 = vmatpush1.bf16.msra.mxu0 0
      %1525 = vmatprep.subr.bf16.mxu0 0
      %1526 = vmatpush1.bf16.msra.mxu0 0
      %1527 = vmatprep.subr.bf16.mxu0 0
      %1528 = vmatpush1.bf16.msra.mxu0 0
      %1529 = vmatprep.subr.bf16.mxu0 0
      %1530 = vmatpush1.bf16.msra.mxu0 0
      %1531 = vmatprep.subr.bf16.mxu0 0
      %1532 = vmatpush1.bf16.msra.mxu0 0
      %1533 = vmatprep.subr.bf16.mxu0 0
      %1534 = vmatpush1.bf16.msra.mxu0 0
      %1535 = vmatprep.subr.bf16.mxu0 0
      %1536 = vmatpush1.bf16.msra.mxu0 0
      %1537 = vmatprep.subr.bf16.mxu0 0
      %1538 = vmatpush1.bf16.msra.mxu0 0
      %1539 = vmatprep.subr.bf16.mxu0 0
      %1540 = vmatpush1.bf16.msra.mxu0 0
      %1541 = vmatprep.subr.bf16.mxu0 0
      %1542 = vmatpush1.bf16.msra.mxu0 0
      %1543 = vmatprep.subr.bf16.mxu0 0
      %1544 = vmatpush1.bf16.msra.mxu0 0
      %1545 = vmatprep.subr.bf16.mxu0 0
      %1546 = vmatpush1.bf16.msra.mxu0 0
      %1547 = vmatprep.mubr.bf16.mxu0 0
      %1548 = vmatmul.mubr.bf16.gmra.mrb[0].mxu0 %v1513
      %v1549 = vpop.f32.mrb[0].mxu0
      %v1550 = vadd.f32 %v517, %v1549
      %v1551 = vpop.f32.mrb[0].mxu0
      %v1552 = vpop.f32.mrb[0].mxu0
      %v1553 = vpop.f32.mrb[0].mxu0
      %1554 = vdwg.mxu0
      %v1556 = vrot.slane %v1550, 1
      %v1559 = vadd.f32 %v502, %v1550
      %v1560 = vadd.f32 %v510, %v1556
      %v1561 = vxor.u32 %v1559, 2147483648
      %v1562 = vxor.u32 %v1560, 2147483648
      %v1563 = vmul.f32 %v1561, 1.442695
      %v1564 = vpow.pop %v1563
      %v1565 = vmul.f32 %v1562, 1.442695
      %v1566 = vpow.pop %v1565
      %v1567 = vadd.f32 %v1564, 1.0
      %v1568 = vadd.f32 %v1566, 1.0
      %v1569 = vrcp.pop %v1567
      %v1570 = vmul.f32 1.0, %v1569
      %v1571 = vrcp.pop %v1568
      %v1572 = vmul.f32 1.0, %v1571
      %1573 = vrot.lane.b32.xlu0 %v1550, 64
      %v1574 = vpop.permute.xlu0 %1573
      %1575 = vrot.lane.b32.xlu0 %v1556, 64
      %v1576 = vpop.permute.xlu0 %1575
      %v1579 = vmul.f32 %v1570, %v1574
      %v1580 = vmul.f32 %v1572, %v1576
      %1583 = vrot.lane.b32.xlu0 %v1579, 64
      %v1584 = vpop.permute.xlu0 %1583
      %1585 = vrot.lane.b32.xlu0 %v1580, 64
      %v1586 = vpop.permute.xlu0 %1585
      %v1589 = vadd.f32 %v502, %v1584
      %v1590 = vadd.f32 %v510, %v1586
      %v1591 = vtanh.pop %v1589
      %v1592 = vtanh.pop %v1590
      %v1593 = vsub.f32 1.0, %v1570
      %v1594 = vsub.f32 1.0, %v1572
      %1597 = vrot.lane.b32.xlu0 %v1591, 96
      %v1598 = vpop.permute.xlu0 %1597
      %1599 = vrot.lane.b32.xlu0 %v1592, 96
      %v1600 = vpop.permute.xlu0 %1599
      %v1603 = vmul.f32 %v1593, %v1598
      %v1604 = vmul.f32 %v1594, %v1600
      %v1605 = vrot.slane %v1487, 7
      %v1606 = vrot.slane %v1488, 7
      %v1609 = vmul.f32 %v1570, %v1605
      %v1610 = vmul.f32 %v1572, %v1606
      %v1611 = vadd.f32 %v1603, %v1609
      %v1612 = vadd.f32 %v1604, %v1610
      %1615 = vrot.lane.b32.xlu0 %v1611, 96
      %v1616 = vpop.permute.xlu0 %1615
      %1617 = vrot.lane.b32.xlu0 %v1612, 96
      %v1618 = vpop.permute.xlu0 %1617
      %1621 = vst.msk [vmem:[#allocation2 + $0x8] sm:$0x1] %vm624, %v1616
      %1622 = vst.msk [vmem:[#allocation2 + $0x18] sm:$0x1] %vm624, %v1618
      %v1623 = vpack.c.bf16 %v1611, %v1611
      %v1624 = vpack.c.bf16 %v1612, %v1612
      %v1627 = vunpack.c.l.b16 %v1623
      %v1628 = vunpack.c.l.b16 %v1624
      %v1629 = vrot.slane %v1628, 7
      %v1630 = vsel %vm634, %v1629, %v1627
      %v1631 = vpack.c.b16 %v1630, %v1630
      %1632 = vrot.lane.b32.xlu0 %v1631, 96
      %v1633 = vpop.permute.xlu0 %1632
      %v1635 = vsel %vm457, %v1633, 0
      %1637 = vmatprep.subr.bf16.mxu0 0
      %1638 = vmatpush1.bf16.msra.mxu0 %v357
      %1639 = vmatprep.subr.bf16.mxu0 0
      %1640 = vmatpush1.bf16.msra.mxu0 %v358
      %1641 = vmatprep.subr.bf16.mxu0 0
      %1642 = vmatpush1.bf16.msra.mxu0 0
      %1643 = vmatprep.subr.bf16.mxu0 0
      %1644 = vmatpush1.bf16.msra.mxu0 0
      %1645 = vmatprep.subr.bf16.mxu0 0
      %1646 = vmatpush1.bf16.msra.mxu0 0
      %1647 = vmatprep.subr.bf16.mxu0 0
      %1648 = vmatpush1.bf16.msra.mxu0 0
      %1649 = vmatprep.subr.bf16.mxu0 0
      %1650 = vmatpush1.bf16.msra.mxu0 0
      %1651 = vmatprep.subr.bf16.mxu0 0
      %1652 = vmatpush1.bf16.msra.mxu0 0
      %1653 = vmatprep.subr.bf16.mxu0 0
      %1654 = vmatpush1.bf16.msra.mxu0 0
      %1655 = vmatprep.subr.bf16.mxu0 0
      %1656 = vmatpush1.bf16.msra.mxu0 0
      %1657 = vmatprep.subr.bf16.mxu0 0
      %1658 = vmatpush1.bf16.msra.mxu0 0
      %1659 = vmatprep.subr.bf16.mxu0 0
      %1660 = vmatpush1.bf16.msra.mxu0 0
      %1661 = vmatprep.subr.bf16.mxu0 0
      %1662 = vmatpush1.bf16.msra.mxu0 0
      %1663 = vmatprep.subr.bf16.mxu0 0
      %1664 = vmatpush1.bf16.msra.mxu0 0
      %1665 = vmatprep.subr.bf16.mxu0 0
      %1666 = vmatpush1.bf16.msra.mxu0 0
      %1667 = vmatprep.subr.bf16.mxu0 0
      %1668 = vmatpush1.bf16.msra.mxu0 0
      %1669 = vmatprep.mubr.bf16.mxu0 0
      %1670 = vmatmul.mubr.bf16.gmra.mrb[0].mxu0 %v1635
      %v1671 = vpop.f32.mrb[0].mxu0
      %v1672 = vadd.f32 %v517, %v1671
      %v1673 = vpop.f32.mrb[0].mxu0
      %v1674 = vpop.f32.mrb[0].mxu0
      %v1675 = vpop.f32.mrb[0].mxu0
      %1676 = vdwg.mxu0
      %v1678 = vrot.slane %v1672, 7
      %v1681 = vadd.f32 %v502, %v1678
      %v1682 = vadd.f32 %v510, %v1672
      %v1683 = vxor.u32 %v1681, 2147483648
      %v1684 = vxor.u32 %v1682, 2147483648
      %v1685 = vmul.f32 %v1683, 1.442695
      %v1686 = vpow.pop %v1685
      %v1687 = vmul.f32 %v1684, 1.442695
      %v1688 = vpow.pop %v1687
      %v1689 = vadd.f32 %v1686, 1.0
      %v1690 = vadd.f32 %v1688, 1.0
      %v1691 = vrcp.pop %v1689
      %v1692 = vmul.f32 1.0, %v1691
      %v1693 = vrcp.pop %v1690
      %v1694 = vmul.f32 1.0, %v1693
      %1695 = vrot.lane.b32.xlu0 %v1678, 64
      %v1696 = vpop.permute.xlu0 %1695
      %1697 = vrot.lane.b32.xlu0 %v1672, 64
      %v1698 = vpop.permute.xlu0 %1697
      %v1701 = vmul.f32 %v1692, %v1696
      %v1702 = vmul.f32 %v1694, %v1698
      %1705 = vrot.lane.b32.xlu0 %v1701, 64
      %v1706 = vpop.permute.xlu0 %1705
      %1707 = vrot.lane.b32.xlu0 %v1702, 64
      %v1708 = vpop.permute.xlu0 %1707
      %v1711 = vadd.f32 %v502, %v1706
      %v1712 = vadd.f32 %v510, %v1708
      %v1713 = vtanh.pop %v1711
      %v1714 = vtanh.pop %v1712
      %v1715 = vsub.f32 1.0, %v1692
      %v1716 = vsub.f32 1.0, %v1694
      %1719 = vrot.lane.b32.xlu0 %v1713, 96
      %v1720 = vpop.permute.xlu0 %1719
      %1721 = vrot.lane.b32.xlu0 %v1714, 96
      %v1722 = vpop.permute.xlu0 %1721
      %v1725 = vmul.f32 %v1715, %v1720
      %v1726 = vmul.f32 %v1716, %v1722
      %v1727 = vrot.slane %v1611, 7
      %v1728 = vrot.slane %v1612, 7
      %v1731 = vmul.f32 %v1692, %v1727
      %v1732 = vmul.f32 %v1694, %v1728
      %v1733 = vadd.f32 %v1725, %v1731
      %v1734 = vadd.f32 %v1726, %v1732
      %1737 = vrot.lane.b32.xlu0 %v1733, 96
      %v1738 = vpop.permute.xlu0 %1737
      %1739 = vrot.lane.b32.xlu0 %v1734, 96
      %v1740 = vpop.permute.xlu0 %1739
      %1743 = vst.msk [vmem:[#allocation2 + $0x8] sm:$0x2] %vm748, %v1738
      %1744 = vst.msk [vmem:[#allocation2 + $0x18] sm:$0x2] %vm748, %v1740
      %v1745 = vpack.c.bf16 %v1733, %v1733
      %v1746 = vpack.c.bf16 %v1734, %v1734
      %v1749 = vunpack.c.l.b16 %v1745
      %v1750 = vunpack.c.l.b16 %v1746
      %v1751 = vrot.slane %v1749, 1
      %v1752 = vsel %vm634, %v1750, %v1751
      %v1753 = vpack.c.b16 %v1752, %v1752
      %1754 = vrot.lane.b32.xlu0 %v1753, 96
      %v1755 = vpop.permute.xlu0 %1754
      %v1757 = vsel %vm457, %v1755, 0
      %1759 = vmatprep.subr.bf16.mxu0 0
      %1760 = vmatpush1.bf16.msra.mxu0 %v357
      %1761 = vmatprep.subr.bf16.mxu0 0
      %1762 = vmatpush1.bf16.msra.mxu0 %v358
      %1763 = vmatprep.subr.bf16.mxu0 0
      %1764 = vmatpush1.bf16.msra.mxu0 0
      %1765 = vmatprep.subr.bf16.mxu0 0
      %1766 = vmatpush1.bf16.msra.mxu0 0
      %1767 = vmatprep.subr.bf16.mxu0 0
      %1768 = vmatpush1.bf16.msra.mxu0 0
      %1769 = vmatprep.subr.bf16.mxu0 0
      %1770 = vmatpush1.bf16.msra.mxu0 0
      %1771 = vmatprep.subr.bf16.mxu0 0
      %1772 = vmatpush1.bf16.msra.mxu0 0
      %1773 = vmatprep.subr.bf16.mxu0 0
      %1774 = vmatpush1.bf16.msra.mxu0 0
      %1775 = vmatprep.subr.bf16.mxu0 0
      %1776 = vmatpush1.bf16.msra.mxu0 0
      %1777 = vmatprep.subr.bf16.mxu0 0
      %1778 = vmatpush1.bf16.msra.mxu0 0
      %1779 = vmatprep.subr.bf16.mxu0 0
      %1780 = vmatpush1.bf16.msra.mxu0 0
      %1781 = vmatprep.subr.bf16.mxu0 0
      %1782 = vmatpush1.bf16.msra.mxu0 0
      %1783 = vmatprep.subr.bf16.mxu0 0
      %1784 = vmatpush1.bf16.msra.mxu0 0
      %1785 = vmatprep.subr.bf16.mxu0 0
      %1786 = vmatpush1.bf16.msra.mxu0 0
      %1787 = vmatprep.subr.bf16.mxu0 0
      %1788 = vmatpush1.bf16.msra.mxu0 0
      %1789 = vmatprep.subr.bf16.mxu0 0
      %1790 = vmatpush1.bf16.msra.mxu0 0
      %1791 = vmatprep.mubr.bf16.mxu0 0
      %1792 = vmatmul.mubr.bf16.gmra.mrb[0].mxu0 %v1757
      %v1793 = vpop.f32.mrb[0].mxu0
      %v1794 = vadd.f32 %v517, %v1793
      %v1795 = vpop.f32.mrb[0].mxu0
      %v1796 = vpop.f32.mrb[0].mxu0
      %v1797 = vpop.f32.mrb[0].mxu0
      %1798 = vdwg.mxu0
      %v1800 = vrot.slane %v1794, 6
      %v1801 = vrot.slane %v1794, 7
      %v1804 = vadd.f32 %v502, %v1800
      %v1805 = vadd.f32 %v510, %v1801
      %v1806 = vxor.u32 %v1804, 2147483648
      %v1807 = vxor.u32 %v1805, 2147483648
      %v1808 = vmul.f32 %v1806, 1.442695
      %v1809 = vpow.pop %v1808
      %v1810 = vmul.f32 %v1807, 1.442695
      %v1811 = vpow.pop %v1810
      %v1812 = vadd.f32 %v1809, 1.0
      %v1813 = vadd.f32 %v1811, 1.0
      %v1814 = vrcp.pop %v1812
      %v1815 = vmul.f32 1.0, %v1814
      %v1816 = vrcp.pop %v1813
      %v1817 = vmul.f32 1.0, %v1816
      %1818 = vrot.lane.b32.xlu0 %v1800, 64
      %v1819 = vpop.permute.xlu0 %1818
      %1820 = vrot.lane.b32.xlu0 %v1801, 64
      %v1821 = vpop.permute.xlu0 %1820
      %v1824 = vmul.f32 %v1815, %v1819
      %v1825 = vmul.f32 %v1817, %v1821
      %1828 = vrot.lane.b32.xlu0 %v1824, 64
      %v1829 = vpop.permute.xlu0 %1828
      %1830 = vrot.lane.b32.xlu0 %v1825, 64
      %v1831 = vpop.permute.xlu0 %1830
      %v1834 = vadd.f32 %v502, %v1829
      %v1835 = vadd.f32 %v510, %v1831
      %v1836 = vtanh.pop %v1834
      %v1837 = vtanh.pop %v1835
      %v1838 = vsub.f32 1.0, %v1815
      %v1839 = vsub.f32 1.0, %v1817
      %1842 = vrot.lane.b32.xlu0 %v1836, 96
      %v1843 = vpop.permute.xlu0 %1842
      %1844 = vrot.lane.b32.xlu0 %v1837, 96
      %v1845 = vpop.permute.xlu0 %1844
      %v1848 = vmul.f32 %v1838, %v1843
      %v1849 = vmul.f32 %v1839, %v1845
      %v1850 = vrot.slane %v1733, 7
      %v1851 = vrot.slane %v1734, 7
      %v1854 = vmul.f32 %v1815, %v1850
      %v1855 = vmul.f32 %v1817, %v1851
      %v1856 = vadd.f32 %v1848, %v1854
      %v1857 = vadd.f32 %v1849, %v1855
      %1860 = vrot.lane.b32.xlu0 %v1856, 96
      %v1861 = vpop.permute.xlu0 %1860
      %1862 = vrot.lane.b32.xlu0 %v1857, 96
      %v1863 = vpop.permute.xlu0 %1862
      %1866 = vst.msk [vmem:[#allocation2 + $0x8] sm:$0x4] %vm872, %v1861
      %1867 = vst.msk [vmem:[#allocation2 + $0x18] sm:$0x4] %vm872, %v1863
      %v1868 = vpack.c.bf16 %v1856, %v1856
      %v1869 = vpack.c.bf16 %v1857, %v1857
      %v1872 = vunpack.c.l.b16 %v1868
      %v1873 = vunpack.c.l.b16 %v1869
      %v1874 = vrot.slane %v1872, 2
      %v1875 = vrot.slane %v1873, 1
      %v1876 = vsel %vm634, %v1875, %v1874
      %v1877 = vpack.c.b16 %v1876, %v1876
      %1878 = vrot.lane.b32.xlu0 %v1877, 96
      %v1879 = vpop.permute.xlu0 %1878
      %v1881 = vsel %vm457, %v1879, 0
      %1883 = vmatprep.subr.bf16.mxu0 0
      %1884 = vmatpush1.bf16.msra.mxu0 %v357
      %1885 = vmatprep.subr.bf16.mxu0 0
      %1886 = vmatpush1.bf16.msra.mxu0 %v358
      %1887 = vmatprep.subr.bf16.mxu0 0
      %1888 = vmatpush1.bf16.msra.mxu0 0
      %1889 = vmatprep.subr.bf16.mxu0 0
      %1890 = vmatpush1.bf16.msra.mxu0 0
      %1891 = vmatprep.subr.bf16.mxu0 0
      %1892 = vmatpush1.bf16.msra.mxu0 0
      %1893 = vmatprep.subr.bf16.mxu0 0
      %1894 = vmatpush1.bf16.msra.mxu0 0
      %1895 = vmatprep.subr.bf16.mxu0 0
      %1896 = vmatpush1.bf16.msra.mxu0 0
      %1897 = vmatprep.subr.bf16.mxu0 0
      %1898 = vmatpush1.bf16.msra.mxu0 0
      %1899 = vmatprep.subr.bf16.mxu0 0
      %1900 = vmatpush1.bf16.msra.mxu0 0
      %1901 = vmatprep.subr.bf16.mxu0 0
      %1902 = vmatpush1.bf16.msra.mxu0 0
      %1903 = vmatprep.subr.bf16.mxu0 0
      %1904 = vmatpush1.bf16.msra.mxu0 0
      %1905 = vmatprep.subr.bf16.mxu0 0
      %1906 = vmatpush1.bf16.msra.mxu0 0
      %1907 = vmatprep.subr.bf16.mxu0 0
      %1908 = vmatpush1.bf16.msra.mxu0 0
      %1909 = vmatprep.subr.bf16.mxu0 0
      %1910 = vmatpush1.bf16.msra.mxu0 0
      %1911 = vmatprep.subr.bf16.mxu0 0
      %1912 = vmatpush1.bf16.msra.mxu0 0
      %1913 = vmatprep.subr.bf16.mxu0 0
      %1914 = vmatpush1.bf16.msra.mxu0 0
      %1915 = vmatprep.mubr.bf16.mxu0 0
      %1916 = vmatmul.mubr.bf16.gmra.mrb[0].mxu0 %v1881
      %v1917 = vpop.f32.mrb[0].mxu0
      %v1918 = vadd.f32 %v517, %v1917
      %v1919 = vpop.f32.mrb[0].mxu0
      %v1920 = vpop.f32.mrb[0].mxu0
      %v1921 = vpop.f32.mrb[0].mxu0
      %1922 = vdwg.mxu0
      %v1924 = vrot.slane %v1918, 5
      %v1925 = vrot.slane %v1918, 6
      %v1928 = vadd.f32 %v502, %v1924
      %v1929 = vadd.f32 %v510, %v1925
      %v1930 = vxor.u32 %v1928, 2147483648
      %v1931 = vxor.u32 %v1929, 2147483648
      %v1932 = vmul.f32 %v1930, 1.442695
      %v1933 = vpow.pop %v1932
      %v1934 = vmul.f32 %v1931, 1.442695
      %v1935 = vpow.pop %v1934
      %v1936 = vadd.f32 %v1933, 1.0
      %v1937 = vadd.f32 %v1935, 1.0
      %v1938 = vrcp.pop %v1936
      %v1939 = vmul.f32 1.0, %v1938
      %v1940 = vrcp.pop %v1937
      %v1941 = vmul.f32 1.0, %v1940
      %1942 = vrot.lane.b32.xlu0 %v1924, 64
      %v1943 = vpop.permute.xlu0 %1942
      %1944 = vrot.lane.b32.xlu0 %v1925, 64
      %v1945 = vpop.permute.xlu0 %1944
      %v1948 = vmul.f32 %v1939, %v1943
      %v1949 = vmul.f32 %v1941, %v1945
      %1952 = vrot.lane.b32.xlu0 %v1948, 64
      %v1953 = vpop.permute.xlu0 %1952
      %1954 = vrot.lane.b32.xlu0 %v1949, 64
      %v1955 = vpop.permute.xlu0 %1954
      %v1958 = vadd.f32 %v502, %v1953
      %v1959 = vadd.f32 %v510, %v1955
      %v1960 = vtanh.pop %v1958
      %v1961 = vtanh.pop %v1959
      %v1962 = vsub.f32 1.0, %v1939
      %v1963 = vsub.f32 1.0, %v1941
      %1966 = vrot.lane.b32.xlu0 %v1960, 96
      %v1967 = vpop.permute.xlu0 %1966
      %1968 = vrot.lane.b32.xlu0 %v1961, 96
      %v1969 = vpop.permute.xlu0 %1968
      %v1972 = vmul.f32 %v1962, %v1967
      %v1973 = vmul.f32 %v1963, %v1969
      %v1974 = vrot.slane %v1856, 7
      %v1975 = vrot.slane %v1857, 7
      %v1978 = vmul.f32 %v1939, %v1974
      %v1979 = vmul.f32 %v1941, %v1975
      %v1980 = vadd.f32 %v1972, %v1978
      %v1981 = vadd.f32 %v1973, %v1979
      %1984 = vrot.lane.b32.xlu0 %v1980, 96
      %v1985 = vpop.permute.xlu0 %1984
      %1986 = vrot.lane.b32.xlu0 %v1981, 96
      %v1987 = vpop.permute.xlu0 %1986
      %1990 = vst.msk [vmem:[#allocation2 + $0x8] sm:$0x8] %vm997, %v1985
      %1991 = vst.msk [vmem:[#allocation2 + $0x18] sm:$0x8] %vm997, %v1987
      %v1992 = vpack.c.bf16 %v1980, %v1980
      %v1993 = vpack.c.bf16 %v1981, %v1981
      %v1996 = vunpack.c.l.b16 %v1992
      %v1997 = vunpack.c.l.b16 %v1993
      %v1998 = vrot.slane %v1996, 3
      %v1999 = vrot.slane %v1997, 2
      %v2000 = vsel %vm634, %v1999, %v1998
      %v2001 = vpack.c.b16 %v2000, %v2000
      %2002 = vrot.lane.b32.xlu0 %v2001, 96
      %v2003 = vpop.permute.xlu0 %2002
      %v2005 = vsel %vm457, %v2003, 0
      %2007 = vmatprep.subr.bf16.mxu0 0
      %2008 = vmatpush1.bf16.msra.mxu0 %v357
      %2009 = vmatprep.subr.bf16.mxu0 0
      %2010 = vmatpush1.bf16.msra.mxu0 %v358
      %2011 = vmatprep.subr.bf16.mxu0 0
      %2012 = vmatpush1.bf16.msra.mxu0 0
      %2013 = vmatprep.subr.bf16.mxu0 0
      %2014 = vmatpush1.bf16.msra.mxu0 0
      %2015 = vmatprep.subr.bf16.mxu0 0
      %2016 = vmatpush1.bf16.msra.mxu0 0
      %2017 = vmatprep.subr.bf16.mxu0 0
      %2018 = vmatpush1.bf16.msra.mxu0 0
      %2019 = vmatprep.subr.bf16.mxu0 0
      %2020 = vmatpush1.bf16.msra.mxu0 0
      %2021 = vmatprep.subr.bf16.mxu0 0
      %2022 = vmatpush1.bf16.msra.mxu0 0
      %2023 = vmatprep.subr.bf16.mxu0 0
      %2024 = vmatpush1.bf16.msra.mxu0 0
      %2025 = vmatprep.subr.bf16.mxu0 0
      %2026 = vmatpush1.bf16.msra.mxu0 0
      %2027 = vmatprep.subr.bf16.mxu0 0
      %2028 = vmatpush1.bf16.msra.mxu0 0
      %2029 = vmatprep.subr.bf16.mxu0 0
      %2030 = vmatpush1.bf16.msra.mxu0 0
      %2031 = vmatprep.subr.bf16.mxu0 0
      %2032 = vmatpush1.bf16.msra.mxu0 0
      %2033 = vmatprep.subr.bf16.mxu0 0
      %2034 = vmatpush1.bf16.msra.mxu0 0
      %2035 = vmatprep.subr.bf16.mxu0 0
      %2036 = vmatpush1.bf16.msra.mxu0 0
      %2037 = vmatprep.subr.bf16.mxu0 0
      %2038 = vmatpush1.bf16.msra.mxu0 0
      %2039 = vmatprep.mubr.bf16.mxu0 0
      %2040 = vmatmul.mubr.bf16.gmra.mrb[0].mxu0 %v2005
      %v2041 = vpop.f32.mrb[0].mxu0
      %v2042 = vadd.f32 %v517, %v2041
      %v2043 = vpop.f32.mrb[0].mxu0
      %v2044 = vpop.f32.mrb[0].mxu0
      %v2045 = vpop.f32.mrb[0].mxu0
      %2046 = vdwg.mxu0
      %v2048 = vrot.slane %v2042, 4
      %v2049 = vrot.slane %v2042, 5
      %v2052 = vadd.f32 %v502, %v2048
      %v2053 = vadd.f32 %v510, %v2049
      %v2054 = vxor.u32 %v2052, 2147483648
      %v2055 = vxor.u32 %v2053, 2147483648
      %v2056 = vmul.f32 %v2054, 1.442695
      %v2057 = vpow.pop %v2056
      %v2058 = vmul.f32 %v2055, 1.442695
      %v2059 = vpow.pop %v2058
      %v2060 = vadd.f32 %v2057, 1.0
      %v2061 = vadd.f32 %v2059, 1.0
      %v2062 = vrcp.pop %v2060
      %v2063 = vmul.f32 1.0, %v2062
      %v2064 = vrcp.pop %v2061
      %v2065 = vmul.f32 1.0, %v2064
      %2066 = vrot.lane.b32.xlu0 %v2048, 64
      %v2067 = vpop.permute.xlu0 %2066
      %2068 = vrot.lane.b32.xlu0 %v2049, 64
      %v2069 = vpop.permute.xlu0 %2068
      %v2072 = vmul.f32 %v2063, %v2067
      %v2073 = vmul.f32 %v2065, %v2069
      %2076 = vrot.lane.b32.xlu0 %v2072, 64
      %v2077 = vpop.permute.xlu0 %2076
      %2078 = vrot.lane.b32.xlu0 %v2073, 64
      %v2079 = vpop.permute.xlu0 %2078
      %v2082 = vadd.f32 %v502, %v2077
      %v2083 = vadd.f32 %v510, %v2079
      %v2084 = vtanh.pop %v2082
      %v2085 = vtanh.pop %v2083
      %v2086 = vsub.f32 1.0, %v2063
      %v2087 = vsub.f32 1.0, %v2065
      %2090 = vrot.lane.b32.xlu0 %v2084, 96
      %v2091 = vpop.permute.xlu0 %2090
      %2092 = vrot.lane.b32.xlu0 %v2085, 96
      %v2093 = vpop.permute.xlu0 %2092
      %v2096 = vmul.f32 %v2086, %v2091
      %v2097 = vmul.f32 %v2087, %v2093
      %v2098 = vrot.slane %v1980, 7
      %v2099 = vrot.slane %v1981, 7
      %v2102 = vmul.f32 %v2063, %v2098
      %v2103 = vmul.f32 %v2065, %v2099
      %v2104 = vadd.f32 %v2096, %v2102
      %v2105 = vadd.f32 %v2097, %v2103
      %2108 = vrot.lane.b32.xlu0 %v2104, 96
      %v2109 = vpop.permute.xlu0 %2108
      %2110 = vrot.lane.b32.xlu0 %v2105, 96
      %v2111 = vpop.permute.xlu0 %2110
      %2114 = vst.msk [vmem:[#allocation2 + $0x8] sm:$0x10] %vm1122, %v2109
      %2115 = vst.msk [vmem:[#allocation2 + $0x18] sm:$0x10] %vm1122, %v2111
      %v2116 = vpack.c.bf16 %v2104, %v2104
      %v2117 = vpack.c.bf16 %v2105, %v2105
      %v2120 = vunpack.c.l.b16 %v2116
      %v2121 = vunpack.c.l.b16 %v2117
      %v2122 = vrot.slane %v2120, 4
      %v2123 = vrot.slane %v2121, 3
      %v2124 = vsel %vm634, %v2123, %v2122
      %v2125 = vpack.c.b16 %v2124, %v2124
      %2126 = vrot.lane.b32.xlu0 %v2125, 96
      %v2127 = vpop.permute.xlu0 %2126
      %v2129 = vsel %vm457, %v2127, 0
      %2131 = vmatprep.subr.bf16.mxu0 0
      %2132 = vmatpush1.bf16.msra.mxu0 %v357
      %2133 = vmatprep.subr.bf16.mxu0 0
      %2134 = vmatpush1.bf16.msra.mxu0 %v358
      %2135 = vmatprep.subr.bf16.mxu0 0
      %2136 = vmatpush1.bf16.msra.mxu0 0
      %2137 = vmatprep.subr.bf16.mxu0 0
      %2138 = vmatpush1.bf16.msra.mxu0 0
      %2139 = vmatprep.subr.bf16.mxu0 0
      %2140 = vmatpush1.bf16.msra.mxu0 0
      %2141 = vmatprep.subr.bf16.mxu0 0
      %2142 = vmatpush1.bf16.msra.mxu0 0
      %2143 = vmatprep.subr.bf16.mxu0 0
      %2144 = vmatpush1.bf16.msra.mxu0 0
      %2145 = vmatprep.subr.bf16.mxu0 0
      %2146 = vmatpush1.bf16.msra.mxu0 0
      %2147 = vmatprep.subr.bf16.mxu0 0
      %2148 = vmatpush1.bf16.msra.mxu0 0
      %2149 = vmatprep.subr.bf16.mxu0 0
      %2150 = vmatpush1.bf16.msra.mxu0 0
      %2151 = vmatprep.subr.bf16.mxu0 0
      %2152 = vmatpush1.bf16.msra.mxu0 0
      %2153 = vmatprep.subr.bf16.mxu0 0
      %2154 = vmatpush1.bf16.msra.mxu0 0
      %2155 = vmatprep.subr.bf16.mxu0 0
      %2156 = vmatpush1.bf16.msra.mxu0 0
      %2157 = vmatprep.subr.bf16.mxu0 0
      %2158 = vmatpush1.bf16.msra.mxu0 0
      %2159 = vmatprep.subr.bf16.mxu0 0
      %2160 = vmatpush1.bf16.msra.mxu0 0
      %2161 = vmatprep.subr.bf16.mxu0 0
      %2162 = vmatpush1.bf16.msra.mxu0 0
      %2163 = vmatprep.mubr.bf16.mxu0 0
      %2164 = vmatmul.mubr.bf16.gmra.mrb[0].mxu0 %v2129
      %v2165 = vpop.f32.mrb[0].mxu0
      %v2166 = vadd.f32 %v517, %v2165
      %v2167 = vpop.f32.mrb[0].mxu0
      %v2168 = vpop.f32.mrb[0].mxu0
      %v2169 = vpop.f32.mrb[0].mxu0
      %2170 = vdwg.mxu0
      %v2172 = vrot.slane %v2166, 3
      %v2173 = vrot.slane %v2166, 4
      %v2176 = vadd.f32 %v502, %v2172
      %v2177 = vadd.f32 %v510, %v2173
      %v2178 = vxor.u32 %v2176, 2147483648
      %v2179 = vxor.u32 %v2177, 2147483648
      %v2180 = vmul.f32 %v2178, 1.442695
      %v2181 = vpow.pop %v2180
      %v2182 = vmul.f32 %v2179, 1.442695
      %v2183 = vpow.pop %v2182
      %v2184 = vadd.f32 %v2181, 1.0
      %v2185 = vadd.f32 %v2183, 1.0
      %v2186 = vrcp.pop %v2184
      %v2187 = vmul.f32 1.0, %v2186
      %v2188 = vrcp.pop %v2185
      %v2189 = vmul.f32 1.0, %v2188
      %2190 = vrot.lane.b32.xlu0 %v2172, 64
      %v2191 = vpop.permute.xlu0 %2190
      %2192 = vrot.lane.b32.xlu0 %v2173, 64
      %v2193 = vpop.permute.xlu0 %2192
      %v2196 = vmul.f32 %v2187, %v2191
      %v2197 = vmul.f32 %v2189, %v2193
      %2200 = vrot.lane.b32.xlu0 %v2196, 64
      %v2201 = vpop.permute.xlu0 %2200
      %2202 = vrot.lane.b32.xlu0 %v2197, 64
      %v2203 = vpop.permute.xlu0 %2202
      %v2206 = vadd.f32 %v502, %v2201
      %v2207 = vadd.f32 %v510, %v2203
      %v2208 = vtanh.pop %v2206
      %v2209 = vtanh.pop %v2207
      %v2210 = vsub.f32 1.0, %v2187
      %v2211 = vsub.f32 1.0, %v2189
      %2214 = vrot.lane.b32.xlu0 %v2208, 96
      %v2215 = vpop.permute.xlu0 %2214
      %2216 = vrot.lane.b32.xlu0 %v2209, 96
      %v2217 = vpop.permute.xlu0 %2216
      %v2220 = vmul.f32 %v2210, %v2215
      %v2221 = vmul.f32 %v2211, %v2217
      %v2222 = vrot.slane %v2104, 7
      %v2223 = vrot.slane %v2105, 7
      %v2226 = vmul.f32 %v2187, %v2222
      %v2227 = vmul.f32 %v2189, %v2223
      %v2228 = vadd.f32 %v2220, %v2226
      %v2229 = vadd.f32 %v2221, %v2227
      %2232 = vrot.lane.b32.xlu0 %v2228, 96
      %v2233 = vpop.permute.xlu0 %2232
      %2234 = vrot.lane.b32.xlu0 %v2229, 96
      %v2235 = vpop.permute.xlu0 %2234
      %2238 = vst.msk [vmem:[#allocation2 + $0x8] sm:$0x20] %vm1247, %v2233
      %2239 = vst.msk [vmem:[#allocation2 + $0x18] sm:$0x20] %vm1247, %v2235
      %v2240 = vpack.c.bf16 %v2228, %v2228
      %v2241 = vpack.c.bf16 %v2229, %v2229
      %v2244 = vunpack.c.l.b16 %v2240
      %v2245 = vunpack.c.l.b16 %v2241
      %v2246 = vrot.slane %v2244, 5
      %v2247 = vrot.slane %v2245, 4
      %v2248 = vsel %vm634, %v2247, %v2246
      %v2249 = vpack.c.b16 %v2248, %v2248
      %2250 = vrot.lane.b32.xlu0 %v2249, 96
      %v2251 = vpop.permute.xlu0 %2250
      %v2253 = vsel %vm457, %v2251, 0
      %2255 = vmatprep.subr.bf16.mxu0 0
      %2256 = vmatpush1.bf16.msra.mxu0 %v357
      %2257 = vmatprep.subr.bf16.mxu0 0
      %2258 = vmatpush1.bf16.msra.mxu0 %v358
      %2259 = vmatprep.subr.bf16.mxu0 0
      %2260 = vmatpush1.bf16.msra.mxu0 0
      %2261 = vmatprep.subr.bf16.mxu0 0
      %2262 = vmatpush1.bf16.msra.mxu0 0
      %2263 = vmatprep.subr.bf16.mxu0 0
      %2264 = vmatpush1.bf16.msra.mxu0 0
      %2265 = vmatprep.subr.bf16.mxu0 0
      %2266 = vmatpush1.bf16.msra.mxu0 0
      %2267 = vmatprep.subr.bf16.mxu0 0
      %2268 = vmatpush1.bf16.msra.mxu0 0
      %2269 = vmatprep.subr.bf16.mxu0 0
      %2270 = vmatpush1.bf16.msra.mxu0 0
      %2271 = vmatprep.subr.bf16.mxu0 0
      %2272 = vmatpush1.bf16.msra.mxu0 0
      %2273 = vmatprep.subr.bf16.mxu0 0
      %2274 = vmatpush1.bf16.msra.mxu0 0
      %2275 = vmatprep.subr.bf16.mxu0 0
      %2276 = vmatpush1.bf16.msra.mxu0 0
      %2277 = vmatprep.subr.bf16.mxu0 0
      %2278 = vmatpush1.bf16.msra.mxu0 0
      %2279 = vmatprep.subr.bf16.mxu0 0
      %2280 = vmatpush1.bf16.msra.mxu0 0
      %2281 = vmatprep.subr.bf16.mxu0 0
      %2282 = vmatpush1.bf16.msra.mxu0 0
      %2283 = vmatprep.subr.bf16.mxu0 0
      %2284 = vmatpush1.bf16.msra.mxu0 0
      %2285 = vmatprep.subr.bf16.mxu0 0
      %2286 = vmatpush1.bf16.msra.mxu0 0
      %2287 = vmatprep.mubr.bf16.mxu0 0
      %2288 = vmatmul.mubr.bf16.gmra.mrb[0].mxu0 %v2253
      %v2289 = vpop.f32.mrb[0].mxu0
      %v2290 = vadd.f32 %v517, %v2289
      %v2291 = vpop.f32.mrb[0].mxu0
      %v2292 = vpop.f32.mrb[0].mxu0
      %v2293 = vpop.f32.mrb[0].mxu0
      %2294 = vdwg.mxu0
      %v2296 = vrot.slane %v2290, 2
      %v2297 = vrot.slane %v2290, 3
      %v2300 = vadd.f32 %v502, %v2296
      %v2301 = vadd.f32 %v510, %v2297
      %v2302 = vxor.u32 %v2300, 2147483648
      %v2303 = vxor.u32 %v2301, 2147483648
      %v2304 = vmul.f32 %v2302, 1.442695
      %v2305 = vpow.pop %v2304
      %v2306 = vmul.f32 %v2303, 1.442695
      %v2307 = vpow.pop %v2306
      %v2308 = vadd.f32 %v2305, 1.0
      %v2309 = vadd.f32 %v2307, 1.0
      %v2310 = vrcp.pop %v2308
      %v2311 = vmul.f32 1.0, %v2310
      %v2312 = vrcp.pop %v2309
      %v2313 = vmul.f32 1.0, %v2312
      %2314 = vrot.lane.b32.xlu0 %v2296, 64
      %v2315 = vpop.permute.xlu0 %2314
      %2316 = vrot.lane.b32.xlu0 %v2297, 64
      %v2317 = vpop.permute.xlu0 %2316
      %v2320 = vmul.f32 %v2311, %v2315
      %v2321 = vmul.f32 %v2313, %v2317
      %2324 = vrot.lane.b32.xlu0 %v2320, 64
      %v2325 = vpop.permute.xlu0 %2324
      %2326 = vrot.lane.b32.xlu0 %v2321, 64
      %v2327 = vpop.permute.xlu0 %2326
      %v2330 = vadd.f32 %v502, %v2325
      %v2331 = vadd.f32 %v510, %v2327
      %v2332 = vtanh.pop %v2330
      %v2333 = vtanh.pop %v2331
      %v2334 = vsub.f32 1.0, %v2311
      %v2335 = vsub.f32 1.0, %v2313
      %2338 = vrot.lane.b32.xlu0 %v2332, 96
      %v2339 = vpop.permute.xlu0 %2338
      %2340 = vrot.lane.b32.xlu0 %v2333, 96
      %v2341 = vpop.permute.xlu0 %2340
      %v2344 = vmul.f32 %v2334, %v2339
      %v2345 = vmul.f32 %v2335, %v2341
      %v2346 = vrot.slane %v2228, 7
      %v2347 = vrot.slane %v2229, 7
      %v2350 = vmul.f32 %v2311, %v2346
      %v2351 = vmul.f32 %v2313, %v2347
      %v2352 = vadd.f32 %v2344, %v2350
      %v2353 = vadd.f32 %v2345, %v2351
      %2356 = vrot.lane.b32.xlu0 %v2352, 96
      %v2357 = vpop.permute.xlu0 %2356
      %2358 = vrot.lane.b32.xlu0 %v2353, 96
      %v2359 = vpop.permute.xlu0 %2358
      %2362 = vst.msk [vmem:[#allocation2 + $0x8] sm:$0x40] %vm1372, %v2357
      %2363 = vst.msk [vmem:[#allocation2 + $0x18] sm:$0x40] %vm1372, %v2359
      %v2364 = vpack.c.bf16 %v2352, %v2352
      %v2365 = vpack.c.bf16 %v2353, %v2353
      %v2368 = vunpack.c.l.b16 %v2364
      %v2369 = vunpack.c.l.b16 %v2365
      %v2370 = vrot.slane %v2368, 6
      %v2371 = vrot.slane %v2369, 5
      %v2372 = vsel %vm634, %v2371, %v2370
      %v2373 = vpack.c.b16 %v2372, %v2372
      %2374 = vrot.lane.b32.xlu0 %v2373, 96
      %v2375 = vpop.permute.xlu0 %2374
      %v2377 = vsel %vm457, %v2375, 0
      %2379 = vmatprep.subr.bf16.mxu0 0
      %2380 = vmatpush1.bf16.msra.mxu0 %v357
      %2381 = vmatprep.subr.bf16.mxu0 0
      %2382 = vmatpush1.bf16.msra.mxu0 %v358
      %2383 = vmatprep.subr.bf16.mxu0 0
      %2384 = vmatpush1.bf16.msra.mxu0 0
      %2385 = vmatprep.subr.bf16.mxu0 0
      %2386 = vmatpush1.bf16.msra.mxu0 0
      %2387 = vmatprep.subr.bf16.mxu0 0
      %2388 = vmatpush1.bf16.msra.mxu0 0
      %2389 = vmatprep.subr.bf16.mxu0 0
      %2390 = vmatpush1.bf16.msra.mxu0 0
      %2391 = vmatprep.subr.bf16.mxu0 0
      %2392 = vmatpush1.bf16.msra.mxu0 0
      %2393 = vmatprep.subr.bf16.mxu0 0
      %2394 = vmatpush1.bf16.msra.mxu0 0
      %2395 = vmatprep.subr.bf16.mxu0 0
      %2396 = vmatpush1.bf16.msra.mxu0 0
      %2397 = vmatprep.subr.bf16.mxu0 0
      %2398 = vmatpush1.bf16.msra.mxu0 0
      %2399 = vmatprep.subr.bf16.mxu0 0
      %2400 = vmatpush1.bf16.msra.mxu0 0
      %2401 = vmatprep.subr.bf16.mxu0 0
      %2402 = vmatpush1.bf16.msra.mxu0 0
      %2403 = vmatprep.subr.bf16.mxu0 0
      %2404 = vmatpush1.bf16.msra.mxu0 0
      %2405 = vmatprep.subr.bf16.mxu0 0
      %2406 = vmatpush1.bf16.msra.mxu0 0
      %2407 = vmatprep.subr.bf16.mxu0 0
      %2408 = vmatpush1.bf16.msra.mxu0 0
      %2409 = vmatprep.subr.bf16.mxu0 0
      %2410 = vmatpush1.bf16.msra.mxu0 0
      %2411 = vmatprep.mubr.bf16.mxu0 0
      %2412 = vmatmul.mubr.bf16.gmra.mrb[0].mxu0 %v2377
      %v2413 = vpop.f32.mrb[0].mxu0
      %v2414 = vadd.f32 %v517, %v2413
      %v2415 = vpop.f32.mrb[0].mxu0
      %v2416 = vpop.f32.mrb[0].mxu0
      %v2417 = vpop.f32.mrb[0].mxu0
      %2418 = vdwg.mxu0
      %v2420 = vrot.slane %v2414, 1
      %v2421 = vrot.slane %v2414, 2
      %v2424 = vadd.f32 %v502, %v2420
      %v2425 = vadd.f32 %v510, %v2421
      %v2426 = vxor.u32 %v2424, 2147483648
      %v2427 = vxor.u32 %v2425, 2147483648
      %v2428 = vmul.f32 %v2426, 1.442695
      %v2429 = vpow.pop %v2428
      %v2430 = vmul.f32 %v2427, 1.442695
      %v2431 = vpow.pop %v2430
      %v2432 = vadd.f32 %v2429, 1.0
      %v2433 = vadd.f32 %v2431, 1.0
      %v2434 = vrcp.pop %v2432
      %v2435 = vmul.f32 1.0, %v2434
      %v2436 = vrcp.pop %v2433
      %v2437 = vmul.f32 1.0, %v2436
      %2438 = vrot.lane.b32.xlu0 %v2420, 64
      %v2439 = vpop.permute.xlu0 %2438
      %2440 = vrot.lane.b32.xlu0 %v2421, 64
      %v2441 = vpop.permute.xlu0 %2440
      %v2444 = vmul.f32 %v2435, %v2439
      %v2445 = vmul.f32 %v2437, %v2441
      %2448 = vrot.lane.b32.xlu0 %v2444, 64
      %v2449 = vpop.permute.xlu0 %2448
      %2450 = vrot.lane.b32.xlu0 %v2445, 64
      %v2451 = vpop.permute.xlu0 %2450
      %v2454 = vadd.f32 %v502, %v2449
      %v2455 = vadd.f32 %v510, %v2451
      %v2456 = vtanh.pop %v2454
      %v2457 = vtanh.pop %v2455
      %v2458 = vsub.f32 1.0, %v2435
      %v2459 = vsub.f32 1.0, %v2437
      %2462 = vrot.lane.b32.xlu0 %v2456, 96
      %v2463 = vpop.permute.xlu0 %2462
      %2464 = vrot.lane.b32.xlu0 %v2457, 96
      %v2465 = vpop.permute.xlu0 %2464
      %v2468 = vmul.f32 %v2458, %v2463
      %v2469 = vmul.f32 %v2459, %v2465
      %v2470 = vrot.slane %v2352, 7
      %v2471 = vrot.slane %v2353, 7
      %v2474 = vmul.f32 %v2435, %v2470
      %v2475 = vmul.f32 %v2437, %v2471
      %v2476 = vadd.f32 %v2468, %v2474
      %v2477 = vadd.f32 %v2469, %v2475
      %2480 = vrot.lane.b32.xlu0 %v2476, 96
      %v2481 = vpop.permute.xlu0 %2480
      %2482 = vrot.lane.b32.xlu0 %v2477, 96
      %v2483 = vpop.permute.xlu0 %2482
      %2486 = vst.msk [vmem:[#allocation2 + $0x8] sm:$0x80] %vm1497, %v2481
      %2487 = vst.msk [vmem:[#allocation2 + $0x18] sm:$0x80] %vm1497, %v2483
      %v2488 = vld [vmem:[#allocation2] sm:$0xff]
      %v2489 = vld [vmem:[#allocation2 + $0x8] sm:$0xff]
      %v2490 = vld [vmem:[#allocation2 + $0x10] sm:$0xff]
      %v2491 = vld [vmem:[#allocation2 + $0x18] sm:$0xff]
      %v2492 = vpack.c.bf16 %v2489, %v2488
      %v2493 = vpack.c.bf16 %v2491, %v2490
      %v2496 = vunpack.c.l.b16 %v2492
      %v2497 = vunpack.c.h.b16 %v2492
      %v2498 = vunpack.c.l.b16 %v2493
      %v2499 = vunpack.c.h.b16 %v2493
      %v2500 = vpack.c.b16 %v2496, %v2496
      %v2501 = vpack.c.b16 %v2497, %v2497
      %v2502 = vpack.c.b16 %v2498, %v2498
      %v2503 = vpack.c.b16 %v2499, %v2499
      %2508 = vst.msk [vmem:[%s328] sm:$0xf] %vm445, %v2500
      %2509 = vst.msk [vmem:[%s328 + $0x4] sm:$0xf] %vm445, %v2501
      %2510 = vst.msk [vmem:[%s328 + $0x8] sm:$0xf] %vm445, %v2502
      %2511 = vst.msk [vmem:[%s328 + $0xc] sm:$0xf] %vm445, %v2503
      %s2512 = smul.u32 2, %s20
      %p2513 = scmp.lt.s32.totalorder %s2512, 3
      %s2514 = scalar_select %p2513, %s2512, 3
      %s2515 = smul.addr %s2514, 2
      %s2516 = smul.addr %s2515, 4
      %s2517 = scalar_lea.vmem %s7, %s2516
      %s2518 = smul.u32 2, %s20
      %p2519 = scmp.lt.s32.totalorder %s2518, 3
      %s2520 = scalar_select %p2519, %s2518, 3
      %s2521 = smul.addr %s2520, 2
      %s2522 = smul.addr %s2521, 4
      %s2523 = scalar_lea.vmem %s8, %s2522
      // Predicated region
      $region49: #{mcan_reid_forward.2} parent=47 // pred_check
        %p2524 = pneg %p190
      $region50: #{mcan_reid_forward.2} parent=47 // pred_check_branch
        %2526 = sbr.rel (%p2524) target = $region52
      $region51: #{mcan_reid_forward.2} parent=47 // pred_region
        %s2527 = smul.u32 2, %s20
      $region52: #{mcan_reid_forward.2} parent=47 // pred_fallthru
        _
      // Predicated region
      $region53: #{mcan_reid_forward.2} parent=47 // pred_check
        %p2528 = pneg %p216
      $region54: #{mcan_reid_forward.2} parent=47 // pred_check_branch
        %2530 = sbr.rel (%p2528) target = $region56
      $region55: #{mcan_reid_forward.2} parent=47 // pred_region
        %s2531 = smul.u32 2, %s20
      $region56: #{mcan_reid_forward.2} parent=47 // pred_fallthru
        _
    $region48: #{mcan_reid_forward.2} parent=5 // pred_fallthru
      _
    %p2532 = scmp.le.s32.totalorder 2, %s15
    // Predicated region
    $region57: #{mcan_reid_forward.2} parent=5 // pred_check
      %p2533 = pneg %p2532
    $region58: #{mcan_reid_forward.2} parent=5 // pred_check_branch
      %2535 = sbr.rel (%p2533) target = $region60
    $region59: #{mcan_reid_forward.2} parent=5 // pred_region
      %s2536 = ssub.s32 %s15, 2
      // Predicated region
      $region61: #{mcan_reid_forward.2} parent=59 // pred_check
        %p2537 = pneg %p196
      $region62: #{mcan_reid_forward.2} parent=59 // pred_check_branch
        %2539 = sbr.rel (%p2537) target = $region64
      $region63: #{mcan_reid_forward.2} parent=59 // pred_region
        %s2540 = smul.u32 2, %s21
        %p2541 = scmp.lt.s32.totalorder %s2540, 3
        %s2542 = scalar_select %p2541, %s2540, 3
        %s2543 = smul.addr %s2542, 2
        %s2544 = smul.addr %s2543, 4
        %s2545 = scalar_lea.vmem %s7, %s2544
      $region64: #{mcan_reid_forward.2} parent=59 // pred_fallthru
        _
      // Predicated region
      $region65: #{mcan_reid_forward.2} parent=59 // pred_check
        %p2546 = pneg %p222
      $region66: #{mcan_reid_forward.2} parent=59 // pred_check_branch
        %2548 = sbr.rel (%p2546) target = $region68
      $region67: #{mcan_reid_forward.2} parent=59 // pred_region
        %s2549 = smul.u32 2, %s21
        %p2550 = scmp.lt.s32.totalorder %s2549, 3
        %s2551 = scalar_select %p2550, %s2549, 3
        %s2552 = smul.addr %s2551, 2
        %s2553 = smul.addr %s2552, 4
        %s2554 = scalar_lea.vmem %s8, %s2553
      $region68: #{mcan_reid_forward.2} parent=59 // pred_fallthru
        _
    $region60: #{mcan_reid_forward.2} parent=5 // pred_fallthru
      _
  $region6: #{mcan_reid_forward.2} parent=0 // loop_footer
    %s19 = sadd.s32 1, %s15
  $region7: #{mcan_reid_forward.2} parent=0 // loop_footer_branch
    %14 = sbr.rel target = $region3
  $region8: #{mcan_reid_forward.2} parent=0 // loop_exit
    _

</llo_original>
